<compile_context>
chip_gen: v7x
topology: tpu7x:2x2x1
jax: 0.10.0
libtpu: 0.0.40
codegen_flags: <defaults>
</compile_context>

<pallas_src>
import jax
import jax.numpy as jnp
from jax.experimental import pallas as pl
from jax.experimental.pallas import tpu as pltpu

EPS = 1e-5


def residual_basic_kernel(x_ref, w1_ref, g1_ref, bt1_ref,
                          w2_ref, g2_ref, bt2_ref,
                          out_ref, pad_ref, patch_ref):
    N, H, W, C = x_ref.shape
    NF = N * H * W

    # Zero only the 1-pixel border of the padded scratch, once.  The interior
    # is fully overwritten before each conv; the border is never touched again.
    pad_ref[:, 0:1, :, :] = jnp.zeros((N, 1, W + 2, C), jnp.float32)
    pad_ref[:, H + 1:H + 2, :, :] = jnp.zeros((N, 1, W + 2, C), jnp.float32)
    pad_ref[:, 1:H + 1, 0:1, :] = jnp.zeros((N, H, 1, C), jnp.float32)
    pad_ref[:, 1:H + 1, W + 1:W + 2, :] = jnp.zeros((N, H, 1, C), jnp.float32)

    def conv3x3(w2d_ref):
        # Gather the 9 shifted taps into the (NF, 9*C) im2col buffer ...
        for ky in range(3):
            for kx in range(3):
                tap = ky * 3 + kx
                patch_ref[:, tap * C:(tap + 1) * C] = (
                    pad_ref[:, ky:ky + H, kx:kx + W, :].reshape(NF, C))
        # ... and contract them with a single MXU push (K = 9*C).
        return jnp.dot(patch_ref[...].astype(w2d_ref.dtype), w2d_ref[...],
                       preferred_element_type=jnp.float32)

    def bn_affine(z, gamma, beta):
        # Training-mode BN folded to a per-channel affine; one-pass statistics.
        inv_nf = 1.0 / NF
        mean = jnp.sum(z, axis=0, keepdims=True) * inv_nf              # (1,C)
        var = jnp.sum(z * z, axis=0, keepdims=True) * inv_nf - mean * mean
        scale = jax.lax.rsqrt(var + EPS) * gamma                        # (1,C)
        shift = beta - mean * scale                                     # (1,C)
        return z * scale + shift

    # block 1: conv -> BN -> ReLU   (conv bias omitted: cancelled by BN mean)
    pad_ref[:, 1:H + 1, 1:W + 1, :] = x_ref[...]
    h = conv3x3(w1_ref)
    h = jnp.maximum(bn_affine(h, g1_ref[...], bt1_ref[...]), 0.0)

    # block 2: conv -> BN   (write h straight into the pad interior; border is
    # still zero from the one-time init)
    pad_ref[:, 1:H + 1, 1:W + 1, :] = h.reshape(N, H, W, C)
    h = conv3x3(w2_ref)
    h = bn_affine(h, g2_ref[...], bt2_ref[...])

    # residual add + final ReLU
    out_ref[...] = jnp.maximum(h.reshape(N, H, W, C) + x_ref[...], 0.0)


def residual_basic(x_nchw, params, matmul_dtype=jnp.float32):
    """params = (w1, b1, g1, bt1, w2, b2, g2, bt2); conv weights are HWIO."""
    w1, b1, g1, bt1, w2, b2, g2, bt2 = params
    del b1, b2  # bias before training-mode BN is a mathematical no-op

    x = jnp.transpose(x_nchw, (0, 2, 3, 1)).astype(jnp.float32)  # NCHW -> NHWC
    N, H, W, C = x.shape

    # Pad channels to a multiple of 128 so the lane dimension is dense.
    Cp = max(128, ((C + 127) // 128) * 128)
    pc = Cp - C
    if pc:
        x = jnp.pad(x, ((0, 0), (0, 0), (0, 0), (0, pc)))
        w1 = jnp.pad(w1, ((0, 0), (0, 0), (0, pc), (0, pc)))
        w2 = jnp.pad(w2, ((0, 0), (0, 0), (0, pc), (0, pc)))
        g1 = jnp.pad(g1, ((0, 0), (0, pc)))
        bt1 = jnp.pad(bt1, ((0, 0), (0, pc)))
        g2 = jnp.pad(g2, ((0, 0), (0, pc)))
        bt2 = jnp.pad(bt2, ((0, 0), (0, pc)))

    # (3,3,Cin,Cout) -> (9*Cin, Cout); row = tap*Cin + cin matches the im2col
    # column layout built inside the kernel.
    w1_2d = w1.reshape(9 * Cp, Cp).astype(matmul_dtype)
    w2_2d = w2.reshape(9 * Cp, Cp).astype(matmul_dtype)

    NF = N * H * W
    f32b = 4
    buf_bytes = (2 * NF * Cp * f32b                        # x + out
                 + 2 * 9 * Cp * Cp * w1_2d.dtype.itemsize  # reshaped weights
                 + N * (H + 2) * (W + 2) * Cp * f32b       # padded-act scratch
                 + NF * 9 * Cp * f32b)                     # im2col scratch
    vmem_limit = int(min(64 * 1024 * 1024, 2 * buf_bytes + (4 << 20)))

    out_nhwc = pl.pallas_call(
        residual_basic_kernel,
        out_shape=jax.ShapeDtypeStruct((N, H, W, Cp), jnp.float32),
        in_specs=[pl.BlockSpec(memory_space=pltpu.MemorySpace.VMEM)] * 7,
        out_specs=pl.BlockSpec(memory_space=pltpu.MemorySpace.VMEM),
        scratch_shapes=[
            pltpu.VMEM((N, H + 2, W + 2, Cp), jnp.float32),   # padded acts
            pltpu.VMEM((NF, 9 * Cp), jnp.float32),            # im2col buffer
        ],
        compiler_params=pltpu.CompilerParams(vmem_limit_bytes=vmem_limit),
    )(x, w1_2d, g1, bt1, w2_2d, g2, bt2)

    return jnp.transpose(out_nhwc[..., :C], (0, 3, 1, 2))       # NHWC -> NCHW


def residual_basic_ref(x_nchw, params):
    """Pure-JAX reference with identical semantics (for verification)."""
    w1, b1, g1, bt1, w2, b2, g2, bt2 = params
    x = jnp.transpose(x_nchw, (0, 2, 3, 1)).astype(jnp.float32)

    def conv(z, w, b):
        y = jax.lax.conv_general_dilated(
            z, w, window_strides=(1, 1), padding=((1, 1), (1, 1)),
            dimension_numbers=('NHWC', 'HWIO', 'NHWC'))
        return y + b

    def bn(z, g, bt):
        mean = jnp.mean(z, axis=(0, 1, 2), keepdims=True)
        var = jnp.mean((z - mean) ** 2, axis=(0, 1, 2), keepdims=True)
        return (z - mean) * jax.lax.rsqrt(var + EPS) * g + bt

    h = jax.nn.relu(bn(conv(x, w1, b1), g1, bt1))
    h = bn(conv(h, w2, b2), g2, bt2)
    out = jax.nn.relu(h + x)
    return jnp.transpose(out, (0, 3, 1, 2))


def make_params(key, channels):
    ks = jax.random.split(key, 8)
    C = channels
    w1 = jax.random.normal(ks[0], (3, 3, C, C), jnp.float32) * 0.2
    b1 = jax.random.normal(ks[1], (1, C), jnp.float32) * 0.1
    g1 = 1.0 + jax.random.normal(ks[2], (1, C), jnp.float32) * 0.1
    bt1 = jax.random.normal(ks[3], (1, C), jnp.float32) * 0.1
    w2 = jax.random.normal(ks[4], (3, 3, C, C), jnp.float32) * 0.2
    b2 = jax.random.normal(ks[5], (1, C), jnp.float32) * 0.1
    g2 = 1.0 + jax.random.normal(ks[6], (1, C), jnp.float32) * 0.1
    bt2 = jax.random.normal(ks[7], (1, C), jnp.float32) * 0.1
    return (w1, b1, g1, bt1, w2, b2, g2, bt2)


if __name__ == "__main__":
    key = jax.random.PRNGKey(0)
    k_x, k_p = jax.random.split(key)

    B, C, H, W = 2, 4, 16, 16
    x = jax.random.normal(k_x, (B, C, H, W), jnp.float32)     # NCHW like PyTorch
    params = make_params(k_p, C)

    out = jax.block_until_ready(residual_basic(x, params))
    ref = residual_basic_ref(x, params)

    assert out.shape == (B, C, H, W)
    assert jnp.allclose(out, ref, atol=1e-4, rtol=1e-3), "mismatch vs reference"

    print("KERNEL_OK")
</pallas_src>

<mosaic_0001>
module attributes {stable_mosaic.version = 11 : i64} {
  func.func @residual_basic_kernel(%arg0: memref<2x16x16x128xf32, #tpu.memory_space<vmem>>, %arg1: memref<1152x128xf32, #tpu.memory_space<vmem>>, %arg2: memref<1x128xf32, #tpu.memory_space<vmem>>, %arg3: memref<1x128xf32, #tpu.memory_space<vmem>>, %arg4: memref<1152x128xf32, #tpu.memory_space<vmem>>, %arg5: memref<1x128xf32, #tpu.memory_space<vmem>>, %arg6: memref<1x128xf32, #tpu.memory_space<vmem>>, %arg7: memref<2x16x16x128xf32, #tpu.memory_space<vmem>>, %arg8: memref<2x18x18x128xf32, #tpu.memory_space<vmem>>, %arg9: memref<512x1152xf32, #tpu.memory_space<vmem>>) attributes {dimension_semantics = [], scalar_prefetch = 0 : i64, scratch_operands = 2 : i64, tpu.core_type = #tpu.core_type<tc>} {
    %cst = arith.constant 0.000000e+00 : f32
    %0 = vector.broadcast %cst : f32 to vector<2x1x18x128xf32>
    %c0 = arith.constant 0 : index
    %c0_0 = arith.constant 0 : index
    %c0_1 = arith.constant 0 : index
    %c0_2 = arith.constant 0 : index
    %1 = vector.load %arg8[%c0, %c0_0, %c0_1, %c0_2] : memref<2x18x18x128xf32, #tpu.memory_space<vmem>>, vector<2x1x18x128xf32>
    tpu.vector_store %arg8[%c0, %c0_0, %c0_1, %c0_2], %0 {strides = array<i32>} : memref<2x18x18x128xf32, #tpu.memory_space<vmem>>, vector<2x1x18x128xf32>,
    %cst_3 = arith.constant 0.000000e+00 : f32
    %2 = vector.broadcast %cst_3 : f32 to vector<2x1x18x128xf32>
    %c0_4 = arith.constant 0 : index
    %c17 = arith.constant 17 : index
    %c0_5 = arith.constant 0 : index
    %c0_6 = arith.constant 0 : index
    %3 = vector.load %arg8[%c0_4, %c17, %c0_5, %c0_6] : memref<2x18x18x128xf32, #tpu.memory_space<vmem>>, vector<2x1x18x128xf32>
    tpu.vector_store %arg8[%c0_4, %c17, %c0_5, %c0_6], %2 {strides = array<i32>} : memref<2x18x18x128xf32, #tpu.memory_space<vmem>>, vector<2x1x18x128xf32>,
    %cst_7 = arith.constant 0.000000e+00 : f32
    %4 = vector.broadcast %cst_7 : f32 to vector<2x16x1x128xf32>
    %c0_8 = arith.constant 0 : index
    %c1 = arith.constant 1 : index
    %c0_9 = arith.constant 0 : index
    %c0_10 = arith.constant 0 : index
    %5 = vector.load %arg8[%c0_8, %c1, %c0_9, %c0_10] : memref<2x18x18x128xf32, #tpu.memory_space<vmem>>, vector<2x16x1x128xf32>
    tpu.vector_store %arg8[%c0_8, %c1, %c0_9, %c0_10], %4 {strides = array<i32>} : memref<2x18x18x128xf32, #tpu.memory_space<vmem>>, vector<2x16x1x128xf32>,
    %cst_11 = arith.constant 0.000000e+00 : f32
    %6 = vector.broadcast %cst_11 : f32 to vector<2x16x1x128xf32>
    %c0_12 = arith.constant 0 : index
    %c1_13 = arith.constant 1 : index
    %c17_14 = arith.constant 17 : index
    %c0_15 = arith.constant 0 : index
    %7 = vector.load %arg8[%c0_12, %c1_13, %c17_14, %c0_15] : memref<2x18x18x128xf32, #tpu.memory_space<vmem>>, vector<2x16x1x128xf32>
    tpu.vector_store %arg8[%c0_12, %c1_13, %c17_14, %c0_15], %6 {strides = array<i32>} : memref<2x18x18x128xf32, #tpu.memory_space<vmem>>, vector<2x16x1x128xf32>,
    %c0_16 = arith.constant 0 : index
    %c0_17 = arith.constant 0 : index
    %c0_18 = arith.constant 0 : index
    %c0_19 = arith.constant 0 : index
    %8 = vector.load %arg0[%c0_16, %c0_17, %c0_18, %c0_19] : memref<2x16x16x128xf32, #tpu.memory_space<vmem>>, vector<2x16x16x128xf32>
    %c0_20 = arith.constant 0 : index
    %c1_21 = arith.constant 1 : index
    %c1_22 = arith.constant 1 : index
    %c0_23 = arith.constant 0 : index
    %9 = vector.load %arg8[%c0_20, %c1_21, %c1_22, %c0_23] : memref<2x18x18x128xf32, #tpu.memory_space<vmem>>, vector<2x16x16x128xf32>
    tpu.vector_store %arg8[%c0_20, %c1_21, %c1_22, %c0_23], %8 {strides = array<i32>} : memref<2x18x18x128xf32, #tpu.memory_space<vmem>>, vector<2x16x16x128xf32>,
    %c0_24 = arith.constant 0 : index
    %c0_25 = arith.constant 0 : index
    %c0_26 = arith.constant 0 : index
    %c0_27 = arith.constant 0 : index
    %10 = vector.load %arg8[%c0_24, %c0_25, %c0_26, %c0_27] : memref<2x18x18x128xf32, #tpu.memory_space<vmem>>, vector<2x16x16x128xf32>
    %11 = vector.shape_cast %10 : vector<2x16x16x128xf32> to vector<512x128xf32>
    %c0_28 = arith.constant 0 : index
    %c0_29 = arith.constant 0 : index
    %12 = vector.load %arg9[%c0_28, %c0_29] : memref<512x1152xf32, #tpu.memory_space<vmem>>, vector<512x128xf32>
    tpu.vector_store %arg9[%c0_28, %c0_29], %11 {strides = array<i32>} : memref<512x1152xf32, #tpu.memory_space<vmem>>, vector<512x128xf32>,
    %c0_30 = arith.constant 0 : index
    %c0_31 = arith.constant 0 : index
    %c1_32 = arith.constant 1 : index
    %c0_33 = arith.constant 0 : index
    %13 = vector.load %arg8[%c0_30, %c0_31, %c1_32, %c0_33] : memref<2x18x18x128xf32, #tpu.memory_space<vmem>>, vector<2x16x16x128xf32>
    %14 = vector.shape_cast %13 : vector<2x16x16x128xf32> to vector<512x128xf32>
    %c0_34 = arith.constant 0 : index
    %c128 = arith.constant 128 : index
    %15 = vector.load %arg9[%c0_34, %c128] : memref<512x1152xf32, #tpu.memory_space<vmem>>, vector<512x128xf32>
    tpu.vector_store %arg9[%c0_34, %c128], %14 {strides = array<i32>} : memref<512x1152xf32, #tpu.memory_space<vmem>>, vector<512x128xf32>,
    %c0_35 = arith.constant 0 : index
    %c0_36 = arith.constant 0 : index
    %c2 = arith.constant 2 : index
    %c0_37 = arith.constant 0 : index
    %16 = vector.load %arg8[%c0_35, %c0_36, %c2, %c0_37] : memref<2x18x18x128xf32, #tpu.memory_space<vmem>>, vector<2x16x16x128xf32>
    %17 = vector.shape_cast %16 : vector<2x16x16x128xf32> to vector<512x128xf32>
    %c0_38 = arith.constant 0 : index
    %c256 = arith.constant 256 : index
    %18 = vector.load %arg9[%c0_38, %c256] : memref<512x1152xf32, #tpu.memory_space<vmem>>, vector<512x128xf32>
    tpu.vector_store %arg9[%c0_38, %c256], %17 {strides = array<i32>} : memref<512x1152xf32, #tpu.memory_space<vmem>>, vector<512x128xf32>,
    %c0_39 = arith.constant 0 : index
    %c1_40 = arith.constant 1 : index
    %c0_41 = arith.constant 0 : index
    %c0_42 = arith.constant 0 : index
    %19 = vector.load %arg8[%c0_39, %c1_40, %c0_41, %c0_42] : memref<2x18x18x128xf32, #tpu.memory_space<vmem>>, vector<2x16x16x128xf32>
    %20 = vector.shape_cast %19 : vector<2x16x16x128xf32> to vector<512x128xf32>
    %c0_43 = arith.constant 0 : index
    %c384 = arith.constant 384 : index
    %21 = vector.load %arg9[%c0_43, %c384] : memref<512x1152xf32, #tpu.memory_space<vmem>>, vector<512x128xf32>
    tpu.vector_store %arg9[%c0_43, %c384], %20 {strides = array<i32>} : memref<512x1152xf32, #tpu.memory_space<vmem>>, vector<512x128xf32>,
    %c0_44 = arith.constant 0 : index
    %c1_45 = arith.constant 1 : index
    %c1_46 = arith.constant 1 : index
    %c0_47 = arith.constant 0 : index
    %22 = vector.load %arg8[%c0_44, %c1_45, %c1_46, %c0_47] : memref<2x18x18x128xf32, #tpu.memory_space<vmem>>, vector<2x16x16x128xf32>
    %23 = vector.shape_cast %22 : vector<2x16x16x128xf32> to vector<512x128xf32>
    %c0_48 = arith.constant 0 : index
    %c512 = arith.constant 512 : index
    %24 = vector.load %arg9[%c0_48, %c512] : memref<512x1152xf32, #tpu.memory_space<vmem>>, vector<512x128xf32>
    tpu.vector_store %arg9[%c0_48, %c512], %23 {strides = array<i32>} : memref<512x1152xf32, #tpu.memory_space<vmem>>, vector<512x128xf32>,
    %c0_49 = arith.constant 0 : index
    %c1_50 = arith.constant 1 : index
    %c2_51 = arith.constant 2 : index
    %c0_52 = arith.constant 0 : index
    %25 = vector.load %arg8[%c0_49, %c1_50, %c2_51, %c0_52] : memref<2x18x18x128xf32, #tpu.memory_space<vmem>>, vector<2x16x16x128xf32>
    %26 = vector.shape_cast %25 : vector<2x16x16x128xf32> to vector<512x128xf32>
    %c0_53 = arith.constant 0 : index
    %c640 = arith.constant 640 : index
    %27 = vector.load %arg9[%c0_53, %c640] : memref<512x1152xf32, #tpu.memory_space<vmem>>, vector<512x128xf32>
    tpu.vector_store %arg9[%c0_53, %c640], %26 {strides = array<i32>} : memref<512x1152xf32, #tpu.memory_space<vmem>>, vector<512x128xf32>,
    %c0_54 = arith.constant 0 : index
    %c2_55 = arith.constant 2 : index
    %c0_56 = arith.constant 0 : index
    %c0_57 = arith.constant 0 : index
    %28 = vector.load %arg8[%c0_54, %c2_55, %c0_56, %c0_57] : memref<2x18x18x128xf32, #tpu.memory_space<vmem>>, vector<2x16x16x128xf32>
    %29 = vector.shape_cast %28 : vector<2x16x16x128xf32> to vector<512x128xf32>
    %c0_58 = arith.constant 0 : index
    %c768 = arith.constant 768 : index
    %30 = vector.load %arg9[%c0_58, %c768] : memref<512x1152xf32, #tpu.memory_space<vmem>>, vector<512x128xf32>
    tpu.vector_store %arg9[%c0_58, %c768], %29 {strides = array<i32>} : memref<512x1152xf32, #tpu.memory_space<vmem>>, vector<512x128xf32>,
    %c0_59 = arith.constant 0 : index
    %c2_60 = arith.constant 2 : index
    %c1_61 = arith.constant 1 : index
    %c0_62 = arith.constant 0 : index
    %31 = vector.load %arg8[%c0_59, %c2_60, %c1_61, %c0_62] : memref<2x18x18x128xf32, #tpu.memory_space<vmem>>, vector<2x16x16x128xf32>
    %32 = vector.shape_cast %31 : vector<2x16x16x128xf32> to vector<512x128xf32>
    %c0_63 = arith.constant 0 : index
    %c896 = arith.constant 896 : index
    %33 = vector.load %arg9[%c0_63, %c896] : memref<512x1152xf32, #tpu.memory_space<vmem>>, vector<512x128xf32>
    tpu.vector_store %arg9[%c0_63, %c896], %32 {strides = array<i32>} : memref<512x1152xf32, #tpu.memory_space<vmem>>, vector<512x128xf32>,
    %c0_64 = arith.constant 0 : index
    %c2_65 = arith.constant 2 : index
    %c2_66 = arith.constant 2 : index
    %c0_67 = arith.constant 0 : index
    %34 = vector.load %arg8[%c0_64, %c2_65, %c2_66, %c0_67] : memref<2x18x18x128xf32, #tpu.memory_space<vmem>>, vector<2x16x16x128xf32>
    %35 = vector.shape_cast %34 : vector<2x16x16x128xf32> to vector<512x128xf32>
    %c0_68 = arith.constant 0 : index
    %c1024 = arith.constant 1024 : index
    %36 = vector.load %arg9[%c0_68, %c1024] : memref<512x1152xf32, #tpu.memory_space<vmem>>, vector<512x128xf32>
    tpu.vector_store %arg9[%c0_68, %c1024], %35 {strides = array<i32>} : memref<512x1152xf32, #tpu.memory_space<vmem>>, vector<512x128xf32>,
    %c0_69 = arith.constant 0 : index
    %c0_70 = arith.constant 0 : index
    %37 = vector.load %arg9[%c0_69, %c0_70] : memref<512x1152xf32, #tpu.memory_space<vmem>>, vector<512x1152xf32>
    %c0_71 = arith.constant 0 : index
    %c0_72 = arith.constant 0 : index
    %38 = vector.load %arg1[%c0_71, %c0_72] : memref<1152x128xf32, #tpu.memory_space<vmem>>, vector<1152x128xf32>
    %cst_73 = arith.constant dense<0.000000e+00> : vector<512x128xf32>
    %39 = tpu.matmul %37, %38, %cst_73 {dimension_numbers = #tpu.dot_dimension_numbers<[1], [0], [0], [1], [0, 0, 1, 1], [], []>} : vector<512x1152xf32>, vector<1152x128xf32>, vector<512x128xf32> -> vector<512x128xf32>
    %c0_74 = arith.constant 0 : index
    %c0_75 = arith.constant 0 : index
    %40 = vector.load %arg2[%c0_74, %c0_75] : memref<1x128xf32, #tpu.memory_space<vmem>>, vector<1x128xf32>
    %c0_76 = arith.constant 0 : index
    %c0_77 = arith.constant 0 : index
    %41 = vector.load %arg3[%c0_76, %c0_77] : memref<1x128xf32, #tpu.memory_space<vmem>>, vector<1x128xf32>
    %cst_78 = arith.constant dense<0.000000e+00> : vector<128xf32>
    %42 = vector.multi_reduction <add>, %39, %cst_78 [0] : vector<512x128xf32> to vector<128xf32>
    %43 = vector.shape_cast %42 : vector<128xf32> to vector<1x128xf32>
    %cst_79 = arith.constant 0.001953125 : f32
    %44 = vector.broadcast %cst_79 : f32 to vector<1x128xf32>
    %45 = arith.mulf %43, %44 : vector<1x128xf32>
    %46 = arith.mulf %39, %39 : vector<512x128xf32>
    %cst_80 = arith.constant dense<0.000000e+00> : vector<128xf32>
    %47 = vector.multi_reduction <add>, %46, %cst_80 [0] : vector<512x128xf32> to vector<128xf32>
    %48 = vector.shape_cast %47 : vector<128xf32> to vector<1x128xf32>
    %cst_81 = arith.constant 0.001953125 : f32
    %49 = vector.broadcast %cst_81 : f32 to vector<1x128xf32>
    %50 = arith.mulf %48, %49 : vector<1x128xf32>
    %51 = arith.mulf %45, %45 : vector<1x128xf32>
    %52 = arith.subf %50, %51 : vector<1x128xf32>
    %cst_82 = arith.constant 9.99999974E-6 : f32
    %53 = vector.broadcast %cst_82 : f32 to vector<1x128xf32>
    %54 = arith.addf %52, %53 : vector<1x128xf32>
    %55 = math.rsqrt %54 : vector<1x128xf32>
    %56 = arith.mulf %55, %40 : vector<1x128xf32>
    %57 = arith.mulf %45, %56 : vector<1x128xf32>
    %58 = arith.subf %41, %57 : vector<1x128xf32>
    %59 = vector.broadcast %56 : vector<1x128xf32> to vector<512x128xf32>
    %60 = arith.mulf %39, %59 : vector<512x128xf32>
    %61 = vector.broadcast %58 : vector<1x128xf32> to vector<512x128xf32>
    %62 = arith.addf %60, %61 : vector<512x128xf32>
    %cst_83 = arith.constant 0.000000e+00 : f32
    %63 = vector.broadcast %cst_83 : f32 to vector<512x128xf32>
    %64 = arith.maximumf %62, %63 : vector<512x128xf32>
    %65 = vector.shape_cast %64 : vector<512x128xf32> to vector<2x16x16x128xf32>
    %c0_84 = arith.constant 0 : index
    %c1_85 = arith.constant 1 : index
    %c1_86 = arith.constant 1 : index
    %c0_87 = arith.constant 0 : index
    %66 = vector.load %arg8[%c0_84, %c1_85, %c1_86, %c0_87] : memref<2x18x18x128xf32, #tpu.memory_space<vmem>>, vector<2x16x16x128xf32>
    tpu.vector_store %arg8[%c0_84, %c1_85, %c1_86, %c0_87], %65 {strides = array<i32>} : memref<2x18x18x128xf32, #tpu.memory_space<vmem>>, vector<2x16x16x128xf32>,
    %c0_88 = arith.constant 0 : index
    %c0_89 = arith.constant 0 : index
    %c0_90 = arith.constant 0 : index
    %c0_91 = arith.constant 0 : index
    %67 = vector.load %arg8[%c0_88, %c0_89, %c0_90, %c0_91] : memref<2x18x18x128xf32, #tpu.memory_space<vmem>>, vector<2x16x16x128xf32>
    %68 = vector.shape_cast %67 : vector<2x16x16x128xf32> to vector<512x128xf32>
    %c0_92 = arith.constant 0 : index
    %c0_93 = arith.constant 0 : index
    %69 = vector.load %arg9[%c0_92, %c0_93] : memref<512x1152xf32, #tpu.memory_space<vmem>>, vector<512x128xf32>
    tpu.vector_store %arg9[%c0_92, %c0_93], %68 {strides = array<i32>} : memref<512x1152xf32, #tpu.memory_space<vmem>>, vector<512x128xf32>,
    %c0_94 = arith.constant 0 : index
    %c0_95 = arith.constant 0 : index
    %c1_96 = arith.constant 1 : index
    %c0_97 = arith.constant 0 : index
    %70 = vector.load %arg8[%c0_94, %c0_95, %c1_96, %c0_97] : memref<2x18x18x128xf32, #tpu.memory_space<vmem>>, vector<2x16x16x128xf32>
    %71 = vector.shape_cast %70 : vector<2x16x16x128xf32> to vector<512x128xf32>
    %c0_98 = arith.constant 0 : index
    %c128_99 = arith.constant 128 : index
    %72 = vector.load %arg9[%c0_98, %c128_99] : memref<512x1152xf32, #tpu.memory_space<vmem>>, vector<512x128xf32>
    tpu.vector_store %arg9[%c0_98, %c128_99], %71 {strides = array<i32>} : memref<512x1152xf32, #tpu.memory_space<vmem>>, vector<512x128xf32>,
    %c0_100 = arith.constant 0 : index
    %c0_101 = arith.constant 0 : index
    %c2_102 = arith.constant 2 : index
    %c0_103 = arith.constant 0 : index
    %73 = vector.load %arg8[%c0_100, %c0_101, %c2_102, %c0_103] : memref<2x18x18x128xf32, #tpu.memory_space<vmem>>, vector<2x16x16x128xf32>
    %74 = vector.shape_cast %73 : vector<2x16x16x128xf32> to vector<512x128xf32>
    %c0_104 = arith.constant 0 : index
    %c256_105 = arith.constant 256 : index
    %75 = vector.load %arg9[%c0_104, %c256_105] : memref<512x1152xf32, #tpu.memory_space<vmem>>, vector<512x128xf32>
    tpu.vector_store %arg9[%c0_104, %c256_105], %74 {strides = array<i32>} : memref<512x1152xf32, #tpu.memory_space<vmem>>, vector<512x128xf32>,
    %c0_106 = arith.constant 0 : index
    %c1_107 = arith.constant 1 : index
    %c0_108 = arith.constant 0 : index
    %c0_109 = arith.constant 0 : index
    %76 = vector.load %arg8[%c0_106, %c1_107, %c0_108, %c0_109] : memref<2x18x18x128xf32, #tpu.memory_space<vmem>>, vector<2x16x16x128xf32>
    %77 = vector.shape_cast %76 : vector<2x16x16x128xf32> to vector<512x128xf32>
    %c0_110 = arith.constant 0 : index
    %c384_111 = arith.constant 384 : index
    %78 = vector.load %arg9[%c0_110, %c384_111] : memref<512x1152xf32, #tpu.memory_space<vmem>>, vector<512x128xf32>
    tpu.vector_store %arg9[%c0_110, %c384_111], %77 {strides = array<i32>} : memref<512x1152xf32, #tpu.memory_space<vmem>>, vector<512x128xf32>,
    %c0_112 = arith.constant 0 : index
    %c1_113 = arith.constant 1 : index
    %c1_114 = arith.constant 1 : index
    %c0_115 = arith.constant 0 : index
    %79 = vector.load %arg8[%c0_112, %c1_113, %c1_114, %c0_115] : memref<2x18x18x128xf32, #tpu.memory_space<vmem>>, vector<2x16x16x128xf32>
    %80 = vector.shape_cast %79 : vector<2x16x16x128xf32> to vector<512x128xf32>
    %c0_116 = arith.constant 0 : index
    %c512_117 = arith.constant 512 : index
    %81 = vector.load %arg9[%c0_116, %c512_117] : memref<512x1152xf32, #tpu.memory_space<vmem>>, vector<512x128xf32>
    tpu.vector_store %arg9[%c0_116, %c512_117], %80 {strides = array<i32>} : memref<512x1152xf32, #tpu.memory_space<vmem>>, vector<512x128xf32>,
    %c0_118 = arith.constant 0 : index
    %c1_119 = arith.constant 1 : index
    %c2_120 = arith.constant 2 : index
    %c0_121 = arith.constant 0 : index
    %82 = vector.load %arg8[%c0_118, %c1_119, %c2_120, %c0_121] : memref<2x18x18x128xf32, #tpu.memory_space<vmem>>, vector<2x16x16x128xf32>
    %83 = vector.shape_cast %82 : vector<2x16x16x128xf32> to vector<512x128xf32>
    %c0_122 = arith.constant 0 : index
    %c640_123 = arith.constant 640 : index
    %84 = vector.load %arg9[%c0_122, %c640_123] : memref<512x1152xf32, #tpu.memory_space<vmem>>, vector<512x128xf32>
    tpu.vector_store %arg9[%c0_122, %c640_123], %83 {strides = array<i32>} : memref<512x1152xf32, #tpu.memory_space<vmem>>, vector<512x128xf32>,
    %c0_124 = arith.constant 0 : index
    %c2_125 = arith.constant 2 : index
    %c0_126 = arith.constant 0 : index
    %c0_127 = arith.constant 0 : index
    %85 = vector.load %arg8[%c0_124, %c2_125, %c0_126, %c0_127] : memref<2x18x18x128xf32, #tpu.memory_space<vmem>>, vector<2x16x16x128xf32>
    %86 = vector.shape_cast %85 : vector<2x16x16x128xf32> to vector<512x128xf32>
    %c0_128 = arith.constant 0 : index
    %c768_129 = arith.constant 768 : index
    %87 = vector.load %arg9[%c0_128, %c768_129] : memref<512x1152xf32, #tpu.memory_space<vmem>>, vector<512x128xf32>
    tpu.vector_store %arg9[%c0_128, %c768_129], %86 {strides = array<i32>} : memref<512x1152xf32, #tpu.memory_space<vmem>>, vector<512x128xf32>,
    %c0_130 = arith.constant 0 : index
    %c2_131 = arith.constant 2 : index
    %c1_132 = arith.constant 1 : index
    %c0_133 = arith.constant 0 : index
    %88 = vector.load %arg8[%c0_130, %c2_131, %c1_132, %c0_133] : memref<2x18x18x128xf32, #tpu.memory_space<vmem>>, vector<2x16x16x128xf32>
    %89 = vector.shape_cast %88 : vector<2x16x16x128xf32> to vector<512x128xf32>
    %c0_134 = arith.constant 0 : index
    %c896_135 = arith.constant 896 : index
    %90 = vector.load %arg9[%c0_134, %c896_135] : memref<512x1152xf32, #tpu.memory_space<vmem>>, vector<512x128xf32>
    tpu.vector_store %arg9[%c0_134, %c896_135], %89 {strides = array<i32>} : memref<512x1152xf32, #tpu.memory_space<vmem>>, vector<512x128xf32>,
    %c0_136 = arith.constant 0 : index
    %c2_137 = arith.constant 2 : index
    %c2_138 = arith.constant 2 : index
    %c0_139 = arith.constant 0 : index
    %91 = vector.load %arg8[%c0_136, %c2_137, %c2_138, %c0_139] : memref<2x18x18x128xf32, #tpu.memory_space<vmem>>, vector<2x16x16x128xf32>
    %92 = vector.shape_cast %91 : vector<2x16x16x128xf32> to vector<512x128xf32>
    %c0_140 = arith.constant 0 : index
    %c1024_141 = arith.constant 1024 : index
    %93 = vector.load %arg9[%c0_140, %c1024_141] : memref<512x1152xf32, #tpu.memory_space<vmem>>, vector<512x128xf32>
    tpu.vector_store %arg9[%c0_140, %c1024_141], %92 {strides = array<i32>} : memref<512x1152xf32, #tpu.memory_space<vmem>>, vector<512x128xf32>,
    %c0_142 = arith.constant 0 : index
    %c0_143 = arith.constant 0 : index
    %94 = vector.load %arg9[%c0_142, %c0_143] : memref<512x1152xf32, #tpu.memory_space<vmem>>, vector<512x1152xf32>
    %c0_144 = arith.constant 0 : index
    %c0_145 = arith.constant 0 : index
    %95 = vector.load %arg4[%c0_144, %c0_145] : memref<1152x128xf32, #tpu.memory_space<vmem>>, vector<1152x128xf32>
    %cst_146 = arith.constant dense<0.000000e+00> : vector<512x128xf32>
    %96 = tpu.matmul %94, %95, %cst_146 {dimension_numbers = #tpu.dot_dimension_numbers<[1], [0], [0], [1], [0, 0, 1, 1], [], []>} : vector<512x1152xf32>, vector<1152x128xf32>, vector<512x128xf32> -> vector<512x128xf32>
    %c0_147 = arith.constant 0 : index
    %c0_148 = arith.constant 0 : index
    %97 = vector.load %arg5[%c0_147, %c0_148] : memref<1x128xf32, #tpu.memory_space<vmem>>, vector<1x128xf32>
    %c0_149 = arith.constant 0 : index
    %c0_150 = arith.constant 0 : index
    %98 = vector.load %arg6[%c0_149, %c0_150] : memref<1x128xf32, #tpu.memory_space<vmem>>, vector<1x128xf32>
    %cst_151 = arith.constant dense<0.000000e+00> : vector<128xf32>
    %99 = vector.multi_reduction <add>, %96, %cst_151 [0] : vector<512x128xf32> to vector<128xf32>
    %100 = vector.shape_cast %99 : vector<128xf32> to vector<1x128xf32>
    %cst_152 = arith.constant 0.001953125 : f32
    %101 = vector.broadcast %cst_152 : f32 to vector<1x128xf32>
    %102 = arith.mulf %100, %101 : vector<1x128xf32>
    %103 = arith.mulf %96, %96 : vector<512x128xf32>
    %cst_153 = arith.constant dense<0.000000e+00> : vector<128xf32>
    %104 = vector.multi_reduction <add>, %103, %cst_153 [0] : vector<512x128xf32> to vector<128xf32>
    %105 = vector.shape_cast %104 : vector<128xf32> to vector<1x128xf32>
    %cst_154 = arith.constant 0.001953125 : f32
    %106 = vector.broadcast %cst_154 : f32 to vector<1x128xf32>
    %107 = arith.mulf %105, %106 : vector<1x128xf32>
    %108 = arith.mulf %102, %102 : vector<1x128xf32>
    %109 = arith.subf %107, %108 : vector<1x128xf32>
    %cst_155 = arith.constant 9.99999974E-6 : f32
    %110 = vector.broadcast %cst_155 : f32 to vector<1x128xf32>
    %111 = arith.addf %109, %110 : vector<1x128xf32>
    %112 = math.rsqrt %111 : vector<1x128xf32>
    %113 = arith.mulf %112, %97 : vector<1x128xf32>
    %114 = arith.mulf %102, %113 : vector<1x128xf32>
    %115 = arith.subf %98, %114 : vector<1x128xf32>
    %116 = vector.broadcast %113 : vector<1x128xf32> to vector<512x128xf32>
    %117 = arith.mulf %96, %116 : vector<512x128xf32>
    %118 = vector.broadcast %115 : vector<1x128xf32> to vector<512x128xf32>
    %119 = arith.addf %117, %118 : vector<512x128xf32>
    %120 = vector.shape_cast %119 : vector<512x128xf32> to vector<2x16x16x128xf32>
    %c0_156 = arith.constant 0 : index
    %c0_157 = arith.constant 0 : index
    %c0_158 = arith.constant 0 : index
    %c0_159 = arith.constant 0 : index
    %121 = vector.load %arg0[%c0_156, %c0_157, %c0_158, %c0_159] : memref<2x16x16x128xf32, #tpu.memory_space<vmem>>, vector<2x16x16x128xf32>
    %122 = arith.addf %120, %121 : vector<2x16x16x128xf32>
    %cst_160 = arith.constant 0.000000e+00 : f32
    %123 = vector.broadcast %cst_160 : f32 to vector<2x16x16x128xf32>
    %124 = arith.maximumf %122, %123 : vector<2x16x16x128xf32>
    %c0_161 = arith.constant 0 : index
    %c0_162 = arith.constant 0 : index
    %c0_163 = arith.constant 0 : index
    %c0_164 = arith.constant 0 : index
    %125 = vector.load %arg7[%c0_161, %c0_162, %c0_163, %c0_164] : memref<2x16x16x128xf32, #tpu.memory_space<vmem>>, vector<2x16x16x128xf32>
    tpu.vector_store %arg7[%c0_161, %c0_162, %c0_163, %c0_164], %124 {strides = array<i32>} : memref<2x16x16x128xf32, #tpu.memory_space<vmem>>, vector<2x16x16x128xf32>,
    return
  }
}

</mosaic_0001>

<llo_original>
// kernel: tpu_custom_call.1
$region0: #{tpu_custom_call.1}
  #allocation0 [shape = 'u32[]', space=smem, size = 0x4, offset = 0x4, fixed_abs, tag = 'smem constant byte address 0x4 - core index']
  #allocation1 [shape = 'u32[144,128]{1,0:T(1,128)}', space=vmem, size = 0x12000, scoped, tag = 'internal scratch']
  #allocation2 [shape = 'f32[2,18,18,128]{3,2,1,0:T(8,128)}', space=vmem, size = 0x6c000, scoped, tag = 'scratch operand']
  #allocation3 [shape = 'f32[512,1152]{1,0:T(8,128)}', space=vmem, size = 0x240000, scoped, tag = 'scratch operand']
  %s0 = inlined_call_operand.hbm [shape: f32[2,16,16,128], index: 0, kind: input, shape index: {}]
  %s1 = inlined_call_operand.hbm [shape: f32[1152,128], index: 1, kind: input, shape index: {}]
  %s2 = inlined_call_operand.vmem [shape: f32[1,128], index: 2, kind: input, shape index: {}]
  %s3 = inlined_call_operand.vmem [shape: f32[1,128], index: 3, kind: input, shape index: {}]
  %s4 = inlined_call_operand.hbm [shape: f32[1152,128], index: 4, kind: input, shape index: {}]
  %s5 = inlined_call_operand.vmem [shape: f32[1,128], index: 5, kind: input, shape index: {}]
  %s6 = inlined_call_operand.vmem [shape: f32[1,128], index: 6, kind: input, shape index: {}]
  %s7 = inlined_call_operand.hbm [shape: f32[2,16,16,128], index: 7, kind: output, shape index: {}]
  %s8 = sld [smem:[#allocation0]]
  $region50: #{tpu_custom_call.1} parent=0
    _
  %s10 = ssub.s32 1, %s8
  %s11 = scalar_select 0, %s10, %s8
  $region1: #{tpu_custom_call.1} parent=0
    #allocation4 [shape = 'u8[262144]{0}', space=vmem, size = 0x40000, scoped, tag = 'input window, operand 0, single buffered']
    #allocation5 [shape = 's32[1]{0}', space=sflag, size = 0x4, scoped, tag = 'scoped memory for tpu_custom_call.1']
    #allocation6 [shape = 's32[1]{0}', space=sflag, size = 0x4, scoped, tag = 'scoped memory for tpu_custom_call.1']
    #allocation7 [shape = 'u8[589824]{0}', space=vmem, size = 0x90000, scoped, tag = 'input window, operand 1, single buffered']
    #allocation8 [shape = 's32[1]{0}', space=sflag, size = 0x4, scoped, tag = 'scoped memory for tpu_custom_call.1']
    #allocation9 [shape = 'u8[589824]{0}', space=vmem, size = 0x90000, scoped, tag = 'input window, operand 4, single buffered']
    #allocation10 [shape = 'u8[262144]{0}', space=vmem, size = 0x40000, scoped, tag = 'output window, operand 0, single buffered']
    %12 = vsyncpa [#allocation5], 0
    %13 = vsyncpa [#allocation8], 0
    %14 = vsyncpa [#allocation6], 0
    // Predicated region
    $region2: #{tpu_custom_call.1} parent=1 // pred_check
      _
    $region3: #{tpu_custom_call.1} parent=1 // pred_check_branch
      %16 = sbr.rel (0) target = $region5
    $region4: #{tpu_custom_call.1} parent=1 // pred_region
      %s18 = ssub.s32 8192, 8192
      %19 = vsyncadd [#allocation5], %s18
      %s20 = sshll.u32 [#allocation4], 4
      %s21 = int_to_ptr.vmem [resolvable:$true] %s20
      %26 = dma.hbm_to_vmem [thread:$0]  %s0, 8192, %s21, [#allocation5], 128, 128, 8
    $region5: #{tpu_custom_call.1} parent=1 // pred_fallthru
      _
    // Predicated region
    $region6: #{tpu_custom_call.1} parent=1 // pred_check
      _
    $region7: #{tpu_custom_call.1} parent=1 // pred_check_branch
      %28 = sbr.rel (0) target = $region9
    $region8: #{tpu_custom_call.1} parent=1 // pred_region
      %s30 = ssub.s32 18432, 18432
      %31 = vsyncadd [#allocation8], %s30
      %s32 = sshll.u32 [#allocation7], 4
      %s33 = int_to_ptr.vmem [resolvable:$true] %s32
      %38 = dma.hbm_to_vmem [thread:$0]  %s1, 18432, %s33, [#allocation8], 128, 128, 8
    $region9: #{tpu_custom_call.1} parent=1 // pred_fallthru
      _
    // Predicated region
    $region10: #{tpu_custom_call.1} parent=1 // pred_check
      _
    $region11: #{tpu_custom_call.1} parent=1 // pred_check_branch
      %40 = sbr.rel (0) target = $region13
    $region12: #{tpu_custom_call.1} parent=1 // pred_region
      _
    $region13: #{tpu_custom_call.1} parent=1 // pred_fallthru
      _
    // Predicated region
    $region14: #{tpu_custom_call.1} parent=1 // pred_check
      _
    $region15: #{tpu_custom_call.1} parent=1 // pred_check_branch
      %42 = sbr.rel (0) target = $region17
    $region16: #{tpu_custom_call.1} parent=1 // pred_region
      _
    $region17: #{tpu_custom_call.1} parent=1 // pred_fallthru
      _
    // Predicated region
    $region18: #{tpu_custom_call.1} parent=1 // pred_check
      _
    $region19: #{tpu_custom_call.1} parent=1 // pred_check_branch
      %44 = sbr.rel (0) target = $region21
    $region20: #{tpu_custom_call.1} parent=1 // pred_region
      %s46 = ssub.s32 18432, 18432
      %47 = vsyncadd [#allocation8], %s46
      %s48 = sshll.u32 [#allocation9], 4
      %s49 = int_to_ptr.vmem [resolvable:$true] %s48
      %54 = dma.hbm_to_vmem [thread:$0]  %s4, 18432, %s49, [#allocation8], 128, 128, 8
    $region21: #{tpu_custom_call.1} parent=1 // pred_fallthru
      _
    // Predicated region
    $region22: #{tpu_custom_call.1} parent=1 // pred_check
      _
    $region23: #{tpu_custom_call.1} parent=1 // pred_check_branch
      %56 = sbr.rel (0) target = $region25
    $region24: #{tpu_custom_call.1} parent=1 // pred_region
      _
    $region25: #{tpu_custom_call.1} parent=1 // pred_fallthru
      _
    // Predicated region
    $region26: #{tpu_custom_call.1} parent=1 // pred_check
      _
    $region27: #{tpu_custom_call.1} parent=1 // pred_check_branch
      %58 = sbr.rel (0) target = $region29
    $region28: #{tpu_custom_call.1} parent=1 // pred_region
      _
    $region29: #{tpu_custom_call.1} parent=1 // pred_fallthru
      _
    // Predicated region
    $region30: #{tpu_custom_call.1} parent=1 // pred_check
      _
    $region31: #{tpu_custom_call.1} parent=1 // pred_check_branch
      %60 = sbr.rel (0) target = $region33
    $region32: #{tpu_custom_call.1} parent=1 // pred_region
      %61 = dma.done [#allocation5], 8192
    $region33: #{tpu_custom_call.1} parent=1 // pred_fallthru
      _
    // Predicated region
    $region34: #{tpu_custom_call.1} parent=1 // pred_check
      _
    $region35: #{tpu_custom_call.1} parent=1 // pred_check_branch
      %63 = sbr.rel (0) target = $region37
    $region36: #{tpu_custom_call.1} parent=1 // pred_region
      %64 = dma.done [#allocation8], 18432
    $region37: #{tpu_custom_call.1} parent=1 // pred_fallthru
      _
    // Predicated region
    $region38: #{tpu_custom_call.1} parent=1 // pred_check
      _
    $region39: #{tpu_custom_call.1} parent=1 // pred_check_branch
      %66 = sbr.rel (0) target = $region41
    $region40: #{tpu_custom_call.1} parent=1 // pred_region
      %67 = dma.done [#allocation8], 18432
    $region41: #{tpu_custom_call.1} parent=1 // pred_fallthru
      _
    %68 = vst [vmem:[#allocation2] sm:$0xff] 0.0
    %69 = vst [vmem:[#allocation2 + $0x8] sm:$0xff] 0.0
    %70 = vst [vmem:[#allocation2 + $0x10] sm:$0x3] 0.0
    %71 = vst [vmem:[#allocation2 + $0x1b0] sm:$0xff] 0.0
    %72 = vst [vmem:[#allocation2 + $0x1b8] sm:$0xff] 0.0
    %73 = vst [vmem:[#allocation2 + $0x1c0] sm:$0x3] 0.0
    %s74 = scalar_lea.vmem [#allocation2], 408
    %75 = vst [vmem:[%s74] sm:$0xff] 0.0
    %76 = vst [vmem:[%s74 + $0x8] sm:$0xff] 0.0
    %77 = vst [vmem:[%s74 + $0x10] sm:$0x3] 0.0
    %78 = vst [vmem:[%s74 + $0x1b0] sm:$0xff] 0.0
    %79 = vst [vmem:[%s74 + $0x1b8] sm:$0xff] 0.0
    %80 = vst [vmem:[%s74 + $0x1c0] sm:$0x3] 0.0
    %s81 = scalar_lea.vmem [#allocation2], 24
    %82 = vst [vmem:[%s81] sm:$0x1] 0.0
    %83 = vst [vmem:[%s81 + $0x18] sm:$0x1] 0.0
    %84 = vst [vmem:[%s81 + $0x30] sm:$0x1] 0.0
    %85 = vst [vmem:[%s81 + $0x48] sm:$0x1] 0.0
    %86 = vst [vmem:[%s81 + $0x60] sm:$0x1] 0.0
    %87 = vst [vmem:[%s81 + $0x78] sm:$0x1] 0.0
    %88 = vst [vmem:[%s81 + $0x90] sm:$0x1] 0.0
    %89 = vst [vmem:[%s81 + $0xa8] sm:$0x1] 0.0
    %90 = vst [vmem:[%s81 + $0xc0] sm:$0x1] 0.0
    %91 = vst [vmem:[%s81 + $0xd8] sm:$0x1] 0.0
    %92 = vst [vmem:[%s81 + $0xf0] sm:$0x1] 0.0
    %93 = vst [vmem:[%s81 + $0x108] sm:$0x1] 0.0
    %94 = vst [vmem:[%s81 + $0x120] sm:$0x1] 0.0
    %95 = vst [vmem:[%s81 + $0x138] sm:$0x1] 0.0
    %96 = vst [vmem:[%s81 + $0x150] sm:$0x1] 0.0
    %97 = vst [vmem:[%s81 + $0x168] sm:$0x1] 0.0
    %98 = vst [vmem:[%s81 + $0x1b0] sm:$0x1] 0.0
    %99 = vst [vmem:[%s81 + $0x1c8] sm:$0x1] 0.0
    %100 = vst [vmem:[%s81 + $0x1e0] sm:$0x1] 0.0
    %101 = vst [vmem:[%s81 + $0x1f8] sm:$0x1] 0.0
    %102 = vst [vmem:[%s81 + $0x210] sm:$0x1] 0.0
    %103 = vst [vmem:[%s81 + $0x228] sm:$0x1] 0.0
    %104 = vst [vmem:[%s81 + $0x240] sm:$0x1] 0.0
    %105 = vst [vmem:[%s81 + $0x258] sm:$0x1] 0.0
    %106 = vst [vmem:[%s81 + $0x270] sm:$0x1] 0.0
    %107 = vst [vmem:[%s81 + $0x288] sm:$0x1] 0.0
    %108 = vst [vmem:[%s81 + $0x2a0] sm:$0x1] 0.0
    %109 = vst [vmem:[%s81 + $0x2b8] sm:$0x1] 0.0
    %110 = vst [vmem:[%s81 + $0x2d0] sm:$0x1] 0.0
    %111 = vst [vmem:[%s81 + $0x2e8] sm:$0x1] 0.0
    %112 = vst [vmem:[%s81 + $0x300] sm:$0x1] 0.0
    %113 = vst [vmem:[%s81 + $0x318] sm:$0x1] 0.0
    %114 = vst [vmem:[%s81 + $0x11] sm:$0x1] 0.0
    %115 = vst [vmem:[%s81 + $0x29] sm:$0x1] 0.0
    %116 = vst [vmem:[%s81 + $0x41] sm:$0x1] 0.0
    %117 = vst [vmem:[%s81 + $0x59] sm:$0x1] 0.0
    %118 = vst [vmem:[%s81 + $0x71] sm:$0x1] 0.0
    %119 = vst [vmem:[%s81 + $0x89] sm:$0x1] 0.0
    %120 = vst [vmem:[%s81 + $0xa1] sm:$0x1] 0.0
    %121 = vst [vmem:[%s81 + $0xb9] sm:$0x1] 0.0
    %122 = vst [vmem:[%s81 + $0xd1] sm:$0x1] 0.0
    %123 = vst [vmem:[%s81 + $0xe9] sm:$0x1] 0.0
    %124 = vst [vmem:[%s81 + $0x101] sm:$0x1] 0.0
    %125 = vst [vmem:[%s81 + $0x119] sm:$0x1] 0.0
    %126 = vst [vmem:[%s81 + $0x131] sm:$0x1] 0.0
    %127 = vst [vmem:[%s81 + $0x149] sm:$0x1] 0.0
    %128 = vst [vmem:[%s81 + $0x161] sm:$0x1] 0.0
    %129 = vst [vmem:[%s81 + $0x179] sm:$0x1] 0.0
    %130 = vst [vmem:[%s81 + $0x1c1] sm:$0x1] 0.0
    %131 = vst [vmem:[%s81 + $0x1d9] sm:$0x1] 0.0
    %132 = vst [vmem:[%s81 + $0x1f1] sm:$0x1] 0.0
    %133 = vst [vmem:[%s81 + $0x209] sm:$0x1] 0.0
    %134 = vst [vmem:[%s81 + $0x221] sm:$0x1] 0.0
    %135 = vst [vmem:[%s81 + $0x239] sm:$0x1] 0.0
    %136 = vst [vmem:[%s81 + $0x251] sm:$0x1] 0.0
    %137 = vst [vmem:[%s81 + $0x269] sm:$0x1] 0.0
    %138 = vst [vmem:[%s81 + $0x281] sm:$0x1] 0.0
    %139 = vst [vmem:[%s81 + $0x299] sm:$0x1] 0.0
    %140 = vst [vmem:[%s81 + $0x2b1] sm:$0x1] 0.0
    %141 = vst [vmem:[%s81 + $0x2c9] sm:$0x1] 0.0
    %142 = vst [vmem:[%s81 + $0x2e1] sm:$0x1] 0.0
    %143 = vst [vmem:[%s81 + $0x2f9] sm:$0x1] 0.0
    %144 = vst [vmem:[%s81 + $0x311] sm:$0x1] 0.0
    %145 = vst [vmem:[%s81 + $0x329] sm:$0x1] 0.0
    %v146 = vld [vmem:[#allocation4] sm:$0xff]
    %v147 = vld [vmem:[#allocation4 + $0x8] sm:$0xff]
    %v148 = vld [vmem:[#allocation4 + $0x10] sm:$0xff]
    %v149 = vld [vmem:[#allocation4 + $0x18] sm:$0xff]
    %v150 = vld [vmem:[#allocation4 + $0x20] sm:$0xff]
    %v151 = vld [vmem:[#allocation4 + $0x28] sm:$0xff]
    %v152 = vld [vmem:[#allocation4 + $0x30] sm:$0xff]
    %v153 = vld [vmem:[#allocation4 + $0x38] sm:$0xff]
    %v154 = vld [vmem:[#allocation4 + $0x40] sm:$0xff]
    %v155 = vld [vmem:[#allocation4 + $0x48] sm:$0xff]
    %v156 = vld [vmem:[#allocation4 + $0x50] sm:$0xff]
    %v157 = vld [vmem:[#allocation4 + $0x58] sm:$0xff]
    %v158 = vld [vmem:[#allocation4 + $0x60] sm:$0xff]
    %v159 = vld [vmem:[#allocation4 + $0x68] sm:$0xff]
    %v160 = vld [vmem:[#allocation4 + $0x70] sm:$0xff]
    %v161 = vld [vmem:[#allocation4 + $0x78] sm:$0xff]
    %v162 = vld [vmem:[#allocation4 + $0x80] sm:$0xff]
    %v163 = vld [vmem:[#allocation4 + $0x88] sm:$0xff]
    %v164 = vld [vmem:[#allocation4 + $0x90] sm:$0xff]
    %v165 = vld [vmem:[#allocation4 + $0x98] sm:$0xff]
    %v166 = vld [vmem:[#allocation4 + $0xa0] sm:$0xff]
    %v167 = vld [vmem:[#allocation4 + $0xa8] sm:$0xff]
    %v168 = vld [vmem:[#allocation4 + $0xb0] sm:$0xff]
    %v169 = vld [vmem:[#allocation4 + $0xb8] sm:$0xff]
    %v170 = vld [vmem:[#allocation4 + $0xc0] sm:$0xff]
    %v171 = vld [vmem:[#allocation4 + $0xc8] sm:$0xff]
    %v172 = vld [vmem:[#allocation4 + $0xd0] sm:$0xff]
    %v173 = vld [vmem:[#allocation4 + $0xd8] sm:$0xff]
    %v174 = vld [vmem:[#allocation4 + $0xe0] sm:$0xff]
    %v175 = vld [vmem:[#allocation4 + $0xe8] sm:$0xff]
    %v176 = vld [vmem:[#allocation4 + $0xf0] sm:$0xff]
    %v177 = vld [vmem:[#allocation4 + $0xf8] sm:$0xff]
    %v178 = vld [vmem:[#allocation4 + $0x100] sm:$0xff]
    %v179 = vld [vmem:[#allocation4 + $0x108] sm:$0xff]
    %v180 = vld [vmem:[#allocation4 + $0x110] sm:$0xff]
    %v181 = vld [vmem:[#allocation4 + $0x118] sm:$0xff]
    %v182 = vld [vmem:[#allocation4 + $0x120] sm:$0xff]
    %v183 = vld [vmem:[#allocation4 + $0x128] sm:$0xff]
    %v184 = vld [vmem:[#allocation4 + $0x130] sm:$0xff]
    %v185 = vld [vmem:[#allocation4 + $0x138] sm:$0xff]
    %v186 = vld [vmem:[#allocation4 + $0x140] sm:$0xff]
    %v187 = vld [vmem:[#allocation4 + $0x148] sm:$0xff]
    %v188 = vld [vmem:[#allocation4 + $0x150] sm:$0xff]
    %v189 = vld [vmem:[#allocation4 + $0x158] sm:$0xff]
    %v190 = vld [vmem:[#allocation4 + $0x160] sm:$0xff]
    %v191 = vld [vmem:[#allocation4 + $0x168] sm:$0xff]
    %v192 = vld [vmem:[#allocation4 + $0x170] sm:$0xff]
    %v193 = vld [vmem:[#allocation4 + $0x178] sm:$0xff]
    %v194 = vld [vmem:[#allocation4 + $0x180] sm:$0xff]
    %v195 = vld [vmem:[#allocation4 + $0x188] sm:$0xff]
    %v196 = vld [vmem:[#allocation4 + $0x190] sm:$0xff]
    %v197 = vld [vmem:[#allocation4 + $0x198] sm:$0xff]
    %v198 = vld [vmem:[#allocation4 + $0x1a0] sm:$0xff]
    %v199 = vld [vmem:[#allocation4 + $0x1a8] sm:$0xff]
    %v200 = vld [vmem:[#allocation4 + $0x1b0] sm:$0xff]
    %v201 = vld [vmem:[#allocation4 + $0x1b8] sm:$0xff]
    %v202 = vld [vmem:[#allocation4 + $0x1c0] sm:$0xff]
    %v203 = vld [vmem:[#allocation4 + $0x1c8] sm:$0xff]
    %v204 = vld [vmem:[#allocation4 + $0x1d0] sm:$0xff]
    %v205 = vld [vmem:[#allocation4 + $0x1d8] sm:$0xff]
    %v206 = vld [vmem:[#allocation4 + $0x1e0] sm:$0xff]
    %v207 = vld [vmem:[#allocation4 + $0x1e8] sm:$0xff]
    %v208 = vld [vmem:[#allocation4 + $0x1f0] sm:$0xff]
    %v209 = vld [vmem:[#allocation4 + $0x1f8] sm:$0xff]
    %210 = vst [vmem:[%s81 + $0x1] sm:$0xff] %v146
    %211 = vst [vmem:[%s81 + $0x9] sm:$0xff] %v147
    %212 = vst [vmem:[%s81 + $0x19] sm:$0xff] %v148
    %213 = vst [vmem:[%s81 + $0x21] sm:$0xff] %v149
    %214 = vst [vmem:[%s81 + $0x31] sm:$0xff] %v150
    %215 = vst [vmem:[%s81 + $0x39] sm:$0xff] %v151
    %216 = vst [vmem:[%s81 + $0x49] sm:$0xff] %v152
    %217 = vst [vmem:[%s81 + $0x51] sm:$0xff] %v153
    %218 = vst [vmem:[%s81 + $0x61] sm:$0xff] %v154
    %219 = vst [vmem:[%s81 + $0x69] sm:$0xff] %v155
    %220 = vst [vmem:[%s81 + $0x79] sm:$0xff] %v156
    %221 = vst [vmem:[%s81 + $0x81] sm:$0xff] %v157
    %222 = vst [vmem:[%s81 + $0x91] sm:$0xff] %v158
    %223 = vst [vmem:[%s81 + $0x99] sm:$0xff] %v159
    %224 = vst [vmem:[%s81 + $0xa9] sm:$0xff] %v160
    %225 = vst [vmem:[%s81 + $0xb1] sm:$0xff] %v161
    %226 = vst [vmem:[%s81 + $0xc1] sm:$0xff] %v162
    %227 = vst [vmem:[%s81 + $0xc9] sm:$0xff] %v163
    %228 = vst [vmem:[%s81 + $0xd9] sm:$0xff] %v164
    %229 = vst [vmem:[%s81 + $0xe1] sm:$0xff] %v165
    %230 = vst [vmem:[%s81 + $0xf1] sm:$0xff] %v166
    %231 = vst [vmem:[%s81 + $0xf9] sm:$0xff] %v167
    %232 = vst [vmem:[%s81 + $0x109] sm:$0xff] %v168
    %233 = vst [vmem:[%s81 + $0x111] sm:$0xff] %v169
    %234 = vst [vmem:[%s81 + $0x121] sm:$0xff] %v170
    %235 = vst [vmem:[%s81 + $0x129] sm:$0xff] %v171
    %236 = vst [vmem:[%s81 + $0x139] sm:$0xff] %v172
    %237 = vst [vmem:[%s81 + $0x141] sm:$0xff] %v173
    %238 = vst [vmem:[%s81 + $0x151] sm:$0xff] %v174
    %239 = vst [vmem:[%s81 + $0x159] sm:$0xff] %v175
    %240 = vst [vmem:[%s81 + $0x169] sm:$0xff] %v176
    %241 = vst [vmem:[%s81 + $0x171] sm:$0xff] %v177
    %242 = vst [vmem:[%s81 + $0x1b1] sm:$0xff] %v178
    %243 = vst [vmem:[%s81 + $0x1b9] sm:$0xff] %v179
    %244 = vst [vmem:[%s81 + $0x1c9] sm:$0xff] %v180
    %245 = vst [vmem:[%s81 + $0x1d1] sm:$0xff] %v181
    %246 = vst [vmem:[%s81 + $0x1e1] sm:$0xff] %v182
    %247 = vst [vmem:[%s81 + $0x1e9] sm:$0xff] %v183
    %248 = vst [vmem:[%s81 + $0x1f9] sm:$0xff] %v184
    %249 = vst [vmem:[%s81 + $0x201] sm:$0xff] %v185
    %250 = vst [vmem:[%s81 + $0x211] sm:$0xff] %v186
    %251 = vst [vmem:[%s81 + $0x219] sm:$0xff] %v187
    %252 = vst [vmem:[%s81 + $0x229] sm:$0xff] %v188
    %253 = vst [vmem:[%s81 + $0x231] sm:$0xff] %v189
    %254 = vst [vmem:[%s81 + $0x241] sm:$0xff] %v190
    %255 = vst [vmem:[%s81 + $0x249] sm:$0xff] %v191
    %256 = vst [vmem:[%s81 + $0x259] sm:$0xff] %v192
    %257 = vst [vmem:[%s81 + $0x261] sm:$0xff] %v193
    %258 = vst [vmem:[%s81 + $0x271] sm:$0xff] %v194
    %259 = vst [vmem:[%s81 + $0x279] sm:$0xff] %v195
    %260 = vst [vmem:[%s81 + $0x289] sm:$0xff] %v196
    %261 = vst [vmem:[%s81 + $0x291] sm:$0xff] %v197
    %262 = vst [vmem:[%s81 + $0x2a1] sm:$0xff] %v198
    %263 = vst [vmem:[%s81 + $0x2a9] sm:$0xff] %v199
    %264 = vst [vmem:[%s81 + $0x2b9] sm:$0xff] %v200
    %265 = vst [vmem:[%s81 + $0x2c1] sm:$0xff] %v201
    %266 = vst [vmem:[%s81 + $0x2d1] sm:$0xff] %v202
    %267 = vst [vmem:[%s81 + $0x2d9] sm:$0xff] %v203
    %268 = vst [vmem:[%s81 + $0x2e9] sm:$0xff] %v204
    %269 = vst [vmem:[%s81 + $0x2f1] sm:$0xff] %v205
    %270 = vst [vmem:[%s81 + $0x301] sm:$0xff] %v206
    %271 = vst [vmem:[%s81 + $0x309] sm:$0xff] %v207
    %272 = vst [vmem:[%s81 + $0x319] sm:$0xff] %v208
    %273 = vst [vmem:[%s81 + $0x321] sm:$0xff] %v209
    %v274 = vld [vmem:[#allocation2] sm:$0xff]
    %v275 = vld [vmem:[#allocation2 + $0x8] sm:$0xff]
    %v276 = vld [vmem:[#allocation2 + $0x18] sm:$0xff]
    %v277 = vld [vmem:[#allocation2 + $0x20] sm:$0xff]
    %v278 = vld [vmem:[#allocation2 + $0x30] sm:$0xff]
    %v279 = vld [vmem:[#allocation2 + $0x38] sm:$0xff]
    %v280 = vld [vmem:[#allocation2 + $0x48] sm:$0xff]
    %v281 = vld [vmem:[#allocation2 + $0x50] sm:$0xff]
    %v282 = vld [vmem:[#allocation2 + $0x60] sm:$0xff]
    %v283 = vld [vmem:[#allocation2 + $0x68] sm:$0xff]
    %v284 = vld [vmem:[#allocation2 + $0x78] sm:$0xff]
    %v285 = vld [vmem:[#allocation2 + $0x80] sm:$0xff]
    %v286 = vld [vmem:[#allocation2 + $0x90] sm:$0xff]
    %v287 = vld [vmem:[#allocation2 + $0x98] sm:$0xff]
    %v288 = vld [vmem:[#allocation2 + $0xa8] sm:$0xff]
    %v289 = vld [vmem:[#allocation2 + $0xb0] sm:$0xff]
    %v290 = vld [vmem:[#allocation2 + $0xc0] sm:$0xff]
    %v291 = vld [vmem:[#allocation2 + $0xc8] sm:$0xff]
    %v292 = vld [vmem:[#allocation2 + $0xd8] sm:$0xff]
    %v293 = vld [vmem:[#allocation2 + $0xe0] sm:$0xff]
    %v294 = vld [vmem:[#allocation2 + $0xf0] sm:$0xff]
    %v295 = vld [vmem:[#allocation2 + $0xf8] sm:$0xff]
    %v296 = vld [vmem:[#allocation2 + $0x108] sm:$0xff]
    %v297 = vld [vmem:[#allocation2 + $0x110] sm:$0xff]
    %v298 = vld [vmem:[#allocation2 + $0x120] sm:$0xff]
    %v299 = vld [vmem:[#allocation2 + $0x128] sm:$0xff]
    %v300 = vld [vmem:[#allocation2 + $0x138] sm:$0xff]
    %v301 = vld [vmem:[#allocation2 + $0x140] sm:$0xff]
    %v302 = vld [vmem:[#allocation2 + $0x150] sm:$0xff]
    %v303 = vld [vmem:[#allocation2 + $0x158] sm:$0xff]
    %v304 = vld [vmem:[#allocation2 + $0x168] sm:$0xff]
    %v305 = vld [vmem:[#allocation2 + $0x170] sm:$0xff]
    %v306 = vld [vmem:[#allocation2 + $0x1b0] sm:$0xff]
    %v307 = vld [vmem:[#allocation2 + $0x1b8] sm:$0xff]
    %v308 = vld [vmem:[#allocation2 + $0x1c8] sm:$0xff]
    %v309 = vld [vmem:[#allocation2 + $0x1d0] sm:$0xff]
    %v310 = vld [vmem:[#allocation2 + $0x1e0] sm:$0xff]
    %v311 = vld [vmem:[#allocation2 + $0x1e8] sm:$0xff]
    %v312 = vld [vmem:[#allocation2 + $0x1f8] sm:$0xff]
    %v313 = vld [vmem:[#allocation2 + $0x200] sm:$0xff]
    %v314 = vld [vmem:[#allocation2 + $0x210] sm:$0xff]
    %v315 = vld [vmem:[#allocation2 + $0x218] sm:$0xff]
    %v316 = vld [vmem:[#allocation2 + $0x228] sm:$0xff]
    %v317 = vld [vmem:[#allocation2 + $0x230] sm:$0xff]
    %v318 = vld [vmem:[#allocation2 + $0x240] sm:$0xff]
    %v319 = vld [vmem:[#allocation2 + $0x248] sm:$0xff]
    %v320 = vld [vmem:[#allocation2 + $0x258] sm:$0xff]
    %v321 = vld [vmem:[#allocation2 + $0x260] sm:$0xff]
    %v322 = vld [vmem:[#allocation2 + $0x270] sm:$0xff]
    %v323 = vld [vmem:[#allocation2 + $0x278] sm:$0xff]
    %v324 = vld [vmem:[#allocation2 + $0x288] sm:$0xff]
    %v325 = vld [vmem:[#allocation2 + $0x290] sm:$0xff]
    %v326 = vld [vmem:[#allocation2 + $0x2a0] sm:$0xff]
    %v327 = vld [vmem:[#allocation2 + $0x2a8] sm:$0xff]
    %v328 = vld [vmem:[#allocation2 + $0x2b8] sm:$0xff]
    %v329 = vld [vmem:[#allocation2 + $0x2c0] sm:$0xff]
    %v330 = vld [vmem:[#allocation2 + $0x2d0] sm:$0xff]
    %v331 = vld [vmem:[#allocation2 + $0x2d8] sm:$0xff]
    %v332 = vld [vmem:[#allocation2 + $0x2e8] sm:$0xff]
    %v333 = vld [vmem:[#allocation2 + $0x2f0] sm:$0xff]
    %v334 = vld [vmem:[#allocation2 + $0x300] sm:$0xff]
    %v335 = vld [vmem:[#allocation2 + $0x308] sm:$0xff]
    %v336 = vld [vmem:[#allocation2 + $0x318] sm:$0xff]
    %v337 = vld [vmem:[#allocation2 + $0x320] sm:$0xff]
    %338 = vst [vmem:[#allocation3] sm:$0xff] %v274
    %339 = vst [vmem:[#allocation3 + $0x48] sm:$0xff] %v275
    %340 = vst [vmem:[#allocation3 + $0x90] sm:$0xff] %v276
    %341 = vst [vmem:[#allocation3 + $0xd8] sm:$0xff] %v277
    %342 = vst [vmem:[#allocation3 + $0x120] sm:$0xff] %v278
    %343 = vst [vmem:[#allocation3 + $0x168] sm:$0xff] %v279
    %344 = vst [vmem:[#allocation3 + $0x1b0] sm:$0xff] %v280
    %345 = vst [vmem:[#allocation3 + $0x1f8] sm:$0xff] %v281
    %346 = vst [vmem:[#allocation3 + $0x240] sm:$0xff] %v282
    %347 = vst [vmem:[#allocation3 + $0x288] sm:$0xff] %v283
    %348 = vst [vmem:[#allocation3 + $0x2d0] sm:$0xff] %v284
    %349 = vst [vmem:[#allocation3 + $0x318] sm:$0xff] %v285
    %350 = vst [vmem:[#allocation3 + $0x360] sm:$0xff] %v286
    %351 = vst [vmem:[#allocation3 + $0x3a8] sm:$0xff] %v287
    %352 = vst [vmem:[#allocation3 + $0x3f0] sm:$0xff] %v288
    %353 = vst [vmem:[#allocation3 + $0x438] sm:$0xff] %v289
    %354 = vst [vmem:[#allocation3 + $0x480] sm:$0xff] %v290
    %355 = vst [vmem:[#allocation3 + $0x4c8] sm:$0xff] %v291
    %356 = vst [vmem:[#allocation3 + $0x510] sm:$0xff] %v292
    %357 = vst [vmem:[#allocation3 + $0x558] sm:$0xff] %v293
    %358 = vst [vmem:[#allocation3 + $0x5a0] sm:$0xff] %v294
    %359 = vst [vmem:[#allocation3 + $0x5e8] sm:$0xff] %v295
    %360 = vst [vmem:[#allocation3 + $0x630] sm:$0xff] %v296
    %361 = vst [vmem:[#allocation3 + $0x678] sm:$0xff] %v297
    %362 = vst [vmem:[#allocation3 + $0x6c0] sm:$0xff] %v298
    %363 = vst [vmem:[#allocation3 + $0x708] sm:$0xff] %v299
    %364 = vst [vmem:[#allocation3 + $0x750] sm:$0xff] %v300
    %365 = vst [vmem:[#allocation3 + $0x798] sm:$0xff] %v301
    %366 = vst [vmem:[#allocation3 + $0x7e0] sm:$0xff] %v302
    %367 = vst [vmem:[#allocation3 + $0x828] sm:$0xff] %v303
    %368 = vst [vmem:[#allocation3 + $0x870] sm:$0xff] %v304
    %369 = vst [vmem:[#allocation3 + $0x8b8] sm:$0xff] %v305
    %370 = vst [vmem:[#allocation3 + $0x900] sm:$0xff] %v306
    %371 = vst [vmem:[#allocation3 + $0x948] sm:$0xff] %v307
    %372 = vst [vmem:[#allocation3 + $0x990] sm:$0xff] %v308
    %373 = vst [vmem:[#allocation3 + $0x9d8] sm:$0xff] %v309
    %374 = vst [vmem:[#allocation3 + $0xa20] sm:$0xff] %v310
    %375 = vst [vmem:[#allocation3 + $0xa68] sm:$0xff] %v311
    %376 = vst [vmem:[#allocation3 + $0xab0] sm:$0xff] %v312
    %377 = vst [vmem:[#allocation3 + $0xaf8] sm:$0xff] %v313
    %378 = vst [vmem:[#allocation3 + $0xb40] sm:$0xff] %v314
    %379 = vst [vmem:[#allocation3 + $0xb88] sm:$0xff] %v315
    %380 = vst [vmem:[#allocation3 + $0xbd0] sm:$0xff] %v316
    %381 = vst [vmem:[#allocation3 + $0xc18] sm:$0xff] %v317
    %382 = vst [vmem:[#allocation3 + $0xc60] sm:$0xff] %v318
    %383 = vst [vmem:[#allocation3 + $0xca8] sm:$0xff] %v319
    %384 = vst [vmem:[#allocation3 + $0xcf0] sm:$0xff] %v320
    %385 = vst [vmem:[#allocation3 + $0xd38] sm:$0xff] %v321
    %386 = vst [vmem:[#allocation3 + $0xd80] sm:$0xff] %v322
    %387 = vst [vmem:[#allocation3 + $0xdc8] sm:$0xff] %v323
    %388 = vst [vmem:[#allocation3 + $0xe10] sm:$0xff] %v324
    %389 = vst [vmem:[#allocation3 + $0xe58] sm:$0xff] %v325
    %390 = vst [vmem:[#allocation3 + $0xea0] sm:$0xff] %v326
    %391 = vst [vmem:[#allocation3 + $0xee8] sm:$0xff] %v327
    %392 = vst [vmem:[#allocation3 + $0xf30] sm:$0xff] %v328
    %393 = vst [vmem:[#allocation3 + $0xf78] sm:$0xff] %v329
    %394 = vst [vmem:[#allocation3 + $0xfc0] sm:$0xff] %v330
    %395 = vst [vmem:[#allocation3 + $0x1008] sm:$0xff] %v331
    %396 = vst [vmem:[#allocation3 + $0x1050] sm:$0xff] %v332
    %397 = vst [vmem:[#allocation3 + $0x1098] sm:$0xff] %v333
    %398 = vst [vmem:[#allocation3 + $0x10e0] sm:$0xff] %v334
    %399 = vst [vmem:[#allocation3 + $0x1128] sm:$0xff] %v335
    %400 = vst [vmem:[#allocation3 + $0x1170] sm:$0xff] %v336
    %401 = vst [vmem:[#allocation3 + $0x11b8] sm:$0xff] %v337
    %v402 = vld [vmem:[#allocation2 + $0x1] sm:$0xff]
    %v403 = vld [vmem:[#allocation2 + $0x9] sm:$0xff]
    %v404 = vld [vmem:[#allocation2 + $0x19] sm:$0xff]
    %v405 = vld [vmem:[#allocation2 + $0x21] sm:$0xff]
    %v406 = vld [vmem:[#allocation2 + $0x31] sm:$0xff]
    %v407 = vld [vmem:[#allocation2 + $0x39] sm:$0xff]
    %v408 = vld [vmem:[#allocation2 + $0x49] sm:$0xff]
    %v409 = vld [vmem:[#allocation2 + $0x51] sm:$0xff]
    %v410 = vld [vmem:[#allocation2 + $0x61] sm:$0xff]
    %v411 = vld [vmem:[#allocation2 + $0x69] sm:$0xff]
    %v412 = vld [vmem:[#allocation2 + $0x79] sm:$0xff]
    %v413 = vld [vmem:[#allocation2 + $0x81] sm:$0xff]
    %v414 = vld [vmem:[#allocation2 + $0x91] sm:$0xff]
    %v415 = vld [vmem:[#allocation2 + $0x99] sm:$0xff]
    %v416 = vld [vmem:[#allocation2 + $0xa9] sm:$0xff]
    %v417 = vld [vmem:[#allocation2 + $0xb1] sm:$0xff]
    %v418 = vld [vmem:[#allocation2 + $0xc1] sm:$0xff]
    %v419 = vld [vmem:[#allocation2 + $0xc9] sm:$0xff]
    %v420 = vld [vmem:[#allocation2 + $0xd9] sm:$0xff]
    %v421 = vld [vmem:[#allocation2 + $0xe1] sm:$0xff]
    %v422 = vld [vmem:[#allocation2 + $0xf1] sm:$0xff]
    %v423 = vld [vmem:[#allocation2 + $0xf9] sm:$0xff]
    %v424 = vld [vmem:[#allocation2 + $0x109] sm:$0xff]
    %v425 = vld [vmem:[#allocation2 + $0x111] sm:$0xff]
    %v426 = vld [vmem:[#allocation2 + $0x121] sm:$0xff]
    %v427 = vld [vmem:[#allocation2 + $0x129] sm:$0xff]
    %v428 = vld [vmem:[#allocation2 + $0x139] sm:$0xff]
    %v429 = vld [vmem:[#allocation2 + $0x141] sm:$0xff]
    %v430 = vld [vmem:[#allocation2 + $0x151] sm:$0xff]
    %v431 = vld [vmem:[#allocation2 + $0x159] sm:$0xff]
    %v432 = vld [vmem:[#allocation2 + $0x169] sm:$0xff]
    %v433 = vld [vmem:[#allocation2 + $0x171] sm:$0xff]
    %v434 = vld [vmem:[#allocation2 + $0x1b1] sm:$0xff]
    %v435 = vld [vmem:[#allocation2 + $0x1b9] sm:$0xff]
    %v436 = vld [vmem:[#allocation2 + $0x1c9] sm:$0xff]
    %v437 = vld [vmem:[#allocation2 + $0x1d1] sm:$0xff]
    %v438 = vld [vmem:[#allocation2 + $0x1e1] sm:$0xff]
    %v439 = vld [vmem:[#allocation2 + $0x1e9] sm:$0xff]
    %v440 = vld [vmem:[#allocation2 + $0x1f9] sm:$0xff]
    %v441 = vld [vmem:[#allocation2 + $0x201] sm:$0xff]
    %v442 = vld [vmem:[#allocation2 + $0x211] sm:$0xff]
    %v443 = vld [vmem:[#allocation2 + $0x219] sm:$0xff]
    %v444 = vld [vmem:[#allocation2 + $0x229] sm:$0xff]
    %v445 = vld [vmem:[#allocation2 + $0x231] sm:$0xff]
    %v446 = vld [vmem:[#allocation2 + $0x241] sm:$0xff]
    %v447 = vld [vmem:[#allocation2 + $0x249] sm:$0xff]
    %v448 = vld [vmem:[#allocation2 + $0x259] sm:$0xff]
    %v449 = vld [vmem:[#allocation2 + $0x261] sm:$0xff]
    %v450 = vld [vmem:[#allocation2 + $0x271] sm:$0xff]
    %v451 = vld [vmem:[#allocation2 + $0x279] sm:$0xff]
    %v452 = vld [vmem:[#allocation2 + $0x289] sm:$0xff]
    %v453 = vld [vmem:[#allocation2 + $0x291] sm:$0xff]
    %v454 = vld [vmem:[#allocation2 + $0x2a1] sm:$0xff]
    %v455 = vld [vmem:[#allocation2 + $0x2a9] sm:$0xff]
    %v456 = vld [vmem:[#allocation2 + $0x2b9] sm:$0xff]
    %v457 = vld [vmem:[#allocation2 + $0x2c1] sm:$0xff]
    %v458 = vld [vmem:[#allocation2 + $0x2d1] sm:$0xff]
    %v459 = vld [vmem:[#allocation2 + $0x2d9] sm:$0xff]
    %v460 = vld [vmem:[#allocation2 + $0x2e9] sm:$0xff]
    %v461 = vld [vmem:[#allocation2 + $0x2f1] sm:$0xff]
    %v462 = vld [vmem:[#allocation2 + $0x301] sm:$0xff]
    %v463 = vld [vmem:[#allocation2 + $0x309] sm:$0xff]
    %v464 = vld [vmem:[#allocation2 + $0x319] sm:$0xff]
    %v465 = vld [vmem:[#allocation2 + $0x321] sm:$0xff]
    %466 = vst [vmem:[#allocation3 + $0x8] sm:$0xff] %v402
    %467 = vst [vmem:[#allocation3 + $0x50] sm:$0xff] %v403
    %468 = vst [vmem:[#allocation3 + $0x98] sm:$0xff] %v404
    %469 = vst [vmem:[#allocation3 + $0xe0] sm:$0xff] %v405
    %470 = vst [vmem:[#allocation3 + $0x128] sm:$0xff] %v406
    %471 = vst [vmem:[#allocation3 + $0x170] sm:$0xff] %v407
    %472 = vst [vmem:[#allocation3 + $0x1b8] sm:$0xff] %v408
    %473 = vst [vmem:[#allocation3 + $0x200] sm:$0xff] %v409
    %474 = vst [vmem:[#allocation3 + $0x248] sm:$0xff] %v410
    %475 = vst [vmem:[#allocation3 + $0x290] sm:$0xff] %v411
    %476 = vst [vmem:[#allocation3 + $0x2d8] sm:$0xff] %v412
    %477 = vst [vmem:[#allocation3 + $0x320] sm:$0xff] %v413
    %478 = vst [vmem:[#allocation3 + $0x368] sm:$0xff] %v414
    %479 = vst [vmem:[#allocation3 + $0x3b0] sm:$0xff] %v415
    %480 = vst [vmem:[#allocation3 + $0x3f8] sm:$0xff] %v416
    %481 = vst [vmem:[#allocation3 + $0x440] sm:$0xff] %v417
    %482 = vst [vmem:[#allocation3 + $0x488] sm:$0xff] %v418
    %483 = vst [vmem:[#allocation3 + $0x4d0] sm:$0xff] %v419
    %484 = vst [vmem:[#allocation3 + $0x518] sm:$0xff] %v420
    %485 = vst [vmem:[#allocation3 + $0x560] sm:$0xff] %v421
    %486 = vst [vmem:[#allocation3 + $0x5a8] sm:$0xff] %v422
    %487 = vst [vmem:[#allocation3 + $0x5f0] sm:$0xff] %v423
    %488 = vst [vmem:[#allocation3 + $0x638] sm:$0xff] %v424
    %489 = vst [vmem:[#allocation3 + $0x680] sm:$0xff] %v425
    %490 = vst [vmem:[#allocation3 + $0x6c8] sm:$0xff] %v426
    %491 = vst [vmem:[#allocation3 + $0x710] sm:$0xff] %v427
    %492 = vst [vmem:[#allocation3 + $0x758] sm:$0xff] %v428
    %493 = vst [vmem:[#allocation3 + $0x7a0] sm:$0xff] %v429
    %494 = vst [vmem:[#allocation3 + $0x7e8] sm:$0xff] %v430
    %495 = vst [vmem:[#allocation3 + $0x830] sm:$0xff] %v431
    %496 = vst [vmem:[#allocation3 + $0x878] sm:$0xff] %v432
    %497 = vst [vmem:[#allocation3 + $0x8c0] sm:$0xff] %v433
    %498 = vst [vmem:[#allocation3 + $0x908] sm:$0xff] %v434
    %499 = vst [vmem:[#allocation3 + $0x950] sm:$0xff] %v435
    %500 = vst [vmem:[#allocation3 + $0x998] sm:$0xff] %v436
    %501 = vst [vmem:[#allocation3 + $0x9e0] sm:$0xff] %v437
    %502 = vst [vmem:[#allocation3 + $0xa28] sm:$0xff] %v438
    %503 = vst [vmem:[#allocation3 + $0xa70] sm:$0xff] %v439
    %504 = vst [vmem:[#allocation3 + $0xab8] sm:$0xff] %v440
    %505 = vst [vmem:[#allocation3 + $0xb00] sm:$0xff] %v441
    %506 = vst [vmem:[#allocation3 + $0xb48] sm:$0xff] %v442
    %507 = vst [vmem:[#allocation3 + $0xb90] sm:$0xff] %v443
    %508 = vst [vmem:[#allocation3 + $0xbd8] sm:$0xff] %v444
    %509 = vst [vmem:[#allocation3 + $0xc20] sm:$0xff] %v445
    %510 = vst [vmem:[#allocation3 + $0xc68] sm:$0xff] %v446
    %511 = vst [vmem:[#allocation3 + $0xcb0] sm:$0xff] %v447
    %512 = vst [vmem:[#allocation3 + $0xcf8] sm:$0xff] %v448
    %513 = vst [vmem:[#allocation3 + $0xd40] sm:$0xff] %v449
    %514 = vst [vmem:[#allocation3 + $0xd88] sm:$0xff] %v450
    %515 = vst [vmem:[#allocation3 + $0xdd0] sm:$0xff] %v451
    %516 = vst [vmem:[#allocation3 + $0xe18] sm:$0xff] %v452
    %517 = vst [vmem:[#allocation3 + $0xe60] sm:$0xff] %v453
    %518 = vst [vmem:[#allocation3 + $0xea8] sm:$0xff] %v454
    %519 = vst [vmem:[#allocation3 + $0xef0] sm:$0xff] %v455
    %520 = vst [vmem:[#allocation3 + $0xf38] sm:$0xff] %v456
    %521 = vst [vmem:[#allocation3 + $0xf80] sm:$0xff] %v457
    %522 = vst [vmem:[#allocation3 + $0xfc8] sm:$0xff] %v458
    %523 = vst [vmem:[#allocation3 + $0x1010] sm:$0xff] %v459
    %524 = vst [vmem:[#allocation3 + $0x1058] sm:$0xff] %v460
    %525 = vst [vmem:[#allocation3 + $0x10a0] sm:$0xff] %v461
    %526 = vst [vmem:[#allocation3 + $0x10e8] sm:$0xff] %v462
    %527 = vst [vmem:[#allocation3 + $0x1130] sm:$0xff] %v463
    %528 = vst [vmem:[#allocation3 + $0x1178] sm:$0xff] %v464
    %529 = vst [vmem:[#allocation3 + $0x11c0] sm:$0xff] %v465
    %v530 = vld [vmem:[#allocation2 + $0x2] sm:$0xff]
    %v531 = vld [vmem:[#allocation2 + $0xa] sm:$0xff]
    %v532 = vld [vmem:[#allocation2 + $0x1a] sm:$0xff]
    %v533 = vld [vmem:[#allocation2 + $0x22] sm:$0xff]
    %v534 = vld [vmem:[#allocation2 + $0x32] sm:$0xff]
    %v535 = vld [vmem:[#allocation2 + $0x3a] sm:$0xff]
    %v536 = vld [vmem:[#allocation2 + $0x4a] sm:$0xff]
    %v537 = vld [vmem:[#allocation2 + $0x52] sm:$0xff]
    %v538 = vld [vmem:[#allocation2 + $0x62] sm:$0xff]
    %v539 = vld [vmem:[#allocation2 + $0x6a] sm:$0xff]
    %v540 = vld [vmem:[#allocation2 + $0x7a] sm:$0xff]
    %v541 = vld [vmem:[#allocation2 + $0x82] sm:$0xff]
    %v542 = vld [vmem:[#allocation2 + $0x92] sm:$0xff]
    %v543 = vld [vmem:[#allocation2 + $0x9a] sm:$0xff]
    %v544 = vld [vmem:[#allocation2 + $0xaa] sm:$0xff]
    %v545 = vld [vmem:[#allocation2 + $0xb2] sm:$0xff]
    %v546 = vld [vmem:[#allocation2 + $0xc2] sm:$0xff]
    %v547 = vld [vmem:[#allocation2 + $0xca] sm:$0xff]
    %v548 = vld [vmem:[#allocation2 + $0xda] sm:$0xff]
    %v549 = vld [vmem:[#allocation2 + $0xe2] sm:$0xff]
    %v550 = vld [vmem:[#allocation2 + $0xf2] sm:$0xff]
    %v551 = vld [vmem:[#allocation2 + $0xfa] sm:$0xff]
    %v552 = vld [vmem:[#allocation2 + $0x10a] sm:$0xff]
    %v553 = vld [vmem:[#allocation2 + $0x112] sm:$0xff]
    %v554 = vld [vmem:[#allocation2 + $0x122] sm:$0xff]
    %v555 = vld [vmem:[#allocation2 + $0x12a] sm:$0xff]
    %v556 = vld [vmem:[#allocation2 + $0x13a] sm:$0xff]
    %v557 = vld [vmem:[#allocation2 + $0x142] sm:$0xff]
    %v558 = vld [vmem:[#allocation2 + $0x152] sm:$0xff]
    %v559 = vld [vmem:[#allocation2 + $0x15a] sm:$0xff]
    %v560 = vld [vmem:[#allocation2 + $0x16a] sm:$0xff]
    %v561 = vld [vmem:[#allocation2 + $0x172] sm:$0xff]
    %v562 = vld [vmem:[#allocation2 + $0x1b2] sm:$0xff]
    %v563 = vld [vmem:[#allocation2 + $0x1ba] sm:$0xff]
    %v564 = vld [vmem:[#allocation2 + $0x1ca] sm:$0xff]
    %v565 = vld [vmem:[#allocation2 + $0x1d2] sm:$0xff]
    %v566 = vld [vmem:[#allocation2 + $0x1e2] sm:$0xff]
    %v567 = vld [vmem:[#allocation2 + $0x1ea] sm:$0xff]
    %v568 = vld [vmem:[#allocation2 + $0x1fa] sm:$0xff]
    %v569 = vld [vmem:[#allocation2 + $0x202] sm:$0xff]
    %v570 = vld [vmem:[#allocation2 + $0x212] sm:$0xff]
    %v571 = vld [vmem:[#allocation2 + $0x21a] sm:$0xff]
    %v572 = vld [vmem:[#allocation2 + $0x22a] sm:$0xff]
    %v573 = vld [vmem:[#allocation2 + $0x232] sm:$0xff]
    %v574 = vld [vmem:[#allocation2 + $0x242] sm:$0xff]
    %v575 = vld [vmem:[#allocation2 + $0x24a] sm:$0xff]
    %v576 = vld [vmem:[#allocation2 + $0x25a] sm:$0xff]
    %v577 = vld [vmem:[#allocation2 + $0x262] sm:$0xff]
    %v578 = vld [vmem:[#allocation2 + $0x272] sm:$0xff]
    %v579 = vld [vmem:[#allocation2 + $0x27a] sm:$0xff]
    %v580 = vld [vmem:[#allocation2 + $0x28a] sm:$0xff]
    %v581 = vld [vmem:[#allocation2 + $0x292] sm:$0xff]
    %v582 = vld [vmem:[#allocation2 + $0x2a2] sm:$0xff]
    %v583 = vld [vmem:[#allocation2 + $0x2aa] sm:$0xff]
    %v584 = vld [vmem:[#allocation2 + $0x2ba] sm:$0xff]
    %v585 = vld [vmem:[#allocation2 + $0x2c2] sm:$0xff]
    %v586 = vld [vmem:[#allocation2 + $0x2d2] sm:$0xff]
    %v587 = vld [vmem:[#allocation2 + $0x2da] sm:$0xff]
    %v588 = vld [vmem:[#allocation2 + $0x2ea] sm:$0xff]
    %v589 = vld [vmem:[#allocation2 + $0x2f2] sm:$0xff]
    %v590 = vld [vmem:[#allocation2 + $0x302] sm:$0xff]
    %v591 = vld [vmem:[#allocation2 + $0x30a] sm:$0xff]
    %v592 = vld [vmem:[#allocation2 + $0x31a] sm:$0xff]
    %v593 = vld [vmem:[#allocation2 + $0x322] sm:$0xff]
    %594 = vst [vmem:[#allocation3 + $0x10] sm:$0xff] %v530
    %595 = vst [vmem:[#allocation3 + $0x58] sm:$0xff] %v531
    %596 = vst [vmem:[#allocation3 + $0xa0] sm:$0xff] %v532
    %597 = vst [vmem:[#allocation3 + $0xe8] sm:$0xff] %v533
    %598 = vst [vmem:[#allocation3 + $0x130] sm:$0xff] %v534
    %599 = vst [vmem:[#allocation3 + $0x178] sm:$0xff] %v535
    %600 = vst [vmem:[#allocation3 + $0x1c0] sm:$0xff] %v536
    %601 = vst [vmem:[#allocation3 + $0x208] sm:$0xff] %v537
    %602 = vst [vmem:[#allocation3 + $0x250] sm:$0xff] %v538
    %603 = vst [vmem:[#allocation3 + $0x298] sm:$0xff] %v539
    %604 = vst [vmem:[#allocation3 + $0x2e0] sm:$0xff] %v540
    %605 = vst [vmem:[#allocation3 + $0x328] sm:$0xff] %v541
    %606 = vst [vmem:[#allocation3 + $0x370] sm:$0xff] %v542
    %607 = vst [vmem:[#allocation3 + $0x3b8] sm:$0xff] %v543
    %608 = vst [vmem:[#allocation3 + $0x400] sm:$0xff] %v544
    %609 = vst [vmem:[#allocation3 + $0x448] sm:$0xff] %v545
    %610 = vst [vmem:[#allocation3 + $0x490] sm:$0xff] %v546
    %611 = vst [vmem:[#allocation3 + $0x4d8] sm:$0xff] %v547
    %612 = vst [vmem:[#allocation3 + $0x520] sm:$0xff] %v548
    %613 = vst [vmem:[#allocation3 + $0x568] sm:$0xff] %v549
    %614 = vst [vmem:[#allocation3 + $0x5b0] sm:$0xff] %v550
    %615 = vst [vmem:[#allocation3 + $0x5f8] sm:$0xff] %v551
    %616 = vst [vmem:[#allocation3 + $0x640] sm:$0xff] %v552
    %617 = vst [vmem:[#allocation3 + $0x688] sm:$0xff] %v553
    %618 = vst [vmem:[#allocation3 + $0x6d0] sm:$0xff] %v554
    %619 = vst [vmem:[#allocation3 + $0x718] sm:$0xff] %v555
    %620 = vst [vmem:[#allocation3 + $0x760] sm:$0xff] %v556
    %621 = vst [vmem:[#allocation3 + $0x7a8] sm:$0xff] %v557
    %622 = vst [vmem:[#allocation3 + $0x7f0] sm:$0xff] %v558
    %623 = vst [vmem:[#allocation3 + $0x838] sm:$0xff] %v559
    %624 = vst [vmem:[#allocation3 + $0x880] sm:$0xff] %v560
    %625 = vst [vmem:[#allocation3 + $0x8c8] sm:$0xff] %v561
    %626 = vst [vmem:[#allocation3 + $0x910] sm:$0xff] %v562
    %627 = vst [vmem:[#allocation3 + $0x958] sm:$0xff] %v563
    %628 = vst [vmem:[#allocation3 + $0x9a0] sm:$0xff] %v564
    %629 = vst [vmem:[#allocation3 + $0x9e8] sm:$0xff] %v565
    %630 = vst [vmem:[#allocation3 + $0xa30] sm:$0xff] %v566
    %631 = vst [vmem:[#allocation3 + $0xa78] sm:$0xff] %v567
    %632 = vst [vmem:[#allocation3 + $0xac0] sm:$0xff] %v568
    %633 = vst [vmem:[#allocation3 + $0xb08] sm:$0xff] %v569
    %634 = vst [vmem:[#allocation3 + $0xb50] sm:$0xff] %v570
    %635 = vst [vmem:[#allocation3 + $0xb98] sm:$0xff] %v571
    %636 = vst [vmem:[#allocation3 + $0xbe0] sm:$0xff] %v572
    %637 = vst [vmem:[#allocation3 + $0xc28] sm:$0xff] %v573
    %638 = vst [vmem:[#allocation3 + $0xc70] sm:$0xff] %v574
    %639 = vst [vmem:[#allocation3 + $0xcb8] sm:$0xff] %v575
    %640 = vst [vmem:[#allocation3 + $0xd00] sm:$0xff] %v576
    %641 = vst [vmem:[#allocation3 + $0xd48] sm:$0xff] %v577
    %642 = vst [vmem:[#allocation3 + $0xd90] sm:$0xff] %v578
    %643 = vst [vmem:[#allocation3 + $0xdd8] sm:$0xff] %v579
    %644 = vst [vmem:[#allocation3 + $0xe20] sm:$0xff] %v580
    %645 = vst [vmem:[#allocation3 + $0xe68] sm:$0xff] %v581
    %646 = vst [vmem:[#allocation3 + $0xeb0] sm:$0xff] %v582
    %647 = vst [vmem:[#allocation3 + $0xef8] sm:$0xff] %v583
    %648 = vst [vmem:[#allocation3 + $0xf40] sm:$0xff] %v584
    %649 = vst [vmem:[#allocation3 + $0xf88] sm:$0xff] %v585
    %650 = vst [vmem:[#allocation3 + $0xfd0] sm:$0xff] %v586
    %651 = vst [vmem:[#allocation3 + $0x1018] sm:$0xff] %v587
    %652 = vst [vmem:[#allocation3 + $0x1060] sm:$0xff] %v588
    %653 = vst [vmem:[#allocation3 + $0x10a8] sm:$0xff] %v589
    %654 = vst [vmem:[#allocation3 + $0x10f0] sm:$0xff] %v590
    %655 = vst [vmem:[#allocation3 + $0x1138] sm:$0xff] %v591
    %656 = vst [vmem:[#allocation3 + $0x1180] sm:$0xff] %v592
    %657 = vst [vmem:[#allocation3 + $0x11c8] sm:$0xff] %v593
    %v658 = vld [vmem:[%s81] sm:$0xff]
    %v659 = vld [vmem:[%s81 + $0x8] sm:$0xff]
    %v660 = vld [vmem:[%s81 + $0x18] sm:$0xff]
    %v661 = vld [vmem:[%s81 + $0x20] sm:$0xff]
    %v662 = vld [vmem:[%s81 + $0x30] sm:$0xff]
    %v663 = vld [vmem:[%s81 + $0x38] sm:$0xff]
    %v664 = vld [vmem:[%s81 + $0x48] sm:$0xff]
    %v665 = vld [vmem:[%s81 + $0x50] sm:$0xff]
    %v666 = vld [vmem:[%s81 + $0x60] sm:$0xff]
    %v667 = vld [vmem:[%s81 + $0x68] sm:$0xff]
    %v668 = vld [vmem:[%s81 + $0x78] sm:$0xff]
    %v669 = vld [vmem:[%s81 + $0x80] sm:$0xff]
    %v670 = vld [vmem:[%s81 + $0x90] sm:$0xff]
    %v671 = vld [vmem:[%s81 + $0x98] sm:$0xff]
    %v672 = vld [vmem:[%s81 + $0xa8] sm:$0xff]
    %v673 = vld [vmem:[%s81 + $0xb0] sm:$0xff]
    %v674 = vld [vmem:[%s81 + $0xc0] sm:$0xff]
    %v675 = vld [vmem:[%s81 + $0xc8] sm:$0xff]
    %v676 = vld [vmem:[%s81 + $0xd8] sm:$0xff]
    %v677 = vld [vmem:[%s81 + $0xe0] sm:$0xff]
    %v678 = vld [vmem:[%s81 + $0xf0] sm:$0xff]
    %v679 = vld [vmem:[%s81 + $0xf8] sm:$0xff]
    %v680 = vld [vmem:[%s81 + $0x108] sm:$0xff]
    %v681 = vld [vmem:[%s81 + $0x110] sm:$0xff]
    %v682 = vld [vmem:[%s81 + $0x120] sm:$0xff]
    %v683 = vld [vmem:[%s81 + $0x128] sm:$0xff]
    %v684 = vld [vmem:[%s81 + $0x138] sm:$0xff]
    %v685 = vld [vmem:[%s81 + $0x140] sm:$0xff]
    %v686 = vld [vmem:[%s81 + $0x150] sm:$0xff]
    %v687 = vld [vmem:[%s81 + $0x158] sm:$0xff]
    %v688 = vld [vmem:[%s81 + $0x168] sm:$0xff]
    %v689 = vld [vmem:[%s81 + $0x170] sm:$0xff]
    %v690 = vld [vmem:[%s81 + $0x1b0] sm:$0xff]
    %v691 = vld [vmem:[%s81 + $0x1b8] sm:$0xff]
    %v692 = vld [vmem:[%s81 + $0x1c8] sm:$0xff]
    %v693 = vld [vmem:[%s81 + $0x1d0] sm:$0xff]
    %v694 = vld [vmem:[%s81 + $0x1e0] sm:$0xff]
    %v695 = vld [vmem:[%s81 + $0x1e8] sm:$0xff]
    %v696 = vld [vmem:[%s81 + $0x1f8] sm:$0xff]
    %v697 = vld [vmem:[%s81 + $0x200] sm:$0xff]
    %v698 = vld [vmem:[%s81 + $0x210] sm:$0xff]
    %v699 = vld [vmem:[%s81 + $0x218] sm:$0xff]
    %v700 = vld [vmem:[%s81 + $0x228] sm:$0xff]
    %v701 = vld [vmem:[%s81 + $0x230] sm:$0xff]
    %v702 = vld [vmem:[%s81 + $0x240] sm:$0xff]
    %v703 = vld [vmem:[%s81 + $0x248] sm:$0xff]
    %v704 = vld [vmem:[%s81 + $0x258] sm:$0xff]
    %v705 = vld [vmem:[%s81 + $0x260] sm:$0xff]
    %v706 = vld [vmem:[%s81 + $0x270] sm:$0xff]
    %v707 = vld [vmem:[%s81 + $0x278] sm:$0xff]
    %v708 = vld [vmem:[%s81 + $0x288] sm:$0xff]
    %v709 = vld [vmem:[%s81 + $0x290] sm:$0xff]
    %v710 = vld [vmem:[%s81 + $0x2a0] sm:$0xff]
    %v711 = vld [vmem:[%s81 + $0x2a8] sm:$0xff]
    %v712 = vld [vmem:[%s81 + $0x2b8] sm:$0xff]
    %v713 = vld [vmem:[%s81 + $0x2c0] sm:$0xff]
    %v714 = vld [vmem:[%s81 + $0x2d0] sm:$0xff]
    %v715 = vld [vmem:[%s81 + $0x2d8] sm:$0xff]
    %v716 = vld [vmem:[%s81 + $0x2e8] sm:$0xff]
    %v717 = vld [vmem:[%s81 + $0x2f0] sm:$0xff]
    %v718 = vld [vmem:[%s81 + $0x300] sm:$0xff]
    %v719 = vld [vmem:[%s81 + $0x308] sm:$0xff]
    %v720 = vld [vmem:[%s81 + $0x318] sm:$0xff]
    %v721 = vld [vmem:[%s81 + $0x320] sm:$0xff]
    %722 = vst [vmem:[#allocation3 + $0x18] sm:$0xff] %v658
    %723 = vst [vmem:[#allocation3 + $0x60] sm:$0xff] %v659
    %724 = vst [vmem:[#allocation3 + $0xa8] sm:$0xff] %v660
    %725 = vst [vmem:[#allocation3 + $0xf0] sm:$0xff] %v661
    %726 = vst [vmem:[#allocation3 + $0x138] sm:$0xff] %v662
    %727 = vst [vmem:[#allocation3 + $0x180] sm:$0xff] %v663
    %728 = vst [vmem:[#allocation3 + $0x1c8] sm:$0xff] %v664
    %729 = vst [vmem:[#allocation3 + $0x210] sm:$0xff] %v665
    %730 = vst [vmem:[#allocation3 + $0x258] sm:$0xff] %v666
    %731 = vst [vmem:[#allocation3 + $0x2a0] sm:$0xff] %v667
    %732 = vst [vmem:[#allocation3 + $0x2e8] sm:$0xff] %v668
    %733 = vst [vmem:[#allocation3 + $0x330] sm:$0xff] %v669
    %734 = vst [vmem:[#allocation3 + $0x378] sm:$0xff] %v670
    %735 = vst [vmem:[#allocation3 + $0x3c0] sm:$0xff] %v671
    %736 = vst [vmem:[#allocation3 + $0x408] sm:$0xff] %v672
    %737 = vst [vmem:[#allocation3 + $0x450] sm:$0xff] %v673
    %738 = vst [vmem:[#allocation3 + $0x498] sm:$0xff] %v674
    %739 = vst [vmem:[#allocation3 + $0x4e0] sm:$0xff] %v675
    %740 = vst [vmem:[#allocation3 + $0x528] sm:$0xff] %v676
    %741 = vst [vmem:[#allocation3 + $0x570] sm:$0xff] %v677
    %742 = vst [vmem:[#allocation3 + $0x5b8] sm:$0xff] %v678
    %743 = vst [vmem:[#allocation3 + $0x600] sm:$0xff] %v679
    %744 = vst [vmem:[#allocation3 + $0x648] sm:$0xff] %v680
    %745 = vst [vmem:[#allocation3 + $0x690] sm:$0xff] %v681
    %746 = vst [vmem:[#allocation3 + $0x6d8] sm:$0xff] %v682
    %747 = vst [vmem:[#allocation3 + $0x720] sm:$0xff] %v683
    %748 = vst [vmem:[#allocation3 + $0x768] sm:$0xff] %v684
    %749 = vst [vmem:[#allocation3 + $0x7b0] sm:$0xff] %v685
    %750 = vst [vmem:[#allocation3 + $0x7f8] sm:$0xff] %v686
    %751 = vst [vmem:[#allocation3 + $0x840] sm:$0xff] %v687
    %752 = vst [vmem:[#allocation3 + $0x888] sm:$0xff] %v688
    %753 = vst [vmem:[#allocation3 + $0x8d0] sm:$0xff] %v689
    %754 = vst [vmem:[#allocation3 + $0x918] sm:$0xff] %v690
    %755 = vst [vmem:[#allocation3 + $0x960] sm:$0xff] %v691
    %756 = vst [vmem:[#allocation3 + $0x9a8] sm:$0xff] %v692
    %757 = vst [vmem:[#allocation3 + $0x9f0] sm:$0xff] %v693
    %758 = vst [vmem:[#allocation3 + $0xa38] sm:$0xff] %v694
    %759 = vst [vmem:[#allocation3 + $0xa80] sm:$0xff] %v695
    %760 = vst [vmem:[#allocation3 + $0xac8] sm:$0xff] %v696
    %761 = vst [vmem:[#allocation3 + $0xb10] sm:$0xff] %v697
    %762 = vst [vmem:[#allocation3 + $0xb58] sm:$0xff] %v698
    %763 = vst [vmem:[#allocation3 + $0xba0] sm:$0xff] %v699
    %764 = vst [vmem:[#allocation3 + $0xbe8] sm:$0xff] %v700
    %765 = vst [vmem:[#allocation3 + $0xc30] sm:$0xff] %v701
    %766 = vst [vmem:[#allocation3 + $0xc78] sm:$0xff] %v702
    %767 = vst [vmem:[#allocation3 + $0xcc0] sm:$0xff] %v703
    %768 = vst [vmem:[#allocation3 + $0xd08] sm:$0xff] %v704
    %769 = vst [vmem:[#allocation3 + $0xd50] sm:$0xff] %v705
    %770 = vst [vmem:[#allocation3 + $0xd98] sm:$0xff] %v706
    %771 = vst [vmem:[#allocation3 + $0xde0] sm:$0xff] %v707
    %772 = vst [vmem:[#allocation3 + $0xe28] sm:$0xff] %v708
    %773 = vst [vmem:[#allocation3 + $0xe70] sm:$0xff] %v709
    %774 = vst [vmem:[#allocation3 + $0xeb8] sm:$0xff] %v710
    %775 = vst [vmem:[#allocation3 + $0xf00] sm:$0xff] %v711
    %776 = vst [vmem:[#allocation3 + $0xf48] sm:$0xff] %v712
    %777 = vst [vmem:[#allocation3 + $0xf90] sm:$0xff] %v713
    %778 = vst [vmem:[#allocation3 + $0xfd8] sm:$0xff] %v714
    %779 = vst [vmem:[#allocation3 + $0x1020] sm:$0xff] %v715
    %780 = vst [vmem:[#allocation3 + $0x1068] sm:$0xff] %v716
    %781 = vst [vmem:[#allocation3 + $0x10b0] sm:$0xff] %v717
    %782 = vst [vmem:[#allocation3 + $0x10f8] sm:$0xff] %v718
    %783 = vst [vmem:[#allocation3 + $0x1140] sm:$0xff] %v719
    %784 = vst [vmem:[#allocation3 + $0x1188] sm:$0xff] %v720
    %785 = vst [vmem:[#allocation3 + $0x11d0] sm:$0xff] %v721
    %v786 = vld [vmem:[%s81 + $0x1] sm:$0xff]
    %v787 = vld [vmem:[%s81 + $0x9] sm:$0xff]
    %v788 = vld [vmem:[%s81 + $0x19] sm:$0xff]
    %v789 = vld [vmem:[%s81 + $0x21] sm:$0xff]
    %v790 = vld [vmem:[%s81 + $0x31] sm:$0xff]
    %v791 = vld [vmem:[%s81 + $0x39] sm:$0xff]
    %v792 = vld [vmem:[%s81 + $0x49] sm:$0xff]
    %v793 = vld [vmem:[%s81 + $0x51] sm:$0xff]
    %v794 = vld [vmem:[%s81 + $0x61] sm:$0xff]
    %v795 = vld [vmem:[%s81 + $0x69] sm:$0xff]
    %v796 = vld [vmem:[%s81 + $0x79] sm:$0xff]
    %v797 = vld [vmem:[%s81 + $0x81] sm:$0xff]
    %v798 = vld [vmem:[%s81 + $0x91] sm:$0xff]
    %v799 = vld [vmem:[%s81 + $0x99] sm:$0xff]
    %v800 = vld [vmem:[%s81 + $0xa9] sm:$0xff]
    %v801 = vld [vmem:[%s81 + $0xb1] sm:$0xff]
    %v802 = vld [vmem:[%s81 + $0xc1] sm:$0xff]
    %v803 = vld [vmem:[%s81 + $0xc9] sm:$0xff]
    %v804 = vld [vmem:[%s81 + $0xd9] sm:$0xff]
    %v805 = vld [vmem:[%s81 + $0xe1] sm:$0xff]
    %v806 = vld [vmem:[%s81 + $0xf1] sm:$0xff]
    %v807 = vld [vmem:[%s81 + $0xf9] sm:$0xff]
    %v808 = vld [vmem:[%s81 + $0x109] sm:$0xff]
    %v809 = vld [vmem:[%s81 + $0x111] sm:$0xff]
    %v810 = vld [vmem:[%s81 + $0x121] sm:$0xff]
    %v811 = vld [vmem:[%s81 + $0x129] sm:$0xff]
    %v812 = vld [vmem:[%s81 + $0x139] sm:$0xff]
    %v813 = vld [vmem:[%s81 + $0x141] sm:$0xff]
    %v814 = vld [vmem:[%s81 + $0x151] sm:$0xff]
    %v815 = vld [vmem:[%s81 + $0x159] sm:$0xff]
    %v816 = vld [vmem:[%s81 + $0x169] sm:$0xff]
    %v817 = vld [vmem:[%s81 + $0x171] sm:$0xff]
    %v818 = vld [vmem:[%s81 + $0x1b1] sm:$0xff]
    %v819 = vld [vmem:[%s81 + $0x1b9] sm:$0xff]
    %v820 = vld [vmem:[%s81 + $0x1c9] sm:$0xff]
    %v821 = vld [vmem:[%s81 + $0x1d1] sm:$0xff]
    %v822 = vld [vmem:[%s81 + $0x1e1] sm:$0xff]
    %v823 = vld [vmem:[%s81 + $0x1e9] sm:$0xff]
    %v824 = vld [vmem:[%s81 + $0x1f9] sm:$0xff]
    %v825 = vld [vmem:[%s81 + $0x201] sm:$0xff]
    %v826 = vld [vmem:[%s81 + $0x211] sm:$0xff]
    %v827 = vld [vmem:[%s81 + $0x219] sm:$0xff]
    %v828 = vld [vmem:[%s81 + $0x229] sm:$0xff]
    %v829 = vld [vmem:[%s81 + $0x231] sm:$0xff]
    %v830 = vld [vmem:[%s81 + $0x241] sm:$0xff]
    %v831 = vld [vmem:[%s81 + $0x249] sm:$0xff]
    %v832 = vld [vmem:[%s81 + $0x259] sm:$0xff]
    %v833 = vld [vmem:[%s81 + $0x261] sm:$0xff]
    %v834 = vld [vmem:[%s81 + $0x271] sm:$0xff]
    %v835 = vld [vmem:[%s81 + $0x279] sm:$0xff]
    %v836 = vld [vmem:[%s81 + $0x289] sm:$0xff]
    %v837 = vld [vmem:[%s81 + $0x291] sm:$0xff]
    %v838 = vld [vmem:[%s81 + $0x2a1] sm:$0xff]
    %v839 = vld [vmem:[%s81 + $0x2a9] sm:$0xff]
    %v840 = vld [vmem:[%s81 + $0x2b9] sm:$0xff]
    %v841 = vld [vmem:[%s81 + $0x2c1] sm:$0xff]
    %v842 = vld [vmem:[%s81 + $0x2d1] sm:$0xff]
    %v843 = vld [vmem:[%s81 + $0x2d9] sm:$0xff]
    %v844 = vld [vmem:[%s81 + $0x2e9] sm:$0xff]
    %v845 = vld [vmem:[%s81 + $0x2f1] sm:$0xff]
    %v846 = vld [vmem:[%s81 + $0x301] sm:$0xff]
    %v847 = vld [vmem:[%s81 + $0x309] sm:$0xff]
    %v848 = vld [vmem:[%s81 + $0x319] sm:$0xff]
    %v849 = vld [vmem:[%s81 + $0x321] sm:$0xff]
    %850 = vst [vmem:[#allocation3 + $0x20] sm:$0xff] %v786
    %851 = vst [vmem:[#allocation3 + $0x68] sm:$0xff] %v787
    %852 = vst [vmem:[#allocation3 + $0xb0] sm:$0xff] %v788
    %853 = vst [vmem:[#allocation3 + $0xf8] sm:$0xff] %v789
    %854 = vst [vmem:[#allocation3 + $0x140] sm:$0xff] %v790
    %855 = vst [vmem:[#allocation3 + $0x188] sm:$0xff] %v791
    %856 = vst [vmem:[#allocation3 + $0x1d0] sm:$0xff] %v792
    %857 = vst [vmem:[#allocation3 + $0x218] sm:$0xff] %v793
    %858 = vst [vmem:[#allocation3 + $0x260] sm:$0xff] %v794
    %859 = vst [vmem:[#allocation3 + $0x2a8] sm:$0xff] %v795
    %860 = vst [vmem:[#allocation3 + $0x2f0] sm:$0xff] %v796
    %861 = vst [vmem:[#allocation3 + $0x338] sm:$0xff] %v797
    %862 = vst [vmem:[#allocation3 + $0x380] sm:$0xff] %v798
    %863 = vst [vmem:[#allocation3 + $0x3c8] sm:$0xff] %v799
    %864 = vst [vmem:[#allocation3 + $0x410] sm:$0xff] %v800
    %865 = vst [vmem:[#allocation3 + $0x458] sm:$0xff] %v801
    %866 = vst [vmem:[#allocation3 + $0x4a0] sm:$0xff] %v802
    %867 = vst [vmem:[#allocation3 + $0x4e8] sm:$0xff] %v803
    %868 = vst [vmem:[#allocation3 + $0x530] sm:$0xff] %v804
    %869 = vst [vmem:[#allocation3 + $0x578] sm:$0xff] %v805
    %870 = vst [vmem:[#allocation3 + $0x5c0] sm:$0xff] %v806
    %871 = vst [vmem:[#allocation3 + $0x608] sm:$0xff] %v807
    %872 = vst [vmem:[#allocation3 + $0x650] sm:$0xff] %v808
    %873 = vst [vmem:[#allocation3 + $0x698] sm:$0xff] %v809
    %874 = vst [vmem:[#allocation3 + $0x6e0] sm:$0xff] %v810
    %875 = vst [vmem:[#allocation3 + $0x728] sm:$0xff] %v811
    %876 = vst [vmem:[#allocation3 + $0x770] sm:$0xff] %v812
    %877 = vst [vmem:[#allocation3 + $0x7b8] sm:$0xff] %v813
    %878 = vst [vmem:[#allocation3 + $0x800] sm:$0xff] %v814
    %879 = vst [vmem:[#allocation3 + $0x848] sm:$0xff] %v815
    %880 = vst [vmem:[#allocation3 + $0x890] sm:$0xff] %v816
    %881 = vst [vmem:[#allocation3 + $0x8d8] sm:$0xff] %v817
    %882 = vst [vmem:[#allocation3 + $0x920] sm:$0xff] %v818
    %883 = vst [vmem:[#allocation3 + $0x968] sm:$0xff] %v819
    %884 = vst [vmem:[#allocation3 + $0x9b0] sm:$0xff] %v820
    %885 = vst [vmem:[#allocation3 + $0x9f8] sm:$0xff] %v821
    %886 = vst [vmem:[#allocation3 + $0xa40] sm:$0xff] %v822
    %887 = vst [vmem:[#allocation3 + $0xa88] sm:$0xff] %v823
    %888 = vst [vmem:[#allocation3 + $0xad0] sm:$0xff] %v824
    %889 = vst [vmem:[#allocation3 + $0xb18] sm:$0xff] %v825
    %890 = vst [vmem:[#allocation3 + $0xb60] sm:$0xff] %v826
    %891 = vst [vmem:[#allocation3 + $0xba8] sm:$0xff] %v827
    %892 = vst [vmem:[#allocation3 + $0xbf0] sm:$0xff] %v828
    %893 = vst [vmem:[#allocation3 + $0xc38] sm:$0xff] %v829
    %894 = vst [vmem:[#allocation3 + $0xc80] sm:$0xff] %v830
    %895 = vst [vmem:[#allocation3 + $0xcc8] sm:$0xff] %v831
    %896 = vst [vmem:[#allocation3 + $0xd10] sm:$0xff] %v832
    %897 = vst [vmem:[#allocation3 + $0xd58] sm:$0xff] %v833
    %898 = vst [vmem:[#allocation3 + $0xda0] sm:$0xff] %v834
    %899 = vst [vmem:[#allocation3 + $0xde8] sm:$0xff] %v835
    %900 = vst [vmem:[#allocation3 + $0xe30] sm:$0xff] %v836
    %901 = vst [vmem:[#allocation3 + $0xe78] sm:$0xff] %v837
    %902 = vst [vmem:[#allocation3 + $0xec0] sm:$0xff] %v838
    %903 = vst [vmem:[#allocation3 + $0xf08] sm:$0xff] %v839
    %904 = vst [vmem:[#allocation3 + $0xf50] sm:$0xff] %v840
    %905 = vst [vmem:[#allocation3 + $0xf98] sm:$0xff] %v841
    %906 = vst [vmem:[#allocation3 + $0xfe0] sm:$0xff] %v842
    %907 = vst [vmem:[#allocation3 + $0x1028] sm:$0xff] %v843
    %908 = vst [vmem:[#allocation3 + $0x1070] sm:$0xff] %v844
    %909 = vst [vmem:[#allocation3 + $0x10b8] sm:$0xff] %v845
    %910 = vst [vmem:[#allocation3 + $0x1100] sm:$0xff] %v846
    %911 = vst [vmem:[#allocation3 + $0x1148] sm:$0xff] %v847
    %912 = vst [vmem:[#allocation3 + $0x1190] sm:$0xff] %v848
    %913 = vst [vmem:[#allocation3 + $0x11d8] sm:$0xff] %v849
    %v914 = vld [vmem:[%s81 + $0x2] sm:$0xff]
    %v915 = vld [vmem:[%s81 + $0xa] sm:$0xff]
    %v916 = vld [vmem:[%s81 + $0x1a] sm:$0xff]
    %v917 = vld [vmem:[%s81 + $0x22] sm:$0xff]
    %v918 = vld [vmem:[%s81 + $0x32] sm:$0xff]
    %v919 = vld [vmem:[%s81 + $0x3a] sm:$0xff]
    %v920 = vld [vmem:[%s81 + $0x4a] sm:$0xff]
    %v921 = vld [vmem:[%s81 + $0x52] sm:$0xff]
    %v922 = vld [vmem:[%s81 + $0x62] sm:$0xff]
    %v923 = vld [vmem:[%s81 + $0x6a] sm:$0xff]
    %v924 = vld [vmem:[%s81 + $0x7a] sm:$0xff]
    %v925 = vld [vmem:[%s81 + $0x82] sm:$0xff]
    %v926 = vld [vmem:[%s81 + $0x92] sm:$0xff]
    %v927 = vld [vmem:[%s81 + $0x9a] sm:$0xff]
    %v928 = vld [vmem:[%s81 + $0xaa] sm:$0xff]
    %v929 = vld [vmem:[%s81 + $0xb2] sm:$0xff]
    %v930 = vld [vmem:[%s81 + $0xc2] sm:$0xff]
    %v931 = vld [vmem:[%s81 + $0xca] sm:$0xff]
    %v932 = vld [vmem:[%s81 + $0xda] sm:$0xff]
    %v933 = vld [vmem:[%s81 + $0xe2] sm:$0xff]
    %v934 = vld [vmem:[%s81 + $0xf2] sm:$0xff]
    %v935 = vld [vmem:[%s81 + $0xfa] sm:$0xff]
    %v936 = vld [vmem:[%s81 + $0x10a] sm:$0xff]
    %v937 = vld [vmem:[%s81 + $0x112] sm:$0xff]
    %v938 = vld [vmem:[%s81 + $0x122] sm:$0xff]
    %v939 = vld [vmem:[%s81 + $0x12a] sm:$0xff]
    %v940 = vld [vmem:[%s81 + $0x13a] sm:$0xff]
    %v941 = vld [vmem:[%s81 + $0x142] sm:$0xff]
    %v942 = vld [vmem:[%s81 + $0x152] sm:$0xff]
    %v943 = vld [vmem:[%s81 + $0x15a] sm:$0xff]
    %v944 = vld [vmem:[%s81 + $0x16a] sm:$0xff]
    %v945 = vld [vmem:[%s81 + $0x172] sm:$0xff]
    %v946 = vld [vmem:[%s81 + $0x1b2] sm:$0xff]
    %v947 = vld [vmem:[%s81 + $0x1ba] sm:$0xff]
    %v948 = vld [vmem:[%s81 + $0x1ca] sm:$0xff]
    %v949 = vld [vmem:[%s81 + $0x1d2] sm:$0xff]
    %v950 = vld [vmem:[%s81 + $0x1e2] sm:$0xff]
    %v951 = vld [vmem:[%s81 + $0x1ea] sm:$0xff]
    %v952 = vld [vmem:[%s81 + $0x1fa] sm:$0xff]
    %v953 = vld [vmem:[%s81 + $0x202] sm:$0xff]
    %v954 = vld [vmem:[%s81 + $0x212] sm:$0xff]
    %v955 = vld [vmem:[%s81 + $0x21a] sm:$0xff]
    %v956 = vld [vmem:[%s81 + $0x22a] sm:$0xff]
    %v957 = vld [vmem:[%s81 + $0x232] sm:$0xff]
    %v958 = vld [vmem:[%s81 + $0x242] sm:$0xff]
    %v959 = vld [vmem:[%s81 + $0x24a] sm:$0xff]
    %v960 = vld [vmem:[%s81 + $0x25a] sm:$0xff]
    %v961 = vld [vmem:[%s81 + $0x262] sm:$0xff]
    %v962 = vld [vmem:[%s81 + $0x272] sm:$0xff]
    %v963 = vld [vmem:[%s81 + $0x27a] sm:$0xff]
    %v964 = vld [vmem:[%s81 + $0x28a] sm:$0xff]
    %v965 = vld [vmem:[%s81 + $0x292] sm:$0xff]
    %v966 = vld [vmem:[%s81 + $0x2a2] sm:$0xff]
    %v967 = vld [vmem:[%s81 + $0x2aa] sm:$0xff]
    %v968 = vld [vmem:[%s81 + $0x2ba] sm:$0xff]
    %v969 = vld [vmem:[%s81 + $0x2c2] sm:$0xff]
    %v970 = vld [vmem:[%s81 + $0x2d2] sm:$0xff]
    %v971 = vld [vmem:[%s81 + $0x2da] sm:$0xff]
    %v972 = vld [vmem:[%s81 + $0x2ea] sm:$0xff]
    %v973 = vld [vmem:[%s81 + $0x2f2] sm:$0xff]
    %v974 = vld [vmem:[%s81 + $0x302] sm:$0xff]
    %v975 = vld [vmem:[%s81 + $0x30a] sm:$0xff]
    %v976 = vld [vmem:[%s81 + $0x31a] sm:$0xff]
    %v977 = vld [vmem:[%s81 + $0x322] sm:$0xff]
    %978 = vst [vmem:[#allocation3 + $0x28] sm:$0xff] %v914
    %979 = vst [vmem:[#allocation3 + $0x70] sm:$0xff] %v915
    %980 = vst [vmem:[#allocation3 + $0xb8] sm:$0xff] %v916
    %981 = vst [vmem:[#allocation3 + $0x100] sm:$0xff] %v917
    %982 = vst [vmem:[#allocation3 + $0x148] sm:$0xff] %v918
    %983 = vst [vmem:[#allocation3 + $0x190] sm:$0xff] %v919
    %984 = vst [vmem:[#allocation3 + $0x1d8] sm:$0xff] %v920
    %985 = vst [vmem:[#allocation3 + $0x220] sm:$0xff] %v921
    %986 = vst [vmem:[#allocation3 + $0x268] sm:$0xff] %v922
    %987 = vst [vmem:[#allocation3 + $0x2b0] sm:$0xff] %v923
    %988 = vst [vmem:[#allocation3 + $0x2f8] sm:$0xff] %v924
    %989 = vst [vmem:[#allocation3 + $0x340] sm:$0xff] %v925
    %990 = vst [vmem:[#allocation3 + $0x388] sm:$0xff] %v926
    %991 = vst [vmem:[#allocation3 + $0x3d0] sm:$0xff] %v927
    %992 = vst [vmem:[#allocation3 + $0x418] sm:$0xff] %v928
    %993 = vst [vmem:[#allocation3 + $0x460] sm:$0xff] %v929
    %994 = vst [vmem:[#allocation3 + $0x4a8] sm:$0xff] %v930
    %995 = vst [vmem:[#allocation3 + $0x4f0] sm:$0xff] %v931
    %996 = vst [vmem:[#allocation3 + $0x538] sm:$0xff] %v932
    %997 = vst [vmem:[#allocation3 + $0x580] sm:$0xff] %v933
    %998 = vst [vmem:[#allocation3 + $0x5c8] sm:$0xff] %v934
    %999 = vst [vmem:[#allocation3 + $0x610] sm:$0xff] %v935
    %1000 = vst [vmem:[#allocation3 + $0x658] sm:$0xff] %v936
    %1001 = vst [vmem:[#allocation3 + $0x6a0] sm:$0xff] %v937
    %1002 = vst [vmem:[#allocation3 + $0x6e8] sm:$0xff] %v938
    %1003 = vst [vmem:[#allocation3 + $0x730] sm:$0xff] %v939
    %1004 = vst [vmem:[#allocation3 + $0x778] sm:$0xff] %v940
    %1005 = vst [vmem:[#allocation3 + $0x7c0] sm:$0xff] %v941
    %1006 = vst [vmem:[#allocation3 + $0x808] sm:$0xff] %v942
    %1007 = vst [vmem:[#allocation3 + $0x850] sm:$0xff] %v943
    %1008 = vst [vmem:[#allocation3 + $0x898] sm:$0xff] %v944
    %1009 = vst [vmem:[#allocation3 + $0x8e0] sm:$0xff] %v945
    %1010 = vst [vmem:[#allocation3 + $0x928] sm:$0xff] %v946
    %1011 = vst [vmem:[#allocation3 + $0x970] sm:$0xff] %v947
    %1012 = vst [vmem:[#allocation3 + $0x9b8] sm:$0xff] %v948
    %1013 = vst [vmem:[#allocation3 + $0xa00] sm:$0xff] %v949
    %1014 = vst [vmem:[#allocation3 + $0xa48] sm:$0xff] %v950
    %1015 = vst [vmem:[#allocation3 + $0xa90] sm:$0xff] %v951
    %1016 = vst [vmem:[#allocation3 + $0xad8] sm:$0xff] %v952
    %1017 = vst [vmem:[#allocation3 + $0xb20] sm:$0xff] %v953
    %1018 = vst [vmem:[#allocation3 + $0xb68] sm:$0xff] %v954
    %1019 = vst [vmem:[#allocation3 + $0xbb0] sm:$0xff] %v955
    %1020 = vst [vmem:[#allocation3 + $0xbf8] sm:$0xff] %v956
    %1021 = vst [vmem:[#allocation3 + $0xc40] sm:$0xff] %v957
    %1022 = vst [vmem:[#allocation3 + $0xc88] sm:$0xff] %v958
    %1023 = vst [vmem:[#allocation3 + $0xcd0] sm:$0xff] %v959
    %1024 = vst [vmem:[#allocation3 + $0xd18] sm:$0xff] %v960
    %1025 = vst [vmem:[#allocation3 + $0xd60] sm:$0xff] %v961
    %1026 = vst [vmem:[#allocation3 + $0xda8] sm:$0xff] %v962
    %1027 = vst [vmem:[#allocation3 + $0xdf0] sm:$0xff] %v963
    %1028 = vst [vmem:[#allocation3 + $0xe38] sm:$0xff] %v964
    %1029 = vst [vmem:[#allocation3 + $0xe80] sm:$0xff] %v965
    %1030 = vst [vmem:[#allocation3 + $0xec8] sm:$0xff] %v966
    %1031 = vst [vmem:[#allocation3 + $0xf10] sm:$0xff] %v967
    %1032 = vst [vmem:[#allocation3 + $0xf58] sm:$0xff] %v968
    %1033 = vst [vmem:[#allocation3 + $0xfa0] sm:$0xff] %v969
    %1034 = vst [vmem:[#allocation3 + $0xfe8] sm:$0xff] %v970
    %1035 = vst [vmem:[#allocation3 + $0x1030] sm:$0xff] %v971
    %1036 = vst [vmem:[#allocation3 + $0x1078] sm:$0xff] %v972
    %1037 = vst [vmem:[#allocation3 + $0x10c0] sm:$0xff] %v973
    %1038 = vst [vmem:[#allocation3 + $0x1108] sm:$0xff] %v974
    %1039 = vst [vmem:[#allocation3 + $0x1150] sm:$0xff] %v975
    %1040 = vst [vmem:[#allocation3 + $0x1198] sm:$0xff] %v976
    %1041 = vst [vmem:[#allocation3 + $0x11e0] sm:$0xff] %v977
    %s1042 = scalar_lea.vmem [#allocation2], 48
    %v1043 = vld [vmem:[%s1042] sm:$0xff]
    %v1044 = vld [vmem:[%s1042 + $0x8] sm:$0xff]
    %v1045 = vld [vmem:[%s1042 + $0x18] sm:$0xff]
    %v1046 = vld [vmem:[%s1042 + $0x20] sm:$0xff]
    %v1047 = vld [vmem:[%s1042 + $0x30] sm:$0xff]
    %v1048 = vld [vmem:[%s1042 + $0x38] sm:$0xff]
    %v1049 = vld [vmem:[%s1042 + $0x48] sm:$0xff]
    %v1050 = vld [vmem:[%s1042 + $0x50] sm:$0xff]
    %v1051 = vld [vmem:[%s1042 + $0x60] sm:$0xff]
    %v1052 = vld [vmem:[%s1042 + $0x68] sm:$0xff]
    %v1053 = vld [vmem:[%s1042 + $0x78] sm:$0xff]
    %v1054 = vld [vmem:[%s1042 + $0x80] sm:$0xff]
    %v1055 = vld [vmem:[%s1042 + $0x90] sm:$0xff]
    %v1056 = vld [vmem:[%s1042 + $0x98] sm:$0xff]
    %v1057 = vld [vmem:[%s1042 + $0xa8] sm:$0xff]
    %v1058 = vld [vmem:[%s1042 + $0xb0] sm:$0xff]
    %v1059 = vld [vmem:[%s1042 + $0xc0] sm:$0xff]
    %v1060 = vld [vmem:[%s1042 + $0xc8] sm:$0xff]
    %v1061 = vld [vmem:[%s1042 + $0xd8] sm:$0xff]
    %v1062 = vld [vmem:[%s1042 + $0xe0] sm:$0xff]
    %v1063 = vld [vmem:[%s1042 + $0xf0] sm:$0xff]
    %v1064 = vld [vmem:[%s1042 + $0xf8] sm:$0xff]
    %v1065 = vld [vmem:[%s1042 + $0x108] sm:$0xff]
    %v1066 = vld [vmem:[%s1042 + $0x110] sm:$0xff]
    %v1067 = vld [vmem:[%s1042 + $0x120] sm:$0xff]
    %v1068 = vld [vmem:[%s1042 + $0x128] sm:$0xff]
    %v1069 = vld [vmem:[%s1042 + $0x138] sm:$0xff]
    %v1070 = vld [vmem:[%s1042 + $0x140] sm:$0xff]
    %v1071 = vld [vmem:[%s1042 + $0x150] sm:$0xff]
    %v1072 = vld [vmem:[%s1042 + $0x158] sm:$0xff]
    %v1073 = vld [vmem:[%s1042 + $0x168] sm:$0xff]
    %v1074 = vld [vmem:[%s1042 + $0x170] sm:$0xff]
    %v1075 = vld [vmem:[%s1042 + $0x1b0] sm:$0xff]
    %v1076 = vld [vmem:[%s1042 + $0x1b8] sm:$0xff]
    %v1077 = vld [vmem:[%s1042 + $0x1c8] sm:$0xff]
    %v1078 = vld [vmem:[%s1042 + $0x1d0] sm:$0xff]
    %v1079 = vld [vmem:[%s1042 + $0x1e0] sm:$0xff]
    %v1080 = vld [vmem:[%s1042 + $0x1e8] sm:$0xff]
    %v1081 = vld [vmem:[%s1042 + $0x1f8] sm:$0xff]
    %v1082 = vld [vmem:[%s1042 + $0x200] sm:$0xff]
    %v1083 = vld [vmem:[%s1042 + $0x210] sm:$0xff]
    %v1084 = vld [vmem:[%s1042 + $0x218] sm:$0xff]
    %v1085 = vld [vmem:[%s1042 + $0x228] sm:$0xff]
    %v1086 = vld [vmem:[%s1042 + $0x230] sm:$0xff]
    %v1087 = vld [vmem:[%s1042 + $0x240] sm:$0xff]
    %v1088 = vld [vmem:[%s1042 + $0x248] sm:$0xff]
    %v1089 = vld [vmem:[%s1042 + $0x258] sm:$0xff]
    %v1090 = vld [vmem:[%s1042 + $0x260] sm:$0xff]
    %v1091 = vld [vmem:[%s1042 + $0x270] sm:$0xff]
    %v1092 = vld [vmem:[%s1042 + $0x278] sm:$0xff]
    %v1093 = vld [vmem:[%s1042 + $0x288] sm:$0xff]
    %v1094 = vld [vmem:[%s1042 + $0x290] sm:$0xff]
    %v1095 = vld [vmem:[%s1042 + $0x2a0] sm:$0xff]
    %v1096 = vld [vmem:[%s1042 + $0x2a8] sm:$0xff]
    %v1097 = vld [vmem:[%s1042 + $0x2b8] sm:$0xff]
    %v1098 = vld [vmem:[%s1042 + $0x2c0] sm:$0xff]
    %v1099 = vld [vmem:[%s1042 + $0x2d0] sm:$0xff]
    %v1100 = vld [vmem:[%s1042 + $0x2d8] sm:$0xff]
    %v1101 = vld [vmem:[%s1042 + $0x2e8] sm:$0xff]
    %v1102 = vld [vmem:[%s1042 + $0x2f0] sm:$0xff]
    %v1103 = vld [vmem:[%s1042 + $0x300] sm:$0xff]
    %v1104 = vld [vmem:[%s1042 + $0x308] sm:$0xff]
    %v1105 = vld [vmem:[%s1042 + $0x318] sm:$0xff]
    %v1106 = vld [vmem:[%s1042 + $0x320] sm:$0xff]
    %1107 = vst [vmem:[#allocation3 + $0x30] sm:$0xff] %v1043
    %1108 = vst [vmem:[#allocation3 + $0x78] sm:$0xff] %v1044
    %1109 = vst [vmem:[#allocation3 + $0xc0] sm:$0xff] %v1045
    %1110 = vst [vmem:[#allocation3 + $0x108] sm:$0xff] %v1046
    %1111 = vst [vmem:[#allocation3 + $0x150] sm:$0xff] %v1047
    %1112 = vst [vmem:[#allocation3 + $0x198] sm:$0xff] %v1048
    %1113 = vst [vmem:[#allocation3 + $0x1e0] sm:$0xff] %v1049
    %1114 = vst [vmem:[#allocation3 + $0x228] sm:$0xff] %v1050
    %1115 = vst [vmem:[#allocation3 + $0x270] sm:$0xff] %v1051
    %1116 = vst [vmem:[#allocation3 + $0x2b8] sm:$0xff] %v1052
    %1117 = vst [vmem:[#allocation3 + $0x300] sm:$0xff] %v1053
    %1118 = vst [vmem:[#allocation3 + $0x348] sm:$0xff] %v1054
    %1119 = vst [vmem:[#allocation3 + $0x390] sm:$0xff] %v1055
    %1120 = vst [vmem:[#allocation3 + $0x3d8] sm:$0xff] %v1056
    %1121 = vst [vmem:[#allocation3 + $0x420] sm:$0xff] %v1057
    %1122 = vst [vmem:[#allocation3 + $0x468] sm:$0xff] %v1058
    %1123 = vst [vmem:[#allocation3 + $0x4b0] sm:$0xff] %v1059
    %1124 = vst [vmem:[#allocation3 + $0x4f8] sm:$0xff] %v1060
    %1125 = vst [vmem:[#allocation3 + $0x540] sm:$0xff] %v1061
    %1126 = vst [vmem:[#allocation3 + $0x588] sm:$0xff] %v1062
    %1127 = vst [vmem:[#allocation3 + $0x5d0] sm:$0xff] %v1063
    %1128 = vst [vmem:[#allocation3 + $0x618] sm:$0xff] %v1064
    %1129 = vst [vmem:[#allocation3 + $0x660] sm:$0xff] %v1065
    %1130 = vst [vmem:[#allocation3 + $0x6a8] sm:$0xff] %v1066
    %1131 = vst [vmem:[#allocation3 + $0x6f0] sm:$0xff] %v1067
    %1132 = vst [vmem:[#allocation3 + $0x738] sm:$0xff] %v1068
    %1133 = vst [vmem:[#allocation3 + $0x780] sm:$0xff] %v1069
    %1134 = vst [vmem:[#allocation3 + $0x7c8] sm:$0xff] %v1070
    %1135 = vst [vmem:[#allocation3 + $0x810] sm:$0xff] %v1071
    %1136 = vst [vmem:[#allocation3 + $0x858] sm:$0xff] %v1072
    %1137 = vst [vmem:[#allocation3 + $0x8a0] sm:$0xff] %v1073
    %1138 = vst [vmem:[#allocation3 + $0x8e8] sm:$0xff] %v1074
    %1139 = vst [vmem:[#allocation3 + $0x930] sm:$0xff] %v1075
    %1140 = vst [vmem:[#allocation3 + $0x978] sm:$0xff] %v1076
    %1141 = vst [vmem:[#allocation3 + $0x9c0] sm:$0xff] %v1077
    %1142 = vst [vmem:[#allocation3 + $0xa08] sm:$0xff] %v1078
    %1143 = vst [vmem:[#allocation3 + $0xa50] sm:$0xff] %v1079
    %1144 = vst [vmem:[#allocation3 + $0xa98] sm:$0xff] %v1080
    %1145 = vst [vmem:[#allocation3 + $0xae0] sm:$0xff] %v1081
    %1146 = vst [vmem:[#allocation3 + $0xb28] sm:$0xff] %v1082
    %1147 = vst [vmem:[#allocation3 + $0xb70] sm:$0xff] %v1083
    %1148 = vst [vmem:[#allocation3 + $0xbb8] sm:$0xff] %v1084
    %1149 = vst [vmem:[#allocation3 + $0xc00] sm:$0xff] %v1085
    %1150 = vst [vmem:[#allocation3 + $0xc48] sm:$0xff] %v1086
    %1151 = vst [vmem:[#allocation3 + $0xc90] sm:$0xff] %v1087
    %1152 = vst [vmem:[#allocation3 + $0xcd8] sm:$0xff] %v1088
    %1153 = vst [vmem:[#allocation3 + $0xd20] sm:$0xff] %v1089
    %1154 = vst [vmem:[#allocation3 + $0xd68] sm:$0xff] %v1090
    %1155 = vst [vmem:[#allocation3 + $0xdb0] sm:$0xff] %v1091
    %1156 = vst [vmem:[#allocation3 + $0xdf8] sm:$0xff] %v1092
    %1157 = vst [vmem:[#allocation3 + $0xe40] sm:$0xff] %v1093
    %1158 = vst [vmem:[#allocation3 + $0xe88] sm:$0xff] %v1094
    %1159 = vst [vmem:[#allocation3 + $0xed0] sm:$0xff] %v1095
    %1160 = vst [vmem:[#allocation3 + $0xf18] sm:$0xff] %v1096
    %1161 = vst [vmem:[#allocation3 + $0xf60] sm:$0xff] %v1097
    %1162 = vst [vmem:[#allocation3 + $0xfa8] sm:$0xff] %v1098
    %1163 = vst [vmem:[#allocation3 + $0xff0] sm:$0xff] %v1099
    %1164 = vst [vmem:[#allocation3 + $0x1038] sm:$0xff] %v1100
    %1165 = vst [vmem:[#allocation3 + $0x1080] sm:$0xff] %v1101
    %1166 = vst [vmem:[#allocation3 + $0x10c8] sm:$0xff] %v1102
    %1167 = vst [vmem:[#allocation3 + $0x1110] sm:$0xff] %v1103
    %1168 = vst [vmem:[#allocation3 + $0x1158] sm:$0xff] %v1104
    %1169 = vst [vmem:[#allocation3 + $0x11a0] sm:$0xff] %v1105
    %1170 = vst [vmem:[#allocation3 + $0x11e8] sm:$0xff] %v1106
    %v1171 = vld [vmem:[%s1042 + $0x1] sm:$0xff]
    %v1172 = vld [vmem:[%s1042 + $0x9] sm:$0xff]
    %v1173 = vld [vmem:[%s1042 + $0x19] sm:$0xff]
    %v1174 = vld [vmem:[%s1042 + $0x21] sm:$0xff]
    %v1175 = vld [vmem:[%s1042 + $0x31] sm:$0xff]
    %v1176 = vld [vmem:[%s1042 + $0x39] sm:$0xff]
    %v1177 = vld [vmem:[%s1042 + $0x49] sm:$0xff]
    %v1178 = vld [vmem:[%s1042 + $0x51] sm:$0xff]
    %v1179 = vld [vmem:[%s1042 + $0x61] sm:$0xff]
    %v1180 = vld [vmem:[%s1042 + $0x69] sm:$0xff]
    %v1181 = vld [vmem:[%s1042 + $0x79] sm:$0xff]
    %v1182 = vld [vmem:[%s1042 + $0x81] sm:$0xff]
    %v1183 = vld [vmem:[%s1042 + $0x91] sm:$0xff]
    %v1184 = vld [vmem:[%s1042 + $0x99] sm:$0xff]
    %v1185 = vld [vmem:[%s1042 + $0xa9] sm:$0xff]
    %v1186 = vld [vmem:[%s1042 + $0xb1] sm:$0xff]
    %v1187 = vld [vmem:[%s1042 + $0xc1] sm:$0xff]
    %v1188 = vld [vmem:[%s1042 + $0xc9] sm:$0xff]
    %v1189 = vld [vmem:[%s1042 + $0xd9] sm:$0xff]
    %v1190 = vld [vmem:[%s1042 + $0xe1] sm:$0xff]
    %v1191 = vld [vmem:[%s1042 + $0xf1] sm:$0xff]
    %v1192 = vld [vmem:[%s1042 + $0xf9] sm:$0xff]
    %v1193 = vld [vmem:[%s1042 + $0x109] sm:$0xff]
    %v1194 = vld [vmem:[%s1042 + $0x111] sm:$0xff]
    %v1195 = vld [vmem:[%s1042 + $0x121] sm:$0xff]
    %v1196 = vld [vmem:[%s1042 + $0x129] sm:$0xff]
    %v1197 = vld [vmem:[%s1042 + $0x139] sm:$0xff]
    %v1198 = vld [vmem:[%s1042 + $0x141] sm:$0xff]
    %v1199 = vld [vmem:[%s1042 + $0x151] sm:$0xff]
    %v1200 = vld [vmem:[%s1042 + $0x159] sm:$0xff]
    %v1201 = vld [vmem:[%s1042 + $0x169] sm:$0xff]
    %v1202 = vld [vmem:[%s1042 + $0x171] sm:$0xff]
    %v1203 = vld [vmem:[%s1042 + $0x1b1] sm:$0xff]
    %v1204 = vld [vmem:[%s1042 + $0x1b9] sm:$0xff]
    %v1205 = vld [vmem:[%s1042 + $0x1c9] sm:$0xff]
    %v1206 = vld [vmem:[%s1042 + $0x1d1] sm:$0xff]
    %v1207 = vld [vmem:[%s1042 + $0x1e1] sm:$0xff]
    %v1208 = vld [vmem:[%s1042 + $0x1e9] sm:$0xff]
    %v1209 = vld [vmem:[%s1042 + $0x1f9] sm:$0xff]
    %v1210 = vld [vmem:[%s1042 + $0x201] sm:$0xff]
    %v1211 = vld [vmem:[%s1042 + $0x211] sm:$0xff]
    %v1212 = vld [vmem:[%s1042 + $0x219] sm:$0xff]
    %v1213 = vld [vmem:[%s1042 + $0x229] sm:$0xff]
    %v1214 = vld [vmem:[%s1042 + $0x231] sm:$0xff]
    %v1215 = vld [vmem:[%s1042 + $0x241] sm:$0xff]
    %v1216 = vld [vmem:[%s1042 + $0x249] sm:$0xff]
    %v1217 = vld [vmem:[%s1042 + $0x259] sm:$0xff]
    %v1218 = vld [vmem:[%s1042 + $0x261] sm:$0xff]
    %v1219 = vld [vmem:[%s1042 + $0x271] sm:$0xff]
    %v1220 = vld [vmem:[%s1042 + $0x279] sm:$0xff]
    %v1221 = vld [vmem:[%s1042 + $0x289] sm:$0xff]
    %v1222 = vld [vmem:[%s1042 + $0x291] sm:$0xff]
    %v1223 = vld [vmem:[%s1042 + $0x2a1] sm:$0xff]
    %v1224 = vld [vmem:[%s1042 + $0x2a9] sm:$0xff]
    %v1225 = vld [vmem:[%s1042 + $0x2b9] sm:$0xff]
    %v1226 = vld [vmem:[%s1042 + $0x2c1] sm:$0xff]
    %v1227 = vld [vmem:[%s1042 + $0x2d1] sm:$0xff]
    %v1228 = vld [vmem:[%s1042 + $0x2d9] sm:$0xff]
    %v1229 = vld [vmem:[%s1042 + $0x2e9] sm:$0xff]
    %v1230 = vld [vmem:[%s1042 + $0x2f1] sm:$0xff]
    %v1231 = vld [vmem:[%s1042 + $0x301] sm:$0xff]
    %v1232 = vld [vmem:[%s1042 + $0x309] sm:$0xff]
    %v1233 = vld [vmem:[%s1042 + $0x319] sm:$0xff]
    %v1234 = vld [vmem:[%s1042 + $0x321] sm:$0xff]
    %1235 = vst [vmem:[#allocation3 + $0x38] sm:$0xff] %v1171
    %1236 = vst [vmem:[#allocation3 + $0x80] sm:$0xff] %v1172
    %1237 = vst [vmem:[#allocation3 + $0xc8] sm:$0xff] %v1173
    %1238 = vst [vmem:[#allocation3 + $0x110] sm:$0xff] %v1174
    %1239 = vst [vmem:[#allocation3 + $0x158] sm:$0xff] %v1175
    %1240 = vst [vmem:[#allocation3 + $0x1a0] sm:$0xff] %v1176
    %1241 = vst [vmem:[#allocation3 + $0x1e8] sm:$0xff] %v1177
    %1242 = vst [vmem:[#allocation3 + $0x230] sm:$0xff] %v1178
    %1243 = vst [vmem:[#allocation3 + $0x278] sm:$0xff] %v1179
    %1244 = vst [vmem:[#allocation3 + $0x2c0] sm:$0xff] %v1180
    %1245 = vst [vmem:[#allocation3 + $0x308] sm:$0xff] %v1181
    %1246 = vst [vmem:[#allocation3 + $0x350] sm:$0xff] %v1182
    %1247 = vst [vmem:[#allocation3 + $0x398] sm:$0xff] %v1183
    %1248 = vst [vmem:[#allocation3 + $0x3e0] sm:$0xff] %v1184
    %1249 = vst [vmem:[#allocation3 + $0x428] sm:$0xff] %v1185
    %1250 = vst [vmem:[#allocation3 + $0x470] sm:$0xff] %v1186
    %1251 = vst [vmem:[#allocation3 + $0x4b8] sm:$0xff] %v1187
    %1252 = vst [vmem:[#allocation3 + $0x500] sm:$0xff] %v1188
    %1253 = vst [vmem:[#allocation3 + $0x548] sm:$0xff] %v1189
    %1254 = vst [vmem:[#allocation3 + $0x590] sm:$0xff] %v1190
    %1255 = vst [vmem:[#allocation3 + $0x5d8] sm:$0xff] %v1191
    %1256 = vst [vmem:[#allocation3 + $0x620] sm:$0xff] %v1192
    %1257 = vst [vmem:[#allocation3 + $0x668] sm:$0xff] %v1193
    %1258 = vst [vmem:[#allocation3 + $0x6b0] sm:$0xff] %v1194
    %1259 = vst [vmem:[#allocation3 + $0x6f8] sm:$0xff] %v1195
    %1260 = vst [vmem:[#allocation3 + $0x740] sm:$0xff] %v1196
    %1261 = vst [vmem:[#allocation3 + $0x788] sm:$0xff] %v1197
    %1262 = vst [vmem:[#allocation3 + $0x7d0] sm:$0xff] %v1198
    %1263 = vst [vmem:[#allocation3 + $0x818] sm:$0xff] %v1199
    %1264 = vst [vmem:[#allocation3 + $0x860] sm:$0xff] %v1200
    %1265 = vst [vmem:[#allocation3 + $0x8a8] sm:$0xff] %v1201
    %1266 = vst [vmem:[#allocation3 + $0x8f0] sm:$0xff] %v1202
    %1267 = vst [vmem:[#allocation3 + $0x938] sm:$0xff] %v1203
    %1268 = vst [vmem:[#allocation3 + $0x980] sm:$0xff] %v1204
    %1269 = vst [vmem:[#allocation3 + $0x9c8] sm:$0xff] %v1205
    %1270 = vst [vmem:[#allocation3 + $0xa10] sm:$0xff] %v1206
    %1271 = vst [vmem:[#allocation3 + $0xa58] sm:$0xff] %v1207
    %1272 = vst [vmem:[#allocation3 + $0xaa0] sm:$0xff] %v1208
    %1273 = vst [vmem:[#allocation3 + $0xae8] sm:$0xff] %v1209
    %1274 = vst [vmem:[#allocation3 + $0xb30] sm:$0xff] %v1210
    %1275 = vst [vmem:[#allocation3 + $0xb78] sm:$0xff] %v1211
    %1276 = vst [vmem:[#allocation3 + $0xbc0] sm:$0xff] %v1212
    %1277 = vst [vmem:[#allocation3 + $0xc08] sm:$0xff] %v1213
    %1278 = vst [vmem:[#allocation3 + $0xc50] sm:$0xff] %v1214
    %1279 = vst [vmem:[#allocation3 + $0xc98] sm:$0xff] %v1215
    %1280 = vst [vmem:[#allocation3 + $0xce0] sm:$0xff] %v1216
    %1281 = vst [vmem:[#allocation3 + $0xd28] sm:$0xff] %v1217
    %1282 = vst [vmem:[#allocation3 + $0xd70] sm:$0xff] %v1218
    %1283 = vst [vmem:[#allocation3 + $0xdb8] sm:$0xff] %v1219
    %1284 = vst [vmem:[#allocation3 + $0xe00] sm:$0xff] %v1220
    %1285 = vst [vmem:[#allocation3 + $0xe48] sm:$0xff] %v1221
    %1286 = vst [vmem:[#allocation3 + $0xe90] sm:$0xff] %v1222
    %1287 = vst [vmem:[#allocation3 + $0xed8] sm:$0xff] %v1223
    %1288 = vst [vmem:[#allocation3 + $0xf20] sm:$0xff] %v1224
    %1289 = vst [vmem:[#allocation3 + $0xf68] sm:$0xff] %v1225
    %1290 = vst [vmem:[#allocation3 + $0xfb0] sm:$0xff] %v1226
    %1291 = vst [vmem:[#allocation3 + $0xff8] sm:$0xff] %v1227
    %1292 = vst [vmem:[#allocation3 + $0x1040] sm:$0xff] %v1228
    %1293 = vst [vmem:[#allocation3 + $0x1088] sm:$0xff] %v1229
    %1294 = vst [vmem:[#allocation3 + $0x10d0] sm:$0xff] %v1230
    %1295 = vst [vmem:[#allocation3 + $0x1118] sm:$0xff] %v1231
    %1296 = vst [vmem:[#allocation3 + $0x1160] sm:$0xff] %v1232
    %1297 = vst [vmem:[#allocation3 + $0x11a8] sm:$0xff] %v1233
    %1298 = vst [vmem:[#allocation3 + $0x11f0] sm:$0xff] %v1234
    %v1299 = vld [vmem:[%s1042 + $0x2] sm:$0xff]
    %v1300 = vld [vmem:[%s1042 + $0xa] sm:$0xff]
    %v1301 = vld [vmem:[%s1042 + $0x1a] sm:$0xff]
    %v1302 = vld [vmem:[%s1042 + $0x22] sm:$0xff]
    %v1303 = vld [vmem:[%s1042 + $0x32] sm:$0xff]
    %v1304 = vld [vmem:[%s1042 + $0x3a] sm:$0xff]
    %v1305 = vld [vmem:[%s1042 + $0x4a] sm:$0xff]
    %v1306 = vld [vmem:[%s1042 + $0x52] sm:$0xff]
    %v1307 = vld [vmem:[%s1042 + $0x62] sm:$0xff]
    %v1308 = vld [vmem:[%s1042 + $0x6a] sm:$0xff]
    %v1309 = vld [vmem:[%s1042 + $0x7a] sm:$0xff]
    %v1310 = vld [vmem:[%s1042 + $0x82] sm:$0xff]
    %v1311 = vld [vmem:[%s1042 + $0x92] sm:$0xff]
    %v1312 = vld [vmem:[%s1042 + $0x9a] sm:$0xff]
    %v1313 = vld [vmem:[%s1042 + $0xaa] sm:$0xff]
    %v1314 = vld [vmem:[%s1042 + $0xb2] sm:$0xff]
    %v1315 = vld [vmem:[%s1042 + $0xc2] sm:$0xff]
    %v1316 = vld [vmem:[%s1042 + $0xca] sm:$0xff]
    %v1317 = vld [vmem:[%s1042 + $0xda] sm:$0xff]
    %v1318 = vld [vmem:[%s1042 + $0xe2] sm:$0xff]
    %v1319 = vld [vmem:[%s1042 + $0xf2] sm:$0xff]
    %v1320 = vld [vmem:[%s1042 + $0xfa] sm:$0xff]
    %v1321 = vld [vmem:[%s1042 + $0x10a] sm:$0xff]
    %v1322 = vld [vmem:[%s1042 + $0x112] sm:$0xff]
    %v1323 = vld [vmem:[%s1042 + $0x122] sm:$0xff]
    %v1324 = vld [vmem:[%s1042 + $0x12a] sm:$0xff]
    %v1325 = vld [vmem:[%s1042 + $0x13a] sm:$0xff]
    %v1326 = vld [vmem:[%s1042 + $0x142] sm:$0xff]
    %v1327 = vld [vmem:[%s1042 + $0x152] sm:$0xff]
    %v1328 = vld [vmem:[%s1042 + $0x15a] sm:$0xff]
    %v1329 = vld [vmem:[%s1042 + $0x16a] sm:$0xff]
    %v1330 = vld [vmem:[%s1042 + $0x172] sm:$0xff]
    %v1331 = vld [vmem:[%s1042 + $0x1b2] sm:$0xff]
    %v1332 = vld [vmem:[%s1042 + $0x1ba] sm:$0xff]
    %v1333 = vld [vmem:[%s1042 + $0x1ca] sm:$0xff]
    %v1334 = vld [vmem:[%s1042 + $0x1d2] sm:$0xff]
    %v1335 = vld [vmem:[%s1042 + $0x1e2] sm:$0xff]
    %v1336 = vld [vmem:[%s1042 + $0x1ea] sm:$0xff]
    %v1337 = vld [vmem:[%s1042 + $0x1fa] sm:$0xff]
    %v1338 = vld [vmem:[%s1042 + $0x202] sm:$0xff]
    %v1339 = vld [vmem:[%s1042 + $0x212] sm:$0xff]
    %v1340 = vld [vmem:[%s1042 + $0x21a] sm:$0xff]
    %v1341 = vld [vmem:[%s1042 + $0x22a] sm:$0xff]
    %v1342 = vld [vmem:[%s1042 + $0x232] sm:$0xff]
    %v1343 = vld [vmem:[%s1042 + $0x242] sm:$0xff]
    %v1344 = vld [vmem:[%s1042 + $0x24a] sm:$0xff]
    %v1345 = vld [vmem:[%s1042 + $0x25a] sm:$0xff]
    %v1346 = vld [vmem:[%s1042 + $0x262] sm:$0xff]
    %v1347 = vld [vmem:[%s1042 + $0x272] sm:$0xff]
    %v1348 = vld [vmem:[%s1042 + $0x27a] sm:$0xff]
    %v1349 = vld [vmem:[%s1042 + $0x28a] sm:$0xff]
    %v1350 = vld [vmem:[%s1042 + $0x292] sm:$0xff]
    %v1351 = vld [vmem:[%s1042 + $0x2a2] sm:$0xff]
    %v1352 = vld [vmem:[%s1042 + $0x2aa] sm:$0xff]
    %v1353 = vld [vmem:[%s1042 + $0x2ba] sm:$0xff]
    %v1354 = vld [vmem:[%s1042 + $0x2c2] sm:$0xff]
    %v1355 = vld [vmem:[%s1042 + $0x2d2] sm:$0xff]
    %v1356 = vld [vmem:[%s1042 + $0x2da] sm:$0xff]
    %v1357 = vld [vmem:[%s1042 + $0x2ea] sm:$0xff]
    %v1358 = vld [vmem:[%s1042 + $0x2f2] sm:$0xff]
    %v1359 = vld [vmem:[%s1042 + $0x302] sm:$0xff]
    %v1360 = vld [vmem:[%s1042 + $0x30a] sm:$0xff]
    %v1361 = vld [vmem:[%s1042 + $0x31a] sm:$0xff]
    %v1362 = vld [vmem:[%s1042 + $0x322] sm:$0xff]
    %1363 = vst [vmem:[#allocation3 + $0x40] sm:$0xff] %v1299
    %1364 = vst [vmem:[#allocation3 + $0x88] sm:$0xff] %v1300
    %1365 = vst [vmem:[#allocation3 + $0xd0] sm:$0xff] %v1301
    %1366 = vst [vmem:[#allocation3 + $0x118] sm:$0xff] %v1302
    %1367 = vst [vmem:[#allocation3 + $0x160] sm:$0xff] %v1303
    %1368 = vst [vmem:[#allocation3 + $0x1a8] sm:$0xff] %v1304
    %1369 = vst [vmem:[#allocation3 + $0x1f0] sm:$0xff] %v1305
    %1370 = vst [vmem:[#allocation3 + $0x238] sm:$0xff] %v1306
    %1371 = vst [vmem:[#allocation3 + $0x280] sm:$0xff] %v1307
    %1372 = vst [vmem:[#allocation3 + $0x2c8] sm:$0xff] %v1308
    %1373 = vst [vmem:[#allocation3 + $0x310] sm:$0xff] %v1309
    %1374 = vst [vmem:[#allocation3 + $0x358] sm:$0xff] %v1310
    %1375 = vst [vmem:[#allocation3 + $0x3a0] sm:$0xff] %v1311
    %1376 = vst [vmem:[#allocation3 + $0x3e8] sm:$0xff] %v1312
    %1377 = vst [vmem:[#allocation3 + $0x430] sm:$0xff] %v1313
    %1378 = vst [vmem:[#allocation3 + $0x478] sm:$0xff] %v1314
    %1379 = vst [vmem:[#allocation3 + $0x4c0] sm:$0xff] %v1315
    %1380 = vst [vmem:[#allocation3 + $0x508] sm:$0xff] %v1316
    %1381 = vst [vmem:[#allocation3 + $0x550] sm:$0xff] %v1317
    %1382 = vst [vmem:[#allocation3 + $0x598] sm:$0xff] %v1318
    %1383 = vst [vmem:[#allocation3 + $0x5e0] sm:$0xff] %v1319
    %1384 = vst [vmem:[#allocation3 + $0x628] sm:$0xff] %v1320
    %1385 = vst [vmem:[#allocation3 + $0x670] sm:$0xff] %v1321
    %1386 = vst [vmem:[#allocation3 + $0x6b8] sm:$0xff] %v1322
    %1387 = vst [vmem:[#allocation3 + $0x700] sm:$0xff] %v1323
    %1388 = vst [vmem:[#allocation3 + $0x748] sm:$0xff] %v1324
    %1389 = vst [vmem:[#allocation3 + $0x790] sm:$0xff] %v1325
    %1390 = vst [vmem:[#allocation3 + $0x7d8] sm:$0xff] %v1326
    %1391 = vst [vmem:[#allocation3 + $0x820] sm:$0xff] %v1327
    %1392 = vst [vmem:[#allocation3 + $0x868] sm:$0xff] %v1328
    %1393 = vst [vmem:[#allocation3 + $0x8b0] sm:$0xff] %v1329
    %1394 = vst [vmem:[#allocation3 + $0x8f8] sm:$0xff] %v1330
    %1395 = vst [vmem:[#allocation3 + $0x940] sm:$0xff] %v1331
    %1396 = vst [vmem:[#allocation3 + $0x988] sm:$0xff] %v1332
    %1397 = vst [vmem:[#allocation3 + $0x9d0] sm:$0xff] %v1333
    %1398 = vst [vmem:[#allocation3 + $0xa18] sm:$0xff] %v1334
    %1399 = vst [vmem:[#allocation3 + $0xa60] sm:$0xff] %v1335
    %1400 = vst [vmem:[#allocation3 + $0xaa8] sm:$0xff] %v1336
    %1401 = vst [vmem:[#allocation3 + $0xaf0] sm:$0xff] %v1337
    %1402 = vst [vmem:[#allocation3 + $0xb38] sm:$0xff] %v1338
    %1403 = vst [vmem:[#allocation3 + $0xb80] sm:$0xff] %v1339
    %1404 = vst [vmem:[#allocation3 + $0xbc8] sm:$0xff] %v1340
    %1405 = vst [vmem:[#allocation3 + $0xc10] sm:$0xff] %v1341
    %1406 = vst [vmem:[#allocation3 + $0xc58] sm:$0xff] %v1342
    %1407 = vst [vmem:[#allocation3 + $0xca0] sm:$0xff] %v1343
    %1408 = vst [vmem:[#allocation3 + $0xce8] sm:$0xff] %v1344
    %1409 = vst [vmem:[#allocation3 + $0xd30] sm:$0xff] %v1345
    %1410 = vst [vmem:[#allocation3 + $0xd78] sm:$0xff] %v1346
    %1411 = vst [vmem:[#allocation3 + $0xdc0] sm:$0xff] %v1347
    %1412 = vst [vmem:[#allocation3 + $0xe08] sm:$0xff] %v1348
    %1413 = vst [vmem:[#allocation3 + $0xe50] sm:$0xff] %v1349
    %1414 = vst [vmem:[#allocation3 + $0xe98] sm:$0xff] %v1350
    %1415 = vst [vmem:[#allocation3 + $0xee0] sm:$0xff] %v1351
    %1416 = vst [vmem:[#allocation3 + $0xf28] sm:$0xff] %v1352
    %1417 = vst [vmem:[#allocation3 + $0xf70] sm:$0xff] %v1353
    %1418 = vst [vmem:[#allocation3 + $0xfb8] sm:$0xff] %v1354
    %1419 = vst [vmem:[#allocation3 + $0x1000] sm:$0xff] %v1355
    %1420 = vst [vmem:[#allocation3 + $0x1048] sm:$0xff] %v1356
    %1421 = vst [vmem:[#allocation3 + $0x1090] sm:$0xff] %v1357
    %1422 = vst [vmem:[#allocation3 + $0x10d8] sm:$0xff] %v1358
    %1423 = vst [vmem:[#allocation3 + $0x1120] sm:$0xff] %v1359
    %1424 = vst [vmem:[#allocation3 + $0x1168] sm:$0xff] %v1360
    %1425 = vst [vmem:[#allocation3 + $0x11b0] sm:$0xff] %v1361
    %1426 = vst [vmem:[#allocation3 + $0x11f8] sm:$0xff] %v1362
    %v1427 = vld [vmem:[#allocation3] sm:$0xff]
    %v1428 = vld [vmem:[#allocation3 + $0x8] sm:$0xff]
    %v1429 = vld [vmem:[#allocation3 + $0x10] sm:$0xff]
    %v1430 = vld [vmem:[#allocation3 + $0x18] sm:$0xff]
    %v1431 = vld [vmem:[#allocation3 + $0x20] sm:$0xff]
    %v1432 = vld [vmem:[#allocation3 + $0x28] sm:$0xff]
    %v1433 = vld [vmem:[#allocation3 + $0x30] sm:$0xff]
    %v1434 = vld [vmem:[#allocation3 + $0x38] sm:$0xff]
    %v1435 = vld [vmem:[#allocation3 + $0x40] sm:$0xff]
    %v1436 = vld [vmem:[#allocation3 + $0x48] sm:$0xff]
    %v1437 = vld [vmem:[#allocation3 + $0x50] sm:$0xff]
    %v1438 = vld [vmem:[#allocation3 + $0x58] sm:$0xff]
    %v1439 = vld [vmem:[#allocation3 + $0x60] sm:$0xff]
    %v1440 = vld [vmem:[#allocation3 + $0x68] sm:$0xff]
    %v1441 = vld [vmem:[#allocation3 + $0x70] sm:$0xff]
    %v1442 = vld [vmem:[#allocation3 + $0x78] sm:$0xff]
    %v1443 = vld [vmem:[#allocation3 + $0x80] sm:$0xff]
    %v1444 = vld [vmem:[#allocation3 + $0x88] sm:$0xff]
    %v1445 = vld [vmem:[#allocation3 + $0x90] sm:$0xff]
    %v1446 = vld [vmem:[#allocation3 + $0x98] sm:$0xff]
    %v1447 = vld [vmem:[#allocation3 + $0xa0] sm:$0xff]
    %v1448 = vld [vmem:[#allocation3 + $0xa8] sm:$0xff]
    %v1449 = vld [vmem:[#allocation3 + $0xb0] sm:$0xff]
    %v1450 = vld [vmem:[#allocation3 + $0xb8] sm:$0xff]
    %v1451 = vld [vmem:[#allocation3 + $0xc0] sm:$0xff]
    %v1452 = vld [vmem:[#allocation3 + $0xc8] sm:$0xff]
    %v1453 = vld [vmem:[#allocation3 + $0xd0] sm:$0xff]
    %v1454 = vld [vmem:[#allocation3 + $0xd8] sm:$0xff]
    %v1455 = vld [vmem:[#allocation3 + $0xe0] sm:$0xff]
    %v1456 = vld [vmem:[#allocation3 + $0xe8] sm:$0xff]
    %v1457 = vld [vmem:[#allocation3 + $0xf0] sm:$0xff]
    %v1458 = vld [vmem:[#allocation3 + $0xf8] sm:$0xff]
    %v1459 = vld [vmem:[#allocation3 + $0x100] sm:$0xff]
    %v1460 = vld [vmem:[#allocation3 + $0x108] sm:$0xff]
    %v1461 = vld [vmem:[#allocation3 + $0x110] sm:$0xff]
    %v1462 = vld [vmem:[#allocation3 + $0x118] sm:$0xff]
    %v1463 = vld [vmem:[#allocation3 + $0x120] sm:$0xff]
    %v1464 = vld [vmem:[#allocation3 + $0x128] sm:$0xff]
    %v1465 = vld [vmem:[#allocation3 + $0x130] sm:$0xff]
    %v1466 = vld [vmem:[#allocation3 + $0x138] sm:$0xff]
    %v1467 = vld [vmem:[#allocation3 + $0x140] sm:$0xff]
    %v1468 = vld [vmem:[#allocation3 + $0x148] sm:$0xff]
    %v1469 = vld [vmem:[#allocation3 + $0x150] sm:$0xff]
    %v1470 = vld [vmem:[#allocation3 + $0x158] sm:$0xff]
    %v1471 = vld [vmem:[#allocation3 + $0x160] sm:$0xff]
    %v1472 = vld [vmem:[#allocation3 + $0x168] sm:$0xff]
    %v1473 = vld [vmem:[#allocation3 + $0x170] sm:$0xff]
    %v1474 = vld [vmem:[#allocation3 + $0x178] sm:$0xff]
    %v1475 = vld [vmem:[#allocation3 + $0x180] sm:$0xff]
    %v1476 = vld [vmem:[#allocation3 + $0x188] sm:$0xff]
    %v1477 = vld [vmem:[#allocation3 + $0x190] sm:$0xff]
    %v1478 = vld [vmem:[#allocation3 + $0x198] sm:$0xff]
    %v1479 = vld [vmem:[#allocation3 + $0x1a0] sm:$0xff]
    %v1480 = vld [vmem:[#allocation3 + $0x1a8] sm:$0xff]
    %v1481 = vld [vmem:[#allocation3 + $0x1b0] sm:$0xff]
    %v1482 = vld [vmem:[#allocation3 + $0x1b8] sm:$0xff]
    %v1483 = vld [vmem:[#allocation3 + $0x1c0] sm:$0xff]
    %v1484 = vld [vmem:[#allocation3 + $0x1c8] sm:$0xff]
    %v1485 = vld [vmem:[#allocation3 + $0x1d0] sm:$0xff]
    %v1486 = vld [vmem:[#allocation3 + $0x1d8] sm:$0xff]
    %v1487 = vld [vmem:[#allocation3 + $0x1e0] sm:$0xff]
    %v1488 = vld [vmem:[#allocation3 + $0x1e8] sm:$0xff]
    %v1489 = vld [vmem:[#allocation3 + $0x1f0] sm:$0xff]
    %v1490 = vld [vmem:[#allocation3 + $0x1f8] sm:$0xff]
    %v1491 = vld [vmem:[#allocation3 + $0x200] sm:$0xff]
    %v1492 = vld [vmem:[#allocation3 + $0x208] sm:$0xff]
    %v1493 = vld [vmem:[#allocation3 + $0x210] sm:$0xff]
    %v1494 = vld [vmem:[#allocation3 + $0x218] sm:$0xff]
    %v1495 = vld [vmem:[#allocation3 + $0x220] sm:$0xff]
    %v1496 = vld [vmem:[#allocation3 + $0x228] sm:$0xff]
    %v1497 = vld [vmem:[#allocation3 + $0x230] sm:$0xff]
    %v1498 = vld [vmem:[#allocation3 + $0x238] sm:$0xff]
    %v1499 = vld [vmem:[#allocation3 + $0x240] sm:$0xff]
    %v1500 = vld [vmem:[#allocation3 + $0x248] sm:$0xff]
    %v1501 = vld [vmem:[#allocation3 + $0x250] sm:$0xff]
    %v1502 = vld [vmem:[#allocation3 + $0x258] sm:$0xff]
    %v1503 = vld [vmem:[#allocation3 + $0x260] sm:$0xff]
    %v1504 = vld [vmem:[#allocation3 + $0x268] sm:$0xff]
    %v1505 = vld [vmem:[#allocation3 + $0x270] sm:$0xff]
    %v1506 = vld [vmem:[#allocation3 + $0x278] sm:$0xff]
    %v1507 = vld [vmem:[#allocation3 + $0x280] sm:$0xff]
    %v1508 = vld [vmem:[#allocation3 + $0x288] sm:$0xff]
    %v1509 = vld [vmem:[#allocation3 + $0x290] sm:$0xff]
    %v1510 = vld [vmem:[#allocation3 + $0x298] sm:$0xff]
    %v1511 = vld [vmem:[#allocation3 + $0x2a0] sm:$0xff]
    %v1512 = vld [vmem:[#allocation3 + $0x2a8] sm:$0xff]
    %v1513 = vld [vmem:[#allocation3 + $0x2b0] sm:$0xff]
    %v1514 = vld [vmem:[#allocation3 + $0x2b8] sm:$0xff]
    %v1515 = vld [vmem:[#allocation3 + $0x2c0] sm:$0xff]
    %v1516 = vld [vmem:[#allocation3 + $0x2c8] sm:$0xff]
    %v1517 = vld [vmem:[#allocation3 + $0x2d0] sm:$0xff]
    %v1518 = vld [vmem:[#allocation3 + $0x2d8] sm:$0xff]
    %v1519 = vld [vmem:[#allocation3 + $0x2e0] sm:$0xff]
    %v1520 = vld [vmem:[#allocation3 + $0x2e8] sm:$0xff]
    %v1521 = vld [vmem:[#allocation3 + $0x2f0] sm:$0xff]
    %v1522 = vld [vmem:[#allocation3 + $0x2f8] sm:$0xff]
    %v1523 = vld [vmem:[#allocation3 + $0x300] sm:$0xff]
    %v1524 = vld [vmem:[#allocation3 + $0x308] sm:$0xff]
    %v1525 = vld [vmem:[#allocation3 + $0x310] sm:$0xff]
    %v1526 = vld [vmem:[#allocation3 + $0x318] sm:$0xff]
    %v1527 = vld [vmem:[#allocation3 + $0x320] sm:$0xff]
    %v1528 = vld [vmem:[#allocation3 + $0x328] sm:$0xff]
    %v1529 = vld [vmem:[#allocation3 + $0x330] sm:$0xff]
    %v1530 = vld [vmem:[#allocation3 + $0x338] sm:$0xff]
    %v1531 = vld [vmem:[#allocation3 + $0x340] sm:$0xff]
    %v1532 = vld [vmem:[#allocation3 + $0x348] sm:$0xff]
    %v1533 = vld [vmem:[#allocation3 + $0x350] sm:$0xff]
    %v1534 = vld [vmem:[#allocation3 + $0x358] sm:$0xff]
    %v1535 = vld [vmem:[#allocation3 + $0x360] sm:$0xff]
    %v1536 = vld [vmem:[#allocation3 + $0x368] sm:$0xff]
    %v1537 = vld [vmem:[#allocation3 + $0x370] sm:$0xff]
    %v1538 = vld [vmem:[#allocation3 + $0x378] sm:$0xff]
    %v1539 = vld [vmem:[#allocation3 + $0x380] sm:$0xff]
    %v1540 = vld [vmem:[#allocation3 + $0x388] sm:$0xff]
    %v1541 = vld [vmem:[#allocation3 + $0x390] sm:$0xff]
    %v1542 = vld [vmem:[#allocation3 + $0x398] sm:$0xff]
    %v1543 = vld [vmem:[#allocation3 + $0x3a0] sm:$0xff]
    %v1544 = vld [vmem:[#allocation3 + $0x3a8] sm:$0xff]
    %v1545 = vld [vmem:[#allocation3 + $0x3b0] sm:$0xff]
    %v1546 = vld [vmem:[#allocation3 + $0x3b8] sm:$0xff]
    %v1547 = vld [vmem:[#allocation3 + $0x3c0] sm:$0xff]
    %v1548 = vld [vmem:[#allocation3 + $0x3c8] sm:$0xff]
    %v1549 = vld [vmem:[#allocation3 + $0x3d0] sm:$0xff]
    %v1550 = vld [vmem:[#allocation3 + $0x3d8] sm:$0xff]
    %v1551 = vld [vmem:[#allocation3 + $0x3e0] sm:$0xff]
    %v1552 = vld [vmem:[#allocation3 + $0x3e8] sm:$0xff]
    %v1553 = vld [vmem:[#allocation3 + $0x3f0] sm:$0xff]
    %v1554 = vld [vmem:[#allocation3 + $0x3f8] sm:$0xff]
    %v1555 = vld [vmem:[#allocation3 + $0x400] sm:$0xff]
    %v1556 = vld [vmem:[#allocation3 + $0x408] sm:$0xff]
    %v1557 = vld [vmem:[#allocation3 + $0x410] sm:$0xff]
    %v1558 = vld [vmem:[#allocation3 + $0x418] sm:$0xff]
    %v1559 = vld [vmem:[#allocation3 + $0x420] sm:$0xff]
    %v1560 = vld [vmem:[#allocation3 + $0x428] sm:$0xff]
    %v1561 = vld [vmem:[#allocation3 + $0x430] sm:$0xff]
    %v1562 = vld [vmem:[#allocation3 + $0x438] sm:$0xff]
    %v1563 = vld [vmem:[#allocation3 + $0x440] sm:$0xff]
    %v1564 = vld [vmem:[#allocation3 + $0x448] sm:$0xff]
    %v1565 = vld [vmem:[#allocation3 + $0x450] sm:$0xff]
    %v1566 = vld [vmem:[#allocation3 + $0x458] sm:$0xff]
    %v1567 = vld [vmem:[#allocation3 + $0x460] sm:$0xff]
    %v1568 = vld [vmem:[#allocation3 + $0x468] sm:$0xff]
    %v1569 = vld [vmem:[#allocation3 + $0x470] sm:$0xff]
    %v1570 = vld [vmem:[#allocation3 + $0x478] sm:$0xff]
    %v1571 = vld [vmem:[#allocation3 + $0x480] sm:$0xff]
    %v1572 = vld [vmem:[#allocation3 + $0x488] sm:$0xff]
    %v1573 = vld [vmem:[#allocation3 + $0x490] sm:$0xff]
    %v1574 = vld [vmem:[#allocation3 + $0x498] sm:$0xff]
    %v1575 = vld [vmem:[#allocation3 + $0x4a0] sm:$0xff]
    %v1576 = vld [vmem:[#allocation3 + $0x4a8] sm:$0xff]
    %v1577 = vld [vmem:[#allocation3 + $0x4b0] sm:$0xff]
    %v1578 = vld [vmem:[#allocation3 + $0x4b8] sm:$0xff]
    %v1579 = vld [vmem:[#allocation3 + $0x4c0] sm:$0xff]
    %v1580 = vld [vmem:[#allocation3 + $0x4c8] sm:$0xff]
    %v1581 = vld [vmem:[#allocation3 + $0x4d0] sm:$0xff]
    %v1582 = vld [vmem:[#allocation3 + $0x4d8] sm:$0xff]
    %v1583 = vld [vmem:[#allocation3 + $0x4e0] sm:$0xff]
    %v1584 = vld [vmem:[#allocation3 + $0x4e8] sm:$0xff]
    %v1585 = vld [vmem:[#allocation3 + $0x4f0] sm:$0xff]
    %v1586 = vld [vmem:[#allocation3 + $0x4f8] sm:$0xff]
    %v1587 = vld [vmem:[#allocation3 + $0x500] sm:$0xff]
    %v1588 = vld [vmem:[#allocation3 + $0x508] sm:$0xff]
    %v1589 = vld [vmem:[#allocation3 + $0x510] sm:$0xff]
    %v1590 = vld [vmem:[#allocation3 + $0x518] sm:$0xff]
    %v1591 = vld [vmem:[#allocation3 + $0x520] sm:$0xff]
    %v1592 = vld [vmem:[#allocation3 + $0x528] sm:$0xff]
    %v1593 = vld [vmem:[#allocation3 + $0x530] sm:$0xff]
    %v1594 = vld [vmem:[#allocation3 + $0x538] sm:$0xff]
    %v1595 = vld [vmem:[#allocation3 + $0x540] sm:$0xff]
    %v1596 = vld [vmem:[#allocation3 + $0x548] sm:$0xff]
    %v1597 = vld [vmem:[#allocation3 + $0x550] sm:$0xff]
    %v1598 = vld [vmem:[#allocation3 + $0x558] sm:$0xff]
    %v1599 = vld [vmem:[#allocation3 + $0x560] sm:$0xff]
    %v1600 = vld [vmem:[#allocation3 + $0x568] sm:$0xff]
    %v1601 = vld [vmem:[#allocation3 + $0x570] sm:$0xff]
    %v1602 = vld [vmem:[#allocation3 + $0x578] sm:$0xff]
    %v1603 = vld [vmem:[#allocation3 + $0x580] sm:$0xff]
    %v1604 = vld [vmem:[#allocation3 + $0x588] sm:$0xff]
    %v1605 = vld [vmem:[#allocation3 + $0x590] sm:$0xff]
    %v1606 = vld [vmem:[#allocation3 + $0x598] sm:$0xff]
    %v1607 = vld [vmem:[#allocation3 + $0x5a0] sm:$0xff]
    %v1608 = vld [vmem:[#allocation3 + $0x5a8] sm:$0xff]
    %v1609 = vld [vmem:[#allocation3 + $0x5b0] sm:$0xff]
    %v1610 = vld [vmem:[#allocation3 + $0x5b8] sm:$0xff]
    %v1611 = vld [vmem:[#allocation3 + $0x5c0] sm:$0xff]
    %v1612 = vld [vmem:[#allocation3 + $0x5c8] sm:$0xff]
    %v1613 = vld [vmem:[#allocation3 + $0x5d0] sm:$0xff]
    %v1614 = vld [vmem:[#allocation3 + $0x5d8] sm:$0xff]
    %v1615 = vld [vmem:[#allocation3 + $0x5e0] sm:$0xff]
    %v1616 = vld [vmem:[#allocation3 + $0x5e8] sm:$0xff]
    %v1617 = vld [vmem:[#allocation3 + $0x5f0] sm:$0xff]
    %v1618 = vld [vmem:[#allocation3 + $0x5f8] sm:$0xff]
    %v1619 = vld [vmem:[#allocation3 + $0x600] sm:$0xff]
    %v1620 = vld [vmem:[#allocation3 + $0x608] sm:$0xff]
    %v1621 = vld [vmem:[#allocation3 + $0x610] sm:$0xff]
    %v1622 = vld [vmem:[#allocation3 + $0x618] sm:$0xff]
    %v1623 = vld [vmem:[#allocation3 + $0x620] sm:$0xff]
    %v1624 = vld [vmem:[#allocation3 + $0x628] sm:$0xff]
    %v1625 = vld [vmem:[#allocation3 + $0x630] sm:$0xff]
    %v1626 = vld [vmem:[#allocation3 + $0x638] sm:$0xff]
    %v1627 = vld [vmem:[#allocation3 + $0x640] sm:$0xff]
    %v1628 = vld [vmem:[#allocation3 + $0x648] sm:$0xff]
    %v1629 = vld [vmem:[#allocation3 + $0x650] sm:$0xff]
    %v1630 = vld [vmem:[#allocation3 + $0x658] sm:$0xff]
    %v1631 = vld [vmem:[#allocation3 + $0x660] sm:$0xff]
    %v1632 = vld [vmem:[#allocation3 + $0x668] sm:$0xff]
    %v1633 = vld [vmem:[#allocation3 + $0x670] sm:$0xff]
    %v1634 = vld [vmem:[#allocation3 + $0x678] sm:$0xff]
    %v1635 = vld [vmem:[#allocation3 + $0x680] sm:$0xff]
    %v1636 = vld [vmem:[#allocation3 + $0x688] sm:$0xff]
    %v1637 = vld [vmem:[#allocation3 + $0x690] sm:$0xff]
    %v1638 = vld [vmem:[#allocation3 + $0x698] sm:$0xff]
    %v1639 = vld [vmem:[#allocation3 + $0x6a0] sm:$0xff]
    %v1640 = vld [vmem:[#allocation3 + $0x6a8] sm:$0xff]
    %v1641 = vld [vmem:[#allocation3 + $0x6b0] sm:$0xff]
    %v1642 = vld [vmem:[#allocation3 + $0x6b8] sm:$0xff]
    %v1643 = vld [vmem:[#allocation3 + $0x6c0] sm:$0xff]
    %v1644 = vld [vmem:[#allocation3 + $0x6c8] sm:$0xff]
    %v1645 = vld [vmem:[#allocation3 + $0x6d0] sm:$0xff]
    %v1646 = vld [vmem:[#allocation3 + $0x6d8] sm:$0xff]
    %v1647 = vld [vmem:[#allocation3 + $0x6e0] sm:$0xff]
    %v1648 = vld [vmem:[#allocation3 + $0x6e8] sm:$0xff]
    %v1649 = vld [vmem:[#allocation3 + $0x6f0] sm:$0xff]
    %v1650 = vld [vmem:[#allocation3 + $0x6f8] sm:$0xff]
    %v1651 = vld [vmem:[#allocation3 + $0x700] sm:$0xff]
    %v1652 = vld [vmem:[#allocation3 + $0x708] sm:$0xff]
    %v1653 = vld [vmem:[#allocation3 + $0x710] sm:$0xff]
    %v1654 = vld [vmem:[#allocation3 + $0x718] sm:$0xff]
    %v1655 = vld [vmem:[#allocation3 + $0x720] sm:$0xff]
    %v1656 = vld [vmem:[#allocation3 + $0x728] sm:$0xff]
    %v1657 = vld [vmem:[#allocation3 + $0x730] sm:$0xff]
    %v1658 = vld [vmem:[#allocation3 + $0x738] sm:$0xff]
    %v1659 = vld [vmem:[#allocation3 + $0x740] sm:$0xff]
    %v1660 = vld [vmem:[#allocation3 + $0x748] sm:$0xff]
    %v1661 = vld [vmem:[#allocation3 + $0x750] sm:$0xff]
    %v1662 = vld [vmem:[#allocation3 + $0x758] sm:$0xff]
    %v1663 = vld [vmem:[#allocation3 + $0x760] sm:$0xff]
    %v1664 = vld [vmem:[#allocation3 + $0x768] sm:$0xff]
    %v1665 = vld [vmem:[#allocation3 + $0x770] sm:$0xff]
    %v1666 = vld [vmem:[#allocation3 + $0x778] sm:$0xff]
    %v1667 = vld [vmem:[#allocation3 + $0x780] sm:$0xff]
    %v1668 = vld [vmem:[#allocation3 + $0x788] sm:$0xff]
    %v1669 = vld [vmem:[#allocation3 + $0x790] sm:$0xff]
    %v1670 = vld [vmem:[#allocation3 + $0x798] sm:$0xff]
    %v1671 = vld [vmem:[#allocation3 + $0x7a0] sm:$0xff]
    %v1672 = vld [vmem:[#allocation3 + $0x7a8] sm:$0xff]
    %v1673 = vld [vmem:[#allocation3 + $0x7b0] sm:$0xff]
    %v1674 = vld [vmem:[#allocation3 + $0x7b8] sm:$0xff]
    %v1675 = vld [vmem:[#allocation3 + $0x7c0] sm:$0xff]
    %v1676 = vld [vmem:[#allocation3 + $0x7c8] sm:$0xff]
    %v1677 = vld [vmem:[#allocation3 + $0x7d0] sm:$0xff]
    %v1678 = vld [vmem:[#allocation3 + $0x7d8] sm:$0xff]
    %v1679 = vld [vmem:[#allocation3 + $0x7e0] sm:$0xff]
    %v1680 = vld [vmem:[#allocation3 + $0x7e8] sm:$0xff]
    %v1681 = vld [vmem:[#allocation3 + $0x7f0] sm:$0xff]
    %v1682 = vld [vmem:[#allocation3 + $0x7f8] sm:$0xff]
    %v1683 = vld [vmem:[#allocation3 + $0x800] sm:$0xff]
    %v1684 = vld [vmem:[#allocation3 + $0x808] sm:$0xff]
    %v1685 = vld [vmem:[#allocation3 + $0x810] sm:$0xff]
    %v1686 = vld [vmem:[#allocation3 + $0x818] sm:$0xff]
    %v1687 = vld [vmem:[#allocation3 + $0x820] sm:$0xff]
    %v1688 = vld [vmem:[#allocation3 + $0x828] sm:$0xff]
    %v1689 = vld [vmem:[#allocation3 + $0x830] sm:$0xff]
    %v1690 = vld [vmem:[#allocation3 + $0x838] sm:$0xff]
    %v1691 = vld [vmem:[#allocation3 + $0x840] sm:$0xff]
    %v1692 = vld [vmem:[#allocation3 + $0x848] sm:$0xff]
    %v1693 = vld [vmem:[#allocation3 + $0x850] sm:$0xff]
    %v1694 = vld [vmem:[#allocation3 + $0x858] sm:$0xff]
    %v1695 = vld [vmem:[#allocation3 + $0x860] sm:$0xff]
    %v1696 = vld [vmem:[#allocation3 + $0x868] sm:$0xff]
    %v1697 = vld [vmem:[#allocation3 + $0x870] sm:$0xff]
    %v1698 = vld [vmem:[#allocation3 + $0x878] sm:$0xff]
    %v1699 = vld [vmem:[#allocation3 + $0x880] sm:$0xff]
    %v1700 = vld [vmem:[#allocation3 + $0x888] sm:$0xff]
    %v1701 = vld [vmem:[#allocation3 + $0x890] sm:$0xff]
    %v1702 = vld [vmem:[#allocation3 + $0x898] sm:$0xff]
    %v1703 = vld [vmem:[#allocation3 + $0x8a0] sm:$0xff]
    %v1704 = vld [vmem:[#allocation3 + $0x8a8] sm:$0xff]
    %v1705 = vld [vmem:[#allocation3 + $0x8b0] sm:$0xff]
    %v1706 = vld [vmem:[#allocation3 + $0x8b8] sm:$0xff]
    %v1707 = vld [vmem:[#allocation3 + $0x8c0] sm:$0xff]
    %v1708 = vld [vmem:[#allocation3 + $0x8c8] sm:$0xff]
    %v1709 = vld [vmem:[#allocation3 + $0x8d0] sm:$0xff]
    %v1710 = vld [vmem:[#allocation3 + $0x8d8] sm:$0xff]
    %v1711 = vld [vmem:[#allocation3 + $0x8e0] sm:$0xff]
    %v1712 = vld [vmem:[#allocation3 + $0x8e8] sm:$0xff]
    %v1713 = vld [vmem:[#allocation3 + $0x8f0] sm:$0xff]
    %v1714 = vld [vmem:[#allocation3 + $0x8f8] sm:$0xff]
    %v1715 = vld [vmem:[#allocation3 + $0x900] sm:$0xff]
    %v1716 = vld [vmem:[#allocation3 + $0x908] sm:$0xff]
    %v1717 = vld [vmem:[#allocation3 + $0x910] sm:$0xff]
    %v1718 = vld [vmem:[#allocation3 + $0x918] sm:$0xff]
    %v1719 = vld [vmem:[#allocation3 + $0x920] sm:$0xff]
    %v1720 = vld [vmem:[#allocation3 + $0x928] sm:$0xff]
    %v1721 = vld [vmem:[#allocation3 + $0x930] sm:$0xff]
    %v1722 = vld [vmem:[#allocation3 + $0x938] sm:$0xff]
    %v1723 = vld [vmem:[#allocation3 + $0x940] sm:$0xff]
    %v1724 = vld [vmem:[#allocation3 + $0x948] sm:$0xff]
    %v1725 = vld [vmem:[#allocation3 + $0x950] sm:$0xff]
    %v1726 = vld [vmem:[#allocation3 + $0x958] sm:$0xff]
    %v1727 = vld [vmem:[#allocation3 + $0x960] sm:$0xff]
    %v1728 = vld [vmem:[#allocation3 + $0x968] sm:$0xff]
    %v1729 = vld [vmem:[#allocation3 + $0x970] sm:$0xff]
    %v1730 = vld [vmem:[#allocation3 + $0x978] sm:$0xff]
    %v1731 = vld [vmem:[#allocation3 + $0x980] sm:$0xff]
    %v1732 = vld [vmem:[#allocation3 + $0x988] sm:$0xff]
    %v1733 = vld [vmem:[#allocation3 + $0x990] sm:$0xff]
    %v1734 = vld [vmem:[#allocation3 + $0x998] sm:$0xff]
    %v1735 = vld [vmem:[#allocation3 + $0x9a0] sm:$0xff]
    %v1736 = vld [vmem:[#allocation3 + $0x9a8] sm:$0xff]
    %v1737 = vld [vmem:[#allocation3 + $0x9b0] sm:$0xff]
    %v1738 = vld [vmem:[#allocation3 + $0x9b8] sm:$0xff]
    %v1739 = vld [vmem:[#allocation3 + $0x9c0] sm:$0xff]
    %v1740 = vld [vmem:[#allocation3 + $0x9c8] sm:$0xff]
    %v1741 = vld [vmem:[#allocation3 + $0x9d0] sm:$0xff]
    %v1742 = vld [vmem:[#allocation3 + $0x9d8] sm:$0xff]
    %v1743 = vld [vmem:[#allocation3 + $0x9e0] sm:$0xff]
    %v1744 = vld [vmem:[#allocation3 + $0x9e8] sm:$0xff]
    %v1745 = vld [vmem:[#allocation3 + $0x9f0] sm:$0xff]
    %v1746 = vld [vmem:[#allocation3 + $0x9f8] sm:$0xff]
    %v1747 = vld [vmem:[#allocation3 + $0xa00] sm:$0xff]
    %v1748 = vld [vmem:[#allocation3 + $0xa08] sm:$0xff]
    %v1749 = vld [vmem:[#allocation3 + $0xa10] sm:$0xff]
    %v1750 = vld [vmem:[#allocation3 + $0xa18] sm:$0xff]
    %v1751 = vld [vmem:[#allocation3 + $0xa20] sm:$0xff]
    %v1752 = vld [vmem:[#allocation3 + $0xa28] sm:$0xff]
    %v1753 = vld [vmem:[#allocation3 + $0xa30] sm:$0xff]
    %v1754 = vld [vmem:[#allocation3 + $0xa38] sm:$0xff]
    %v1755 = vld [vmem:[#allocation3 + $0xa40] sm:$0xff]
    %v1756 = vld [vmem:[#allocation3 + $0xa48] sm:$0xff]
    %v1757 = vld [vmem:[#allocation3 + $0xa50] sm:$0xff]
    %v1758 = vld [vmem:[#allocation3 + $0xa58] sm:$0xff]
    %v1759 = vld [vmem:[#allocation3 + $0xa60] sm:$0xff]
    %v1760 = vld [vmem:[#allocation3 + $0xa68] sm:$0xff]
    %v1761 = vld [vmem:[#allocation3 + $0xa70] sm:$0xff]
    %v1762 = vld [vmem:[#allocation3 + $0xa78] sm:$0xff]
    %v1763 = vld [vmem:[#allocation3 + $0xa80] sm:$0xff]
    %v1764 = vld [vmem:[#allocation3 + $0xa88] sm:$0xff]
    %v1765 = vld [vmem:[#allocation3 + $0xa90] sm:$0xff]
    %v1766 = vld [vmem:[#allocation3 + $0xa98] sm:$0xff]
    %v1767 = vld [vmem:[#allocation3 + $0xaa0] sm:$0xff]
    %v1768 = vld [vmem:[#allocation3 + $0xaa8] sm:$0xff]
    %v1769 = vld [vmem:[#allocation3 + $0xab0] sm:$0xff]
    %v1770 = vld [vmem:[#allocation3 + $0xab8] sm:$0xff]
    %v1771 = vld [vmem:[#allocation3 + $0xac0] sm:$0xff]
    %v1772 = vld [vmem:[#allocation3 + $0xac8] sm:$0xff]
    %v1773 = vld [vmem:[#allocation3 + $0xad0] sm:$0xff]
    %v1774 = vld [vmem:[#allocation3 + $0xad8] sm:$0xff]
    %v1775 = vld [vmem:[#allocation3 + $0xae0] sm:$0xff]
    %v1776 = vld [vmem:[#allocation3 + $0xae8] sm:$0xff]
    %v1777 = vld [vmem:[#allocation3 + $0xaf0] sm:$0xff]
    %v1778 = vld [vmem:[#allocation3 + $0xaf8] sm:$0xff]
    %v1779 = vld [vmem:[#allocation3 + $0xb00] sm:$0xff]
    %v1780 = vld [vmem:[#allocation3 + $0xb08] sm:$0xff]
    %v1781 = vld [vmem:[#allocation3 + $0xb10] sm:$0xff]
    %v1782 = vld [vmem:[#allocation3 + $0xb18] sm:$0xff]
    %v1783 = vld [vmem:[#allocation3 + $0xb20] sm:$0xff]
    %v1784 = vld [vmem:[#allocation3 + $0xb28] sm:$0xff]
    %v1785 = vld [vmem:[#allocation3 + $0xb30] sm:$0xff]
    %v1786 = vld [vmem:[#allocation3 + $0xb38] sm:$0xff]
    %v1787 = vld [vmem:[#allocation3 + $0xb40] sm:$0xff]
    %v1788 = vld [vmem:[#allocation3 + $0xb48] sm:$0xff]
    %v1789 = vld [vmem:[#allocation3 + $0xb50] sm:$0xff]
    %v1790 = vld [vmem:[#allocation3 + $0xb58] sm:$0xff]
    %v1791 = vld [vmem:[#allocation3 + $0xb60] sm:$0xff]
    %v1792 = vld [vmem:[#allocation3 + $0xb68] sm:$0xff]
    %v1793 = vld [vmem:[#allocation3 + $0xb70] sm:$0xff]
    %v1794 = vld [vmem:[#allocation3 + $0xb78] sm:$0xff]
    %v1795 = vld [vmem:[#allocation3 + $0xb80] sm:$0xff]
    %v1796 = vld [vmem:[#allocation3 + $0xb88] sm:$0xff]
    %v1797 = vld [vmem:[#allocation3 + $0xb90] sm:$0xff]
    %v1798 = vld [vmem:[#allocation3 + $0xb98] sm:$0xff]
    %v1799 = vld [vmem:[#allocation3 + $0xba0] sm:$0xff]
    %v1800 = vld [vmem:[#allocation3 + $0xba8] sm:$0xff]
    %v1801 = vld [vmem:[#allocation3 + $0xbb0] sm:$0xff]
    %v1802 = vld [vmem:[#allocation3 + $0xbb8] sm:$0xff]
    %v1803 = vld [vmem:[#allocation3 + $0xbc0] sm:$0xff]
    %v1804 = vld [vmem:[#allocation3 + $0xbc8] sm:$0xff]
    %v1805 = vld [vmem:[#allocation3 + $0xbd0] sm:$0xff]
    %v1806 = vld [vmem:[#allocation3 + $0xbd8] sm:$0xff]
    %v1807 = vld [vmem:[#allocation3 + $0xbe0] sm:$0xff]
    %v1808 = vld [vmem:[#allocation3 + $0xbe8] sm:$0xff]
    %v1809 = vld [vmem:[#allocation3 + $0xbf0] sm:$0xff]
    %v1810 = vld [vmem:[#allocation3 + $0xbf8] sm:$0xff]
    %v1811 = vld [vmem:[#allocation3 + $0xc00] sm:$0xff]
    %v1812 = vld [vmem:[#allocation3 + $0xc08] sm:$0xff]
    %v1813 = vld [vmem:[#allocation3 + $0xc10] sm:$0xff]
    %v1814 = vld [vmem:[#allocation3 + $0xc18] sm:$0xff]
    %v1815 = vld [vmem:[#allocation3 + $0xc20] sm:$0xff]
    %v1816 = vld [vmem:[#allocation3 + $0xc28] sm:$0xff]
    %v1817 = vld [vmem:[#allocation3 + $0xc30] sm:$0xff]
    %v1818 = vld [vmem:[#allocation3 + $0xc38] sm:$0xff]
    %v1819 = vld [vmem:[#allocation3 + $0xc40] sm:$0xff]
    %v1820 = vld [vmem:[#allocation3 + $0xc48] sm:$0xff]
    %v1821 = vld [vmem:[#allocation3 + $0xc50] sm:$0xff]
    %v1822 = vld [vmem:[#allocation3 + $0xc58] sm:$0xff]
    %v1823 = vld [vmem:[#allocation3 + $0xc60] sm:$0xff]
    %v1824 = vld [vmem:[#allocation3 + $0xc68] sm:$0xff]
    %v1825 = vld [vmem:[#allocation3 + $0xc70] sm:$0xff]
    %v1826 = vld [vmem:[#allocation3 + $0xc78] sm:$0xff]
    %v1827 = vld [vmem:[#allocation3 + $0xc80] sm:$0xff]
    %v1828 = vld [vmem:[#allocation3 + $0xc88] sm:$0xff]
    %v1829 = vld [vmem:[#allocation3 + $0xc90] sm:$0xff]
    %v1830 = vld [vmem:[#allocation3 + $0xc98] sm:$0xff]
    %v1831 = vld [vmem:[#allocation3 + $0xca0] sm:$0xff]
    %v1832 = vld [vmem:[#allocation3 + $0xca8] sm:$0xff]
    %v1833 = vld [vmem:[#allocation3 + $0xcb0] sm:$0xff]
    %v1834 = vld [vmem:[#allocation3 + $0xcb8] sm:$0xff]
    %v1835 = vld [vmem:[#allocation3 + $0xcc0] sm:$0xff]
    %v1836 = vld [vmem:[#allocation3 + $0xcc8] sm:$0xff]
    %v1837 = vld [vmem:[#allocation3 + $0xcd0] sm:$0xff]
    %v1838 = vld [vmem:[#allocation3 + $0xcd8] sm:$0xff]
    %v1839 = vld [vmem:[#allocation3 + $0xce0] sm:$0xff]
    %v1840 = vld [vmem:[#allocation3 + $0xce8] sm:$0xff]
    %v1841 = vld [vmem:[#allocation3 + $0xcf0] sm:$0xff]
    %v1842 = vld [vmem:[#allocation3 + $0xcf8] sm:$0xff]
    %v1843 = vld [vmem:[#allocation3 + $0xd00] sm:$0xff]
    %v1844 = vld [vmem:[#allocation3 + $0xd08] sm:$0xff]
    %v1845 = vld [vmem:[#allocation3 + $0xd10] sm:$0xff]
    %v1846 = vld [vmem:[#allocation3 + $0xd18] sm:$0xff]
    %v1847 = vld [vmem:[#allocation3 + $0xd20] sm:$0xff]
    %v1848 = vld [vmem:[#allocation3 + $0xd28] sm:$0xff]
    %v1849 = vld [vmem:[#allocation3 + $0xd30] sm:$0xff]
    %v1850 = vld [vmem:[#allocation3 + $0xd38] sm:$0xff]
    %v1851 = vld [vmem:[#allocation3 + $0xd40] sm:$0xff]
    %v1852 = vld [vmem:[#allocation3 + $0xd48] sm:$0xff]
    %v1853 = vld [vmem:[#allocation3 + $0xd50] sm:$0xff]
    %v1854 = vld [vmem:[#allocation3 + $0xd58] sm:$0xff]
    %v1855 = vld [vmem:[#allocation3 + $0xd60] sm:$0xff]
    %v1856 = vld [vmem:[#allocation3 + $0xd68] sm:$0xff]
    %v1857 = vld [vmem:[#allocation3 + $0xd70] sm:$0xff]
    %v1858 = vld [vmem:[#allocation3 + $0xd78] sm:$0xff]
    %v1859 = vld [vmem:[#allocation3 + $0xd80] sm:$0xff]
    %v1860 = vld [vmem:[#allocation3 + $0xd88] sm:$0xff]
    %v1861 = vld [vmem:[#allocation3 + $0xd90] sm:$0xff]
    %v1862 = vld [vmem:[#allocation3 + $0xd98] sm:$0xff]
    %v1863 = vld [vmem:[#allocation3 + $0xda0] sm:$0xff]
    %v1864 = vld [vmem:[#allocation3 + $0xda8] sm:$0xff]
    %v1865 = vld [vmem:[#allocation3 + $0xdb0] sm:$0xff]
    %v1866 = vld [vmem:[#allocation3 + $0xdb8] sm:$0xff]
    %v1867 = vld [vmem:[#allocation3 + $0xdc0] sm:$0xff]
    %v1868 = vld [vmem:[#allocation3 + $0xdc8] sm:$0xff]
    %v1869 = vld [vmem:[#allocation3 + $0xdd0] sm:$0xff]
    %v1870 = vld [vmem:[#allocation3 + $0xdd8] sm:$0xff]
    %v1871 = vld [vmem:[#allocation3 + $0xde0] sm:$0xff]
    %v1872 = vld [vmem:[#allocation3 + $0xde8] sm:$0xff]
    %v1873 = vld [vmem:[#allocation3 + $0xdf0] sm:$0xff]
    %v1874 = vld [vmem:[#allocation3 + $0xdf8] sm:$0xff]
    %v1875 = vld [vmem:[#allocation3 + $0xe00] sm:$0xff]
    %v1876 = vld [vmem:[#allocation3 + $0xe08] sm:$0xff]
    %v1877 = vld [vmem:[#allocation3 + $0xe10] sm:$0xff]
    %v1878 = vld [vmem:[#allocation3 + $0xe18] sm:$0xff]
    %v1879 = vld [vmem:[#allocation3 + $0xe20] sm:$0xff]
    %v1880 = vld [vmem:[#allocation3 + $0xe28] sm:$0xff]
    %v1881 = vld [vmem:[#allocation3 + $0xe30] sm:$0xff]
    %v1882 = vld [vmem:[#allocation3 + $0xe38] sm:$0xff]
    %v1883 = vld [vmem:[#allocation3 + $0xe40] sm:$0xff]
    %v1884 = vld [vmem:[#allocation3 + $0xe48] sm:$0xff]
    %v1885 = vld [vmem:[#allocation3 + $0xe50] sm:$0xff]
    %v1886 = vld [vmem:[#allocation3 + $0xe58] sm:$0xff]
    %v1887 = vld [vmem:[#allocation3 + $0xe60] sm:$0xff]
    %v1888 = vld [vmem:[#allocation3 + $0xe68] sm:$0xff]
    %v1889 = vld [vmem:[#allocation3 + $0xe70] sm:$0xff]
    %v1890 = vld [vmem:[#allocation3 + $0xe78] sm:$0xff]
    %v1891 = vld [vmem:[#allocation3 + $0xe80] sm:$0xff]
    %v1892 = vld [vmem:[#allocation3 + $0xe88] sm:$0xff]
    %v1893 = vld [vmem:[#allocation3 + $0xe90] sm:$0xff]
    %v1894 = vld [vmem:[#allocation3 + $0xe98] sm:$0xff]
    %v1895 = vld [vmem:[#allocation3 + $0xea0] sm:$0xff]
    %v1896 = vld [vmem:[#allocation3 + $0xea8] sm:$0xff]
    %v1897 = vld [vmem:[#allocation3 + $0xeb0] sm:$0xff]
    %v1898 = vld [vmem:[#allocation3 + $0xeb8] sm:$0xff]
    %v1899 = vld [vmem:[#allocation3 + $0xec0] sm:$0xff]
    %v1900 = vld [vmem:[#allocation3 + $0xec8] sm:$0xff]
    %v1901 = vld [vmem:[#allocation3 + $0xed0] sm:$0xff]
    %v1902 = vld [vmem:[#allocation3 + $0xed8] sm:$0xff]
    %v1903 = vld [vmem:[#allocation3 + $0xee0] sm:$0xff]
    %v1904 = vld [vmem:[#allocation3 + $0xee8] sm:$0xff]
    %v1905 = vld [vmem:[#allocation3 + $0xef0] sm:$0xff]
    %v1906 = vld [vmem:[#allocation3 + $0xef8] sm:$0xff]
    %v1907 = vld [vmem:[#allocation3 + $0xf00] sm:$0xff]
    %v1908 = vld [vmem:[#allocation3 + $0xf08] sm:$0xff]
    %v1909 = vld [vmem:[#allocation3 + $0xf10] sm:$0xff]
    %v1910 = vld [vmem:[#allocation3 + $0xf18] sm:$0xff]
    %v1911 = vld [vmem:[#allocation3 + $0xf20] sm:$0xff]
    %v1912 = vld [vmem:[#allocation3 + $0xf28] sm:$0xff]
    %v1913 = vld [vmem:[#allocation3 + $0xf30] sm:$0xff]
    %v1914 = vld [vmem:[#allocation3 + $0xf38] sm:$0xff]
    %v1915 = vld [vmem:[#allocation3 + $0xf40] sm:$0xff]
    %v1916 = vld [vmem:[#allocation3 + $0xf48] sm:$0xff]
    %v1917 = vld [vmem:[#allocation3 + $0xf50] sm:$0xff]
    %v1918 = vld [vmem:[#allocation3 + $0xf58] sm:$0xff]
    %v1919 = vld [vmem:[#allocation3 + $0xf60] sm:$0xff]
    %v1920 = vld [vmem:[#allocation3 + $0xf68] sm:$0xff]
    %v1921 = vld [vmem:[#allocation3 + $0xf70] sm:$0xff]
    %v1922 = vld [vmem:[#allocation3 + $0xf78] sm:$0xff]
    %v1923 = vld [vmem:[#allocation3 + $0xf80] sm:$0xff]
    %v1924 = vld [vmem:[#allocation3 + $0xf88] sm:$0xff]
    %v1925 = vld [vmem:[#allocation3 + $0xf90] sm:$0xff]
    %v1926 = vld [vmem:[#allocation3 + $0xf98] sm:$0xff]
    %v1927 = vld [vmem:[#allocation3 + $0xfa0] sm:$0xff]
    %v1928 = vld [vmem:[#allocation3 + $0xfa8] sm:$0xff]
    %v1929 = vld [vmem:[#allocation3 + $0xfb0] sm:$0xff]
    %v1930 = vld [vmem:[#allocation3 + $0xfb8] sm:$0xff]
    %v1931 = vld [vmem:[#allocation3 + $0xfc0] sm:$0xff]
    %v1932 = vld [vmem:[#allocation3 + $0xfc8] sm:$0xff]
    %v1933 = vld [vmem:[#allocation3 + $0xfd0] sm:$0xff]
    %v1934 = vld [vmem:[#allocation3 + $0xfd8] sm:$0xff]
    %v1935 = vld [vmem:[#allocation3 + $0xfe0] sm:$0xff]
    %v1936 = vld [vmem:[#allocation3 + $0xfe8] sm:$0xff]
    %v1937 = vld [vmem:[#allocation3 + $0xff0] sm:$0xff]
    %v1938 = vld [vmem:[#allocation3 + $0xff8] sm:$0xff]
    %v1939 = vld [vmem:[#allocation3 + $0x1000] sm:$0xff]
    %v1940 = vld [vmem:[#allocation3 + $0x1008] sm:$0xff]
    %v1941 = vld [vmem:[#allocation3 + $0x1010] sm:$0xff]
    %v1942 = vld [vmem:[#allocation3 + $0x1018] sm:$0xff]
    %v1943 = vld [vmem:[#allocation3 + $0x1020] sm:$0xff]
    %v1944 = vld [vmem:[#allocation3 + $0x1028] sm:$0xff]
    %v1945 = vld [vmem:[#allocation3 + $0x1030] sm:$0xff]
    %v1946 = vld [vmem:[#allocation3 + $0x1038] sm:$0xff]
    %v1947 = vld [vmem:[#allocation3 + $0x1040] sm:$0xff]
    %v1948 = vld [vmem:[#allocation3 + $0x1048] sm:$0xff]
    %v1949 = vld [vmem:[#allocation3 + $0x1050] sm:$0xff]
    %v1950 = vld [vmem:[#allocation3 + $0x1058] sm:$0xff]
    %v1951 = vld [vmem:[#allocation3 + $0x1060] sm:$0xff]
    %v1952 = vld [vmem:[#allocation3 + $0x1068] sm:$0xff]
    %v1953 = vld [vmem:[#allocation3 + $0x1070] sm:$0xff]
    %v1954 = vld [vmem:[#allocation3 + $0x1078] sm:$0xff]
    %v1955 = vld [vmem:[#allocation3 + $0x1080] sm:$0xff]
    %v1956 = vld [vmem:[#allocation3 + $0x1088] sm:$0xff]
    %v1957 = vld [vmem:[#allocation3 + $0x1090] sm:$0xff]
    %v1958 = vld [vmem:[#allocation3 + $0x1098] sm:$0xff]
    %v1959 = vld [vmem:[#allocation3 + $0x10a0] sm:$0xff]
    %v1960 = vld [vmem:[#allocation3 + $0x10a8] sm:$0xff]
    %v1961 = vld [vmem:[#allocation3 + $0x10b0] sm:$0xff]
    %v1962 = vld [vmem:[#allocation3 + $0x10b8] sm:$0xff]
    %v1963 = vld [vmem:[#allocation3 + $0x10c0] sm:$0xff]
    %v1964 = vld [vmem:[#allocation3 + $0x10c8] sm:$0xff]
    %v1965 = vld [vmem:[#allocation3 + $0x10d0] sm:$0xff]
    %v1966 = vld [vmem:[#allocation3 + $0x10d8] sm:$0xff]
    %v1967 = vld [vmem:[#allocation3 + $0x10e0] sm:$0xff]
    %v1968 = vld [vmem:[#allocation3 + $0x10e8] sm:$0xff]
    %v1969 = vld [vmem:[#allocation3 + $0x10f0] sm:$0xff]
    %v1970 = vld [vmem:[#allocation3 + $0x10f8] sm:$0xff]
    %v1971 = vld [vmem:[#allocation3 + $0x1100] sm:$0xff]
    %v1972 = vld [vmem:[#allocation3 + $0x1108] sm:$0xff]
    %v1973 = vld [vmem:[#allocation3 + $0x1110] sm:$0xff]
    %v1974 = vld [vmem:[#allocation3 + $0x1118] sm:$0xff]
    %v1975 = vld [vmem:[#allocation3 + $0x1120] sm:$0xff]
    %v1976 = vld [vmem:[#allocation3 + $0x1128] sm:$0xff]
    %v1977 = vld [vmem:[#allocation3 + $0x1130] sm:$0xff]
    %v1978 = vld [vmem:[#allocation3 + $0x1138] sm:$0xff]
    %v1979 = vld [vmem:[#allocation3 + $0x1140] sm:$0xff]
    %v1980 = vld [vmem:[#allocation3 + $0x1148] sm:$0xff]
    %v1981 = vld [vmem:[#allocation3 + $0x1150] sm:$0xff]
    %v1982 = vld [vmem:[#allocation3 + $0x1158] sm:$0xff]
    %v1983 = vld [vmem:[#allocation3 + $0x1160] sm:$0xff]
    %v1984 = vld [vmem:[#allocation3 + $0x1168] sm:$0xff]
    %v1985 = vld [vmem:[#allocation3 + $0x1170] sm:$0xff]
    %v1986 = vld [vmem:[#allocation3 + $0x1178] sm:$0xff]
    %v1987 = vld [vmem:[#allocation3 + $0x1180] sm:$0xff]
    %v1988 = vld [vmem:[#allocation3 + $0x1188] sm:$0xff]
    %v1989 = vld [vmem:[#allocation3 + $0x1190] sm:$0xff]
    %v1990 = vld [vmem:[#allocation3 + $0x1198] sm:$0xff]
    %v1991 = vld [vmem:[#allocation3 + $0x11a0] sm:$0xff]
    %v1992 = vld [vmem:[#allocation3 + $0x11a8] sm:$0xff]
    %v1993 = vld [vmem:[#allocation3 + $0x11b0] sm:$0xff]
    %v1994 = vld [vmem:[#allocation3 + $0x11b8] sm:$0xff]
    %v1995 = vld [vmem:[#allocation3 + $0x11c0] sm:$0xff]
    %v1996 = vld [vmem:[#allocation3 + $0x11c8] sm:$0xff]
    %v1997 = vld [vmem:[#allocation3 + $0x11d0] sm:$0xff]
    %v1998 = vld [vmem:[#allocation3 + $0x11d8] sm:$0xff]
    %v1999 = vld [vmem:[#allocation3 + $0x11e0] sm:$0xff]
    %v2000 = vld [vmem:[#allocation3 + $0x11e8] sm:$0xff]
    %v2001 = vld [vmem:[#allocation3 + $0x11f0] sm:$0xff]
    %v2002 = vld [vmem:[#allocation3 + $0x11f8] sm:$0xff]
    %v2003 = vld [vmem:[#allocation7] sm:$0xff]
    %v2004 = vld [vmem:[#allocation7 + $0x8] sm:$0xff]
    %v2005 = vld [vmem:[#allocation7 + $0x10] sm:$0xff]
    %v2006 = vld [vmem:[#allocation7 + $0x18] sm:$0xff]
    %v2007 = vld [vmem:[#allocation7 + $0x20] sm:$0xff]
    %v2008 = vld [vmem:[#allocation7 + $0x28] sm:$0xff]
    %v2009 = vld [vmem:[#allocation7 + $0x30] sm:$0xff]
    %v2010 = vld [vmem:[#allocation7 + $0x38] sm:$0xff]
    %v2011 = vld [vmem:[#allocation7 + $0x40] sm:$0xff]
    %v2012 = vld [vmem:[#allocation7 + $0x48] sm:$0xff]
    %v2013 = vld [vmem:[#allocation7 + $0x50] sm:$0xff]
    %v2014 = vld [vmem:[#allocation7 + $0x58] sm:$0xff]
    %v2015 = vld [vmem:[#allocation7 + $0x60] sm:$0xff]
    %v2016 = vld [vmem:[#allocation7 + $0x68] sm:$0xff]
    %v2017 = vld [vmem:[#allocation7 + $0x70] sm:$0xff]
    %v2018 = vld [vmem:[#allocation7 + $0x78] sm:$0xff]
    %v2019 = vld [vmem:[#allocation7 + $0x80] sm:$0xff]
    %v2020 = vld [vmem:[#allocation7 + $0x88] sm:$0xff]
    %v2021 = vld [vmem:[#allocation7 + $0x90] sm:$0xff]
    %v2022 = vld [vmem:[#allocation7 + $0x98] sm:$0xff]
    %v2023 = vld [vmem:[#allocation7 + $0xa0] sm:$0xff]
    %v2024 = vld [vmem:[#allocation7 + $0xa8] sm:$0xff]
    %v2025 = vld [vmem:[#allocation7 + $0xb0] sm:$0xff]
    %v2026 = vld [vmem:[#allocation7 + $0xb8] sm:$0xff]
    %v2027 = vld [vmem:[#allocation7 + $0xc0] sm:$0xff]
    %v2028 = vld [vmem:[#allocation7 + $0xc8] sm:$0xff]
    %v2029 = vld [vmem:[#allocation7 + $0xd0] sm:$0xff]
    %v2030 = vld [vmem:[#allocation7 + $0xd8] sm:$0xff]
    %v2031 = vld [vmem:[#allocation7 + $0xe0] sm:$0xff]
    %v2032 = vld [vmem:[#allocation7 + $0xe8] sm:$0xff]
    %v2033 = vld [vmem:[#allocation7 + $0xf0] sm:$0xff]
    %v2034 = vld [vmem:[#allocation7 + $0xf8] sm:$0xff]
    %v2035 = vld [vmem:[#allocation7 + $0x100] sm:$0xff]
    %v2036 = vld [vmem:[#allocation7 + $0x108] sm:$0xff]
    %v2037 = vld [vmem:[#allocation7 + $0x110] sm:$0xff]
    %v2038 = vld [vmem:[#allocation7 + $0x118] sm:$0xff]
    %v2039 = vld [vmem:[#allocation7 + $0x120] sm:$0xff]
    %v2040 = vld [vmem:[#allocation7 + $0x128] sm:$0xff]
    %v2041 = vld [vmem:[#allocation7 + $0x130] sm:$0xff]
    %v2042 = vld [vmem:[#allocation7 + $0x138] sm:$0xff]
    %v2043 = vld [vmem:[#allocation7 + $0x140] sm:$0xff]
    %v2044 = vld [vmem:[#allocation7 + $0x148] sm:$0xff]
    %v2045 = vld [vmem:[#allocation7 + $0x150] sm:$0xff]
    %v2046 = vld [vmem:[#allocation7 + $0x158] sm:$0xff]
    %v2047 = vld [vmem:[#allocation7 + $0x160] sm:$0xff]
    %v2048 = vld [vmem:[#allocation7 + $0x168] sm:$0xff]
    %v2049 = vld [vmem:[#allocation7 + $0x170] sm:$0xff]
    %v2050 = vld [vmem:[#allocation7 + $0x178] sm:$0xff]
    %v2051 = vld [vmem:[#allocation7 + $0x180] sm:$0xff]
    %v2052 = vld [vmem:[#allocation7 + $0x188] sm:$0xff]
    %v2053 = vld [vmem:[#allocation7 + $0x190] sm:$0xff]
    %v2054 = vld [vmem:[#allocation7 + $0x198] sm:$0xff]
    %v2055 = vld [vmem:[#allocation7 + $0x1a0] sm:$0xff]
    %v2056 = vld [vmem:[#allocation7 + $0x1a8] sm:$0xff]
    %v2057 = vld [vmem:[#allocation7 + $0x1b0] sm:$0xff]
    %v2058 = vld [vmem:[#allocation7 + $0x1b8] sm:$0xff]
    %v2059 = vld [vmem:[#allocation7 + $0x1c0] sm:$0xff]
    %v2060 = vld [vmem:[#allocation7 + $0x1c8] sm:$0xff]
    %v2061 = vld [vmem:[#allocation7 + $0x1d0] sm:$0xff]
    %v2062 = vld [vmem:[#allocation7 + $0x1d8] sm:$0xff]
    %v2063 = vld [vmem:[#allocation7 + $0x1e0] sm:$0xff]
    %v2064 = vld [vmem:[#allocation7 + $0x1e8] sm:$0xff]
    %v2065 = vld [vmem:[#allocation7 + $0x1f0] sm:$0xff]
    %v2066 = vld [vmem:[#allocation7 + $0x1f8] sm:$0xff]
    %v2067 = vld [vmem:[#allocation7 + $0x200] sm:$0xff]
    %v2068 = vld [vmem:[#allocation7 + $0x208] sm:$0xff]
    %v2069 = vld [vmem:[#allocation7 + $0x210] sm:$0xff]
    %v2070 = vld [vmem:[#allocation7 + $0x218] sm:$0xff]
    %v2071 = vld [vmem:[#allocation7 + $0x220] sm:$0xff]
    %v2072 = vld [vmem:[#allocation7 + $0x228] sm:$0xff]
    %v2073 = vld [vmem:[#allocation7 + $0x230] sm:$0xff]
    %v2074 = vld [vmem:[#allocation7 + $0x238] sm:$0xff]
    %v2075 = vld [vmem:[#allocation7 + $0x240] sm:$0xff]
    %v2076 = vld [vmem:[#allocation7 + $0x248] sm:$0xff]
    %v2077 = vld [vmem:[#allocation7 + $0x250] sm:$0xff]
    %v2078 = vld [vmem:[#allocation7 + $0x258] sm:$0xff]
    %v2079 = vld [vmem:[#allocation7 + $0x260] sm:$0xff]
    %v2080 = vld [vmem:[#allocation7 + $0x268] sm:$0xff]
    %v2081 = vld [vmem:[#allocation7 + $0x270] sm:$0xff]
    %v2082 = vld [vmem:[#allocation7 + $0x278] sm:$0xff]
    %v2083 = vld [vmem:[#allocation7 + $0x280] sm:$0xff]
    %v2084 = vld [vmem:[#allocation7 + $0x288] sm:$0xff]
    %v2085 = vld [vmem:[#allocation7 + $0x290] sm:$0xff]
    %v2086 = vld [vmem:[#allocation7 + $0x298] sm:$0xff]
    %v2087 = vld [vmem:[#allocation7 + $0x2a0] sm:$0xff]
    %v2088 = vld [vmem:[#allocation7 + $0x2a8] sm:$0xff]
    %v2089 = vld [vmem:[#allocation7 + $0x2b0] sm:$0xff]
    %v2090 = vld [vmem:[#allocation7 + $0x2b8] sm:$0xff]
    %v2091 = vld [vmem:[#allocation7 + $0x2c0] sm:$0xff]
    %v2092 = vld [vmem:[#allocation7 + $0x2c8] sm:$0xff]
    %v2093 = vld [vmem:[#allocation7 + $0x2d0] sm:$0xff]
    %v2094 = vld [vmem:[#allocation7 + $0x2d8] sm:$0xff]
    %v2095 = vld [vmem:[#allocation7 + $0x2e0] sm:$0xff]
    %v2096 = vld [vmem:[#allocation7 + $0x2e8] sm:$0xff]
    %v2097 = vld [vmem:[#allocation7 + $0x2f0] sm:$0xff]
    %v2098 = vld [vmem:[#allocation7 + $0x2f8] sm:$0xff]
    %v2099 = vld [vmem:[#allocation7 + $0x300] sm:$0xff]
    %v2100 = vld [vmem:[#allocation7 + $0x308] sm:$0xff]
    %v2101 = vld [vmem:[#allocation7 + $0x310] sm:$0xff]
    %v2102 = vld [vmem:[#allocation7 + $0x318] sm:$0xff]
    %v2103 = vld [vmem:[#allocation7 + $0x320] sm:$0xff]
    %v2104 = vld [vmem:[#allocation7 + $0x328] sm:$0xff]
    %v2105 = vld [vmem:[#allocation7 + $0x330] sm:$0xff]
    %v2106 = vld [vmem:[#allocation7 + $0x338] sm:$0xff]
    %v2107 = vld [vmem:[#allocation7 + $0x340] sm:$0xff]
    %v2108 = vld [vmem:[#allocation7 + $0x348] sm:$0xff]
    %v2109 = vld [vmem:[#allocation7 + $0x350] sm:$0xff]
    %v2110 = vld [vmem:[#allocation7 + $0x358] sm:$0xff]
    %v2111 = vld [vmem:[#allocation7 + $0x360] sm:$0xff]
    %v2112 = vld [vmem:[#allocation7 + $0x368] sm:$0xff]
    %v2113 = vld [vmem:[#allocation7 + $0x370] sm:$0xff]
    %v2114 = vld [vmem:[#allocation7 + $0x378] sm:$0xff]
    %v2115 = vld [vmem:[#allocation7 + $0x380] sm:$0xff]
    %v2116 = vld [vmem:[#allocation7 + $0x388] sm:$0xff]
    %v2117 = vld [vmem:[#allocation7 + $0x390] sm:$0xff]
    %v2118 = vld [vmem:[#allocation7 + $0x398] sm:$0xff]
    %v2119 = vld [vmem:[#allocation7 + $0x3a0] sm:$0xff]
    %v2120 = vld [vmem:[#allocation7 + $0x3a8] sm:$0xff]
    %v2121 = vld [vmem:[#allocation7 + $0x3b0] sm:$0xff]
    %v2122 = vld [vmem:[#allocation7 + $0x3b8] sm:$0xff]
    %v2123 = vld [vmem:[#allocation7 + $0x3c0] sm:$0xff]
    %v2124 = vld [vmem:[#allocation7 + $0x3c8] sm:$0xff]
    %v2125 = vld [vmem:[#allocation7 + $0x3d0] sm:$0xff]
    %v2126 = vld [vmem:[#allocation7 + $0x3d8] sm:$0xff]
    %v2127 = vld [vmem:[#allocation7 + $0x3e0] sm:$0xff]
    %v2128 = vld [vmem:[#allocation7 + $0x3e8] sm:$0xff]
    %v2129 = vld [vmem:[#allocation7 + $0x3f0] sm:$0xff]
    %v2130 = vld [vmem:[#allocation7 + $0x3f8] sm:$0xff]
    %v2131 = vld [vmem:[#allocation7 + $0x400] sm:$0xff]
    %v2132 = vld [vmem:[#allocation7 + $0x408] sm:$0xff]
    %v2133 = vld [vmem:[#allocation7 + $0x410] sm:$0xff]
    %v2134 = vld [vmem:[#allocation7 + $0x418] sm:$0xff]
    %v2135 = vld [vmem:[#allocation7 + $0x420] sm:$0xff]
    %v2136 = vld [vmem:[#allocation7 + $0x428] sm:$0xff]
    %v2137 = vld [vmem:[#allocation7 + $0x430] sm:$0xff]
    %v2138 = vld [vmem:[#allocation7 + $0x438] sm:$0xff]
    %v2139 = vld [vmem:[#allocation7 + $0x440] sm:$0xff]
    %v2140 = vld [vmem:[#allocation7 + $0x448] sm:$0xff]
    %v2141 = vld [vmem:[#allocation7 + $0x450] sm:$0xff]
    %v2142 = vld [vmem:[#allocation7 + $0x458] sm:$0xff]
    %v2143 = vld [vmem:[#allocation7 + $0x460] sm:$0xff]
    %v2144 = vld [vmem:[#allocation7 + $0x468] sm:$0xff]
    %v2145 = vld [vmem:[#allocation7 + $0x470] sm:$0xff]
    %v2146 = vld [vmem:[#allocation7 + $0x478] sm:$0xff]
    %2147 = vmatprep.subr.mxu0 0.0
    %2148 = vmatpush1.msra.mxu0 %v2003
    %2149 = vmatprep.subr.mxu0 0.0
    %2150 = vmatpush1.msra.mxu0 %v2004
    %2151 = vmatprep.subr.mxu0 0.0
    %2152 = vmatpush1.msra.mxu0 %v2005
    %2153 = vmatprep.subr.mxu0 0.0
    %2154 = vmatpush1.msra.mxu0 %v2006
    %2155 = vmatprep.subr.mxu0 0.0
    %2156 = vmatpush1.msra.mxu0 %v2007
    %2157 = vmatprep.subr.mxu0 0.0
    %2158 = vmatpush1.msra.mxu0 %v2008
    %2159 = vmatprep.subr.mxu0 0.0
    %2160 = vmatpush1.msra.mxu0 %v2009
    %2161 = vmatprep.subr.mxu0 0.0
    %2162 = vmatpush1.msra.mxu0 %v2010
    %2163 = vmatprep.subr.mxu0 0.0
    %2164 = vmatpush1.msra.mxu0 %v2011
    %2165 = vmatprep.subr.mxu0 0.0
    %2166 = vmatpush1.msra.mxu0 %v2012
    %2167 = vmatprep.subr.mxu0 0.0
    %2168 = vmatpush1.msra.mxu0 %v2013
    %2169 = vmatprep.subr.mxu0 0.0
    %2170 = vmatpush1.msra.mxu0 %v2014
    %2171 = vmatprep.subr.mxu0 0.0
    %2172 = vmatpush1.msra.mxu0 %v2015
    %2173 = vmatprep.subr.mxu0 0.0
    %2174 = vmatpush1.msra.mxu0 %v2016
    %2175 = vmatprep.subr.mxu0 0.0
    %2176 = vmatpush1.msra.mxu0 %v2017
    %2177 = vmatprep.subr.mxu0 0.0
    %2178 = vmatpush1.msra.mxu0 %v2018
    %2179 = vmatprep.subr.mxu0 0.0
    %2180 = vmatpush1.msra.mxu0 %v2019
    %2181 = vmatprep.subr.mxu0 0.0
    %2182 = vmatpush1.msra.mxu0 %v2020
    %2183 = vmatprep.subr.mxu0 0.0
    %2184 = vmatpush1.msra.mxu0 %v2021
    %2185 = vmatprep.subr.mxu0 0.0
    %2186 = vmatpush1.msra.mxu0 %v2022
    %2187 = vmatprep.subr.mxu0 0.0
    %2188 = vmatpush1.msra.mxu0 %v2023
    %2189 = vmatprep.subr.mxu0 0.0
    %2190 = vmatpush1.msra.mxu0 %v2024
    %2191 = vmatprep.subr.mxu0 0.0
    %2192 = vmatpush1.msra.mxu0 %v2025
    %2193 = vmatprep.subr.mxu0 0.0
    %2194 = vmatpush1.msra.mxu0 %v2026
    %2195 = vmatprep.subr.mxu0 0.0
    %2196 = vmatpush1.msra.mxu0 %v2027
    %2197 = vmatprep.subr.mxu0 0.0
    %2198 = vmatpush1.msra.mxu0 %v2028
    %2199 = vmatprep.subr.mxu0 0.0
    %2200 = vmatpush1.msra.mxu0 %v2029
    %2201 = vmatprep.subr.mxu0 0.0
    %2202 = vmatpush1.msra.mxu0 %v2030
    %2203 = vmatprep.subr.mxu0 0.0
    %2204 = vmatpush1.msra.mxu0 %v2031
    %2205 = vmatprep.subr.mxu0 0.0
    %2206 = vmatpush1.msra.mxu0 %v2032
    %2207 = vmatprep.subr.mxu0 0.0
    %2208 = vmatpush1.msra.mxu0 %v2033
    %2209 = vmatprep.subr.mxu0 0.0
    %2210 = vmatpush1.msra.mxu0 %v2034
    %2211 = vmatprep.mubr.f32.mxu0 %v1428
    %2212 = vmatmul.mubr.f32.gmra.mrb[0].mxu0 %v1427
    %v2213 = vpop.f32.mrb[0].mxu0
    %v2214 = vadd.f32 0.0, %v2213
    %v2215 = vpop.f32.mrb[0].mxu0
    %2216 = vmatprep.mubr.f32.mxu0 %v1437
    %2217 = vmatmul.mubr.f32.gmra.mrb[0].mxu0 %v1436
    %v2218 = vpop.f32.mrb[0].mxu0
    %v2219 = vadd.f32 0.0, %v2218
    %v2220 = vpop.f32.mrb[0].mxu0
    %2221 = vmatprep.mubr.f32.mxu0 %v1446
    %2222 = vmatmul.mubr.f32.gmra.mrb[0].mxu0 %v1445
    %v2223 = vpop.f32.mrb[0].mxu0
    %v2224 = vadd.f32 0.0, %v2223
    %v2225 = vpop.f32.mrb[0].mxu0
    %2226 = vmatprep.mubr.f32.mxu0 %v1455
    %2227 = vmatmul.mubr.f32.gmra.mrb[0].mxu0 %v1454
    %v2228 = vpop.f32.mrb[0].mxu0
    %v2229 = vadd.f32 0.0, %v2228
    %v2230 = vpop.f32.mrb[0].mxu0
    %2231 = vmatprep.mubr.f32.mxu0 %v1464
    %2232 = vmatmul.mubr.f32.gmra.mrb[0].mxu0 %v1463
    %v2233 = vpop.f32.mrb[0].mxu0
    %v2234 = vadd.f32 0.0, %v2233
    %v2235 = vpop.f32.mrb[0].mxu0
    %2236 = vmatprep.mubr.f32.mxu0 %v1473
    %2237 = vmatmul.mubr.f32.gmra.mrb[0].mxu0 %v1472
    %v2238 = vpop.f32.mrb[0].mxu0
    %v2239 = vadd.f32 0.0, %v2238
    %v2240 = vpop.f32.mrb[0].mxu0
    %2241 = vmatprep.mubr.f32.mxu0 %v1482
    %2242 = vmatmul.mubr.f32.gmra.mrb[0].mxu0 %v1481
    %v2243 = vpop.f32.mrb[0].mxu0
    %v2244 = vadd.f32 0.0, %v2243
    %v2245 = vpop.f32.mrb[0].mxu0
    %2246 = vmatprep.mubr.f32.mxu0 %v1491
    %2247 = vmatmul.mubr.f32.gmra.mrb[0].mxu0 %v1490
    %v2248 = vpop.f32.mrb[0].mxu0
    %v2249 = vadd.f32 0.0, %v2248
    %v2250 = vpop.f32.mrb[0].mxu0
    %2251 = vmatprep.mubr.f32.mxu0 %v1500
    %2252 = vmatmul.mubr.f32.gmra.mrb[0].mxu0 %v1499
    %v2253 = vpop.f32.mrb[0].mxu0
    %v2254 = vadd.f32 0.0, %v2253
    %v2255 = vpop.f32.mrb[0].mxu0
    %2256 = vmatprep.mubr.f32.mxu0 %v1509
    %2257 = vmatmul.mubr.f32.gmra.mrb[0].mxu0 %v1508
    %v2258 = vpop.f32.mrb[0].mxu0
    %v2259 = vadd.f32 0.0, %v2258
    %v2260 = vpop.f32.mrb[0].mxu0
    %2261 = vmatprep.mubr.f32.mxu0 %v1518
    %2262 = vmatmul.mubr.f32.gmra.mrb[0].mxu0 %v1517
    %v2263 = vpop.f32.mrb[0].mxu0
    %v2264 = vadd.f32 0.0, %v2263
    %v2265 = vpop.f32.mrb[0].mxu0
    %2266 = vmatprep.mubr.f32.mxu0 %v1527
    %2267 = vmatmul.mubr.f32.gmra.mrb[0].mxu0 %v1526
    %v2268 = vpop.f32.mrb[0].mxu0
    %v2269 = vadd.f32 0.0, %v2268
    %v2270 = vpop.f32.mrb[0].mxu0
    %2271 = vmatprep.mubr.f32.mxu0 %v1536
    %2272 = vmatmul.mubr.f32.gmra.mrb[0].mxu0 %v1535
    %v2273 = vpop.f32.mrb[0].mxu0
    %v2274 = vadd.f32 0.0, %v2273
    %v2275 = vpop.f32.mrb[0].mxu0
    %2276 = vmatprep.mubr.f32.mxu0 %v1545
    %2277 = vmatmul.mubr.f32.gmra.mrb[0].mxu0 %v1544
    %v2278 = vpop.f32.mrb[0].mxu0
    %v2279 = vadd.f32 0.0, %v2278
    %v2280 = vpop.f32.mrb[0].mxu0
    %2281 = vmatprep.mubr.f32.mxu0 %v1554
    %2282 = vmatmul.mubr.f32.gmra.mrb[0].mxu0 %v1553
    %v2283 = vpop.f32.mrb[0].mxu0
    %v2284 = vadd.f32 0.0, %v2283
    %v2285 = vpop.f32.mrb[0].mxu0
    %2286 = vmatprep.mubr.f32.mxu0 %v1563
    %2287 = vmatmul.mubr.f32.gmra.mrb[0].mxu0 %v1562
    %v2288 = vpop.f32.mrb[0].mxu0
    %v2289 = vadd.f32 0.0, %v2288
    %v2290 = vpop.f32.mrb[0].mxu0
    %2291 = vmatprep.mubr.f32.mxu0 %v1572
    %2292 = vmatmul.mubr.f32.gmra.mrb[0].mxu0 %v1571
    %v2293 = vpop.f32.mrb[0].mxu0
    %v2294 = vadd.f32 0.0, %v2293
    %v2295 = vpop.f32.mrb[0].mxu0
    %2296 = vmatprep.mubr.f32.mxu0 %v1581
    %2297 = vmatmul.mubr.f32.gmra.mrb[0].mxu0 %v1580
    %v2298 = vpop.f32.mrb[0].mxu0
    %v2299 = vadd.f32 0.0, %v2298
    %v2300 = vpop.f32.mrb[0].mxu0
    %2301 = vmatprep.mubr.f32.mxu0 %v1590
    %2302 = vmatmul.mubr.f32.gmra.mrb[0].mxu0 %v1589
    %v2303 = vpop.f32.mrb[0].mxu0
    %v2304 = vadd.f32 0.0, %v2303
    %v2305 = vpop.f32.mrb[0].mxu0
    %2306 = vmatprep.mubr.f32.mxu0 %v1599
    %2307 = vmatmul.mubr.f32.gmra.mrb[0].mxu0 %v1598
    %v2308 = vpop.f32.mrb[0].mxu0
    %v2309 = vadd.f32 0.0, %v2308
    %v2310 = vpop.f32.mrb[0].mxu0
    %2311 = vmatprep.mubr.f32.mxu0 %v1608
    %2312 = vmatmul.mubr.f32.gmra.mrb[0].mxu0 %v1607
    %v2313 = vpop.f32.mrb[0].mxu0
    %v2314 = vadd.f32 0.0, %v2313
    %v2315 = vpop.f32.mrb[0].mxu0
    %2316 = vmatprep.mubr.f32.mxu0 %v1617
    %2317 = vmatmul.mubr.f32.gmra.mrb[0].mxu0 %v1616
    %v2318 = vpop.f32.mrb[0].mxu0
    %v2319 = vadd.f32 0.0, %v2318
    %v2320 = vpop.f32.mrb[0].mxu0
    %2321 = vmatprep.mubr.f32.mxu0 %v1626
    %2322 = vmatmul.mubr.f32.gmra.mrb[0].mxu0 %v1625
    %v2323 = vpop.f32.mrb[0].mxu0
    %v2324 = vadd.f32 0.0, %v2323
    %v2325 = vpop.f32.mrb[0].mxu0
    %2326 = vmatprep.mubr.f32.mxu0 %v1635
    %2327 = vmatmul.mubr.f32.gmra.mrb[0].mxu0 %v1634
    %v2328 = vpop.f32.mrb[0].mxu0
    %v2329 = vadd.f32 0.0, %v2328
    %v2330 = vpop.f32.mrb[0].mxu0
    %2331 = vmatprep.mubr.f32.mxu0 %v1644
    %2332 = vmatmul.mubr.f32.gmra.mrb[0].mxu0 %v1643
    %v2333 = vpop.f32.mrb[0].mxu0
    %v2334 = vadd.f32 0.0, %v2333
    %v2335 = vpop.f32.mrb[0].mxu0
    %2336 = vmatprep.mubr.f32.mxu0 %v1653
    %2337 = vmatmul.mubr.f32.gmra.mrb[0].mxu0 %v1652
    %v2338 = vpop.f32.mrb[0].mxu0
    %v2339 = vadd.f32 0.0, %v2338
    %v2340 = vpop.f32.mrb[0].mxu0
    %2341 = vmatprep.mubr.f32.mxu0 %v1662
    %2342 = vmatmul.mubr.f32.gmra.mrb[0].mxu0 %v1661
    %v2343 = vpop.f32.mrb[0].mxu0
    %v2344 = vadd.f32 0.0, %v2343
    %v2345 = vpop.f32.mrb[0].mxu0
    %2346 = vmatprep.mubr.f32.mxu0 %v1671
    %2347 = vmatmul.mubr.f32.gmra.mrb[0].mxu0 %v1670
    %v2348 = vpop.f32.mrb[0].mxu0
    %v2349 = vadd.f32 0.0, %v2348
    %v2350 = vpop.f32.mrb[0].mxu0
    %2351 = vmatprep.mubr.f32.mxu0 %v1680
    %2352 = vmatmul.mubr.f32.gmra.mrb[0].mxu0 %v1679
    %v2353 = vpop.f32.mrb[0].mxu0
    %v2354 = vadd.f32 0.0, %v2353
    %v2355 = vpop.f32.mrb[0].mxu0
    %2356 = vmatprep.mubr.f32.mxu0 %v1689
    %2357 = vmatmul.mubr.f32.gmra.mrb[0].mxu0 %v1688
    %v2358 = vpop.f32.mrb[0].mxu0
    %v2359 = vadd.f32 0.0, %v2358
    %v2360 = vpop.f32.mrb[0].mxu0
    %2361 = vmatprep.mubr.f32.mxu0 %v1698
    %2362 = vmatmul.mubr.f32.gmra.mrb[0].mxu0 %v1697
    %v2363 = vpop.f32.mrb[0].mxu0
    %v2364 = vadd.f32 0.0, %v2363
    %v2365 = vpop.f32.mrb[0].mxu0
    %2366 = vmatprep.mubr.f32.mxu0 %v1707
    %2367 = vmatmul.mubr.f32.gmra.mrb[0].mxu0 %v1706
    %v2368 = vpop.f32.mrb[0].mxu0
    %v2369 = vadd.f32 0.0, %v2368
    %v2370 = vpop.f32.mrb[0].mxu0
    %2371 = vmatprep.mubr.f32.mxu0 %v1716
    %2372 = vmatmul.mubr.f32.gmra.mrb[0].mxu0 %v1715
    %v2373 = vpop.f32.mrb[0].mxu0
    %v2374 = vadd.f32 0.0, %v2373
    %v2375 = vpop.f32.mrb[0].mxu0
    %2376 = vmatprep.mubr.f32.mxu0 %v1725
    %2377 = vmatmul.mubr.f32.gmra.mrb[0].mxu0 %v1724
    %v2378 = vpop.f32.mrb[0].mxu0
    %v2379 = vadd.f32 0.0, %v2378
    %v2380 = vpop.f32.mrb[0].mxu0
    %2381 = vmatprep.mubr.f32.mxu0 %v1734
    %2382 = vmatmul.mubr.f32.gmra.mrb[0].mxu0 %v1733
    %v2383 = vpop.f32.mrb[0].mxu0
    %v2384 = vadd.f32 0.0, %v2383
    %v2385 = vpop.f32.mrb[0].mxu0
    %2386 = vmatprep.mubr.f32.mxu0 %v1743
    %2387 = vmatmul.mubr.f32.gmra.mrb[0].mxu0 %v1742
    %v2388 = vpop.f32.mrb[0].mxu0
    %v2389 = vadd.f32 0.0, %v2388
    %v2390 = vpop.f32.mrb[0].mxu0
    %2391 = vmatprep.mubr.f32.mxu0 %v1752
    %2392 = vmatmul.mubr.f32.gmra.mrb[0].mxu0 %v1751
    %v2393 = vpop.f32.mrb[0].mxu0
    %v2394 = vadd.f32 0.0, %v2393
    %v2395 = vpop.f32.mrb[0].mxu0
    %2396 = vmatprep.mubr.f32.mxu0 %v1761
    %2397 = vmatmul.mubr.f32.gmra.mrb[0].mxu0 %v1760
    %v2398 = vpop.f32.mrb[0].mxu0
    %v2399 = vadd.f32 0.0, %v2398
    %v2400 = vpop.f32.mrb[0].mxu0
    %2401 = vmatprep.mubr.f32.mxu0 %v1770
    %2402 = vmatmul.mubr.f32.gmra.mrb[0].mxu0 %v1769
    %v2403 = vpop.f32.mrb[0].mxu0
    %v2404 = vadd.f32 0.0, %v2403
    %v2405 = vpop.f32.mrb[0].mxu0
    %2406 = vmatprep.mubr.f32.mxu0 %v1779
    %2407 = vmatmul.mubr.f32.gmra.mrb[0].mxu0 %v1778
    %v2408 = vpop.f32.mrb[0].mxu0
    %v2409 = vadd.f32 0.0, %v2408
    %v2410 = vpop.f32.mrb[0].mxu0
    %2411 = vmatprep.mubr.f32.mxu0 %v1788
    %2412 = vmatmul.mubr.f32.gmra.mrb[0].mxu0 %v1787
    %v2413 = vpop.f32.mrb[0].mxu0
    %v2414 = vadd.f32 0.0, %v2413
    %v2415 = vpop.f32.mrb[0].mxu0
    %2416 = vmatprep.mubr.f32.mxu0 %v1797
    %2417 = vmatmul.mubr.f32.gmra.mrb[0].mxu0 %v1796
    %v2418 = vpop.f32.mrb[0].mxu0
    %v2419 = vadd.f32 0.0, %v2418
    %v2420 = vpop.f32.mrb[0].mxu0
    %2421 = vmatprep.mubr.f32.mxu0 %v1806
    %2422 = vmatmul.mubr.f32.gmra.mrb[0].mxu0 %v1805
    %v2423 = vpop.f32.mrb[0].mxu0
    %v2424 = vadd.f32 0.0, %v2423
    %v2425 = vpop.f32.mrb[0].mxu0
    %2426 = vmatprep.mubr.f32.mxu0 %v1815
    %2427 = vmatmul.mubr.f32.gmra.mrb[0].mxu0 %v1814
    %v2428 = vpop.f32.mrb[0].mxu0
    %v2429 = vadd.f32 0.0, %v2428
    %v2430 = vpop.f32.mrb[0].mxu0
    %2431 = vmatprep.mubr.f32.mxu0 %v1824
    %2432 = vmatmul.mubr.f32.gmra.mrb[0].mxu0 %v1823
    %v2433 = vpop.f32.mrb[0].mxu0
    %v2434 = vadd.f32 0.0, %v2433
    %v2435 = vpop.f32.mrb[0].mxu0
    %2436 = vmatprep.mubr.f32.mxu0 %v1833
    %2437 = vmatmul.mubr.f32.gmra.mrb[0].mxu0 %v1832
    %v2438 = vpop.f32.mrb[0].mxu0
    %v2439 = vadd.f32 0.0, %v2438
    %v2440 = vpop.f32.mrb[0].mxu0
    %2441 = vmatprep.mubr.f32.mxu0 %v1842
    %2442 = vmatmul.mubr.f32.gmra.mrb[0].mxu0 %v1841
    %v2443 = vpop.f32.mrb[0].mxu0
    %v2444 = vadd.f32 0.0, %v2443
    %v2445 = vpop.f32.mrb[0].mxu0
    %2446 = vmatprep.mubr.f32.mxu0 %v1851
    %2447 = vmatmul.mubr.f32.gmra.mrb[0].mxu0 %v1850
    %v2448 = vpop.f32.mrb[0].mxu0
    %v2449 = vadd.f32 0.0, %v2448
    %v2450 = vpop.f32.mrb[0].mxu0
    %2451 = vmatprep.mubr.f32.mxu0 %v1860
    %2452 = vmatmul.mubr.f32.gmra.mrb[0].mxu0 %v1859
    %v2453 = vpop.f32.mrb[0].mxu0
    %v2454 = vadd.f32 0.0, %v2453
    %v2455 = vpop.f32.mrb[0].mxu0
    %2456 = vmatprep.mubr.f32.mxu0 %v1869
    %2457 = vmatmul.mubr.f32.gmra.mrb[0].mxu0 %v1868
    %v2458 = vpop.f32.mrb[0].mxu0
    %v2459 = vadd.f32 0.0, %v2458
    %v2460 = vpop.f32.mrb[0].mxu0
    %2461 = vmatprep.mubr.f32.mxu0 %v1878
    %2462 = vmatmul.mubr.f32.gmra.mrb[0].mxu0 %v1877
    %v2463 = vpop.f32.mrb[0].mxu0
    %v2464 = vadd.f32 0.0, %v2463
    %v2465 = vpop.f32.mrb[0].mxu0
    %2466 = vmatprep.mubr.f32.mxu0 %v1887
    %2467 = vmatmul.mubr.f32.gmra.mrb[0].mxu0 %v1886
    %v2468 = vpop.f32.mrb[0].mxu0
    %v2469 = vadd.f32 0.0, %v2468
    %v2470 = vpop.f32.mrb[0].mxu0
    %2471 = vmatprep.mubr.f32.mxu0 %v1896
    %2472 = vmatmul.mubr.f32.gmra.mrb[0].mxu0 %v1895
    %v2473 = vpop.f32.mrb[0].mxu0
    %v2474 = vadd.f32 0.0, %v2473
    %v2475 = vpop.f32.mrb[0].mxu0
    %2476 = vmatprep.mubr.f32.mxu0 %v1905
    %2477 = vmatmul.mubr.f32.gmra.mrb[0].mxu0 %v1904
    %v2478 = vpop.f32.mrb[0].mxu0
    %v2479 = vadd.f32 0.0, %v2478
    %v2480 = vpop.f32.mrb[0].mxu0
    %2481 = vmatprep.mubr.f32.mxu0 %v1914
    %2482 = vmatmul.mubr.f32.gmra.mrb[0].mxu0 %v1913
    %v2483 = vpop.f32.mrb[0].mxu0
    %v2484 = vadd.f32 0.0, %v2483
    %v2485 = vpop.f32.mrb[0].mxu0
    %2486 = vmatprep.mubr.f32.mxu0 %v1923
    %2487 = vmatmul.mubr.f32.gmra.mrb[0].mxu0 %v1922
    %v2488 = vpop.f32.mrb[0].mxu0
    %v2489 = vadd.f32 0.0, %v2488
    %v2490 = vpop.f32.mrb[0].mxu0
    %2491 = vmatprep.mubr.f32.mxu0 %v1932
    %2492 = vmatmul.mubr.f32.gmra.mrb[0].mxu0 %v1931
    %v2493 = vpop.f32.mrb[0].mxu0
    %v2494 = vadd.f32 0.0, %v2493
    %v2495 = vpop.f32.mrb[0].mxu0
    %2496 = vmatprep.mubr.f32.mxu0 %v1941
    %2497 = vmatmul.mubr.f32.gmra.mrb[0].mxu0 %v1940
    %v2498 = vpop.f32.mrb[0].mxu0
    %v2499 = vadd.f32 0.0, %v2498
    %v2500 = vpop.f32.mrb[0].mxu0
    %2501 = vmatprep.mubr.f32.mxu0 %v1950
    %2502 = vmatmul.mubr.f32.gmra.mrb[0].mxu0 %v1949
    %v2503 = vpop.f32.mrb[0].mxu0
    %v2504 = vadd.f32 0.0, %v2503
    %v2505 = vpop.f32.mrb[0].mxu0
    %2506 = vmatprep.mubr.f32.mxu0 %v1959
    %2507 = vmatmul.mubr.f32.gmra.mrb[0].mxu0 %v1958
    %v2508 = vpop.f32.mrb[0].mxu0
    %v2509 = vadd.f32 0.0, %v2508
    %v2510 = vpop.f32.mrb[0].mxu0
    %2511 = vmatprep.mubr.f32.mxu0 %v1968
    %2512 = vmatmul.mubr.f32.gmra.mrb[0].mxu0 %v1967
    %v2513 = vpop.f32.mrb[0].mxu0
    %v2514 = vadd.f32 0.0, %v2513
    %v2515 = vpop.f32.mrb[0].mxu0
    %2516 = vmatprep.mubr.f32.mxu0 %v1977
    %2517 = vmatmul.mubr.f32.gmra.mrb[0].mxu0 %v1976
    %v2518 = vpop.f32.mrb[0].mxu0
    %v2519 = vadd.f32 0.0, %v2518
    %v2520 = vpop.f32.mrb[0].mxu0
    %2521 = vmatprep.mubr.f32.mxu0 %v1986
    %2522 = vmatmul.mubr.f32.gmra.mrb[0].mxu0 %v1985
    %v2523 = vpop.f32.mrb[0].mxu0
    %v2524 = vadd.f32 0.0, %v2523
    %v2525 = vpop.f32.mrb[0].mxu0
    %2526 = vmatprep.mubr.f32.mxu0 %v1995
    %2527 = vmatmul.mubr.f32.gmra.mrb[0].mxu0 %v1994
    %v2528 = vpop.f32.mrb[0].mxu0
    %v2529 = vadd.f32 0.0, %v2528
    %v2530 = vpop.f32.mrb[0].mxu0
    %2531 = vdwg.mxu0
    %2532 = vmatprep.subr.mxu0 0.0
    %2533 = vmatpush1.msra.mxu0 %v2035
    %2534 = vmatprep.subr.mxu0 0.0
    %2535 = vmatpush1.msra.mxu0 %v2036
    %2536 = vmatprep.subr.mxu0 0.0
    %2537 = vmatpush1.msra.mxu0 %v2037
    %2538 = vmatprep.subr.mxu0 0.0
    %2539 = vmatpush1.msra.mxu0 %v2038
    %2540 = vmatprep.subr.mxu0 0.0
    %2541 = vmatpush1.msra.mxu0 %v2039
    %2542 = vmatprep.subr.mxu0 0.0
    %2543 = vmatpush1.msra.mxu0 %v2040
    %2544 = vmatprep.subr.mxu0 0.0
    %2545 = vmatpush1.msra.mxu0 %v2041
    %2546 = vmatprep.subr.mxu0 0.0
    %2547 = vmatpush1.msra.mxu0 %v2042
    %2548 = vmatprep.subr.mxu0 0.0
    %2549 = vmatpush1.msra.mxu0 %v2043
    %2550 = vmatprep.subr.mxu0 0.0
    %2551 = vmatpush1.msra.mxu0 %v2044
    %2552 = vmatprep.subr.mxu0 0.0
    %2553 = vmatpush1.msra.mxu0 %v2045
    %2554 = vmatprep.subr.mxu0 0.0
    %2555 = vmatpush1.msra.mxu0 %v2046
    %2556 = vmatprep.subr.mxu0 0.0
    %2557 = vmatpush1.msra.mxu0 %v2047
    %2558 = vmatprep.subr.mxu0 0.0
    %2559 = vmatpush1.msra.mxu0 %v2048
    %2560 = vmatprep.subr.mxu0 0.0
    %2561 = vmatpush1.msra.mxu0 %v2049
    %2562 = vmatprep.subr.mxu0 0.0
    %2563 = vmatpush1.msra.mxu0 %v2050
    %2564 = vmatprep.subr.mxu0 0.0
    %2565 = vmatpush1.msra.mxu0 %v2051
    %2566 = vmatprep.subr.mxu0 0.0
    %2567 = vmatpush1.msra.mxu0 %v2052
    %2568 = vmatprep.subr.mxu0 0.0
    %2569 = vmatpush1.msra.mxu0 %v2053
    %2570 = vmatprep.subr.mxu0 0.0
    %2571 = vmatpush1.msra.mxu0 %v2054
    %2572 = vmatprep.subr.mxu0 0.0
    %2573 = vmatpush1.msra.mxu0 %v2055
    %2574 = vmatprep.subr.mxu0 0.0
    %2575 = vmatpush1.msra.mxu0 %v2056
    %2576 = vmatprep.subr.mxu0 0.0
    %2577 = vmatpush1.msra.mxu0 %v2057
    %2578 = vmatprep.subr.mxu0 0.0
    %2579 = vmatpush1.msra.mxu0 %v2058
    %2580 = vmatprep.subr.mxu0 0.0
    %2581 = vmatpush1.msra.mxu0 %v2059
    %2582 = vmatprep.subr.mxu0 0.0
    %2583 = vmatpush1.msra.mxu0 %v2060
    %2584 = vmatprep.subr.mxu0 0.0
    %2585 = vmatpush1.msra.mxu0 %v2061
    %2586 = vmatprep.subr.mxu0 0.0
    %2587 = vmatpush1.msra.mxu0 %v2062
    %2588 = vmatprep.subr.mxu0 0.0
    %2589 = vmatpush1.msra.mxu0 %v2063
    %2590 = vmatprep.subr.mxu0 0.0
    %2591 = vmatpush1.msra.mxu0 %v2064
    %2592 = vmatprep.subr.mxu0 0.0
    %2593 = vmatpush1.msra.mxu0 %v2065
    %2594 = vmatprep.subr.mxu0 0.0
    %2595 = vmatpush1.msra.mxu0 %v2066
    %2596 = vmatprep.mubr.f32.mxu0 %v1430
    %2597 = vmatmul.mubr.f32.gmra.mrb[0].mxu0 %v1429
    %v2598 = vpop.f32.mrb[0].mxu0
    %v2599 = vadd.f32 %v2214, %v2598
    %v2600 = vpop.f32.mrb[0].mxu0
    %2601 = vmatprep.mubr.f32.mxu0 %v1439
    %2602 = vmatmul.mubr.f32.gmra.mrb[0].mxu0 %v1438
    %v2603 = vpop.f32.mrb[0].mxu0
    %v2604 = vadd.f32 %v2219, %v2603
    %v2605 = vpop.f32.mrb[0].mxu0
    %2606 = vmatprep.mubr.f32.mxu0 %v1448
    %2607 = vmatmul.mubr.f32.gmra.mrb[0].mxu0 %v1447
    %v2608 = vpop.f32.mrb[0].mxu0
    %v2609 = vadd.f32 %v2224, %v2608
    %v2610 = vpop.f32.mrb[0].mxu0
    %2611 = vmatprep.mubr.f32.mxu0 %v1457
    %2612 = vmatmul.mubr.f32.gmra.mrb[0].mxu0 %v1456
    %v2613 = vpop.f32.mrb[0].mxu0
    %v2614 = vadd.f32 %v2229, %v2613
    %v2615 = vpop.f32.mrb[0].mxu0
    %2616 = vmatprep.mubr.f32.mxu0 %v1466
    %2617 = vmatmul.mubr.f32.gmra.mrb[0].mxu0 %v1465
    %v2618 = vpop.f32.mrb[0].mxu0
    %v2619 = vadd.f32 %v2234, %v2618
    %v2620 = vpop.f32.mrb[0].mxu0
    %2621 = vmatprep.mubr.f32.mxu0 %v1475
    %2622 = vmatmul.mubr.f32.gmra.mrb[0].mxu0 %v1474
    %v2623 = vpop.f32.mrb[0].mxu0
    %v2624 = vadd.f32 %v2239, %v2623
    %v2625 = vpop.f32.mrb[0].mxu0
    %2626 = vmatprep.mubr.f32.mxu0 %v1484
    %2627 = vmatmul.mubr.f32.gmra.mrb[0].mxu0 %v1483
    %v2628 = vpop.f32.mrb[0].mxu0
    %v2629 = vadd.f32 %v2244, %v2628
    %v2630 = vpop.f32.mrb[0].mxu0
    %2631 = vmatprep.mubr.f32.mxu0 %v1493
    %2632 = vmatmul.mubr.f32.gmra.mrb[0].mxu0 %v1492
    %v2633 = vpop.f32.mrb[0].mxu0
    %v2634 = vadd.f32 %v2249, %v2633
    %v2635 = vpop.f32.mrb[0].mxu0
    %2636 = vmatprep.mubr.f32.mxu0 %v1502
    %2637 = vmatmul.mubr.f32.gmra.mrb[0].mxu0 %v1501
    %v2638 = vpop.f32.mrb[0].mxu0
    %v2639 = vadd.f32 %v2254, %v2638
    %v2640 = vpop.f32.mrb[0].mxu0
    %2641 = vmatprep.mubr.f32.mxu0 %v1511
    %2642 = vmatmul.mubr.f32.gmra.mrb[0].mxu0 %v1510
    %v2643 = vpop.f32.mrb[0].mxu0
    %v2644 = vadd.f32 %v2259, %v2643
    %v2645 = vpop.f32.mrb[0].mxu0
    %2646 = vmatprep.mubr.f32.mxu0 %v1520
    %2647 = vmatmul.mubr.f32.gmra.mrb[0].mxu0 %v1519
    %v2648 = vpop.f32.mrb[0].mxu0
    %v2649 = vadd.f32 %v2264, %v2648
    %v2650 = vpop.f32.mrb[0].mxu0
    %2651 = vmatprep.mubr.f32.mxu0 %v1529
    %2652 = vmatmul.mubr.f32.gmra.mrb[0].mxu0 %v1528
    %v2653 = vpop.f32.mrb[0].mxu0
    %v2654 = vadd.f32 %v2269, %v2653
    %v2655 = vpop.f32.mrb[0].mxu0
    %2656 = vmatprep.mubr.f32.mxu0 %v1538
    %2657 = vmatmul.mubr.f32.gmra.mrb[0].mxu0 %v1537
    %v2658 = vpop.f32.mrb[0].mxu0
    %v2659 = vadd.f32 %v2274, %v2658
    %v2660 = vpop.f32.mrb[0].mxu0
    %2661 = vmatprep.mubr.f32.mxu0 %v1547
    %2662 = vmatmul.mubr.f32.gmra.mrb[0].mxu0 %v1546
    %v2663 = vpop.f32.mrb[0].mxu0
    %v2664 = vadd.f32 %v2279, %v2663
    %v2665 = vpop.f32.mrb[0].mxu0
    %2666 = vmatprep.mubr.f32.mxu0 %v1556
    %2667 = vmatmul.mubr.f32.gmra.mrb[0].mxu0 %v1555
    %v2668 = vpop.f32.mrb[0].mxu0
    %v2669 = vadd.f32 %v2284, %v2668
    %v2670 = vpop.f32.mrb[0].mxu0
    %2671 = vmatprep.mubr.f32.mxu0 %v1565
    %2672 = vmatmul.mubr.f32.gmra.mrb[0].mxu0 %v1564
    %v2673 = vpop.f32.mrb[0].mxu0
    %v2674 = vadd.f32 %v2289, %v2673
    %v2675 = vpop.f32.mrb[0].mxu0
    %2676 = vmatprep.mubr.f32.mxu0 %v1574
    %2677 = vmatmul.mubr.f32.gmra.mrb[0].mxu0 %v1573
    %v2678 = vpop.f32.mrb[0].mxu0
    %v2679 = vadd.f32 %v2294, %v2678
    %v2680 = vpop.f32.mrb[0].mxu0
    %2681 = vmatprep.mubr.f32.mxu0 %v1583
    %2682 = vmatmul.mubr.f32.gmra.mrb[0].mxu0 %v1582
    %v2683 = vpop.f32.mrb[0].mxu0
    %v2684 = vadd.f32 %v2299, %v2683
    %v2685 = vpop.f32.mrb[0].mxu0
    %2686 = vmatprep.mubr.f32.mxu0 %v1592
    %2687 = vmatmul.mubr.f32.gmra.mrb[0].mxu0 %v1591
    %v2688 = vpop.f32.mrb[0].mxu0
    %v2689 = vadd.f32 %v2304, %v2688
    %v2690 = vpop.f32.mrb[0].mxu0
    %2691 = vmatprep.mubr.f32.mxu0 %v1601
    %2692 = vmatmul.mubr.f32.gmra.mrb[0].mxu0 %v1600
    %v2693 = vpop.f32.mrb[0].mxu0
    %v2694 = vadd.f32 %v2309, %v2693
    %v2695 = vpop.f32.mrb[0].mxu0
    %2696 = vmatprep.mubr.f32.mxu0 %v1610
    %2697 = vmatmul.mubr.f32.gmra.mrb[0].mxu0 %v1609
    %v2698 = vpop.f32.mrb[0].mxu0
    %v2699 = vadd.f32 %v2314, %v2698
    %v2700 = vpop.f32.mrb[0].mxu0
    %2701 = vmatprep.mubr.f32.mxu0 %v1619
    %2702 = vmatmul.mubr.f32.gmra.mrb[0].mxu0 %v1618
    %v2703 = vpop.f32.mrb[0].mxu0
    %v2704 = vadd.f32 %v2319, %v2703
    %v2705 = vpop.f32.mrb[0].mxu0
    %2706 = vmatprep.mubr.f32.mxu0 %v1628
    %2707 = vmatmul.mubr.f32.gmra.mrb[0].mxu0 %v1627
    %v2708 = vpop.f32.mrb[0].mxu0
    %v2709 = vadd.f32 %v2324, %v2708
    %v2710 = vpop.f32.mrb[0].mxu0
    %2711 = vmatprep.mubr.f32.mxu0 %v1637
    %2712 = vmatmul.mubr.f32.gmra.mrb[0].mxu0 %v1636
    %v2713 = vpop.f32.mrb[0].mxu0
    %v2714 = vadd.f32 %v2329, %v2713
    %v2715 = vpop.f32.mrb[0].mxu0
    %2716 = vmatprep.mubr.f32.mxu0 %v1646
    %2717 = vmatmul.mubr.f32.gmra.mrb[0].mxu0 %v1645
    %v2718 = vpop.f32.mrb[0].mxu0
    %v2719 = vadd.f32 %v2334, %v2718
    %v2720 = vpop.f32.mrb[0].mxu0
    %2721 = vmatprep.mubr.f32.mxu0 %v1655
    %2722 = vmatmul.mubr.f32.gmra.mrb[0].mxu0 %v1654
    %v2723 = vpop.f32.mrb[0].mxu0
    %v2724 = vadd.f32 %v2339, %v2723
    %v2725 = vpop.f32.mrb[0].mxu0
    %2726 = vmatprep.mubr.f32.mxu0 %v1664
    %2727 = vmatmul.mubr.f32.gmra.mrb[0].mxu0 %v1663
    %v2728 = vpop.f32.mrb[0].mxu0
    %v2729 = vadd.f32 %v2344, %v2728
    %v2730 = vpop.f32.mrb[0].mxu0
    %2731 = vmatprep.mubr.f32.mxu0 %v1673
    %2732 = vmatmul.mubr.f32.gmra.mrb[0].mxu0 %v1672
    %v2733 = vpop.f32.mrb[0].mxu0
    %v2734 = vadd.f32 %v2349, %v2733
    %v2735 = vpop.f32.mrb[0].mxu0
    %2736 = vmatprep.mubr.f32.mxu0 %v1682
    %2737 = vmatmul.mubr.f32.gmra.mrb[0].mxu0 %v1681
    %v2738 = vpop.f32.mrb[0].mxu0
    %v2739 = vadd.f32 %v2354, %v2738
    %v2740 = vpop.f32.mrb[0].mxu0
    %2741 = vmatprep.mubr.f32.mxu0 %v1691
    %2742 = vmatmul.mubr.f32.gmra.mrb[0].mxu0 %v1690
    %v2743 = vpop.f32.mrb[0].mxu0
    %v2744 = vadd.f32 %v2359, %v2743
    %v2745 = vpop.f32.mrb[0].mxu0
    %2746 = vmatprep.mubr.f32.mxu0 %v1700
    %2747 = vmatmul.mubr.f32.gmra.mrb[0].mxu0 %v1699
    %v2748 = vpop.f32.mrb[0].mxu0
    %v2749 = vadd.f32 %v2364, %v2748
    %v2750 = vpop.f32.mrb[0].mxu0
    %2751 = vmatprep.mubr.f32.mxu0 %v1709
    %2752 = vmatmul.mubr.f32.gmra.mrb[0].mxu0 %v1708
    %v2753 = vpop.f32.mrb[0].mxu0
    %v2754 = vadd.f32 %v2369, %v2753
    %v2755 = vpop.f32.mrb[0].mxu0
    %2756 = vmatprep.mubr.f32.mxu0 %v1718
    %2757 = vmatmul.mubr.f32.gmra.mrb[0].mxu0 %v1717
    %v2758 = vpop.f32.mrb[0].mxu0
    %v2759 = vadd.f32 %v2374, %v2758
    %v2760 = vpop.f32.mrb[0].mxu0
    %2761 = vmatprep.mubr.f32.mxu0 %v1727
    %2762 = vmatmul.mubr.f32.gmra.mrb[0].mxu0 %v1726
    %v2763 = vpop.f32.mrb[0].mxu0
    %v2764 = vadd.f32 %v2379, %v2763
    %v2765 = vpop.f32.mrb[0].mxu0
    %2766 = vmatprep.mubr.f32.mxu0 %v1736
    %2767 = vmatmul.mubr.f32.gmra.mrb[0].mxu0 %v1735
    %v2768 = vpop.f32.mrb[0].mxu0
    %v2769 = vadd.f32 %v2384, %v2768
    %v2770 = vpop.f32.mrb[0].mxu0
    %2771 = vmatprep.mubr.f32.mxu0 %v1745
    %2772 = vmatmul.mubr.f32.gmra.mrb[0].mxu0 %v1744
    %v2773 = vpop.f32.mrb[0].mxu0
    %v2774 = vadd.f32 %v2389, %v2773
    %v2775 = vpop.f32.mrb[0].mxu0
    %2776 = vmatprep.mubr.f32.mxu0 %v1754
    %2777 = vmatmul.mubr.f32.gmra.mrb[0].mxu0 %v1753
    %v2778 = vpop.f32.mrb[0].mxu0
    %v2779 = vadd.f32 %v2394, %v2778
    %v2780 = vpop.f32.mrb[0].mxu0
    %2781 = vmatprep.mubr.f32.mxu0 %v1763
    %2782 = vmatmul.mubr.f32.gmra.mrb[0].mxu0 %v1762
    %v2783 = vpop.f32.mrb[0].mxu0
    %v2784 = vadd.f32 %v2399, %v2783
    %v2785 = vpop.f32.mrb[0].mxu0
    %2786 = vmatprep.mubr.f32.mxu0 %v1772
    %2787 = vmatmul.mubr.f32.gmra.mrb[0].mxu0 %v1771
    %v2788 = vpop.f32.mrb[0].mxu0
    %v2789 = vadd.f32 %v2404, %v2788
    %v2790 = vpop.f32.mrb[0].mxu0
    %2791 = vmatprep.mubr.f32.mxu0 %v1781
    %2792 = vmatmul.mubr.f32.gmra.mrb[0].mxu0 %v1780
    %v2793 = vpop.f32.mrb[0].mxu0
    %v2794 = vadd.f32 %v2409, %v2793
    %v2795 = vpop.f32.mrb[0].mxu0
    %2796 = vmatprep.mubr.f32.mxu0 %v1790
    %2797 = vmatmul.mubr.f32.gmra.mrb[0].mxu0 %v1789
    %v2798 = vpop.f32.mrb[0].mxu0
    %v2799 = vadd.f32 %v2414, %v2798
    %v2800 = vpop.f32.mrb[0].mxu0
    %2801 = vmatprep.mubr.f32.mxu0 %v1799
    %2802 = vmatmul.mubr.f32.gmra.mrb[0].mxu0 %v1798
    %v2803 = vpop.f32.mrb[0].mxu0
    %v2804 = vadd.f32 %v2419, %v2803
    %v2805 = vpop.f32.mrb[0].mxu0
    %2806 = vmatprep.mubr.f32.mxu0 %v1808
    %2807 = vmatmul.mubr.f32.gmra.mrb[0].mxu0 %v1807
    %v2808 = vpop.f32.mrb[0].mxu0
    %v2809 = vadd.f32 %v2424, %v2808
    %v2810 = vpop.f32.mrb[0].mxu0
    %2811 = vmatprep.mubr.f32.mxu0 %v1817
    %2812 = vmatmul.mubr.f32.gmra.mrb[0].mxu0 %v1816
    %v2813 = vpop.f32.mrb[0].mxu0
    %v2814 = vadd.f32 %v2429, %v2813
    %v2815 = vpop.f32.mrb[0].mxu0
    %2816 = vmatprep.mubr.f32.mxu0 %v1826
    %2817 = vmatmul.mubr.f32.gmra.mrb[0].mxu0 %v1825
    %v2818 = vpop.f32.mrb[0].mxu0
    %v2819 = vadd.f32 %v2434, %v2818
    %v2820 = vpop.f32.mrb[0].mxu0
    %2821 = vmatprep.mubr.f32.mxu0 %v1835
    %2822 = vmatmul.mubr.f32.gmra.mrb[0].mxu0 %v1834
    %v2823 = vpop.f32.mrb[0].mxu0
    %v2824 = vadd.f32 %v2439, %v2823
    %v2825 = vpop.f32.mrb[0].mxu0
    %2826 = vmatprep.mubr.f32.mxu0 %v1844
    %2827 = vmatmul.mubr.f32.gmra.mrb[0].mxu0 %v1843
    %v2828 = vpop.f32.mrb[0].mxu0
    %v2829 = vadd.f32 %v2444, %v2828
    %v2830 = vpop.f32.mrb[0].mxu0
    %2831 = vmatprep.mubr.f32.mxu0 %v1853
    %2832 = vmatmul.mubr.f32.gmra.mrb[0].mxu0 %v1852
    %v2833 = vpop.f32.mrb[0].mxu0
    %v2834 = vadd.f32 %v2449, %v2833
    %v2835 = vpop.f32.mrb[0].mxu0
    %2836 = vmatprep.mubr.f32.mxu0 %v1862
    %2837 = vmatmul.mubr.f32.gmra.mrb[0].mxu0 %v1861
    %v2838 = vpop.f32.mrb[0].mxu0
    %v2839 = vadd.f32 %v2454, %v2838
    %v2840 = vpop.f32.mrb[0].mxu0
    %2841 = vmatprep.mubr.f32.mxu0 %v1871
    %2842 = vmatmul.mubr.f32.gmra.mrb[0].mxu0 %v1870
    %v2843 = vpop.f32.mrb[0].mxu0
    %v2844 = vadd.f32 %v2459, %v2843
    %v2845 = vpop.f32.mrb[0].mxu0
    %2846 = vmatprep.mubr.f32.mxu0 %v1880
    %2847 = vmatmul.mubr.f32.gmra.mrb[0].mxu0 %v1879
    %v2848 = vpop.f32.mrb[0].mxu0
    %v2849 = vadd.f32 %v2464, %v2848
    %v2850 = vpop.f32.mrb[0].mxu0
    %2851 = vmatprep.mubr.f32.mxu0 %v1889
    %2852 = vmatmul.mubr.f32.gmra.mrb[0].mxu0 %v1888
    %v2853 = vpop.f32.mrb[0].mxu0
    %v2854 = vadd.f32 %v2469, %v2853
    %v2855 = vpop.f32.mrb[0].mxu0
    %2856 = vmatprep.mubr.f32.mxu0 %v1898
    %2857 = vmatmul.mubr.f32.gmra.mrb[0].mxu0 %v1897
    %v2858 = vpop.f32.mrb[0].mxu0
    %v2859 = vadd.f32 %v2474, %v2858
    %v2860 = vpop.f32.mrb[0].mxu0
    %2861 = vmatprep.mubr.f32.mxu0 %v1907
    %2862 = vmatmul.mubr.f32.gmra.mrb[0].mxu0 %v1906
    %v2863 = vpop.f32.mrb[0].mxu0
    %v2864 = vadd.f32 %v2479, %v2863
    %v2865 = vpop.f32.mrb[0].mxu0
    %2866 = vmatprep.mubr.f32.mxu0 %v1916
    %2867 = vmatmul.mubr.f32.gmra.mrb[0].mxu0 %v1915
    %v2868 = vpop.f32.mrb[0].mxu0
    %v2869 = vadd.f32 %v2484, %v2868
    %v2870 = vpop.f32.mrb[0].mxu0
    %2871 = vmatprep.mubr.f32.mxu0 %v1925
    %2872 = vmatmul.mubr.f32.gmra.mrb[0].mxu0 %v1924
    %v2873 = vpop.f32.mrb[0].mxu0
    %v2874 = vadd.f32 %v2489, %v2873
    %v2875 = vpop.f32.mrb[0].mxu0
    %2876 = vmatprep.mubr.f32.mxu0 %v1934
    %2877 = vmatmul.mubr.f32.gmra.mrb[0].mxu0 %v1933
    %v2878 = vpop.f32.mrb[0].mxu0
    %v2879 = vadd.f32 %v2494, %v2878
    %v2880 = vpop.f32.mrb[0].mxu0
    %2881 = vmatprep.mubr.f32.mxu0 %v1943
    %2882 = vmatmul.mubr.f32.gmra.mrb[0].mxu0 %v1942
    %v2883 = vpop.f32.mrb[0].mxu0
    %v2884 = vadd.f32 %v2499, %v2883
    %v2885 = vpop.f32.mrb[0].mxu0
    %2886 = vmatprep.mubr.f32.mxu0 %v1952
    %2887 = vmatmul.mubr.f32.gmra.mrb[0].mxu0 %v1951
    %v2888 = vpop.f32.mrb[0].mxu0
    %v2889 = vadd.f32 %v2504, %v2888
    %v2890 = vpop.f32.mrb[0].mxu0
    %2891 = vmatprep.mubr.f32.mxu0 %v1961
    %2892 = vmatmul.mubr.f32.gmra.mrb[0].mxu0 %v1960
    %v2893 = vpop.f32.mrb[0].mxu0
    %v2894 = vadd.f32 %v2509, %v2893
    %v2895 = vpop.f32.mrb[0].mxu0
    %2896 = vmatprep.mubr.f32.mxu0 %v1970
    %2897 = vmatmul.mubr.f32.gmra.mrb[0].mxu0 %v1969
    %v2898 = vpop.f32.mrb[0].mxu0
    %v2899 = vadd.f32 %v2514, %v2898
    %v2900 = vpop.f32.mrb[0].mxu0
    %2901 = vmatprep.mubr.f32.mxu0 %v1979
    %2902 = vmatmul.mubr.f32.gmra.mrb[0].mxu0 %v1978
    %v2903 = vpop.f32.mrb[0].mxu0
    %v2904 = vadd.f32 %v2519, %v2903
    %v2905 = vpop.f32.mrb[0].mxu0
    %2906 = vmatprep.mubr.f32.mxu0 %v1988
    %2907 = vmatmul.mubr.f32.gmra.mrb[0].mxu0 %v1987
    %v2908 = vpop.f32.mrb[0].mxu0
    %v2909 = vadd.f32 %v2524, %v2908
    %v2910 = vpop.f32.mrb[0].mxu0
    %2911 = vmatprep.mubr.f32.mxu0 %v1997
    %2912 = vmatmul.mubr.f32.gmra.mrb[0].mxu0 %v1996
    %v2913 = vpop.f32.mrb[0].mxu0
    %v2914 = vadd.f32 %v2529, %v2913
    %v2915 = vpop.f32.mrb[0].mxu0
    %2916 = vdwg.mxu0
    %2917 = vmatprep.subr.mxu0 0.0
    %2918 = vmatpush1.msra.mxu0 %v2067
    %2919 = vmatprep.subr.mxu0 0.0
    %2920 = vmatpush1.msra.mxu0 %v2068
    %2921 = vmatprep.subr.mxu0 0.0
    %2922 = vmatpush1.msra.mxu0 %v2069
    %2923 = vmatprep.subr.mxu0 0.0
    %2924 = vmatpush1.msra.mxu0 %v2070
    %2925 = vmatprep.subr.mxu0 0.0
    %2926 = vmatpush1.msra.mxu0 %v2071
    %2927 = vmatprep.subr.mxu0 0.0
    %2928 = vmatpush1.msra.mxu0 %v2072
    %2929 = vmatprep.subr.mxu0 0.0
    %2930 = vmatpush1.msra.mxu0 %v2073
    %2931 = vmatprep.subr.mxu0 0.0
    %2932 = vmatpush1.msra.mxu0 %v2074
    %2933 = vmatprep.subr.mxu0 0.0
    %2934 = vmatpush1.msra.mxu0 %v2075
    %2935 = vmatprep.subr.mxu0 0.0
    %2936 = vmatpush1.msra.mxu0 %v2076
    %2937 = vmatprep.subr.mxu0 0.0
    %2938 = vmatpush1.msra.mxu0 %v2077
    %2939 = vmatprep.subr.mxu0 0.0
    %2940 = vmatpush1.msra.mxu0 %v2078
    %2941 = vmatprep.subr.mxu0 0.0
    %2942 = vmatpush1.msra.mxu0 %v2079
    %2943 = vmatprep.subr.mxu0 0.0
    %2944 = vmatpush1.msra.mxu0 %v2080
    %2945 = vmatprep.subr.mxu0 0.0
    %2946 = vmatpush1.msra.mxu0 %v2081
    %2947 = vmatprep.subr.mxu0 0.0
    %2948 = vmatpush1.msra.mxu0 %v2082
    %2949 = vmatprep.subr.mxu0 0.0
    %2950 = vmatpush1.msra.mxu0 %v2083
    %2951 = vmatprep.subr.mxu0 0.0
    %2952 = vmatpush1.msra.mxu0 %v2084
    %2953 = vmatprep.subr.mxu0 0.0
    %2954 = vmatpush1.msra.mxu0 %v2085
    %2955 = vmatprep.subr.mxu0 0.0
    %2956 = vmatpush1.msra.mxu0 %v2086
    %2957 = vmatprep.subr.mxu0 0.0
    %2958 = vmatpush1.msra.mxu0 %v2087
    %2959 = vmatprep.subr.mxu0 0.0
    %2960 = vmatpush1.msra.mxu0 %v2088
    %2961 = vmatprep.subr.mxu0 0.0
    %2962 = vmatpush1.msra.mxu0 %v2089
    %2963 = vmatprep.subr.mxu0 0.0
    %2964 = vmatpush1.msra.mxu0 %v2090
    %2965 = vmatprep.subr.mxu0 0.0
    %2966 = vmatpush1.msra.mxu0 %v2091
    %2967 = vmatprep.subr.mxu0 0.0
    %2968 = vmatpush1.msra.mxu0 %v2092
    %2969 = vmatprep.subr.mxu0 0.0
    %2970 = vmatpush1.msra.mxu0 %v2093
    %2971 = vmatprep.subr.mxu0 0.0
    %2972 = vmatpush1.msra.mxu0 %v2094
    %2973 = vmatprep.subr.mxu0 0.0
    %2974 = vmatpush1.msra.mxu0 %v2095
    %2975 = vmatprep.subr.mxu0 0.0
    %2976 = vmatpush1.msra.mxu0 %v2096
    %2977 = vmatprep.subr.mxu0 0.0
    %2978 = vmatpush1.msra.mxu0 %v2097
    %2979 = vmatprep.subr.mxu0 0.0
    %2980 = vmatpush1.msra.mxu0 %v2098
    %2981 = vmatprep.mubr.f32.mxu0 %v1432
    %2982 = vmatmul.mubr.f32.gmra.mrb[0].mxu0 %v1431
    %v2983 = vpop.f32.mrb[0].mxu0
    %v2984 = vadd.f32 %v2599, %v2983
    %v2985 = vpop.f32.mrb[0].mxu0
    %2986 = vmatprep.mubr.f32.mxu0 %v1441
    %2987 = vmatmul.mubr.f32.gmra.mrb[0].mxu0 %v1440
    %v2988 = vpop.f32.mrb[0].mxu0
    %v2989 = vadd.f32 %v2604, %v2988
    %v2990 = vpop.f32.mrb[0].mxu0
    %2991 = vmatprep.mubr.f32.mxu0 %v1450
    %2992 = vmatmul.mubr.f32.gmra.mrb[0].mxu0 %v1449
    %v2993 = vpop.f32.mrb[0].mxu0
    %v2994 = vadd.f32 %v2609, %v2993
    %v2995 = vpop.f32.mrb[0].mxu0
    %2996 = vmatprep.mubr.f32.mxu0 %v1459
    %2997 = vmatmul.mubr.f32.gmra.mrb[0].mxu0 %v1458
    %v2998 = vpop.f32.mrb[0].mxu0
    %v2999 = vadd.f32 %v2614, %v2998
    %v3000 = vpop.f32.mrb[0].mxu0
    %3001 = vmatprep.mubr.f32.mxu0 %v1468
    %3002 = vmatmul.mubr.f32.gmra.mrb[0].mxu0 %v1467
    %v3003 = vpop.f32.mrb[0].mxu0
    %v3004 = vadd.f32 %v2619, %v3003
    %v3005 = vpop.f32.mrb[0].mxu0
    %3006 = vmatprep.mubr.f32.mxu0 %v1477
    %3007 = vmatmul.mubr.f32.gmra.mrb[0].mxu0 %v1476
    %v3008 = vpop.f32.mrb[0].mxu0
    %v3009 = vadd.f32 %v2624, %v3008
    %v3010 = vpop.f32.mrb[0].mxu0
    %3011 = vmatprep.mubr.f32.mxu0 %v1486
    %3012 = vmatmul.mubr.f32.gmra.mrb[0].mxu0 %v1485
    %v3013 = vpop.f32.mrb[0].mxu0
    %v3014 = vadd.f32 %v2629, %v3013
    %v3015 = vpop.f32.mrb[0].mxu0
    %3016 = vmatprep.mubr.f32.mxu0 %v1495
    %3017 = vmatmul.mubr.f32.gmra.mrb[0].mxu0 %v1494
    %v3018 = vpop.f32.mrb[0].mxu0
    %v3019 = vadd.f32 %v2634, %v3018
    %v3020 = vpop.f32.mrb[0].mxu0
    %3021 = vmatprep.mubr.f32.mxu0 %v1504
    %3022 = vmatmul.mubr.f32.gmra.mrb[0].mxu0 %v1503
    %v3023 = vpop.f32.mrb[0].mxu0
    %v3024 = vadd.f32 %v2639, %v3023
    %v3025 = vpop.f32.mrb[0].mxu0
    %3026 = vmatprep.mubr.f32.mxu0 %v1513
    %3027 = vmatmul.mubr.f32.gmra.mrb[0].mxu0 %v1512
    %v3028 = vpop.f32.mrb[0].mxu0
    %v3029 = vadd.f32 %v2644, %v3028
    %v3030 = vpop.f32.mrb[0].mxu0
    %3031 = vmatprep.mubr.f32.mxu0 %v1522
    %3032 = vmatmul.mubr.f32.gmra.mrb[0].mxu0 %v1521
    %v3033 = vpop.f32.mrb[0].mxu0
    %v3034 = vadd.f32 %v2649, %v3033
    %v3035 = vpop.f32.mrb[0].mxu0
    %3036 = vmatprep.mubr.f32.mxu0 %v1531
    %3037 = vmatmul.mubr.f32.gmra.mrb[0].mxu0 %v1530
    %v3038 = vpop.f32.mrb[0].mxu0
    %v3039 = vadd.f32 %v2654, %v3038
    %v3040 = vpop.f32.mrb[0].mxu0
    %3041 = vmatprep.mubr.f32.mxu0 %v1540
    %3042 = vmatmul.mubr.f32.gmra.mrb[0].mxu0 %v1539
    %v3043 = vpop.f32.mrb[0].mxu0
    %v3044 = vadd.f32 %v2659, %v3043
    %v3045 = vpop.f32.mrb[0].mxu0
    %3046 = vmatprep.mubr.f32.mxu0 %v1549
    %3047 = vmatmul.mubr.f32.gmra.mrb[0].mxu0 %v1548
    %v3048 = vpop.f32.mrb[0].mxu0
    %v3049 = vadd.f32 %v2664, %v3048
    %v3050 = vpop.f32.mrb[0].mxu0
    %3051 = vmatprep.mubr.f32.mxu0 %v1558
    %3052 = vmatmul.mubr.f32.gmra.mrb[0].mxu0 %v1557
    %v3053 = vpop.f32.mrb[0].mxu0
    %v3054 = vadd.f32 %v2669, %v3053
    %v3055 = vpop.f32.mrb[0].mxu0
    %3056 = vmatprep.mubr.f32.mxu0 %v1567
    %3057 = vmatmul.mubr.f32.gmra.mrb[0].mxu0 %v1566
    %v3058 = vpop.f32.mrb[0].mxu0
    %v3059 = vadd.f32 %v2674, %v3058
    %v3060 = vpop.f32.mrb[0].mxu0
    %3061 = vmatprep.mubr.f32.mxu0 %v1576
    %3062 = vmatmul.mubr.f32.gmra.mrb[0].mxu0 %v1575
    %v3063 = vpop.f32.mrb[0].mxu0
    %v3064 = vadd.f32 %v2679, %v3063
    %v3065 = vpop.f32.mrb[0].mxu0
    %3066 = vmatprep.mubr.f32.mxu0 %v1585
    %3067 = vmatmul.mubr.f32.gmra.mrb[0].mxu0 %v1584
    %v3068 = vpop.f32.mrb[0].mxu0
    %v3069 = vadd.f32 %v2684, %v3068
    %v3070 = vpop.f32.mrb[0].mxu0
    %3071 = vmatprep.mubr.f32.mxu0 %v1594
    %3072 = vmatmul.mubr.f32.gmra.mrb[0].mxu0 %v1593
    %v3073 = vpop.f32.mrb[0].mxu0
    %v3074 = vadd.f32 %v2689, %v3073
    %v3075 = vpop.f32.mrb[0].mxu0
    %3076 = vmatprep.mubr.f32.mxu0 %v1603
    %3077 = vmatmul.mubr.f32.gmra.mrb[0].mxu0 %v1602
    %v3078 = vpop.f32.mrb[0].mxu0
    %v3079 = vadd.f32 %v2694, %v3078
    %v3080 = vpop.f32.mrb[0].mxu0
    %3081 = vmatprep.mubr.f32.mxu0 %v1612
    %3082 = vmatmul.mubr.f32.gmra.mrb[0].mxu0 %v1611
    %v3083 = vpop.f32.mrb[0].mxu0
    %v3084 = vadd.f32 %v2699, %v3083
    %v3085 = vpop.f32.mrb[0].mxu0
    %3086 = vmatprep.mubr.f32.mxu0 %v1621
    %3087 = vmatmul.mubr.f32.gmra.mrb[0].mxu0 %v1620
    %v3088 = vpop.f32.mrb[0].mxu0
    %v3089 = vadd.f32 %v2704, %v3088
    %v3090 = vpop.f32.mrb[0].mxu0
    %3091 = vmatprep.mubr.f32.mxu0 %v1630
    %3092 = vmatmul.mubr.f32.gmra.mrb[0].mxu0 %v1629
    %v3093 = vpop.f32.mrb[0].mxu0
    %v3094 = vadd.f32 %v2709, %v3093
    %v3095 = vpop.f32.mrb[0].mxu0
    %3096 = vmatprep.mubr.f32.mxu0 %v1639
    %3097 = vmatmul.mubr.f32.gmra.mrb[0].mxu0 %v1638
    %v3098 = vpop.f32.mrb[0].mxu0
    %v3099 = vadd.f32 %v2714, %v3098
    %v3100 = vpop.f32.mrb[0].mxu0
    %3101 = vmatprep.mubr.f32.mxu0 %v1648
    %3102 = vmatmul.mubr.f32.gmra.mrb[0].mxu0 %v1647
    %v3103 = vpop.f32.mrb[0].mxu0
    %v3104 = vadd.f32 %v2719, %v3103
    %v3105 = vpop.f32.mrb[0].mxu0
    %3106 = vmatprep.mubr.f32.mxu0 %v1657
    %3107 = vmatmul.mubr.f32.gmra.mrb[0].mxu0 %v1656
    %v3108 = vpop.f32.mrb[0].mxu0
    %v3109 = vadd.f32 %v2724, %v3108
    %v3110 = vpop.f32.mrb[0].mxu0
    %3111 = vmatprep.mubr.f32.mxu0 %v1666
    %3112 = vmatmul.mubr.f32.gmra.mrb[0].mxu0 %v1665
    %v3113 = vpop.f32.mrb[0].mxu0
    %v3114 = vadd.f32 %v2729, %v3113
    %v3115 = vpop.f32.mrb[0].mxu0
    %3116 = vmatprep.mubr.f32.mxu0 %v1675
    %3117 = vmatmul.mubr.f32.gmra.mrb[0].mxu0 %v1674
    %v3118 = vpop.f32.mrb[0].mxu0
    %v3119 = vadd.f32 %v2734, %v3118
    %v3120 = vpop.f32.mrb[0].mxu0
    %3121 = vmatprep.mubr.f32.mxu0 %v1684
    %3122 = vmatmul.mubr.f32.gmra.mrb[0].mxu0 %v1683
    %v3123 = vpop.f32.mrb[0].mxu0
    %v3124 = vadd.f32 %v2739, %v3123
    %v3125 = vpop.f32.mrb[0].mxu0
    %3126 = vmatprep.mubr.f32.mxu0 %v1693
    %3127 = vmatmul.mubr.f32.gmra.mrb[0].mxu0 %v1692
    %v3128 = vpop.f32.mrb[0].mxu0
    %v3129 = vadd.f32 %v2744, %v3128
    %v3130 = vpop.f32.mrb[0].mxu0
    %3131 = vmatprep.mubr.f32.mxu0 %v1702
    %3132 = vmatmul.mubr.f32.gmra.mrb[0].mxu0 %v1701
    %v3133 = vpop.f32.mrb[0].mxu0
    %v3134 = vadd.f32 %v2749, %v3133
    %v3135 = vpop.f32.mrb[0].mxu0
    %3136 = vmatprep.mubr.f32.mxu0 %v1711
    %3137 = vmatmul.mubr.f32.gmra.mrb[0].mxu0 %v1710
    %v3138 = vpop.f32.mrb[0].mxu0
    %v3139 = vadd.f32 %v2754, %v3138
    %v3140 = vpop.f32.mrb[0].mxu0
    %3141 = vmatprep.mubr.f32.mxu0 %v1720
    %3142 = vmatmul.mubr.f32.gmra.mrb[0].mxu0 %v1719
    %v3143 = vpop.f32.mrb[0].mxu0
    %v3144 = vadd.f32 %v2759, %v3143
    %v3145 = vpop.f32.mrb[0].mxu0
    %3146 = vmatprep.mubr.f32.mxu0 %v1729
    %3147 = vmatmul.mubr.f32.gmra.mrb[0].mxu0 %v1728
    %v3148 = vpop.f32.mrb[0].mxu0
    %v3149 = vadd.f32 %v2764, %v3148
    %v3150 = vpop.f32.mrb[0].mxu0
    %3151 = vmatprep.mubr.f32.mxu0 %v1738
    %3152 = vmatmul.mubr.f32.gmra.mrb[0].mxu0 %v1737
    %v3153 = vpop.f32.mrb[0].mxu0
    %v3154 = vadd.f32 %v2769, %v3153
    %v3155 = vpop.f32.mrb[0].mxu0
    %3156 = vmatprep.mubr.f32.mxu0 %v1747
    %3157 = vmatmul.mubr.f32.gmra.mrb[0].mxu0 %v1746
    %v3158 = vpop.f32.mrb[0].mxu0
    %v3159 = vadd.f32 %v2774, %v3158
    %v3160 = vpop.f32.mrb[0].mxu0
    %3161 = vmatprep.mubr.f32.mxu0 %v1756
    %3162 = vmatmul.mubr.f32.gmra.mrb[0].mxu0 %v1755
    %v3163 = vpop.f32.mrb[0].mxu0
    %v3164 = vadd.f32 %v2779, %v3163
    %v3165 = vpop.f32.mrb[0].mxu0
    %3166 = vmatprep.mubr.f32.mxu0 %v1765
    %3167 = vmatmul.mubr.f32.gmra.mrb[0].mxu0 %v1764
    %v3168 = vpop.f32.mrb[0].mxu0
    %v3169 = vadd.f32 %v2784, %v3168
    %v3170 = vpop.f32.mrb[0].mxu0
    %3171 = vmatprep.mubr.f32.mxu0 %v1774
    %3172 = vmatmul.mubr.f32.gmra.mrb[0].mxu0 %v1773
    %v3173 = vpop.f32.mrb[0].mxu0
    %v3174 = vadd.f32 %v2789, %v3173
    %v3175 = vpop.f32.mrb[0].mxu0
    %3176 = vmatprep.mubr.f32.mxu0 %v1783
    %3177 = vmatmul.mubr.f32.gmra.mrb[0].mxu0 %v1782
    %v3178 = vpop.f32.mrb[0].mxu0
    %v3179 = vadd.f32 %v2794, %v3178
    %v3180 = vpop.f32.mrb[0].mxu0
    %3181 = vmatprep.mubr.f32.mxu0 %v1792
    %3182 = vmatmul.mubr.f32.gmra.mrb[0].mxu0 %v1791
    %v3183 = vpop.f32.mrb[0].mxu0
    %v3184 = vadd.f32 %v2799, %v3183
    %v3185 = vpop.f32.mrb[0].mxu0
    %3186 = vmatprep.mubr.f32.mxu0 %v1801
    %3187 = vmatmul.mubr.f32.gmra.mrb[0].mxu0 %v1800
    %v3188 = vpop.f32.mrb[0].mxu0
    %v3189 = vadd.f32 %v2804, %v3188
    %v3190 = vpop.f32.mrb[0].mxu0
    %3191 = vmatprep.mubr.f32.mxu0 %v1810
    %3192 = vmatmul.mubr.f32.gmra.mrb[0].mxu0 %v1809
    %v3193 = vpop.f32.mrb[0].mxu0
    %v3194 = vadd.f32 %v2809, %v3193
    %v3195 = vpop.f32.mrb[0].mxu0
    %3196 = vmatprep.mubr.f32.mxu0 %v1819
    %3197 = vmatmul.mubr.f32.gmra.mrb[0].mxu0 %v1818
    %v3198 = vpop.f32.mrb[0].mxu0
    %v3199 = vadd.f32 %v2814, %v3198
    %v3200 = vpop.f32.mrb[0].mxu0
    %3201 = vmatprep.mubr.f32.mxu0 %v1828
    %3202 = vmatmul.mubr.f32.gmra.mrb[0].mxu0 %v1827
    %v3203 = vpop.f32.mrb[0].mxu0
    %v3204 = vadd.f32 %v2819, %v3203
    %v3205 = vpop.f32.mrb[0].mxu0
    %3206 = vmatprep.mubr.f32.mxu0 %v1837
    %3207 = vmatmul.mubr.f32.gmra.mrb[0].mxu0 %v1836
    %v3208 = vpop.f32.mrb[0].mxu0
    %v3209 = vadd.f32 %v2824, %v3208
    %v3210 = vpop.f32.mrb[0].mxu0
    %3211 = vmatprep.mubr.f32.mxu0 %v1846
    %3212 = vmatmul.mubr.f32.gmra.mrb[0].mxu0 %v1845
    %v3213 = vpop.f32.mrb[0].mxu0
    %v3214 = vadd.f32 %v2829, %v3213
    %v3215 = vpop.f32.mrb[0].mxu0
    %3216 = vmatprep.mubr.f32.mxu0 %v1855
    %3217 = vmatmul.mubr.f32.gmra.mrb[0].mxu0 %v1854
    %v3218 = vpop.f32.mrb[0].mxu0
    %v3219 = vadd.f32 %v2834, %v3218
    %v3220 = vpop.f32.mrb[0].mxu0
    %3221 = vmatprep.mubr.f32.mxu0 %v1864
    %3222 = vmatmul.mubr.f32.gmra.mrb[0].mxu0 %v1863
    %v3223 = vpop.f32.mrb[0].mxu0
    %v3224 = vadd.f32 %v2839, %v3223
    %v3225 = vpop.f32.mrb[0].mxu0
    %3226 = vmatprep.mubr.f32.mxu0 %v1873
    %3227 = vmatmul.mubr.f32.gmra.mrb[0].mxu0 %v1872
    %v3228 = vpop.f32.mrb[0].mxu0
    %v3229 = vadd.f32 %v2844, %v3228
    %v3230 = vpop.f32.mrb[0].mxu0
    %3231 = vmatprep.mubr.f32.mxu0 %v1882
    %3232 = vmatmul.mubr.f32.gmra.mrb[0].mxu0 %v1881
    %v3233 = vpop.f32.mrb[0].mxu0
    %v3234 = vadd.f32 %v2849, %v3233
    %v3235 = vpop.f32.mrb[0].mxu0
    %3236 = vmatprep.mubr.f32.mxu0 %v1891
    %3237 = vmatmul.mubr.f32.gmra.mrb[0].mxu0 %v1890
    %v3238 = vpop.f32.mrb[0].mxu0
    %v3239 = vadd.f32 %v2854, %v3238
    %v3240 = vpop.f32.mrb[0].mxu0
    %3241 = vmatprep.mubr.f32.mxu0 %v1900
    %3242 = vmatmul.mubr.f32.gmra.mrb[0].mxu0 %v1899
    %v3243 = vpop.f32.mrb[0].mxu0
    %v3244 = vadd.f32 %v2859, %v3243
    %v3245 = vpop.f32.mrb[0].mxu0
    %3246 = vmatprep.mubr.f32.mxu0 %v1909
    %3247 = vmatmul.mubr.f32.gmra.mrb[0].mxu0 %v1908
    %v3248 = vpop.f32.mrb[0].mxu0
    %v3249 = vadd.f32 %v2864, %v3248
    %v3250 = vpop.f32.mrb[0].mxu0
    %3251 = vmatprep.mubr.f32.mxu0 %v1918
    %3252 = vmatmul.mubr.f32.gmra.mrb[0].mxu0 %v1917
    %v3253 = vpop.f32.mrb[0].mxu0
    %v3254 = vadd.f32 %v2869, %v3253
    %v3255 = vpop.f32.mrb[0].mxu0
    %3256 = vmatprep.mubr.f32.mxu0 %v1927
    %3257 = vmatmul.mubr.f32.gmra.mrb[0].mxu0 %v1926
    %v3258 = vpop.f32.mrb[0].mxu0
    %v3259 = vadd.f32 %v2874, %v3258
    %v3260 = vpop.f32.mrb[0].mxu0
    %3261 = vmatprep.mubr.f32.mxu0 %v1936
    %3262 = vmatmul.mubr.f32.gmra.mrb[0].mxu0 %v1935
    %v3263 = vpop.f32.mrb[0].mxu0
    %v3264 = vadd.f32 %v2879, %v3263
    %v3265 = vpop.f32.mrb[0].mxu0
    %3266 = vmatprep.mubr.f32.mxu0 %v1945
    %3267 = vmatmul.mubr.f32.gmra.mrb[0].mxu0 %v1944
    %v3268 = vpop.f32.mrb[0].mxu0
    %v3269 = vadd.f32 %v2884, %v3268
    %v3270 = vpop.f32.mrb[0].mxu0
    %3271 = vmatprep.mubr.f32.mxu0 %v1954
    %3272 = vmatmul.mubr.f32.gmra.mrb[0].mxu0 %v1953
    %v3273 = vpop.f32.mrb[0].mxu0
    %v3274 = vadd.f32 %v2889, %v3273
    %v3275 = vpop.f32.mrb[0].mxu0
    %3276 = vmatprep.mubr.f32.mxu0 %v1963
    %3277 = vmatmul.mubr.f32.gmra.mrb[0].mxu0 %v1962
    %v3278 = vpop.f32.mrb[0].mxu0
    %v3279 = vadd.f32 %v2894, %v3278
    %v3280 = vpop.f32.mrb[0].mxu0
    %3281 = vmatprep.mubr.f32.mxu0 %v1972
    %3282 = vmatmul.mubr.f32.gmra.mrb[0].mxu0 %v1971
    %v3283 = vpop.f32.mrb[0].mxu0
    %v3284 = vadd.f32 %v2899, %v3283
    %v3285 = vpop.f32.mrb[0].mxu0
    %3286 = vmatprep.mubr.f32.mxu0 %v1981
    %3287 = vmatmul.mubr.f32.gmra.mrb[0].mxu0 %v1980
    %v3288 = vpop.f32.mrb[0].mxu0
    %v3289 = vadd.f32 %v2904, %v3288
    %v3290 = vpop.f32.mrb[0].mxu0
    %3291 = vmatprep.mubr.f32.mxu0 %v1990
    %3292 = vmatmul.mubr.f32.gmra.mrb[0].mxu0 %v1989
    %v3293 = vpop.f32.mrb[0].mxu0
    %v3294 = vadd.f32 %v2909, %v3293
    %v3295 = vpop.f32.mrb[0].mxu0
    %3296 = vmatprep.mubr.f32.mxu0 %v1999
    %3297 = vmatmul.mubr.f32.gmra.mrb[0].mxu0 %v1998
    %v3298 = vpop.f32.mrb[0].mxu0
    %v3299 = vadd.f32 %v2914, %v3298
    %v3300 = vpop.f32.mrb[0].mxu0
    %3301 = vdwg.mxu0
    %3302 = vmatprep.subr.mxu0 0.0
    %3303 = vmatpush1.msra.mxu0 %v2099
    %3304 = vmatprep.subr.mxu0 0.0
    %3305 = vmatpush1.msra.mxu0 %v2100
    %3306 = vmatprep.subr.mxu0 0.0
    %3307 = vmatpush1.msra.mxu0 %v2101
    %3308 = vmatprep.subr.mxu0 0.0
    %3309 = vmatpush1.msra.mxu0 %v2102
    %3310 = vmatprep.subr.mxu0 0.0
    %3311 = vmatpush1.msra.mxu0 %v2103
    %3312 = vmatprep.subr.mxu0 0.0
    %3313 = vmatpush1.msra.mxu0 %v2104
    %3314 = vmatprep.subr.mxu0 0.0
    %3315 = vmatpush1.msra.mxu0 %v2105
    %3316 = vmatprep.subr.mxu0 0.0
    %3317 = vmatpush1.msra.mxu0 %v2106
    %3318 = vmatprep.subr.mxu0 0.0
    %3319 = vmatpush1.msra.mxu0 %v2107
    %3320 = vmatprep.subr.mxu0 0.0
    %3321 = vmatpush1.msra.mxu0 %v2108
    %3322 = vmatprep.subr.mxu0 0.0
    %3323 = vmatpush1.msra.mxu0 %v2109
    %3324 = vmatprep.subr.mxu0 0.0
    %3325 = vmatpush1.msra.mxu0 %v2110
    %3326 = vmatprep.subr.mxu0 0.0
    %3327 = vmatpush1.msra.mxu0 %v2111
    %3328 = vmatprep.subr.mxu0 0.0
    %3329 = vmatpush1.msra.mxu0 %v2112
    %3330 = vmatprep.subr.mxu0 0.0
    %3331 = vmatpush1.msra.mxu0 %v2113
    %3332 = vmatprep.subr.mxu0 0.0
    %3333 = vmatpush1.msra.mxu0 %v2114
    %3334 = vmatprep.subr.mxu0 0.0
    %3335 = vmatpush1.msra.mxu0 %v2115
    %3336 = vmatprep.subr.mxu0 0.0
    %3337 = vmatpush1.msra.mxu0 %v2116
    %3338 = vmatprep.subr.mxu0 0.0
    %3339 = vmatpush1.msra.mxu0 %v2117
    %3340 = vmatprep.subr.mxu0 0.0
    %3341 = vmatpush1.msra.mxu0 %v2118
    %3342 = vmatprep.subr.mxu0 0.0
    %3343 = vmatpush1.msra.mxu0 %v2119
    %3344 = vmatprep.subr.mxu0 0.0
    %3345 = vmatpush1.msra.mxu0 %v2120
    %3346 = vmatprep.subr.mxu0 0.0
    %3347 = vmatpush1.msra.mxu0 %v2121
    %3348 = vmatprep.subr.mxu0 0.0
    %3349 = vmatpush1.msra.mxu0 %v2122
    %3350 = vmatprep.subr.mxu0 0.0
    %3351 = vmatpush1.msra.mxu0 %v2123
    %3352 = vmatprep.subr.mxu0 0.0
    %3353 = vmatpush1.msra.mxu0 %v2124
    %3354 = vmatprep.subr.mxu0 0.0
    %3355 = vmatpush1.msra.mxu0 %v2125
    %3356 = vmatprep.subr.mxu0 0.0
    %3357 = vmatpush1.msra.mxu0 %v2126
    %3358 = vmatprep.subr.mxu0 0.0
    %3359 = vmatpush1.msra.mxu0 %v2127
    %3360 = vmatprep.subr.mxu0 0.0
    %3361 = vmatpush1.msra.mxu0 %v2128
    %3362 = vmatprep.subr.mxu0 0.0
    %3363 = vmatpush1.msra.mxu0 %v2129
    %3364 = vmatprep.subr.mxu0 0.0
    %3365 = vmatpush1.msra.mxu0 %v2130
    %3366 = vmatprep.mubr.f32.mxu0 %v1434
    %3367 = vmatmul.mubr.f32.gmra.mrb[0].mxu0 %v1433
    %v3368 = vpop.f32.mrb[0].mxu0
    %v3369 = vadd.f32 %v2984, %v3368
    %v3370 = vpop.f32.mrb[0].mxu0
    %3371 = vmatprep.mubr.f32.mxu0 %v1443
    %3372 = vmatmul.mubr.f32.gmra.mrb[0].mxu0 %v1442
    %v3373 = vpop.f32.mrb[0].mxu0
    %v3374 = vadd.f32 %v2989, %v3373
    %v3375 = vpop.f32.mrb[0].mxu0
    %3376 = vmatprep.mubr.f32.mxu0 %v1452
    %3377 = vmatmul.mubr.f32.gmra.mrb[0].mxu0 %v1451
    %v3378 = vpop.f32.mrb[0].mxu0
    %v3379 = vadd.f32 %v2994, %v3378
    %v3380 = vpop.f32.mrb[0].mxu0
    %3381 = vmatprep.mubr.f32.mxu0 %v1461
    %3382 = vmatmul.mubr.f32.gmra.mrb[0].mxu0 %v1460
    %v3383 = vpop.f32.mrb[0].mxu0
    %v3384 = vadd.f32 %v2999, %v3383
    %v3385 = vpop.f32.mrb[0].mxu0
    %3386 = vmatprep.mubr.f32.mxu0 %v1470
    %3387 = vmatmul.mubr.f32.gmra.mrb[0].mxu0 %v1469
    %v3388 = vpop.f32.mrb[0].mxu0
    %v3389 = vadd.f32 %v3004, %v3388
    %v3390 = vpop.f32.mrb[0].mxu0
    %3391 = vmatprep.mubr.f32.mxu0 %v1479
    %3392 = vmatmul.mubr.f32.gmra.mrb[0].mxu0 %v1478
    %v3393 = vpop.f32.mrb[0].mxu0
    %v3394 = vadd.f32 %v3009, %v3393
    %v3395 = vpop.f32.mrb[0].mxu0
    %3396 = vmatprep.mubr.f32.mxu0 %v1488
    %3397 = vmatmul.mubr.f32.gmra.mrb[0].mxu0 %v1487
    %v3398 = vpop.f32.mrb[0].mxu0
    %v3399 = vadd.f32 %v3014, %v3398
    %v3400 = vpop.f32.mrb[0].mxu0
    %3401 = vmatprep.mubr.f32.mxu0 %v1497
    %3402 = vmatmul.mubr.f32.gmra.mrb[0].mxu0 %v1496
    %v3403 = vpop.f32.mrb[0].mxu0
    %v3404 = vadd.f32 %v3019, %v3403
    %v3405 = vpop.f32.mrb[0].mxu0
    %3406 = vmatprep.mubr.f32.mxu0 %v1506
    %3407 = vmatmul.mubr.f32.gmra.mrb[0].mxu0 %v1505
    %v3408 = vpop.f32.mrb[0].mxu0
    %v3409 = vadd.f32 %v3024, %v3408
    %v3410 = vpop.f32.mrb[0].mxu0
    %3411 = vmatprep.mubr.f32.mxu0 %v1515
    %3412 = vmatmul.mubr.f32.gmra.mrb[0].mxu0 %v1514
    %v3413 = vpop.f32.mrb[0].mxu0
    %v3414 = vadd.f32 %v3029, %v3413
    %v3415 = vpop.f32.mrb[0].mxu0
    %3416 = vmatprep.mubr.f32.mxu0 %v1524
    %3417 = vmatmul.mubr.f32.gmra.mrb[0].mxu0 %v1523
    %v3418 = vpop.f32.mrb[0].mxu0
    %v3419 = vadd.f32 %v3034, %v3418
    %v3420 = vpop.f32.mrb[0].mxu0
    %3421 = vmatprep.mubr.f32.mxu0 %v1533
    %3422 = vmatmul.mubr.f32.gmra.mrb[0].mxu0 %v1532
    %v3423 = vpop.f32.mrb[0].mxu0
    %v3424 = vadd.f32 %v3039, %v3423
    %v3425 = vpop.f32.mrb[0].mxu0
    %3426 = vmatprep.mubr.f32.mxu0 %v1542
    %3427 = vmatmul.mubr.f32.gmra.mrb[0].mxu0 %v1541
    %v3428 = vpop.f32.mrb[0].mxu0
    %v3429 = vadd.f32 %v3044, %v3428
    %v3430 = vpop.f32.mrb[0].mxu0
    %3431 = vmatprep.mubr.f32.mxu0 %v1551
    %3432 = vmatmul.mubr.f32.gmra.mrb[0].mxu0 %v1550
    %v3433 = vpop.f32.mrb[0].mxu0
    %v3434 = vadd.f32 %v3049, %v3433
    %v3435 = vpop.f32.mrb[0].mxu0
    %3436 = vmatprep.mubr.f32.mxu0 %v1560
    %3437 = vmatmul.mubr.f32.gmra.mrb[0].mxu0 %v1559
    %v3438 = vpop.f32.mrb[0].mxu0
    %v3439 = vadd.f32 %v3054, %v3438
    %v3440 = vpop.f32.mrb[0].mxu0
    %3441 = vmatprep.mubr.f32.mxu0 %v1569
    %3442 = vmatmul.mubr.f32.gmra.mrb[0].mxu0 %v1568
    %v3443 = vpop.f32.mrb[0].mxu0
    %v3444 = vadd.f32 %v3059, %v3443
    %v3445 = vpop.f32.mrb[0].mxu0
    %3446 = vmatprep.mubr.f32.mxu0 %v1578
    %3447 = vmatmul.mubr.f32.gmra.mrb[0].mxu0 %v1577
    %v3448 = vpop.f32.mrb[0].mxu0
    %v3449 = vadd.f32 %v3064, %v3448
    %v3450 = vpop.f32.mrb[0].mxu0
    %3451 = vmatprep.mubr.f32.mxu0 %v1587
    %3452 = vmatmul.mubr.f32.gmra.mrb[0].mxu0 %v1586
    %v3453 = vpop.f32.mrb[0].mxu0
    %v3454 = vadd.f32 %v3069, %v3453
    %v3455 = vpop.f32.mrb[0].mxu0
    %3456 = vmatprep.mubr.f32.mxu0 %v1596
    %3457 = vmatmul.mubr.f32.gmra.mrb[0].mxu0 %v1595
    %v3458 = vpop.f32.mrb[0].mxu0
    %v3459 = vadd.f32 %v3074, %v3458
    %v3460 = vpop.f32.mrb[0].mxu0
    %3461 = vmatprep.mubr.f32.mxu0 %v1605
    %3462 = vmatmul.mubr.f32.gmra.mrb[0].mxu0 %v1604
    %v3463 = vpop.f32.mrb[0].mxu0
    %v3464 = vadd.f32 %v3079, %v3463
    %v3465 = vpop.f32.mrb[0].mxu0
    %3466 = vmatprep.mubr.f32.mxu0 %v1614
    %3467 = vmatmul.mubr.f32.gmra.mrb[0].mxu0 %v1613
    %v3468 = vpop.f32.mrb[0].mxu0
    %v3469 = vadd.f32 %v3084, %v3468
    %v3470 = vpop.f32.mrb[0].mxu0
    %3471 = vmatprep.mubr.f32.mxu0 %v1623
    %3472 = vmatmul.mubr.f32.gmra.mrb[0].mxu0 %v1622
    %v3473 = vpop.f32.mrb[0].mxu0
    %v3474 = vadd.f32 %v3089, %v3473
    %v3475 = vpop.f32.mrb[0].mxu0
    %3476 = vmatprep.mubr.f32.mxu0 %v1632
    %3477 = vmatmul.mubr.f32.gmra.mrb[0].mxu0 %v1631
    %v3478 = vpop.f32.mrb[0].mxu0
    %v3479 = vadd.f32 %v3094, %v3478
    %v3480 = vpop.f32.mrb[0].mxu0
    %3481 = vmatprep.mubr.f32.mxu0 %v1641
    %3482 = vmatmul.mubr.f32.gmra.mrb[0].mxu0 %v1640
    %v3483 = vpop.f32.mrb[0].mxu0
    %v3484 = vadd.f32 %v3099, %v3483
    %v3485 = vpop.f32.mrb[0].mxu0
    %3486 = vmatprep.mubr.f32.mxu0 %v1650
    %3487 = vmatmul.mubr.f32.gmra.mrb[0].mxu0 %v1649
    %v3488 = vpop.f32.mrb[0].mxu0
    %v3489 = vadd.f32 %v3104, %v3488
    %v3490 = vpop.f32.mrb[0].mxu0
    %3491 = vmatprep.mubr.f32.mxu0 %v1659
    %3492 = vmatmul.mubr.f32.gmra.mrb[0].mxu0 %v1658
    %v3493 = vpop.f32.mrb[0].mxu0
    %v3494 = vadd.f32 %v3109, %v3493
    %v3495 = vpop.f32.mrb[0].mxu0
    %3496 = vmatprep.mubr.f32.mxu0 %v1668
    %3497 = vmatmul.mubr.f32.gmra.mrb[0].mxu0 %v1667
    %v3498 = vpop.f32.mrb[0].mxu0
    %v3499 = vadd.f32 %v3114, %v3498
    %v3500 = vpop.f32.mrb[0].mxu0
    %3501 = vmatprep.mubr.f32.mxu0 %v1677
    %3502 = vmatmul.mubr.f32.gmra.mrb[0].mxu0 %v1676
    %v3503 = vpop.f32.mrb[0].mxu0
    %v3504 = vadd.f32 %v3119, %v3503
    %v3505 = vpop.f32.mrb[0].mxu0
    %3506 = vmatprep.mubr.f32.mxu0 %v1686
    %3507 = vmatmul.mubr.f32.gmra.mrb[0].mxu0 %v1685
    %v3508 = vpop.f32.mrb[0].mxu0
    %v3509 = vadd.f32 %v3124, %v3508
    %v3510 = vpop.f32.mrb[0].mxu0
    %3511 = vmatprep.mubr.f32.mxu0 %v1695
    %3512 = vmatmul.mubr.f32.gmra.mrb[0].mxu0 %v1694
    %v3513 = vpop.f32.mrb[0].mxu0
    %v3514 = vadd.f32 %v3129, %v3513
    %v3515 = vpop.f32.mrb[0].mxu0
    %3516 = vmatprep.mubr.f32.mxu0 %v1704
    %3517 = vmatmul.mubr.f32.gmra.mrb[0].mxu0 %v1703
    %v3518 = vpop.f32.mrb[0].mxu0
    %v3519 = vadd.f32 %v3134, %v3518
    %v3520 = vpop.f32.mrb[0].mxu0
    %3521 = vmatprep.mubr.f32.mxu0 %v1713
    %3522 = vmatmul.mubr.f32.gmra.mrb[0].mxu0 %v1712
    %v3523 = vpop.f32.mrb[0].mxu0
    %v3524 = vadd.f32 %v3139, %v3523
    %v3525 = vpop.f32.mrb[0].mxu0
    %3526 = vmatprep.mubr.f32.mxu0 %v1722
    %3527 = vmatmul.mubr.f32.gmra.mrb[0].mxu0 %v1721
    %v3528 = vpop.f32.mrb[0].mxu0
    %v3529 = vadd.f32 %v3144, %v3528
    %v3530 = vpop.f32.mrb[0].mxu0
    %3531 = vmatprep.mubr.f32.mxu0 %v1731
    %3532 = vmatmul.mubr.f32.gmra.mrb[0].mxu0 %v1730
    %v3533 = vpop.f32.mrb[0].mxu0
    %v3534 = vadd.f32 %v3149, %v3533
    %v3535 = vpop.f32.mrb[0].mxu0
    %3536 = vmatprep.mubr.f32.mxu0 %v1740
    %3537 = vmatmul.mubr.f32.gmra.mrb[0].mxu0 %v1739
    %v3538 = vpop.f32.mrb[0].mxu0
    %v3539 = vadd.f32 %v3154, %v3538
    %v3540 = vpop.f32.mrb[0].mxu0
    %3541 = vmatprep.mubr.f32.mxu0 %v1749
    %3542 = vmatmul.mubr.f32.gmra.mrb[0].mxu0 %v1748
    %v3543 = vpop.f32.mrb[0].mxu0
    %v3544 = vadd.f32 %v3159, %v3543
    %v3545 = vpop.f32.mrb[0].mxu0
    %3546 = vmatprep.mubr.f32.mxu0 %v1758
    %3547 = vmatmul.mubr.f32.gmra.mrb[0].mxu0 %v1757
    %v3548 = vpop.f32.mrb[0].mxu0
    %v3549 = vadd.f32 %v3164, %v3548
    %v3550 = vpop.f32.mrb[0].mxu0
    %3551 = vmatprep.mubr.f32.mxu0 %v1767
    %3552 = vmatmul.mubr.f32.gmra.mrb[0].mxu0 %v1766
    %v3553 = vpop.f32.mrb[0].mxu0
    %v3554 = vadd.f32 %v3169, %v3553
    %v3555 = vpop.f32.mrb[0].mxu0
    %3556 = vmatprep.mubr.f32.mxu0 %v1776
    %3557 = vmatmul.mubr.f32.gmra.mrb[0].mxu0 %v1775
    %v3558 = vpop.f32.mrb[0].mxu0
    %v3559 = vadd.f32 %v3174, %v3558
    %v3560 = vpop.f32.mrb[0].mxu0
    %3561 = vmatprep.mubr.f32.mxu0 %v1785
    %3562 = vmatmul.mubr.f32.gmra.mrb[0].mxu0 %v1784
    %v3563 = vpop.f32.mrb[0].mxu0
    %v3564 = vadd.f32 %v3179, %v3563
    %v3565 = vpop.f32.mrb[0].mxu0
    %3566 = vmatprep.mubr.f32.mxu0 %v1794
    %3567 = vmatmul.mubr.f32.gmra.mrb[0].mxu0 %v1793
    %v3568 = vpop.f32.mrb[0].mxu0
    %v3569 = vadd.f32 %v3184, %v3568
    %v3570 = vpop.f32.mrb[0].mxu0
    %3571 = vmatprep.mubr.f32.mxu0 %v1803
    %3572 = vmatmul.mubr.f32.gmra.mrb[0].mxu0 %v1802
    %v3573 = vpop.f32.mrb[0].mxu0
    %v3574 = vadd.f32 %v3189, %v3573
    %v3575 = vpop.f32.mrb[0].mxu0
    %3576 = vmatprep.mubr.f32.mxu0 %v1812
    %3577 = vmatmul.mubr.f32.gmra.mrb[0].mxu0 %v1811
    %v3578 = vpop.f32.mrb[0].mxu0
    %v3579 = vadd.f32 %v3194, %v3578
    %v3580 = vpop.f32.mrb[0].mxu0
    %3581 = vmatprep.mubr.f32.mxu0 %v1821
    %3582 = vmatmul.mubr.f32.gmra.mrb[0].mxu0 %v1820
    %v3583 = vpop.f32.mrb[0].mxu0
    %v3584 = vadd.f32 %v3199, %v3583
    %v3585 = vpop.f32.mrb[0].mxu0
    %3586 = vmatprep.mubr.f32.mxu0 %v1830
    %3587 = vmatmul.mubr.f32.gmra.mrb[0].mxu0 %v1829
    %v3588 = vpop.f32.mrb[0].mxu0
    %v3589 = vadd.f32 %v3204, %v3588
    %v3590 = vpop.f32.mrb[0].mxu0
    %3591 = vmatprep.mubr.f32.mxu0 %v1839
    %3592 = vmatmul.mubr.f32.gmra.mrb[0].mxu0 %v1838
    %v3593 = vpop.f32.mrb[0].mxu0
    %v3594 = vadd.f32 %v3209, %v3593
    %v3595 = vpop.f32.mrb[0].mxu0
    %3596 = vmatprep.mubr.f32.mxu0 %v1848
    %3597 = vmatmul.mubr.f32.gmra.mrb[0].mxu0 %v1847
    %v3598 = vpop.f32.mrb[0].mxu0
    %v3599 = vadd.f32 %v3214, %v3598
    %v3600 = vpop.f32.mrb[0].mxu0
    %3601 = vmatprep.mubr.f32.mxu0 %v1857
    %3602 = vmatmul.mubr.f32.gmra.mrb[0].mxu0 %v1856
    %v3603 = vpop.f32.mrb[0].mxu0
    %v3604 = vadd.f32 %v3219, %v3603
    %v3605 = vpop.f32.mrb[0].mxu0
    %3606 = vmatprep.mubr.f32.mxu0 %v1866
    %3607 = vmatmul.mubr.f32.gmra.mrb[0].mxu0 %v1865
    %v3608 = vpop.f32.mrb[0].mxu0
    %v3609 = vadd.f32 %v3224, %v3608
    %v3610 = vpop.f32.mrb[0].mxu0
    %3611 = vmatprep.mubr.f32.mxu0 %v1875
    %3612 = vmatmul.mubr.f32.gmra.mrb[0].mxu0 %v1874
    %v3613 = vpop.f32.mrb[0].mxu0
    %v3614 = vadd.f32 %v3229, %v3613
    %v3615 = vpop.f32.mrb[0].mxu0
    %3616 = vmatprep.mubr.f32.mxu0 %v1884
    %3617 = vmatmul.mubr.f32.gmra.mrb[0].mxu0 %v1883
    %v3618 = vpop.f32.mrb[0].mxu0
    %v3619 = vadd.f32 %v3234, %v3618
    %v3620 = vpop.f32.mrb[0].mxu0
    %3621 = vmatprep.mubr.f32.mxu0 %v1893
    %3622 = vmatmul.mubr.f32.gmra.mrb[0].mxu0 %v1892
    %v3623 = vpop.f32.mrb[0].mxu0
    %v3624 = vadd.f32 %v3239, %v3623
    %v3625 = vpop.f32.mrb[0].mxu0
    %3626 = vmatprep.mubr.f32.mxu0 %v1902
    %3627 = vmatmul.mubr.f32.gmra.mrb[0].mxu0 %v1901
    %v3628 = vpop.f32.mrb[0].mxu0
    %v3629 = vadd.f32 %v3244, %v3628
    %v3630 = vpop.f32.mrb[0].mxu0
    %3631 = vmatprep.mubr.f32.mxu0 %v1911
    %3632 = vmatmul.mubr.f32.gmra.mrb[0].mxu0 %v1910
    %v3633 = vpop.f32.mrb[0].mxu0
    %v3634 = vadd.f32 %v3249, %v3633
    %v3635 = vpop.f32.mrb[0].mxu0
    %3636 = vmatprep.mubr.f32.mxu0 %v1920
    %3637 = vmatmul.mubr.f32.gmra.mrb[0].mxu0 %v1919
    %v3638 = vpop.f32.mrb[0].mxu0
    %v3639 = vadd.f32 %v3254, %v3638
    %v3640 = vpop.f32.mrb[0].mxu0
    %3641 = vmatprep.mubr.f32.mxu0 %v1929
    %3642 = vmatmul.mubr.f32.gmra.mrb[0].mxu0 %v1928
    %v3643 = vpop.f32.mrb[0].mxu0
    %v3644 = vadd.f32 %v3259, %v3643
    %v3645 = vpop.f32.mrb[0].mxu0
    %3646 = vmatprep.mubr.f32.mxu0 %v1938
    %3647 = vmatmul.mubr.f32.gmra.mrb[0].mxu0 %v1937
    %v3648 = vpop.f32.mrb[0].mxu0
    %v3649 = vadd.f32 %v3264, %v3648
    %v3650 = vpop.f32.mrb[0].mxu0
    %3651 = vmatprep.mubr.f32.mxu0 %v1947
    %3652 = vmatmul.mubr.f32.gmra.mrb[0].mxu0 %v1946
    %v3653 = vpop.f32.mrb[0].mxu0
    %v3654 = vadd.f32 %v3269, %v3653
    %v3655 = vpop.f32.mrb[0].mxu0
    %3656 = vmatprep.mubr.f32.mxu0 %v1956
    %3657 = vmatmul.mubr.f32.gmra.mrb[0].mxu0 %v1955
    %v3658 = vpop.f32.mrb[0].mxu0
    %v3659 = vadd.f32 %v3274, %v3658
    %v3660 = vpop.f32.mrb[0].mxu0
    %3661 = vmatprep.mubr.f32.mxu0 %v1965
    %3662 = vmatmul.mubr.f32.gmra.mrb[0].mxu0 %v1964
    %v3663 = vpop.f32.mrb[0].mxu0
    %v3664 = vadd.f32 %v3279, %v3663
    %v3665 = vpop.f32.mrb[0].mxu0
    %3666 = vmatprep.mubr.f32.mxu0 %v1974
    %3667 = vmatmul.mubr.f32.gmra.mrb[0].mxu0 %v1973
    %v3668 = vpop.f32.mrb[0].mxu0
    %v3669 = vadd.f32 %v3284, %v3668
    %v3670 = vpop.f32.mrb[0].mxu0
    %3671 = vmatprep.mubr.f32.mxu0 %v1983
    %3672 = vmatmul.mubr.f32.gmra.mrb[0].mxu0 %v1982
    %v3673 = vpop.f32.mrb[0].mxu0
    %v3674 = vadd.f32 %v3289, %v3673
    %v3675 = vpop.f32.mrb[0].mxu0
    %3676 = vmatprep.mubr.f32.mxu0 %v1992
    %3677 = vmatmul.mubr.f32.gmra.mrb[0].mxu0 %v1991
    %v3678 = vpop.f32.mrb[0].mxu0
    %v3679 = vadd.f32 %v3294, %v3678
    %v3680 = vpop.f32.mrb[0].mxu0
    %3681 = vmatprep.mubr.f32.mxu0 %v2001
    %3682 = vmatmul.mubr.f32.gmra.mrb[0].mxu0 %v2000
    %v3683 = vpop.f32.mrb[0].mxu0
    %v3684 = vadd.f32 %v3299, %v3683
    %v3685 = vpop.f32.mrb[0].mxu0
    %3686 = vdwg.mxu0
    %3687 = vmatprep.subr.mxu0 0.0
    %3688 = vmatpush1.msra.mxu0 %v2131
    %3689 = vmatprep.subr.mxu0 0.0
    %3690 = vmatpush1.msra.mxu0 %v2132
    %3691 = vmatprep.subr.mxu0 0.0
    %3692 = vmatpush1.msra.mxu0 %v2133
    %3693 = vmatprep.subr.mxu0 0.0
    %3694 = vmatpush1.msra.mxu0 %v2134
    %3695 = vmatprep.subr.mxu0 0.0
    %3696 = vmatpush1.msra.mxu0 %v2135
    %3697 = vmatprep.subr.mxu0 0.0
    %3698 = vmatpush1.msra.mxu0 %v2136
    %3699 = vmatprep.subr.mxu0 0.0
    %3700 = vmatpush1.msra.mxu0 %v2137
    %3701 = vmatprep.subr.mxu0 0.0
    %3702 = vmatpush1.msra.mxu0 %v2138
    %3703 = vmatprep.subr.mxu0 0.0
    %3704 = vmatpush1.msra.mxu0 %v2139
    %3705 = vmatprep.subr.mxu0 0.0
    %3706 = vmatpush1.msra.mxu0 %v2140
    %3707 = vmatprep.subr.mxu0 0.0
    %3708 = vmatpush1.msra.mxu0 %v2141
    %3709 = vmatprep.subr.mxu0 0.0
    %3710 = vmatpush1.msra.mxu0 %v2142
    %3711 = vmatprep.subr.mxu0 0.0
    %3712 = vmatpush1.msra.mxu0 %v2143
    %3713 = vmatprep.subr.mxu0 0.0
    %3714 = vmatpush1.msra.mxu0 %v2144
    %3715 = vmatprep.subr.mxu0 0.0
    %3716 = vmatpush1.msra.mxu0 %v2145
    %3717 = vmatprep.subr.mxu0 0.0
    %3718 = vmatpush1.msra.mxu0 %v2146
    %3719 = vmatprep.subr.mxu0 0.0
    %3720 = vmatpush1.msra.mxu0 0.0
    %3721 = vmatprep.subr.mxu0 0.0
    %3722 = vmatpush1.msra.mxu0 0.0
    %3723 = vmatprep.subr.mxu0 0.0
    %3724 = vmatpush1.msra.mxu0 0.0
    %3725 = vmatprep.subr.mxu0 0.0
    %3726 = vmatpush1.msra.mxu0 0.0
    %3727 = vmatprep.subr.mxu0 0.0
    %3728 = vmatpush1.msra.mxu0 0.0
    %3729 = vmatprep.subr.mxu0 0.0
    %3730 = vmatpush1.msra.mxu0 0.0
    %3731 = vmatprep.subr.mxu0 0.0
    %3732 = vmatpush1.msra.mxu0 0.0
    %3733 = vmatprep.subr.mxu0 0.0
    %3734 = vmatpush1.msra.mxu0 0.0
    %3735 = vmatprep.subr.mxu0 0.0
    %3736 = vmatpush1.msra.mxu0 0.0
    %3737 = vmatprep.subr.mxu0 0.0
    %3738 = vmatpush1.msra.mxu0 0.0
    %3739 = vmatprep.subr.mxu0 0.0
    %3740 = vmatpush1.msra.mxu0 0.0
    %3741 = vmatprep.subr.mxu0 0.0
    %3742 = vmatpush1.msra.mxu0 0.0
    %3743 = vmatprep.subr.mxu0 0.0
    %3744 = vmatpush1.msra.mxu0 0.0
    %3745 = vmatprep.subr.mxu0 0.0
    %3746 = vmatpush1.msra.mxu0 0.0
    %3747 = vmatprep.subr.mxu0 0.0
    %3748 = vmatpush1.msra.mxu0 0.0
    %3749 = vmatprep.subr.mxu0 0.0
    %3750 = vmatpush1.msra.mxu0 0.0
    %3751 = vmatprep.mubr.f32.mxu0 0.0
    %3752 = vmatmul.mubr.f32.gmra.mrb[0].mxu0 %v1435
    %v3753 = vpop.f32.mrb[0].mxu0
    %v3754 = vadd.f32 %v3369, %v3753
    %v3755 = vpop.f32.mrb[0].mxu0
    %3756 = vmatprep.mubr.f32.mxu0 0.0
    %3757 = vmatmul.mubr.f32.gmra.mrb[0].mxu0 %v1444
    %v3758 = vpop.f32.mrb[0].mxu0
    %v3759 = vadd.f32 %v3374, %v3758
    %v3760 = vpop.f32.mrb[0].mxu0
    %3761 = vmatprep.mubr.f32.mxu0 0.0
    %3762 = vmatmul.mubr.f32.gmra.mrb[0].mxu0 %v1453
    %v3763 = vpop.f32.mrb[0].mxu0
    %v3764 = vadd.f32 %v3379, %v3763
    %v3765 = vpop.f32.mrb[0].mxu0
    %3766 = vmatprep.mubr.f32.mxu0 0.0
    %3767 = vmatmul.mubr.f32.gmra.mrb[0].mxu0 %v1462
    %v3768 = vpop.f32.mrb[0].mxu0
    %v3769 = vadd.f32 %v3384, %v3768
    %v3770 = vpop.f32.mrb[0].mxu0
    %3771 = vmatprep.mubr.f32.mxu0 0.0
    %3772 = vmatmul.mubr.f32.gmra.mrb[0].mxu0 %v1471
    %v3773 = vpop.f32.mrb[0].mxu0
    %v3774 = vadd.f32 %v3389, %v3773
    %v3775 = vpop.f32.mrb[0].mxu0
    %3776 = vmatprep.mubr.f32.mxu0 0.0
    %3777 = vmatmul.mubr.f32.gmra.mrb[0].mxu0 %v1480
    %v3778 = vpop.f32.mrb[0].mxu0
    %v3779 = vadd.f32 %v3394, %v3778
    %v3780 = vpop.f32.mrb[0].mxu0
    %3781 = vmatprep.mubr.f32.mxu0 0.0
    %3782 = vmatmul.mubr.f32.gmra.mrb[0].mxu0 %v1489
    %v3783 = vpop.f32.mrb[0].mxu0
    %v3784 = vadd.f32 %v3399, %v3783
    %v3785 = vpop.f32.mrb[0].mxu0
    %3786 = vmatprep.mubr.f32.mxu0 0.0
    %3787 = vmatmul.mubr.f32.gmra.mrb[0].mxu0 %v1498
    %v3788 = vpop.f32.mrb[0].mxu0
    %v3789 = vadd.f32 %v3404, %v3788
    %v3790 = vpop.f32.mrb[0].mxu0
    %3791 = vmatprep.mubr.f32.mxu0 0.0
    %3792 = vmatmul.mubr.f32.gmra.mrb[0].mxu0 %v1507
    %v3793 = vpop.f32.mrb[0].mxu0
    %v3794 = vadd.f32 %v3409, %v3793
    %v3795 = vpop.f32.mrb[0].mxu0
    %3796 = vmatprep.mubr.f32.mxu0 0.0
    %3797 = vmatmul.mubr.f32.gmra.mrb[0].mxu0 %v1516
    %v3798 = vpop.f32.mrb[0].mxu0
    %v3799 = vadd.f32 %v3414, %v3798
    %v3800 = vpop.f32.mrb[0].mxu0
    %3801 = vmatprep.mubr.f32.mxu0 0.0
    %3802 = vmatmul.mubr.f32.gmra.mrb[0].mxu0 %v1525
    %v3803 = vpop.f32.mrb[0].mxu0
    %v3804 = vadd.f32 %v3419, %v3803
    %v3805 = vpop.f32.mrb[0].mxu0
    %3806 = vmatprep.mubr.f32.mxu0 0.0
    %3807 = vmatmul.mubr.f32.gmra.mrb[0].mxu0 %v1534
    %v3808 = vpop.f32.mrb[0].mxu0
    %v3809 = vadd.f32 %v3424, %v3808
    %v3810 = vpop.f32.mrb[0].mxu0
    %3811 = vmatprep.mubr.f32.mxu0 0.0
    %3812 = vmatmul.mubr.f32.gmra.mrb[0].mxu0 %v1543
    %v3813 = vpop.f32.mrb[0].mxu0
    %v3814 = vadd.f32 %v3429, %v3813
    %v3815 = vpop.f32.mrb[0].mxu0
    %3816 = vmatprep.mubr.f32.mxu0 0.0
    %3817 = vmatmul.mubr.f32.gmra.mrb[0].mxu0 %v1552
    %v3818 = vpop.f32.mrb[0].mxu0
    %v3819 = vadd.f32 %v3434, %v3818
    %v3820 = vpop.f32.mrb[0].mxu0
    %3821 = vmatprep.mubr.f32.mxu0 0.0
    %3822 = vmatmul.mubr.f32.gmra.mrb[0].mxu0 %v1561
    %v3823 = vpop.f32.mrb[0].mxu0
    %v3824 = vadd.f32 %v3439, %v3823
    %v3825 = vpop.f32.mrb[0].mxu0
    %3826 = vmatprep.mubr.f32.mxu0 0.0
    %3827 = vmatmul.mubr.f32.gmra.mrb[0].mxu0 %v1570
    %v3828 = vpop.f32.mrb[0].mxu0
    %v3829 = vadd.f32 %v3444, %v3828
    %v3830 = vpop.f32.mrb[0].mxu0
    %3831 = vmatprep.mubr.f32.mxu0 0.0
    %3832 = vmatmul.mubr.f32.gmra.mrb[0].mxu0 %v1579
    %v3833 = vpop.f32.mrb[0].mxu0
    %v3834 = vadd.f32 %v3449, %v3833
    %v3835 = vpop.f32.mrb[0].mxu0
    %3836 = vmatprep.mubr.f32.mxu0 0.0
    %3837 = vmatmul.mubr.f32.gmra.mrb[0].mxu0 %v1588
    %v3838 = vpop.f32.mrb[0].mxu0
    %v3839 = vadd.f32 %v3454, %v3838
    %v3840 = vpop.f32.mrb[0].mxu0
    %3841 = vmatprep.mubr.f32.mxu0 0.0
    %3842 = vmatmul.mubr.f32.gmra.mrb[0].mxu0 %v1597
    %v3843 = vpop.f32.mrb[0].mxu0
    %v3844 = vadd.f32 %v3459, %v3843
    %v3845 = vpop.f32.mrb[0].mxu0
    %3846 = vmatprep.mubr.f32.mxu0 0.0
    %3847 = vmatmul.mubr.f32.gmra.mrb[0].mxu0 %v1606
    %v3848 = vpop.f32.mrb[0].mxu0
    %v3849 = vadd.f32 %v3464, %v3848
    %v3850 = vpop.f32.mrb[0].mxu0
    %3851 = vmatprep.mubr.f32.mxu0 0.0
    %3852 = vmatmul.mubr.f32.gmra.mrb[0].mxu0 %v1615
    %v3853 = vpop.f32.mrb[0].mxu0
    %v3854 = vadd.f32 %v3469, %v3853
    %v3855 = vpop.f32.mrb[0].mxu0
    %3856 = vmatprep.mubr.f32.mxu0 0.0
    %3857 = vmatmul.mubr.f32.gmra.mrb[0].mxu0 %v1624
    %v3858 = vpop.f32.mrb[0].mxu0
    %v3859 = vadd.f32 %v3474, %v3858
    %v3860 = vpop.f32.mrb[0].mxu0
    %3861 = vmatprep.mubr.f32.mxu0 0.0
    %3862 = vmatmul.mubr.f32.gmra.mrb[0].mxu0 %v1633
    %v3863 = vpop.f32.mrb[0].mxu0
    %v3864 = vadd.f32 %v3479, %v3863
    %v3865 = vpop.f32.mrb[0].mxu0
    %3866 = vmatprep.mubr.f32.mxu0 0.0
    %3867 = vmatmul.mubr.f32.gmra.mrb[0].mxu0 %v1642
    %v3868 = vpop.f32.mrb[0].mxu0
    %v3869 = vadd.f32 %v3484, %v3868
    %v3870 = vpop.f32.mrb[0].mxu0
    %3871 = vmatprep.mubr.f32.mxu0 0.0
    %3872 = vmatmul.mubr.f32.gmra.mrb[0].mxu0 %v1651
    %v3873 = vpop.f32.mrb[0].mxu0
    %v3874 = vadd.f32 %v3489, %v3873
    %v3875 = vpop.f32.mrb[0].mxu0
    %3876 = vmatprep.mubr.f32.mxu0 0.0
    %3877 = vmatmul.mubr.f32.gmra.mrb[0].mxu0 %v1660
    %v3878 = vpop.f32.mrb[0].mxu0
    %v3879 = vadd.f32 %v3494, %v3878
    %v3880 = vpop.f32.mrb[0].mxu0
    %3881 = vmatprep.mubr.f32.mxu0 0.0
    %3882 = vmatmul.mubr.f32.gmra.mrb[0].mxu0 %v1669
    %v3883 = vpop.f32.mrb[0].mxu0
    %v3884 = vadd.f32 %v3499, %v3883
    %v3885 = vpop.f32.mrb[0].mxu0
    %3886 = vmatprep.mubr.f32.mxu0 0.0
    %3887 = vmatmul.mubr.f32.gmra.mrb[0].mxu0 %v1678
    %v3888 = vpop.f32.mrb[0].mxu0
    %v3889 = vadd.f32 %v3504, %v3888
    %v3890 = vpop.f32.mrb[0].mxu0
    %3891 = vmatprep.mubr.f32.mxu0 0.0
    %3892 = vmatmul.mubr.f32.gmra.mrb[0].mxu0 %v1687
    %v3893 = vpop.f32.mrb[0].mxu0
    %v3894 = vadd.f32 %v3509, %v3893
    %v3895 = vpop.f32.mrb[0].mxu0
    %3896 = vmatprep.mubr.f32.mxu0 0.0
    %3897 = vmatmul.mubr.f32.gmra.mrb[0].mxu0 %v1696
    %v3898 = vpop.f32.mrb[0].mxu0
    %v3899 = vadd.f32 %v3514, %v3898
    %v3900 = vpop.f32.mrb[0].mxu0
    %3901 = vmatprep.mubr.f32.mxu0 0.0
    %3902 = vmatmul.mubr.f32.gmra.mrb[0].mxu0 %v1705
    %v3903 = vpop.f32.mrb[0].mxu0
    %v3904 = vadd.f32 %v3519, %v3903
    %v3905 = vpop.f32.mrb[0].mxu0
    %3906 = vmatprep.mubr.f32.mxu0 0.0
    %3907 = vmatmul.mubr.f32.gmra.mrb[0].mxu0 %v1714
    %v3908 = vpop.f32.mrb[0].mxu0
    %v3909 = vadd.f32 %v3524, %v3908
    %v3910 = vpop.f32.mrb[0].mxu0
    %3911 = vmatprep.mubr.f32.mxu0 0.0
    %3912 = vmatmul.mubr.f32.gmra.mrb[0].mxu0 %v1723
    %v3913 = vpop.f32.mrb[0].mxu0
    %v3914 = vadd.f32 %v3529, %v3913
    %v3915 = vpop.f32.mrb[0].mxu0
    %3916 = vmatprep.mubr.f32.mxu0 0.0
    %3917 = vmatmul.mubr.f32.gmra.mrb[0].mxu0 %v1732
    %v3918 = vpop.f32.mrb[0].mxu0
    %v3919 = vadd.f32 %v3534, %v3918
    %v3920 = vpop.f32.mrb[0].mxu0
    %3921 = vmatprep.mubr.f32.mxu0 0.0
    %3922 = vmatmul.mubr.f32.gmra.mrb[0].mxu0 %v1741
    %v3923 = vpop.f32.mrb[0].mxu0
    %v3924 = vadd.f32 %v3539, %v3923
    %v3925 = vpop.f32.mrb[0].mxu0
    %3926 = vmatprep.mubr.f32.mxu0 0.0
    %3927 = vmatmul.mubr.f32.gmra.mrb[0].mxu0 %v1750
    %v3928 = vpop.f32.mrb[0].mxu0
    %v3929 = vadd.f32 %v3544, %v3928
    %v3930 = vpop.f32.mrb[0].mxu0
    %3931 = vmatprep.mubr.f32.mxu0 0.0
    %3932 = vmatmul.mubr.f32.gmra.mrb[0].mxu0 %v1759
    %v3933 = vpop.f32.mrb[0].mxu0
    %v3934 = vadd.f32 %v3549, %v3933
    %v3935 = vpop.f32.mrb[0].mxu0
    %3936 = vmatprep.mubr.f32.mxu0 0.0
    %3937 = vmatmul.mubr.f32.gmra.mrb[0].mxu0 %v1768
    %v3938 = vpop.f32.mrb[0].mxu0
    %v3939 = vadd.f32 %v3554, %v3938
    %v3940 = vpop.f32.mrb[0].mxu0
    %3941 = vmatprep.mubr.f32.mxu0 0.0
    %3942 = vmatmul.mubr.f32.gmra.mrb[0].mxu0 %v1777
    %v3943 = vpop.f32.mrb[0].mxu0
    %v3944 = vadd.f32 %v3559, %v3943
    %v3945 = vpop.f32.mrb[0].mxu0
    %3946 = vmatprep.mubr.f32.mxu0 0.0
    %3947 = vmatmul.mubr.f32.gmra.mrb[0].mxu0 %v1786
    %v3948 = vpop.f32.mrb[0].mxu0
    %v3949 = vadd.f32 %v3564, %v3948
    %v3950 = vpop.f32.mrb[0].mxu0
    %3951 = vmatprep.mubr.f32.mxu0 0.0
    %3952 = vmatmul.mubr.f32.gmra.mrb[0].mxu0 %v1795
    %v3953 = vpop.f32.mrb[0].mxu0
    %v3954 = vadd.f32 %v3569, %v3953
    %v3955 = vpop.f32.mrb[0].mxu0
    %3956 = vmatprep.mubr.f32.mxu0 0.0
    %3957 = vmatmul.mubr.f32.gmra.mrb[0].mxu0 %v1804
    %v3958 = vpop.f32.mrb[0].mxu0
    %v3959 = vadd.f32 %v3574, %v3958
    %v3960 = vpop.f32.mrb[0].mxu0
    %3961 = vmatprep.mubr.f32.mxu0 0.0
    %3962 = vmatmul.mubr.f32.gmra.mrb[0].mxu0 %v1813
    %v3963 = vpop.f32.mrb[0].mxu0
    %v3964 = vadd.f32 %v3579, %v3963
    %v3965 = vpop.f32.mrb[0].mxu0
    %3966 = vmatprep.mubr.f32.mxu0 0.0
    %3967 = vmatmul.mubr.f32.gmra.mrb[0].mxu0 %v1822
    %v3968 = vpop.f32.mrb[0].mxu0
    %v3969 = vadd.f32 %v3584, %v3968
    %v3970 = vpop.f32.mrb[0].mxu0
    %3971 = vmatprep.mubr.f32.mxu0 0.0
    %3972 = vmatmul.mubr.f32.gmra.mrb[0].mxu0 %v1831
    %v3973 = vpop.f32.mrb[0].mxu0
    %v3974 = vadd.f32 %v3589, %v3973
    %v3975 = vpop.f32.mrb[0].mxu0
    %3976 = vmatprep.mubr.f32.mxu0 0.0
    %3977 = vmatmul.mubr.f32.gmra.mrb[0].mxu0 %v1840
    %v3978 = vpop.f32.mrb[0].mxu0
    %v3979 = vadd.f32 %v3594, %v3978
    %v3980 = vpop.f32.mrb[0].mxu0
    %3981 = vmatprep.mubr.f32.mxu0 0.0
    %3982 = vmatmul.mubr.f32.gmra.mrb[0].mxu0 %v1849
    %v3983 = vpop.f32.mrb[0].mxu0
    %v3984 = vadd.f32 %v3599, %v3983
    %v3985 = vpop.f32.mrb[0].mxu0
    %3986 = vmatprep.mubr.f32.mxu0 0.0
    %3987 = vmatmul.mubr.f32.gmra.mrb[0].mxu0 %v1858
    %v3988 = vpop.f32.mrb[0].mxu0
    %v3989 = vadd.f32 %v3604, %v3988
    %v3990 = vpop.f32.mrb[0].mxu0
    %3991 = vmatprep.mubr.f32.mxu0 0.0
    %3992 = vmatmul.mubr.f32.gmra.mrb[0].mxu0 %v1867
    %v3993 = vpop.f32.mrb[0].mxu0
    %v3994 = vadd.f32 %v3609, %v3993
    %v3995 = vpop.f32.mrb[0].mxu0
    %3996 = vmatprep.mubr.f32.mxu0 0.0
    %3997 = vmatmul.mubr.f32.gmra.mrb[0].mxu0 %v1876
    %v3998 = vpop.f32.mrb[0].mxu0
    %v3999 = vadd.f32 %v3614, %v3998
    %v4000 = vpop.f32.mrb[0].mxu0
    %4001 = vmatprep.mubr.f32.mxu0 0.0
    %4002 = vmatmul.mubr.f32.gmra.mrb[0].mxu0 %v1885
    %v4003 = vpop.f32.mrb[0].mxu0
    %v4004 = vadd.f32 %v3619, %v4003
    %v4005 = vpop.f32.mrb[0].mxu0
    %4006 = vmatprep.mubr.f32.mxu0 0.0
    %4007 = vmatmul.mubr.f32.gmra.mrb[0].mxu0 %v1894
    %v4008 = vpop.f32.mrb[0].mxu0
    %v4009 = vadd.f32 %v3624, %v4008
    %v4010 = vpop.f32.mrb[0].mxu0
    %4011 = vmatprep.mubr.f32.mxu0 0.0
    %4012 = vmatmul.mubr.f32.gmra.mrb[0].mxu0 %v1903
    %v4013 = vpop.f32.mrb[0].mxu0
    %v4014 = vadd.f32 %v3629, %v4013
    %v4015 = vpop.f32.mrb[0].mxu0
    %4016 = vmatprep.mubr.f32.mxu0 0.0
    %4017 = vmatmul.mubr.f32.gmra.mrb[0].mxu0 %v1912
    %v4018 = vpop.f32.mrb[0].mxu0
    %v4019 = vadd.f32 %v3634, %v4018
    %v4020 = vpop.f32.mrb[0].mxu0
    %4021 = vmatprep.mubr.f32.mxu0 0.0
    %4022 = vmatmul.mubr.f32.gmra.mrb[0].mxu0 %v1921
    %v4023 = vpop.f32.mrb[0].mxu0
    %v4024 = vadd.f32 %v3639, %v4023
    %v4025 = vpop.f32.mrb[0].mxu0
    %4026 = vmatprep.mubr.f32.mxu0 0.0
    %4027 = vmatmul.mubr.f32.gmra.mrb[0].mxu0 %v1930
    %v4028 = vpop.f32.mrb[0].mxu0
    %v4029 = vadd.f32 %v3644, %v4028
    %v4030 = vpop.f32.mrb[0].mxu0
    %4031 = vmatprep.mubr.f32.mxu0 0.0
    %4032 = vmatmul.mubr.f32.gmra.mrb[0].mxu0 %v1939
    %v4033 = vpop.f32.mrb[0].mxu0
    %v4034 = vadd.f32 %v3649, %v4033
    %v4035 = vpop.f32.mrb[0].mxu0
    %4036 = vmatprep.mubr.f32.mxu0 0.0
    %4037 = vmatmul.mubr.f32.gmra.mrb[0].mxu0 %v1948
    %v4038 = vpop.f32.mrb[0].mxu0
    %v4039 = vadd.f32 %v3654, %v4038
    %v4040 = vpop.f32.mrb[0].mxu0
    %4041 = vmatprep.mubr.f32.mxu0 0.0
    %4042 = vmatmul.mubr.f32.gmra.mrb[0].mxu0 %v1957
    %v4043 = vpop.f32.mrb[0].mxu0
    %v4044 = vadd.f32 %v3659, %v4043
    %v4045 = vpop.f32.mrb[0].mxu0
    %4046 = vmatprep.mubr.f32.mxu0 0.0
    %4047 = vmatmul.mubr.f32.gmra.mrb[0].mxu0 %v1966
    %v4048 = vpop.f32.mrb[0].mxu0
    %v4049 = vadd.f32 %v3664, %v4048
    %v4050 = vpop.f32.mrb[0].mxu0
    %4051 = vmatprep.mubr.f32.mxu0 0.0
    %4052 = vmatmul.mubr.f32.gmra.mrb[0].mxu0 %v1975
    %v4053 = vpop.f32.mrb[0].mxu0
    %v4054 = vadd.f32 %v3669, %v4053
    %v4055 = vpop.f32.mrb[0].mxu0
    %4056 = vmatprep.mubr.f32.mxu0 0.0
    %4057 = vmatmul.mubr.f32.gmra.mrb[0].mxu0 %v1984
    %v4058 = vpop.f32.mrb[0].mxu0
    %v4059 = vadd.f32 %v3674, %v4058
    %v4060 = vpop.f32.mrb[0].mxu0
    %4061 = vmatprep.mubr.f32.mxu0 0.0
    %4062 = vmatmul.mubr.f32.gmra.mrb[0].mxu0 %v1993
    %v4063 = vpop.f32.mrb[0].mxu0
    %v4064 = vadd.f32 %v3679, %v4063
    %v4065 = vpop.f32.mrb[0].mxu0
    %4066 = vmatprep.mubr.f32.mxu0 0.0
    %4067 = vmatmul.mubr.f32.gmra.mrb[0].mxu0 %v2002
    %v4068 = vpop.f32.mrb[0].mxu0
    %v4069 = vadd.f32 %v3684, %v4068
    %v4070 = vpop.f32.mrb[0].mxu0
    %4071 = vdwg.mxu0
    %v4072 = vld [vmem:[%s2] sm:$0x1]
    %v4073 = vld [vmem:[%s3] sm:$0x1]
    %v4074 = vadd.f32 %v3754, %v3759
    %v4075 = vadd.f32 %v4074, %v3764
    %v4076 = vadd.f32 %v4075, %v3769
    %v4077 = vadd.f32 %v4076, %v3774
    %v4078 = vadd.f32 %v4077, %v3779
    %v4079 = vadd.f32 %v4078, %v3784
    %v4080 = vadd.f32 %v4079, %v3789
    %v4081 = vadd.f32 %v4080, %v3794
    %v4082 = vadd.f32 %v4081, %v3799
    %v4083 = vadd.f32 %v4082, %v3804
    %v4084 = vadd.f32 %v4083, %v3809
    %v4085 = vadd.f32 %v4084, %v3814
    %v4086 = vadd.f32 %v4085, %v3819
    %v4087 = vadd.f32 %v4086, %v3824
    %v4088 = vadd.f32 %v4087, %v3829
    %v4089 = vadd.f32 %v4088, %v3834
    %v4090 = vadd.f32 %v4089, %v3839
    %v4091 = vadd.f32 %v4090, %v3844
    %v4092 = vadd.f32 %v4091, %v3849
    %v4093 = vadd.f32 %v4092, %v3854
    %v4094 = vadd.f32 %v4093, %v3859
    %v4095 = vadd.f32 %v4094, %v3864
    %v4096 = vadd.f32 %v4095, %v3869
    %v4097 = vadd.f32 %v4096, %v3874
    %v4098 = vadd.f32 %v4097, %v3879
    %v4099 = vadd.f32 %v4098, %v3884
    %v4100 = vadd.f32 %v4099, %v3889
    %v4101 = vadd.f32 %v4100, %v3894
    %v4102 = vadd.f32 %v4101, %v3899
    %v4103 = vadd.f32 %v4102, %v3904
    %v4104 = vadd.f32 %v4103, %v3909
    %v4105 = vadd.f32 %v4104, %v3914
    %v4106 = vadd.f32 %v4105, %v3919
    %v4107 = vadd.f32 %v4106, %v3924
    %v4108 = vadd.f32 %v4107, %v3929
    %v4109 = vadd.f32 %v4108, %v3934
    %v4110 = vadd.f32 %v4109, %v3939
    %v4111 = vadd.f32 %v4110, %v3944
    %v4112 = vadd.f32 %v4111, %v3949
    %v4113 = vadd.f32 %v4112, %v3954
    %v4114 = vadd.f32 %v4113, %v3959
    %v4115 = vadd.f32 %v4114, %v3964
    %v4116 = vadd.f32 %v4115, %v3969
    %v4117 = vadd.f32 %v4116, %v3974
    %v4118 = vadd.f32 %v4117, %v3979
    %v4119 = vadd.f32 %v4118, %v3984
    %v4120 = vadd.f32 %v4119, %v3989
    %v4121 = vadd.f32 %v4120, %v3994
    %v4122 = vadd.f32 %v4121, %v3999
    %v4123 = vadd.f32 %v4122, %v4004
    %v4124 = vadd.f32 %v4123, %v4009
    %v4125 = vadd.f32 %v4124, %v4014
    %v4126 = vadd.f32 %v4125, %v4019
    %v4127 = vadd.f32 %v4126, %v4024
    %v4128 = vadd.f32 %v4127, %v4029
    %v4129 = vadd.f32 %v4128, %v4034
    %v4130 = vadd.f32 %v4129, %v4039
    %v4131 = vadd.f32 %v4130, %v4044
    %v4132 = vadd.f32 %v4131, %v4049
    %v4133 = vadd.f32 %v4132, %v4054
    %v4134 = vadd.f32 %v4133, %v4059
    %v4135 = vadd.f32 %v4134, %v4064
    %v4136 = vadd.f32 %v4135, %v4069
    %v4137 = vrot.slane %v4136, 4
    %v4138 = vadd.f32 %v4136, %v4137
    %v4139 = vrot.slane %v4138, 2
    %v4140 = vadd.f32 %v4138, %v4139
    %v4141 = vrot.slane %v4140, 1
    %v4142 = vadd.f32 %v4140, %v4141
    %v4143 = vmul.f32 %v4142, 0.001953125
    %v4144 = vmul.f32 %v3754, %v3754
    %v4145 = vmul.f32 %v3759, %v3759
    %v4146 = vmul.f32 %v3764, %v3764
    %v4147 = vmul.f32 %v3769, %v3769
    %v4148 = vmul.f32 %v3774, %v3774
    %v4149 = vmul.f32 %v3779, %v3779
    %v4150 = vmul.f32 %v3784, %v3784
    %v4151 = vmul.f32 %v3789, %v3789
    %v4152 = vmul.f32 %v3794, %v3794
    %v4153 = vmul.f32 %v3799, %v3799
    %v4154 = vmul.f32 %v3804, %v3804
    %v4155 = vmul.f32 %v3809, %v3809
    %v4156 = vmul.f32 %v3814, %v3814
    %v4157 = vmul.f32 %v3819, %v3819
    %v4158 = vmul.f32 %v3824, %v3824
    %v4159 = vmul.f32 %v3829, %v3829
    %v4160 = vmul.f32 %v3834, %v3834
    %v4161 = vmul.f32 %v3839, %v3839
    %v4162 = vmul.f32 %v3844, %v3844
    %v4163 = vmul.f32 %v3849, %v3849
    %v4164 = vmul.f32 %v3854, %v3854
    %v4165 = vmul.f32 %v3859, %v3859
    %v4166 = vmul.f32 %v3864, %v3864
    %v4167 = vmul.f32 %v3869, %v3869
    %v4168 = vmul.f32 %v3874, %v3874
    %v4169 = vmul.f32 %v3879, %v3879
    %v4170 = vmul.f32 %v3884, %v3884
    %v4171 = vmul.f32 %v3889, %v3889
    %v4172 = vmul.f32 %v3894, %v3894
    %v4173 = vmul.f32 %v3899, %v3899
    %v4174 = vmul.f32 %v3904, %v3904
    %v4175 = vmul.f32 %v3909, %v3909
    %v4176 = vmul.f32 %v3914, %v3914
    %v4177 = vmul.f32 %v3919, %v3919
    %v4178 = vmul.f32 %v3924, %v3924
    %v4179 = vmul.f32 %v3929, %v3929
    %v4180 = vmul.f32 %v3934, %v3934
    %v4181 = vmul.f32 %v3939, %v3939
    %v4182 = vmul.f32 %v3944, %v3944
    %v4183 = vmul.f32 %v3949, %v3949
    %v4184 = vmul.f32 %v3954, %v3954
    %v4185 = vmul.f32 %v3959, %v3959
    %v4186 = vmul.f32 %v3964, %v3964
    %v4187 = vmul.f32 %v3969, %v3969
    %v4188 = vmul.f32 %v3974, %v3974
    %v4189 = vmul.f32 %v3979, %v3979
    %v4190 = vmul.f32 %v3984, %v3984
    %v4191 = vmul.f32 %v3989, %v3989
    %v4192 = vmul.f32 %v3994, %v3994
    %v4193 = vmul.f32 %v3999, %v3999
    %v4194 = vmul.f32 %v4004, %v4004
    %v4195 = vmul.f32 %v4009, %v4009
    %v4196 = vmul.f32 %v4014, %v4014
    %v4197 = vmul.f32 %v4019, %v4019
    %v4198 = vmul.f32 %v4024, %v4024
    %v4199 = vmul.f32 %v4029, %v4029
    %v4200 = vmul.f32 %v4034, %v4034
    %v4201 = vmul.f32 %v4039, %v4039
    %v4202 = vmul.f32 %v4044, %v4044
    %v4203 = vmul.f32 %v4049, %v4049
    %v4204 = vmul.f32 %v4054, %v4054
    %v4205 = vmul.f32 %v4059, %v4059
    %v4206 = vmul.f32 %v4064, %v4064
    %v4207 = vmul.f32 %v4069, %v4069
    %v4208 = vadd.f32 %v4144, %v4145
    %v4209 = vadd.f32 %v4208, %v4146
    %v4210 = vadd.f32 %v4209, %v4147
    %v4211 = vadd.f32 %v4210, %v4148
    %v4212 = vadd.f32 %v4211, %v4149
    %v4213 = vadd.f32 %v4212, %v4150
    %v4214 = vadd.f32 %v4213, %v4151
    %v4215 = vadd.f32 %v4214, %v4152
    %v4216 = vadd.f32 %v4215, %v4153
    %v4217 = vadd.f32 %v4216, %v4154
    %v4218 = vadd.f32 %v4217, %v4155
    %v4219 = vadd.f32 %v4218, %v4156
    %v4220 = vadd.f32 %v4219, %v4157
    %v4221 = vadd.f32 %v4220, %v4158
    %v4222 = vadd.f32 %v4221, %v4159
    %v4223 = vadd.f32 %v4222, %v4160
    %v4224 = vadd.f32 %v4223, %v4161
    %v4225 = vadd.f32 %v4224, %v4162
    %v4226 = vadd.f32 %v4225, %v4163
    %v4227 = vadd.f32 %v4226, %v4164
    %v4228 = vadd.f32 %v4227, %v4165
    %v4229 = vadd.f32 %v4228, %v4166
    %v4230 = vadd.f32 %v4229, %v4167
    %v4231 = vadd.f32 %v4230, %v4168
    %v4232 = vadd.f32 %v4231, %v4169
    %v4233 = vadd.f32 %v4232, %v4170
    %v4234 = vadd.f32 %v4233, %v4171
    %v4235 = vadd.f32 %v4234, %v4172
    %v4236 = vadd.f32 %v4235, %v4173
    %v4237 = vadd.f32 %v4236, %v4174
    %v4238 = vadd.f32 %v4237, %v4175
    %v4239 = vadd.f32 %v4238, %v4176
    %v4240 = vadd.f32 %v4239, %v4177
    %v4241 = vadd.f32 %v4240, %v4178
    %v4242 = vadd.f32 %v4241, %v4179
    %v4243 = vadd.f32 %v4242, %v4180
    %v4244 = vadd.f32 %v4243, %v4181
    %v4245 = vadd.f32 %v4244, %v4182
    %v4246 = vadd.f32 %v4245, %v4183
    %v4247 = vadd.f32 %v4246, %v4184
    %v4248 = vadd.f32 %v4247, %v4185
    %v4249 = vadd.f32 %v4248, %v4186
    %v4250 = vadd.f32 %v4249, %v4187
    %v4251 = vadd.f32 %v4250, %v4188
    %v4252 = vadd.f32 %v4251, %v4189
    %v4253 = vadd.f32 %v4252, %v4190
    %v4254 = vadd.f32 %v4253, %v4191
    %v4255 = vadd.f32 %v4254, %v4192
    %v4256 = vadd.f32 %v4255, %v4193
    %v4257 = vadd.f32 %v4256, %v4194
    %v4258 = vadd.f32 %v4257, %v4195
    %v4259 = vadd.f32 %v4258, %v4196
    %v4260 = vadd.f32 %v4259, %v4197
    %v4261 = vadd.f32 %v4260, %v4198
    %v4262 = vadd.f32 %v4261, %v4199
    %v4263 = vadd.f32 %v4262, %v4200
    %v4264 = vadd.f32 %v4263, %v4201
    %v4265 = vadd.f32 %v4264, %v4202
    %v4266 = vadd.f32 %v4265, %v4203
    %v4267 = vadd.f32 %v4266, %v4204
    %v4268 = vadd.f32 %v4267, %v4205
    %v4269 = vadd.f32 %v4268, %v4206
    %v4270 = vadd.f32 %v4269, %v4207
    %v4271 = vrot.slane %v4270, 4
    %v4272 = vadd.f32 %v4270, %v4271
    %v4273 = vrot.slane %v4272, 2
    %v4274 = vadd.f32 %v4272, %v4273
    %v4275 = vrot.slane %v4274, 1
    %v4276 = vadd.f32 %v4274, %v4275
    %v4277 = vmul.f32 %v4276, 0.001953125
    %v4278 = vmul.f32 %v4143, %v4143
    %v4279 = vsub.f32 %v4277, %v4278
    %v4280 = vadd.f32 %v4279, 1e-05
    %v4281 = vrsqrt.pop %v4280
    %v4282 = vmul.f32 %v4281, %v4072
    %v4283 = vmul.f32 %v4143, %v4282
    %v4284 = vsub.f32 %v4073, %v4283
    %v4285 = vlaneseq
    %v4286 = vshrl.u32 %v4285, 7
    %v4287 = vsub.s32 0, %v4286
    %v4288 = vrot.slane %v4282, %v4287
    %v4289 = vmul.f32 %v3754, %v4288
    %v4290 = vmul.f32 %v3759, %v4288
    %v4291 = vmul.f32 %v3764, %v4288
    %v4292 = vmul.f32 %v3769, %v4288
    %v4293 = vmul.f32 %v3774, %v4288
    %v4294 = vmul.f32 %v3779, %v4288
    %v4295 = vmul.f32 %v3784, %v4288
    %v4296 = vmul.f32 %v3789, %v4288
    %v4297 = vmul.f32 %v3794, %v4288
    %v4298 = vmul.f32 %v3799, %v4288
    %v4299 = vmul.f32 %v3804, %v4288
    %v4300 = vmul.f32 %v3809, %v4288
    %v4301 = vmul.f32 %v3814, %v4288
    %v4302 = vmul.f32 %v3819, %v4288
    %v4303 = vmul.f32 %v3824, %v4288
    %v4304 = vmul.f32 %v3829, %v4288
    %v4305 = vmul.f32 %v3834, %v4288
    %v4306 = vmul.f32 %v3839, %v4288
    %v4307 = vmul.f32 %v3844, %v4288
    %v4308 = vmul.f32 %v3849, %v4288
    %v4309 = vmul.f32 %v3854, %v4288
    %v4310 = vmul.f32 %v3859, %v4288
    %v4311 = vmul.f32 %v3864, %v4288
    %v4312 = vmul.f32 %v3869, %v4288
    %v4313 = vmul.f32 %v3874, %v4288
    %v4314 = vmul.f32 %v3879, %v4288
    %v4315 = vmul.f32 %v3884, %v4288
    %v4316 = vmul.f32 %v3889, %v4288
    %v4317 = vmul.f32 %v3894, %v4288
    %v4318 = vmul.f32 %v3899, %v4288
    %v4319 = vmul.f32 %v3904, %v4288
    %v4320 = vmul.f32 %v3909, %v4288
    %v4321 = vmul.f32 %v3914, %v4288
    %v4322 = vmul.f32 %v3919, %v4288
    %v4323 = vmul.f32 %v3924, %v4288
    %v4324 = vmul.f32 %v3929, %v4288
    %v4325 = vmul.f32 %v3934, %v4288
    %v4326 = vmul.f32 %v3939, %v4288
    %v4327 = vmul.f32 %v3944, %v4288
    %v4328 = vmul.f32 %v3949, %v4288
    %v4329 = vmul.f32 %v3954, %v4288
    %v4330 = vmul.f32 %v3959, %v4288
    %v4331 = vmul.f32 %v3964, %v4288
    %v4332 = vmul.f32 %v3969, %v4288
    %v4333 = vmul.f32 %v3974, %v4288
    %v4334 = vmul.f32 %v3979, %v4288
    %v4335 = vmul.f32 %v3984, %v4288
    %v4336 = vmul.f32 %v3989, %v4288
    %v4337 = vmul.f32 %v3994, %v4288
    %v4338 = vmul.f32 %v3999, %v4288
    %v4339 = vmul.f32 %v4004, %v4288
    %v4340 = vmul.f32 %v4009, %v4288
    %v4341 = vmul.f32 %v4014, %v4288
    %v4342 = vmul.f32 %v4019, %v4288
    %v4343 = vmul.f32 %v4024, %v4288
    %v4344 = vmul.f32 %v4029, %v4288
    %v4345 = vmul.f32 %v4034, %v4288
    %v4346 = vmul.f32 %v4039, %v4288
    %v4347 = vmul.f32 %v4044, %v4288
    %v4348 = vmul.f32 %v4049, %v4288
    %v4349 = vmul.f32 %v4054, %v4288
    %v4350 = vmul.f32 %v4059, %v4288
    %v4351 = vmul.f32 %v4064, %v4288
    %v4352 = vmul.f32 %v4069, %v4288
    %v4354 = vlaneseq
    %v4355 = vshrl.u32 %v4354, 7
    %v4356 = vsub.s32 0, %v4355
    %v4357 = vrot.slane %v4284, %v4356
    %v4359 = vadd.f32 %v4289, %v4357
    %v4360 = vadd.f32 %v4290, %v4357
    %v4361 = vadd.f32 %v4291, %v4357
    %v4362 = vadd.f32 %v4292, %v4357
    %v4363 = vadd.f32 %v4293, %v4357
    %v4364 = vadd.f32 %v4294, %v4357
    %v4365 = vadd.f32 %v4295, %v4357
    %v4366 = vadd.f32 %v4296, %v4357
    %v4367 = vadd.f32 %v4297, %v4357
    %v4368 = vadd.f32 %v4298, %v4357
    %v4369 = vadd.f32 %v4299, %v4357
    %v4370 = vadd.f32 %v4300, %v4357
    %v4371 = vadd.f32 %v4301, %v4357
    %v4372 = vadd.f32 %v4302, %v4357
    %v4373 = vadd.f32 %v4303, %v4357
    %v4374 = vadd.f32 %v4304, %v4357
    %v4375 = vadd.f32 %v4305, %v4357
    %v4376 = vadd.f32 %v4306, %v4357
    %v4377 = vadd.f32 %v4307, %v4357
    %v4378 = vadd.f32 %v4308, %v4357
    %v4379 = vadd.f32 %v4309, %v4357
    %v4380 = vadd.f32 %v4310, %v4357
    %v4381 = vadd.f32 %v4311, %v4357
    %v4382 = vadd.f32 %v4312, %v4357
    %v4383 = vadd.f32 %v4313, %v4357
    %v4384 = vadd.f32 %v4314, %v4357
    %v4385 = vadd.f32 %v4315, %v4357
    %v4386 = vadd.f32 %v4316, %v4357
    %v4387 = vadd.f32 %v4317, %v4357
    %v4388 = vadd.f32 %v4318, %v4357
    %v4389 = vadd.f32 %v4319, %v4357
    %v4390 = vadd.f32 %v4320, %v4357
    %v4391 = vadd.f32 %v4321, %v4357
    %v4392 = vadd.f32 %v4322, %v4357
    %v4393 = vadd.f32 %v4323, %v4357
    %v4394 = vadd.f32 %v4324, %v4357
    %v4395 = vadd.f32 %v4325, %v4357
    %v4396 = vadd.f32 %v4326, %v4357
    %v4397 = vadd.f32 %v4327, %v4357
    %v4398 = vadd.f32 %v4328, %v4357
    %v4399 = vadd.f32 %v4329, %v4357
    %v4400 = vadd.f32 %v4330, %v4357
    %v4401 = vadd.f32 %v4331, %v4357
    %v4402 = vadd.f32 %v4332, %v4357
    %v4403 = vadd.f32 %v4333, %v4357
    %v4404 = vadd.f32 %v4334, %v4357
    %v4405 = vadd.f32 %v4335, %v4357
    %v4406 = vadd.f32 %v4336, %v4357
    %v4407 = vadd.f32 %v4337, %v4357
    %v4408 = vadd.f32 %v4338, %v4357
    %v4409 = vadd.f32 %v4339, %v4357
    %v4410 = vadd.f32 %v4340, %v4357
    %v4411 = vadd.f32 %v4341, %v4357
    %v4412 = vadd.f32 %v4342, %v4357
    %v4413 = vadd.f32 %v4343, %v4357
    %v4414 = vadd.f32 %v4344, %v4357
    %v4415 = vadd.f32 %v4345, %v4357
    %v4416 = vadd.f32 %v4346, %v4357
    %v4417 = vadd.f32 %v4347, %v4357
    %v4418 = vadd.f32 %v4348, %v4357
    %v4419 = vadd.f32 %v4349, %v4357
    %v4420 = vadd.f32 %v4350, %v4357
    %v4421 = vadd.f32 %v4351, %v4357
    %v4422 = vadd.f32 %v4352, %v4357
    %v4423 = vmax.f32 %v4359, 0.0
    %v4424 = vmax.f32 %v4360, 0.0
    %v4425 = vmax.f32 %v4361, 0.0
    %v4426 = vmax.f32 %v4362, 0.0
    %v4427 = vmax.f32 %v4363, 0.0
    %v4428 = vmax.f32 %v4364, 0.0
    %v4429 = vmax.f32 %v4365, 0.0
    %v4430 = vmax.f32 %v4366, 0.0
    %v4431 = vmax.f32 %v4367, 0.0
    %v4432 = vmax.f32 %v4368, 0.0
    %v4433 = vmax.f32 %v4369, 0.0
    %v4434 = vmax.f32 %v4370, 0.0
    %v4435 = vmax.f32 %v4371, 0.0
    %v4436 = vmax.f32 %v4372, 0.0
    %v4437 = vmax.f32 %v4373, 0.0
    %v4438 = vmax.f32 %v4374, 0.0
    %v4439 = vmax.f32 %v4375, 0.0
    %v4440 = vmax.f32 %v4376, 0.0
    %v4441 = vmax.f32 %v4377, 0.0
    %v4442 = vmax.f32 %v4378, 0.0
    %v4443 = vmax.f32 %v4379, 0.0
    %v4444 = vmax.f32 %v4380, 0.0
    %v4445 = vmax.f32 %v4381, 0.0
    %v4446 = vmax.f32 %v4382, 0.0
    %v4447 = vmax.f32 %v4383, 0.0
    %v4448 = vmax.f32 %v4384, 0.0
    %v4449 = vmax.f32 %v4385, 0.0
    %v4450 = vmax.f32 %v4386, 0.0
    %v4451 = vmax.f32 %v4387, 0.0
    %v4452 = vmax.f32 %v4388, 0.0
    %v4453 = vmax.f32 %v4389, 0.0
    %v4454 = vmax.f32 %v4390, 0.0
    %v4455 = vmax.f32 %v4391, 0.0
    %v4456 = vmax.f32 %v4392, 0.0
    %v4457 = vmax.f32 %v4393, 0.0
    %v4458 = vmax.f32 %v4394, 0.0
    %v4459 = vmax.f32 %v4395, 0.0
    %v4460 = vmax.f32 %v4396, 0.0
    %v4461 = vmax.f32 %v4397, 0.0
    %v4462 = vmax.f32 %v4398, 0.0
    %v4463 = vmax.f32 %v4399, 0.0
    %v4464 = vmax.f32 %v4400, 0.0
    %v4465 = vmax.f32 %v4401, 0.0
    %v4466 = vmax.f32 %v4402, 0.0
    %v4467 = vmax.f32 %v4403, 0.0
    %v4468 = vmax.f32 %v4404, 0.0
    %v4469 = vmax.f32 %v4405, 0.0
    %v4470 = vmax.f32 %v4406, 0.0
    %v4471 = vmax.f32 %v4407, 0.0
    %v4472 = vmax.f32 %v4408, 0.0
    %v4473 = vmax.f32 %v4409, 0.0
    %v4474 = vmax.f32 %v4410, 0.0
    %v4475 = vmax.f32 %v4411, 0.0
    %v4476 = vmax.f32 %v4412, 0.0
    %v4477 = vmax.f32 %v4413, 0.0
    %v4478 = vmax.f32 %v4414, 0.0
    %v4479 = vmax.f32 %v4415, 0.0
    %v4480 = vmax.f32 %v4416, 0.0
    %v4481 = vmax.f32 %v4417, 0.0
    %v4482 = vmax.f32 %v4418, 0.0
    %v4483 = vmax.f32 %v4419, 0.0
    %v4484 = vmax.f32 %v4420, 0.0
    %v4485 = vmax.f32 %v4421, 0.0
    %v4486 = vmax.f32 %v4422, 0.0
    %4487 = vst [vmem:[%s81 + $0x1] sm:$0xff] %v4423
    %4488 = vst [vmem:[%s81 + $0x9] sm:$0xff] %v4424
    %4489 = vst [vmem:[%s81 + $0x19] sm:$0xff] %v4425
    %4490 = vst [vmem:[%s81 + $0x21] sm:$0xff] %v4426
    %4491 = vst [vmem:[%s81 + $0x31] sm:$0xff] %v4427
    %4492 = vst [vmem:[%s81 + $0x39] sm:$0xff] %v4428
    %4493 = vst [vmem:[%s81 + $0x49] sm:$0xff] %v4429
    %4494 = vst [vmem:[%s81 + $0x51] sm:$0xff] %v4430
    %4495 = vst [vmem:[%s81 + $0x61] sm:$0xff] %v4431
    %4496 = vst [vmem:[%s81 + $0x69] sm:$0xff] %v4432
    %4497 = vst [vmem:[%s81 + $0x79] sm:$0xff] %v4433
    %4498 = vst [vmem:[%s81 + $0x81] sm:$0xff] %v4434
    %4499 = vst [vmem:[%s81 + $0x91] sm:$0xff] %v4435
    %4500 = vst [vmem:[%s81 + $0x99] sm:$0xff] %v4436
    %4501 = vst [vmem:[%s81 + $0xa9] sm:$0xff] %v4437
    %4502 = vst [vmem:[%s81 + $0xb1] sm:$0xff] %v4438
    %4503 = vst [vmem:[%s81 + $0xc1] sm:$0xff] %v4439
    %4504 = vst [vmem:[%s81 + $0xc9] sm:$0xff] %v4440
    %4505 = vst [vmem:[%s81 + $0xd9] sm:$0xff] %v4441
    %4506 = vst [vmem:[%s81 + $0xe1] sm:$0xff] %v4442
    %4507 = vst [vmem:[%s81 + $0xf1] sm:$0xff] %v4443
    %4508 = vst [vmem:[%s81 + $0xf9] sm:$0xff] %v4444
    %4509 = vst [vmem:[%s81 + $0x109] sm:$0xff] %v4445
    %4510 = vst [vmem:[%s81 + $0x111] sm:$0xff] %v4446
    %4511 = vst [vmem:[%s81 + $0x121] sm:$0xff] %v4447
    %4512 = vst [vmem:[%s81 + $0x129] sm:$0xff] %v4448
    %4513 = vst [vmem:[%s81 + $0x139] sm:$0xff] %v4449
    %4514 = vst [vmem:[%s81 + $0x141] sm:$0xff] %v4450
    %4515 = vst [vmem:[%s81 + $0x151] sm:$0xff] %v4451
    %4516 = vst [vmem:[%s81 + $0x159] sm:$0xff] %v4452
    %4517 = vst [vmem:[%s81 + $0x169] sm:$0xff] %v4453
    %4518 = vst [vmem:[%s81 + $0x171] sm:$0xff] %v4454
    %4519 = vst [vmem:[%s81 + $0x1b1] sm:$0xff] %v4455
    %4520 = vst [vmem:[%s81 + $0x1b9] sm:$0xff] %v4456
    %4521 = vst [vmem:[%s81 + $0x1c9] sm:$0xff] %v4457
    %4522 = vst [vmem:[%s81 + $0x1d1] sm:$0xff] %v4458
    %4523 = vst [vmem:[%s81 + $0x1e1] sm:$0xff] %v4459
    %4524 = vst [vmem:[%s81 + $0x1e9] sm:$0xff] %v4460
    %4525 = vst [vmem:[%s81 + $0x1f9] sm:$0xff] %v4461
    %4526 = vst [vmem:[%s81 + $0x201] sm:$0xff] %v4462
    %4527 = vst [vmem:[%s81 + $0x211] sm:$0xff] %v4463
    %4528 = vst [vmem:[%s81 + $0x219] sm:$0xff] %v4464
    %4529 = vst [vmem:[%s81 + $0x229] sm:$0xff] %v4465
    %4530 = vst [vmem:[%s81 + $0x231] sm:$0xff] %v4466
    %4531 = vst [vmem:[%s81 + $0x241] sm:$0xff] %v4467
    %4532 = vst [vmem:[%s81 + $0x249] sm:$0xff] %v4468
    %4533 = vst [vmem:[%s81 + $0x259] sm:$0xff] %v4469
    %4534 = vst [vmem:[%s81 + $0x261] sm:$0xff] %v4470
    %4535 = vst [vmem:[%s81 + $0x271] sm:$0xff] %v4471
    %4536 = vst [vmem:[%s81 + $0x279] sm:$0xff] %v4472
    %4537 = vst [vmem:[%s81 + $0x289] sm:$0xff] %v4473
    %4538 = vst [vmem:[%s81 + $0x291] sm:$0xff] %v4474
    %4539 = vst [vmem:[%s81 + $0x2a1] sm:$0xff] %v4475
    %4540 = vst [vmem:[%s81 + $0x2a9] sm:$0xff] %v4476
    %4541 = vst [vmem:[%s81 + $0x2b9] sm:$0xff] %v4477
    %4542 = vst [vmem:[%s81 + $0x2c1] sm:$0xff] %v4478
    %4543 = vst [vmem:[%s81 + $0x2d1] sm:$0xff] %v4479
    %4544 = vst [vmem:[%s81 + $0x2d9] sm:$0xff] %v4480
    %4545 = vst [vmem:[%s81 + $0x2e9] sm:$0xff] %v4481
    %4546 = vst [vmem:[%s81 + $0x2f1] sm:$0xff] %v4482
    %4547 = vst [vmem:[%s81 + $0x301] sm:$0xff] %v4483
    %4548 = vst [vmem:[%s81 + $0x309] sm:$0xff] %v4484
    %4549 = vst [vmem:[%s81 + $0x319] sm:$0xff] %v4485
    %4550 = vst [vmem:[%s81 + $0x321] sm:$0xff] %v4486
    %v4551 = vld [vmem:[#allocation2] sm:$0xff]
    %v4552 = vld [vmem:[#allocation2 + $0x8] sm:$0xff]
    %v4553 = vld [vmem:[#allocation2 + $0x18] sm:$0xff]
    %v4554 = vld [vmem:[#allocation2 + $0x20] sm:$0xff]
    %v4555 = vld [vmem:[#allocation2 + $0x30] sm:$0xff]
    %v4556 = vld [vmem:[#allocation2 + $0x38] sm:$0xff]
    %v4557 = vld [vmem:[#allocation2 + $0x48] sm:$0xff]
    %v4558 = vld [vmem:[#allocation2 + $0x50] sm:$0xff]
    %v4559 = vld [vmem:[#allocation2 + $0x60] sm:$0xff]
    %v4560 = vld [vmem:[#allocation2 + $0x68] sm:$0xff]
    %v4561 = vld [vmem:[#allocation2 + $0x78] sm:$0xff]
    %v4562 = vld [vmem:[#allocation2 + $0x80] sm:$0xff]
    %v4563 = vld [vmem:[#allocation2 + $0x90] sm:$0xff]
    %v4564 = vld [vmem:[#allocation2 + $0x98] sm:$0xff]
    %v4565 = vld [vmem:[#allocation2 + $0xa8] sm:$0xff]
    %v4566 = vld [vmem:[#allocation2 + $0xb0] sm:$0xff]
    %v4567 = vld [vmem:[#allocation2 + $0xc0] sm:$0xff]
    %v4568 = vld [vmem:[#allocation2 + $0xc8] sm:$0xff]
    %v4569 = vld [vmem:[#allocation2 + $0xd8] sm:$0xff]
    %v4570 = vld [vmem:[#allocation2 + $0xe0] sm:$0xff]
    %v4571 = vld [vmem:[#allocation2 + $0xf0] sm:$0xff]
    %v4572 = vld [vmem:[#allocation2 + $0xf8] sm:$0xff]
    %v4573 = vld [vmem:[#allocation2 + $0x108] sm:$0xff]
    %v4574 = vld [vmem:[#allocation2 + $0x110] sm:$0xff]
    %v4575 = vld [vmem:[#allocation2 + $0x120] sm:$0xff]
    %v4576 = vld [vmem:[#allocation2 + $0x128] sm:$0xff]
    %v4577 = vld [vmem:[#allocation2 + $0x138] sm:$0xff]
    %v4578 = vld [vmem:[#allocation2 + $0x140] sm:$0xff]
    %v4579 = vld [vmem:[#allocation2 + $0x150] sm:$0xff]
    %v4580 = vld [vmem:[#allocation2 + $0x158] sm:$0xff]
    %v4581 = vld [vmem:[#allocation2 + $0x168] sm:$0xff]
    %v4582 = vld [vmem:[#allocation2 + $0x170] sm:$0xff]
    %v4583 = vld [vmem:[#allocation2 + $0x1b0] sm:$0xff]
    %v4584 = vld [vmem:[#allocation2 + $0x1b8] sm:$0xff]
    %v4585 = vld [vmem:[#allocation2 + $0x1c8] sm:$0xff]
    %v4586 = vld [vmem:[#allocation2 + $0x1d0] sm:$0xff]
    %v4587 = vld [vmem:[#allocation2 + $0x1e0] sm:$0xff]
    %v4588 = vld [vmem:[#allocation2 + $0x1e8] sm:$0xff]
    %v4589 = vld [vmem:[#allocation2 + $0x1f8] sm:$0xff]
    %v4590 = vld [vmem:[#allocation2 + $0x200] sm:$0xff]
    %v4591 = vld [vmem:[#allocation2 + $0x210] sm:$0xff]
    %v4592 = vld [vmem:[#allocation2 + $0x218] sm:$0xff]
    %v4593 = vld [vmem:[#allocation2 + $0x228] sm:$0xff]
    %v4594 = vld [vmem:[#allocation2 + $0x230] sm:$0xff]
    %v4595 = vld [vmem:[#allocation2 + $0x240] sm:$0xff]
    %v4596 = vld [vmem:[#allocation2 + $0x248] sm:$0xff]
    %v4597 = vld [vmem:[#allocation2 + $0x258] sm:$0xff]
    %v4598 = vld [vmem:[#allocation2 + $0x260] sm:$0xff]
    %v4599 = vld [vmem:[#allocation2 + $0x270] sm:$0xff]
    %v4600 = vld [vmem:[#allocation2 + $0x278] sm:$0xff]
    %v4601 = vld [vmem:[#allocation2 + $0x288] sm:$0xff]
    %v4602 = vld [vmem:[#allocation2 + $0x290] sm:$0xff]
    %v4603 = vld [vmem:[#allocation2 + $0x2a0] sm:$0xff]
    %v4604 = vld [vmem:[#allocation2 + $0x2a8] sm:$0xff]
    %v4605 = vld [vmem:[#allocation2 + $0x2b8] sm:$0xff]
    %v4606 = vld [vmem:[#allocation2 + $0x2c0] sm:$0xff]
    %v4607 = vld [vmem:[#allocation2 + $0x2d0] sm:$0xff]
    %v4608 = vld [vmem:[#allocation2 + $0x2d8] sm:$0xff]
    %v4609 = vld [vmem:[#allocation2 + $0x2e8] sm:$0xff]
    %v4610 = vld [vmem:[#allocation2 + $0x2f0] sm:$0xff]
    %v4611 = vld [vmem:[#allocation2 + $0x300] sm:$0xff]
    %v4612 = vld [vmem:[#allocation2 + $0x308] sm:$0xff]
    %v4613 = vld [vmem:[#allocation2 + $0x318] sm:$0xff]
    %v4614 = vld [vmem:[#allocation2 + $0x320] sm:$0xff]
    %4615 = vst [vmem:[#allocation3] sm:$0xff] %v4551
    %4616 = vst [vmem:[#allocation3 + $0x48] sm:$0xff] %v4552
    %4617 = vst [vmem:[#allocation3 + $0x90] sm:$0xff] %v4553
    %4618 = vst [vmem:[#allocation3 + $0xd8] sm:$0xff] %v4554
    %4619 = vst [vmem:[#allocation3 + $0x120] sm:$0xff] %v4555
    %4620 = vst [vmem:[#allocation3 + $0x168] sm:$0xff] %v4556
    %4621 = vst [vmem:[#allocation3 + $0x1b0] sm:$0xff] %v4557
    %4622 = vst [vmem:[#allocation3 + $0x1f8] sm:$0xff] %v4558
    %4623 = vst [vmem:[#allocation3 + $0x240] sm:$0xff] %v4559
    %4624 = vst [vmem:[#allocation3 + $0x288] sm:$0xff] %v4560
    %4625 = vst [vmem:[#allocation3 + $0x2d0] sm:$0xff] %v4561
    %4626 = vst [vmem:[#allocation3 + $0x318] sm:$0xff] %v4562
    %4627 = vst [vmem:[#allocation3 + $0x360] sm:$0xff] %v4563
    %4628 = vst [vmem:[#allocation3 + $0x3a8] sm:$0xff] %v4564
    %4629 = vst [vmem:[#allocation3 + $0x3f0] sm:$0xff] %v4565
    %4630 = vst [vmem:[#allocation3 + $0x438] sm:$0xff] %v4566
    %4631 = vst [vmem:[#allocation3 + $0x480] sm:$0xff] %v4567
    %4632 = vst [vmem:[#allocation3 + $0x4c8] sm:$0xff] %v4568
    %4633 = vst [vmem:[#allocation3 + $0x510] sm:$0xff] %v4569
    %4634 = vst [vmem:[#allocation3 + $0x558] sm:$0xff] %v4570
    %4635 = vst [vmem:[#allocation3 + $0x5a0] sm:$0xff] %v4571
    %4636 = vst [vmem:[#allocation3 + $0x5e8] sm:$0xff] %v4572
    %4637 = vst [vmem:[#allocation3 + $0x630] sm:$0xff] %v4573
    %4638 = vst [vmem:[#allocation3 + $0x678] sm:$0xff] %v4574
    %4639 = vst [vmem:[#allocation3 + $0x6c0] sm:$0xff] %v4575
    %4640 = vst [vmem:[#allocation3 + $0x708] sm:$0xff] %v4576
    %4641 = vst [vmem:[#allocation3 + $0x750] sm:$0xff] %v4577
    %4642 = vst [vmem:[#allocation3 + $0x798] sm:$0xff] %v4578
    %4643 = vst [vmem:[#allocation3 + $0x7e0] sm:$0xff] %v4579
    %4644 = vst [vmem:[#allocation3 + $0x828] sm:$0xff] %v4580
    %4645 = vst [vmem:[#allocation3 + $0x870] sm:$0xff] %v4581
    %4646 = vst [vmem:[#allocation3 + $0x8b8] sm:$0xff] %v4582
    %4647 = vst [vmem:[#allocation3 + $0x900] sm:$0xff] %v4583
    %4648 = vst [vmem:[#allocation3 + $0x948] sm:$0xff] %v4584
    %4649 = vst [vmem:[#allocation3 + $0x990] sm:$0xff] %v4585
    %4650 = vst [vmem:[#allocation3 + $0x9d8] sm:$0xff] %v4586
    %4651 = vst [vmem:[#allocation3 + $0xa20] sm:$0xff] %v4587
    %4652 = vst [vmem:[#allocation3 + $0xa68] sm:$0xff] %v4588
    %4653 = vst [vmem:[#allocation3 + $0xab0] sm:$0xff] %v4589
    %4654 = vst [vmem:[#allocation3 + $0xaf8] sm:$0xff] %v4590
    %4655 = vst [vmem:[#allocation3 + $0xb40] sm:$0xff] %v4591
    %4656 = vst [vmem:[#allocation3 + $0xb88] sm:$0xff] %v4592
    %4657 = vst [vmem:[#allocation3 + $0xbd0] sm:$0xff] %v4593
    %4658 = vst [vmem:[#allocation3 + $0xc18] sm:$0xff] %v4594
    %4659 = vst [vmem:[#allocation3 + $0xc60] sm:$0xff] %v4595
    %4660 = vst [vmem:[#allocation3 + $0xca8] sm:$0xff] %v4596
    %4661 = vst [vmem:[#allocation3 + $0xcf0] sm:$0xff] %v4597
    %4662 = vst [vmem:[#allocation3 + $0xd38] sm:$0xff] %v4598
    %4663 = vst [vmem:[#allocation3 + $0xd80] sm:$0xff] %v4599
    %4664 = vst [vmem:[#allocation3 + $0xdc8] sm:$0xff] %v4600
    %4665 = vst [vmem:[#allocation3 + $0xe10] sm:$0xff] %v4601
    %4666 = vst [vmem:[#allocation3 + $0xe58] sm:$0xff] %v4602
    %4667 = vst [vmem:[#allocation3 + $0xea0] sm:$0xff] %v4603
    %4668 = vst [vmem:[#allocation3 + $0xee8] sm:$0xff] %v4604
    %4669 = vst [vmem:[#allocation3 + $0xf30] sm:$0xff] %v4605
    %4670 = vst [vmem:[#allocation3 + $0xf78] sm:$0xff] %v4606
    %4671 = vst [vmem:[#allocation3 + $0xfc0] sm:$0xff] %v4607
    %4672 = vst [vmem:[#allocation3 + $0x1008] sm:$0xff] %v4608
    %4673 = vst [vmem:[#allocation3 + $0x1050] sm:$0xff] %v4609
    %4674 = vst [vmem:[#allocation3 + $0x1098] sm:$0xff] %v4610
    %4675 = vst [vmem:[#allocation3 + $0x10e0] sm:$0xff] %v4611
    %4676 = vst [vmem:[#allocation3 + $0x1128] sm:$0xff] %v4612
    %4677 = vst [vmem:[#allocation3 + $0x1170] sm:$0xff] %v4613
    %4678 = vst [vmem:[#allocation3 + $0x11b8] sm:$0xff] %v4614
    %v4679 = vld [vmem:[#allocation2 + $0x1] sm:$0xff]
    %v4680 = vld [vmem:[#allocation2 + $0x9] sm:$0xff]
    %v4681 = vld [vmem:[#allocation2 + $0x19] sm:$0xff]
    %v4682 = vld [vmem:[#allocation2 + $0x21] sm:$0xff]
    %v4683 = vld [vmem:[#allocation2 + $0x31] sm:$0xff]
    %v4684 = vld [vmem:[#allocation2 + $0x39] sm:$0xff]
    %v4685 = vld [vmem:[#allocation2 + $0x49] sm:$0xff]
    %v4686 = vld [vmem:[#allocation2 + $0x51] sm:$0xff]
    %v4687 = vld [vmem:[#allocation2 + $0x61] sm:$0xff]
    %v4688 = vld [vmem:[#allocation2 + $0x69] sm:$0xff]
    %v4689 = vld [vmem:[#allocation2 + $0x79] sm:$0xff]
    %v4690 = vld [vmem:[#allocation2 + $0x81] sm:$0xff]
    %v4691 = vld [vmem:[#allocation2 + $0x91] sm:$0xff]
    %v4692 = vld [vmem:[#allocation2 + $0x99] sm:$0xff]
    %v4693 = vld [vmem:[#allocation2 + $0xa9] sm:$0xff]
    %v4694 = vld [vmem:[#allocation2 + $0xb1] sm:$0xff]
    %v4695 = vld [vmem:[#allocation2 + $0xc1] sm:$0xff]
    %v4696 = vld [vmem:[#allocation2 + $0xc9] sm:$0xff]
    %v4697 = vld [vmem:[#allocation2 + $0xd9] sm:$0xff]
    %v4698 = vld [vmem:[#allocation2 + $0xe1] sm:$0xff]
    %v4699 = vld [vmem:[#allocation2 + $0xf1] sm:$0xff]
    %v4700 = vld [vmem:[#allocation2 + $0xf9] sm:$0xff]
    %v4701 = vld [vmem:[#allocation2 + $0x109] sm:$0xff]
    %v4702 = vld [vmem:[#allocation2 + $0x111] sm:$0xff]
    %v4703 = vld [vmem:[#allocation2 + $0x121] sm:$0xff]
    %v4704 = vld [vmem:[#allocation2 + $0x129] sm:$0xff]
    %v4705 = vld [vmem:[#allocation2 + $0x139] sm:$0xff]
    %v4706 = vld [vmem:[#allocation2 + $0x141] sm:$0xff]
    %v4707 = vld [vmem:[#allocation2 + $0x151] sm:$0xff]
    %v4708 = vld [vmem:[#allocation2 + $0x159] sm:$0xff]
    %v4709 = vld [vmem:[#allocation2 + $0x169] sm:$0xff]
    %v4710 = vld [vmem:[#allocation2 + $0x171] sm:$0xff]
    %v4711 = vld [vmem:[#allocation2 + $0x1b1] sm:$0xff]
    %v4712 = vld [vmem:[#allocation2 + $0x1b9] sm:$0xff]
    %v4713 = vld [vmem:[#allocation2 + $0x1c9] sm:$0xff]
    %v4714 = vld [vmem:[#allocation2 + $0x1d1] sm:$0xff]
    %v4715 = vld [vmem:[#allocation2 + $0x1e1] sm:$0xff]
    %v4716 = vld [vmem:[#allocation2 + $0x1e9] sm:$0xff]
    %v4717 = vld [vmem:[#allocation2 + $0x1f9] sm:$0xff]
    %v4718 = vld [vmem:[#allocation2 + $0x201] sm:$0xff]
    %v4719 = vld [vmem:[#allocation2 + $0x211] sm:$0xff]
    %v4720 = vld [vmem:[#allocation2 + $0x219] sm:$0xff]
    %v4721 = vld [vmem:[#allocation2 + $0x229] sm:$0xff]
    %v4722 = vld [vmem:[#allocation2 + $0x231] sm:$0xff]
    %v4723 = vld [vmem:[#allocation2 + $0x241] sm:$0xff]
    %v4724 = vld [vmem:[#allocation2 + $0x249] sm:$0xff]
    %v4725 = vld [vmem:[#allocation2 + $0x259] sm:$0xff]
    %v4726 = vld [vmem:[#allocation2 + $0x261] sm:$0xff]
    %v4727 = vld [vmem:[#allocation2 + $0x271] sm:$0xff]
    %v4728 = vld [vmem:[#allocation2 + $0x279] sm:$0xff]
    %v4729 = vld [vmem:[#allocation2 + $0x289] sm:$0xff]
    %v4730 = vld [vmem:[#allocation2 + $0x291] sm:$0xff]
    %v4731 = vld [vmem:[#allocation2 + $0x2a1] sm:$0xff]
    %v4732 = vld [vmem:[#allocation2 + $0x2a9] sm:$0xff]
    %v4733 = vld [vmem:[#allocation2 + $0x2b9] sm:$0xff]
    %v4734 = vld [vmem:[#allocation2 + $0x2c1] sm:$0xff]
    %v4735 = vld [vmem:[#allocation2 + $0x2d1] sm:$0xff]
    %v4736 = vld [vmem:[#allocation2 + $0x2d9] sm:$0xff]
    %v4737 = vld [vmem:[#allocation2 + $0x2e9] sm:$0xff]
    %v4738 = vld [vmem:[#allocation2 + $0x2f1] sm:$0xff]
    %v4739 = vld [vmem:[#allocation2 + $0x301] sm:$0xff]
    %v4740 = vld [vmem:[#allocation2 + $0x309] sm:$0xff]
    %v4741 = vld [vmem:[#allocation2 + $0x319] sm:$0xff]
    %v4742 = vld [vmem:[#allocation2 + $0x321] sm:$0xff]
    %4743 = vst [vmem:[#allocation3 + $0x8] sm:$0xff] %v4679
    %4744 = vst [vmem:[#allocation3 + $0x50] sm:$0xff] %v4680
    %4745 = vst [vmem:[#allocation3 + $0x98] sm:$0xff] %v4681
    %4746 = vst [vmem:[#allocation3 + $0xe0] sm:$0xff] %v4682
    %4747 = vst [vmem:[#allocation3 + $0x128] sm:$0xff] %v4683
    %4748 = vst [vmem:[#allocation3 + $0x170] sm:$0xff] %v4684
    %4749 = vst [vmem:[#allocation3 + $0x1b8] sm:$0xff] %v4685
    %4750 = vst [vmem:[#allocation3 + $0x200] sm:$0xff] %v4686
    %4751 = vst [vmem:[#allocation3 + $0x248] sm:$0xff] %v4687
    %4752 = vst [vmem:[#allocation3 + $0x290] sm:$0xff] %v4688
    %4753 = vst [vmem:[#allocation3 + $0x2d8] sm:$0xff] %v4689
    %4754 = vst [vmem:[#allocation3 + $0x320] sm:$0xff] %v4690
    %4755 = vst [vmem:[#allocation3 + $0x368] sm:$0xff] %v4691
    %4756 = vst [vmem:[#allocation3 + $0x3b0] sm:$0xff] %v4692
    %4757 = vst [vmem:[#allocation3 + $0x3f8] sm:$0xff] %v4693
    %4758 = vst [vmem:[#allocation3 + $0x440] sm:$0xff] %v4694
    %4759 = vst [vmem:[#allocation3 + $0x488] sm:$0xff] %v4695
    %4760 = vst [vmem:[#allocation3 + $0x4d0] sm:$0xff] %v4696
    %4761 = vst [vmem:[#allocation3 + $0x518] sm:$0xff] %v4697
    %4762 = vst [vmem:[#allocation3 + $0x560] sm:$0xff] %v4698
    %4763 = vst [vmem:[#allocation3 + $0x5a8] sm:$0xff] %v4699
    %4764 = vst [vmem:[#allocation3 + $0x5f0] sm:$0xff] %v4700
    %4765 = vst [vmem:[#allocation3 + $0x638] sm:$0xff] %v4701
    %4766 = vst [vmem:[#allocation3 + $0x680] sm:$0xff] %v4702
    %4767 = vst [vmem:[#allocation3 + $0x6c8] sm:$0xff] %v4703
    %4768 = vst [vmem:[#allocation3 + $0x710] sm:$0xff] %v4704
    %4769 = vst [vmem:[#allocation3 + $0x758] sm:$0xff] %v4705
    %4770 = vst [vmem:[#allocation3 + $0x7a0] sm:$0xff] %v4706
    %4771 = vst [vmem:[#allocation3 + $0x7e8] sm:$0xff] %v4707
    %4772 = vst [vmem:[#allocation3 + $0x830] sm:$0xff] %v4708
    %4773 = vst [vmem:[#allocation3 + $0x878] sm:$0xff] %v4709
    %4774 = vst [vmem:[#allocation3 + $0x8c0] sm:$0xff] %v4710
    %4775 = vst [vmem:[#allocation3 + $0x908] sm:$0xff] %v4711
    %4776 = vst [vmem:[#allocation3 + $0x950] sm:$0xff] %v4712
    %4777 = vst [vmem:[#allocation3 + $0x998] sm:$0xff] %v4713
    %4778 = vst [vmem:[#allocation3 + $0x9e0] sm:$0xff] %v4714
    %4779 = vst [vmem:[#allocation3 + $0xa28] sm:$0xff] %v4715
    %4780 = vst [vmem:[#allocation3 + $0xa70] sm:$0xff] %v4716
    %4781 = vst [vmem:[#allocation3 + $0xab8] sm:$0xff] %v4717
    %4782 = vst [vmem:[#allocation3 + $0xb00] sm:$0xff] %v4718
    %4783 = vst [vmem:[#allocation3 + $0xb48] sm:$0xff] %v4719
    %4784 = vst [vmem:[#allocation3 + $0xb90] sm:$0xff] %v4720
    %4785 = vst [vmem:[#allocation3 + $0xbd8] sm:$0xff] %v4721
    %4786 = vst [vmem:[#allocation3 + $0xc20] sm:$0xff] %v4722
    %4787 = vst [vmem:[#allocation3 + $0xc68] sm:$0xff] %v4723
    %4788 = vst [vmem:[#allocation3 + $0xcb0] sm:$0xff] %v4724
    %4789 = vst [vmem:[#allocation3 + $0xcf8] sm:$0xff] %v4725
    %4790 = vst [vmem:[#allocation3 + $0xd40] sm:$0xff] %v4726
    %4791 = vst [vmem:[#allocation3 + $0xd88] sm:$0xff] %v4727
    %4792 = vst [vmem:[#allocation3 + $0xdd0] sm:$0xff] %v4728
    %4793 = vst [vmem:[#allocation3 + $0xe18] sm:$0xff] %v4729
    %4794 = vst [vmem:[#allocation3 + $0xe60] sm:$0xff] %v4730
    %4795 = vst [vmem:[#allocation3 + $0xea8] sm:$0xff] %v4731
    %4796 = vst [vmem:[#allocation3 + $0xef0] sm:$0xff] %v4732
    %4797 = vst [vmem:[#allocation3 + $0xf38] sm:$0xff] %v4733
    %4798 = vst [vmem:[#allocation3 + $0xf80] sm:$0xff] %v4734
    %4799 = vst [vmem:[#allocation3 + $0xfc8] sm:$0xff] %v4735
    %4800 = vst [vmem:[#allocation3 + $0x1010] sm:$0xff] %v4736
    %4801 = vst [vmem:[#allocation3 + $0x1058] sm:$0xff] %v4737
    %4802 = vst [vmem:[#allocation3 + $0x10a0] sm:$0xff] %v4738
    %4803 = vst [vmem:[#allocation3 + $0x10e8] sm:$0xff] %v4739
    %4804 = vst [vmem:[#allocation3 + $0x1130] sm:$0xff] %v4740
    %4805 = vst [vmem:[#allocation3 + $0x1178] sm:$0xff] %v4741
    %4806 = vst [vmem:[#allocation3 + $0x11c0] sm:$0xff] %v4742
    %v4807 = vld [vmem:[#allocation2 + $0x2] sm:$0xff]
    %v4808 = vld [vmem:[#allocation2 + $0xa] sm:$0xff]
    %v4809 = vld [vmem:[#allocation2 + $0x1a] sm:$0xff]
    %v4810 = vld [vmem:[#allocation2 + $0x22] sm:$0xff]
    %v4811 = vld [vmem:[#allocation2 + $0x32] sm:$0xff]
    %v4812 = vld [vmem:[#allocation2 + $0x3a] sm:$0xff]
    %v4813 = vld [vmem:[#allocation2 + $0x4a] sm:$0xff]
    %v4814 = vld [vmem:[#allocation2 + $0x52] sm:$0xff]
    %v4815 = vld [vmem:[#allocation2 + $0x62] sm:$0xff]
    %v4816 = vld [vmem:[#allocation2 + $0x6a] sm:$0xff]
    %v4817 = vld [vmem:[#allocation2 + $0x7a] sm:$0xff]
    %v4818 = vld [vmem:[#allocation2 + $0x82] sm:$0xff]
    %v4819 = vld [vmem:[#allocation2 + $0x92] sm:$0xff]
    %v4820 = vld [vmem:[#allocation2 + $0x9a] sm:$0xff]
    %v4821 = vld [vmem:[#allocation2 + $0xaa] sm:$0xff]
    %v4822 = vld [vmem:[#allocation2 + $0xb2] sm:$0xff]
    %v4823 = vld [vmem:[#allocation2 + $0xc2] sm:$0xff]
    %v4824 = vld [vmem:[#allocation2 + $0xca] sm:$0xff]
    %v4825 = vld [vmem:[#allocation2 + $0xda] sm:$0xff]
    %v4826 = vld [vmem:[#allocation2 + $0xe2] sm:$0xff]
    %v4827 = vld [vmem:[#allocation2 + $0xf2] sm:$0xff]
    %v4828 = vld [vmem:[#allocation2 + $0xfa] sm:$0xff]
    %v4829 = vld [vmem:[#allocation2 + $0x10a] sm:$0xff]
    %v4830 = vld [vmem:[#allocation2 + $0x112] sm:$0xff]
    %v4831 = vld [vmem:[#allocation2 + $0x122] sm:$0xff]
    %v4832 = vld [vmem:[#allocation2 + $0x12a] sm:$0xff]
    %v4833 = vld [vmem:[#allocation2 + $0x13a] sm:$0xff]
    %v4834 = vld [vmem:[#allocation2 + $0x142] sm:$0xff]
    %v4835 = vld [vmem:[#allocation2 + $0x152] sm:$0xff]
    %v4836 = vld [vmem:[#allocation2 + $0x15a] sm:$0xff]
    %v4837 = vld [vmem:[#allocation2 + $0x16a] sm:$0xff]
    %v4838 = vld [vmem:[#allocation2 + $0x172] sm:$0xff]
    %v4839 = vld [vmem:[#allocation2 + $0x1b2] sm:$0xff]
    %v4840 = vld [vmem:[#allocation2 + $0x1ba] sm:$0xff]
    %v4841 = vld [vmem:[#allocation2 + $0x1ca] sm:$0xff]
    %v4842 = vld [vmem:[#allocation2 + $0x1d2] sm:$0xff]
    %v4843 = vld [vmem:[#allocation2 + $0x1e2] sm:$0xff]
    %v4844 = vld [vmem:[#allocation2 + $0x1ea] sm:$0xff]
    %v4845 = vld [vmem:[#allocation2 + $0x1fa] sm:$0xff]
    %v4846 = vld [vmem:[#allocation2 + $0x202] sm:$0xff]
    %v4847 = vld [vmem:[#allocation2 + $0x212] sm:$0xff]
    %v4848 = vld [vmem:[#allocation2 + $0x21a] sm:$0xff]
    %v4849 = vld [vmem:[#allocation2 + $0x22a] sm:$0xff]
    %v4850 = vld [vmem:[#allocation2 + $0x232] sm:$0xff]
    %v4851 = vld [vmem:[#allocation2 + $0x242] sm:$0xff]
    %v4852 = vld [vmem:[#allocation2 + $0x24a] sm:$0xff]
    %v4853 = vld [vmem:[#allocation2 + $0x25a] sm:$0xff]
    %v4854 = vld [vmem:[#allocation2 + $0x262] sm:$0xff]
    %v4855 = vld [vmem:[#allocation2 + $0x272] sm:$0xff]
    %v4856 = vld [vmem:[#allocation2 + $0x27a] sm:$0xff]
    %v4857 = vld [vmem:[#allocation2 + $0x28a] sm:$0xff]
    %v4858 = vld [vmem:[#allocation2 + $0x292] sm:$0xff]
    %v4859 = vld [vmem:[#allocation2 + $0x2a2] sm:$0xff]
    %v4860 = vld [vmem:[#allocation2 + $0x2aa] sm:$0xff]
    %v4861 = vld [vmem:[#allocation2 + $0x2ba] sm:$0xff]
    %v4862 = vld [vmem:[#allocation2 + $0x2c2] sm:$0xff]
    %v4863 = vld [vmem:[#allocation2 + $0x2d2] sm:$0xff]
    %v4864 = vld [vmem:[#allocation2 + $0x2da] sm:$0xff]
    %v4865 = vld [vmem:[#allocation2 + $0x2ea] sm:$0xff]
    %v4866 = vld [vmem:[#allocation2 + $0x2f2] sm:$0xff]
    %v4867 = vld [vmem:[#allocation2 + $0x302] sm:$0xff]
    %v4868 = vld [vmem:[#allocation2 + $0x30a] sm:$0xff]
    %v4869 = vld [vmem:[#allocation2 + $0x31a] sm:$0xff]
    %v4870 = vld [vmem:[#allocation2 + $0x322] sm:$0xff]
    %4871 = vst [vmem:[#allocation3 + $0x10] sm:$0xff] %v4807
    %4872 = vst [vmem:[#allocation3 + $0x58] sm:$0xff] %v4808
    %4873 = vst [vmem:[#allocation3 + $0xa0] sm:$0xff] %v4809
    %4874 = vst [vmem:[#allocation3 + $0xe8] sm:$0xff] %v4810
    %4875 = vst [vmem:[#allocation3 + $0x130] sm:$0xff] %v4811
    %4876 = vst [vmem:[#allocation3 + $0x178] sm:$0xff] %v4812
    %4877 = vst [vmem:[#allocation3 + $0x1c0] sm:$0xff] %v4813
    %4878 = vst [vmem:[#allocation3 + $0x208] sm:$0xff] %v4814
    %4879 = vst [vmem:[#allocation3 + $0x250] sm:$0xff] %v4815
    %4880 = vst [vmem:[#allocation3 + $0x298] sm:$0xff] %v4816
    %4881 = vst [vmem:[#allocation3 + $0x2e0] sm:$0xff] %v4817
    %4882 = vst [vmem:[#allocation3 + $0x328] sm:$0xff] %v4818
    %4883 = vst [vmem:[#allocation3 + $0x370] sm:$0xff] %v4819
    %4884 = vst [vmem:[#allocation3 + $0x3b8] sm:$0xff] %v4820
    %4885 = vst [vmem:[#allocation3 + $0x400] sm:$0xff] %v4821
    %4886 = vst [vmem:[#allocation3 + $0x448] sm:$0xff] %v4822
    %4887 = vst [vmem:[#allocation3 + $0x490] sm:$0xff] %v4823
    %4888 = vst [vmem:[#allocation3 + $0x4d8] sm:$0xff] %v4824
    %4889 = vst [vmem:[#allocation3 + $0x520] sm:$0xff] %v4825
    %4890 = vst [vmem:[#allocation3 + $0x568] sm:$0xff] %v4826
    %4891 = vst [vmem:[#allocation3 + $0x5b0] sm:$0xff] %v4827
    %4892 = vst [vmem:[#allocation3 + $0x5f8] sm:$0xff] %v4828
    %4893 = vst [vmem:[#allocation3 + $0x640] sm:$0xff] %v4829
    %4894 = vst [vmem:[#allocation3 + $0x688] sm:$0xff] %v4830
    %4895 = vst [vmem:[#allocation3 + $0x6d0] sm:$0xff] %v4831
    %4896 = vst [vmem:[#allocation3 + $0x718] sm:$0xff] %v4832
    %4897 = vst [vmem:[#allocation3 + $0x760] sm:$0xff] %v4833
    %4898 = vst [vmem:[#allocation3 + $0x7a8] sm:$0xff] %v4834
    %4899 = vst [vmem:[#allocation3 + $0x7f0] sm:$0xff] %v4835
    %4900 = vst [vmem:[#allocation3 + $0x838] sm:$0xff] %v4836
    %4901 = vst [vmem:[#allocation3 + $0x880] sm:$0xff] %v4837
    %4902 = vst [vmem:[#allocation3 + $0x8c8] sm:$0xff] %v4838
    %4903 = vst [vmem:[#allocation3 + $0x910] sm:$0xff] %v4839
    %4904 = vst [vmem:[#allocation3 + $0x958] sm:$0xff] %v4840
    %4905 = vst [vmem:[#allocation3 + $0x9a0] sm:$0xff] %v4841
    %4906 = vst [vmem:[#allocation3 + $0x9e8] sm:$0xff] %v4842
    %4907 = vst [vmem:[#allocation3 + $0xa30] sm:$0xff] %v4843
    %4908 = vst [vmem:[#allocation3 + $0xa78] sm:$0xff] %v4844
    %4909 = vst [vmem:[#allocation3 + $0xac0] sm:$0xff] %v4845
    %4910 = vst [vmem:[#allocation3 + $0xb08] sm:$0xff] %v4846
    %4911 = vst [vmem:[#allocation3 + $0xb50] sm:$0xff] %v4847
    %4912 = vst [vmem:[#allocation3 + $0xb98] sm:$0xff] %v4848
    %4913 = vst [vmem:[#allocation3 + $0xbe0] sm:$0xff] %v4849
    %4914 = vst [vmem:[#allocation3 + $0xc28] sm:$0xff] %v4850
    %4915 = vst [vmem:[#allocation3 + $0xc70] sm:$0xff] %v4851
    %4916 = vst [vmem:[#allocation3 + $0xcb8] sm:$0xff] %v4852
    %4917 = vst [vmem:[#allocation3 + $0xd00] sm:$0xff] %v4853
    %4918 = vst [vmem:[#allocation3 + $0xd48] sm:$0xff] %v4854
    %4919 = vst [vmem:[#allocation3 + $0xd90] sm:$0xff] %v4855
    %4920 = vst [vmem:[#allocation3 + $0xdd8] sm:$0xff] %v4856
    %4921 = vst [vmem:[#allocation3 + $0xe20] sm:$0xff] %v4857
    %4922 = vst [vmem:[#allocation3 + $0xe68] sm:$0xff] %v4858
    %4923 = vst [vmem:[#allocation3 + $0xeb0] sm:$0xff] %v4859
    %4924 = vst [vmem:[#allocation3 + $0xef8] sm:$0xff] %v4860
    %4925 = vst [vmem:[#allocation3 + $0xf40] sm:$0xff] %v4861
    %4926 = vst [vmem:[#allocation3 + $0xf88] sm:$0xff] %v4862
    %4927 = vst [vmem:[#allocation3 + $0xfd0] sm:$0xff] %v4863
    %4928 = vst [vmem:[#allocation3 + $0x1018] sm:$0xff] %v4864
    %4929 = vst [vmem:[#allocation3 + $0x1060] sm:$0xff] %v4865
    %4930 = vst [vmem:[#allocation3 + $0x10a8] sm:$0xff] %v4866
    %4931 = vst [vmem:[#allocation3 + $0x10f0] sm:$0xff] %v4867
    %4932 = vst [vmem:[#allocation3 + $0x1138] sm:$0xff] %v4868
    %4933 = vst [vmem:[#allocation3 + $0x1180] sm:$0xff] %v4869
    %4934 = vst [vmem:[#allocation3 + $0x11c8] sm:$0xff] %v4870
    %v4935 = vld [vmem:[%s81] sm:$0xff]
    %v4936 = vld [vmem:[%s81 + $0x8] sm:$0xff]
    %v4937 = vld [vmem:[%s81 + $0x18] sm:$0xff]
    %v4938 = vld [vmem:[%s81 + $0x20] sm:$0xff]
    %v4939 = vld [vmem:[%s81 + $0x30] sm:$0xff]
    %v4940 = vld [vmem:[%s81 + $0x38] sm:$0xff]
    %v4941 = vld [vmem:[%s81 + $0x48] sm:$0xff]
    %v4942 = vld [vmem:[%s81 + $0x50] sm:$0xff]
    %v4943 = vld [vmem:[%s81 + $0x60] sm:$0xff]
    %v4944 = vld [vmem:[%s81 + $0x68] sm:$0xff]
    %v4945 = vld [vmem:[%s81 + $0x78] sm:$0xff]
    %v4946 = vld [vmem:[%s81 + $0x80] sm:$0xff]
    %v4947 = vld [vmem:[%s81 + $0x90] sm:$0xff]
    %v4948 = vld [vmem:[%s81 + $0x98] sm:$0xff]
    %v4949 = vld [vmem:[%s81 + $0xa8] sm:$0xff]
    %v4950 = vld [vmem:[%s81 + $0xb0] sm:$0xff]
    %v4951 = vld [vmem:[%s81 + $0xc0] sm:$0xff]
    %v4952 = vld [vmem:[%s81 + $0xc8] sm:$0xff]
    %v4953 = vld [vmem:[%s81 + $0xd8] sm:$0xff]
    %v4954 = vld [vmem:[%s81 + $0xe0] sm:$0xff]
    %v4955 = vld [vmem:[%s81 + $0xf0] sm:$0xff]
    %v4956 = vld [vmem:[%s81 + $0xf8] sm:$0xff]
    %v4957 = vld [vmem:[%s81 + $0x108] sm:$0xff]
    %v4958 = vld [vmem:[%s81 + $0x110] sm:$0xff]
    %v4959 = vld [vmem:[%s81 + $0x120] sm:$0xff]
    %v4960 = vld [vmem:[%s81 + $0x128] sm:$0xff]
    %v4961 = vld [vmem:[%s81 + $0x138] sm:$0xff]
    %v4962 = vld [vmem:[%s81 + $0x140] sm:$0xff]
    %v4963 = vld [vmem:[%s81 + $0x150] sm:$0xff]
    %v4964 = vld [vmem:[%s81 + $0x158] sm:$0xff]
    %v4965 = vld [vmem:[%s81 + $0x168] sm:$0xff]
    %v4966 = vld [vmem:[%s81 + $0x170] sm:$0xff]
    %v4967 = vld [vmem:[%s81 + $0x1b0] sm:$0xff]
    %v4968 = vld [vmem:[%s81 + $0x1b8] sm:$0xff]
    %v4969 = vld [vmem:[%s81 + $0x1c8] sm:$0xff]
    %v4970 = vld [vmem:[%s81 + $0x1d0] sm:$0xff]
    %v4971 = vld [vmem:[%s81 + $0x1e0] sm:$0xff]
    %v4972 = vld [vmem:[%s81 + $0x1e8] sm:$0xff]
    %v4973 = vld [vmem:[%s81 + $0x1f8] sm:$0xff]
    %v4974 = vld [vmem:[%s81 + $0x200] sm:$0xff]
    %v4975 = vld [vmem:[%s81 + $0x210] sm:$0xff]
    %v4976 = vld [vmem:[%s81 + $0x218] sm:$0xff]
    %v4977 = vld [vmem:[%s81 + $0x228] sm:$0xff]
    %v4978 = vld [vmem:[%s81 + $0x230] sm:$0xff]
    %v4979 = vld [vmem:[%s81 + $0x240] sm:$0xff]
    %v4980 = vld [vmem:[%s81 + $0x248] sm:$0xff]
    %v4981 = vld [vmem:[%s81 + $0x258] sm:$0xff]
    %v4982 = vld [vmem:[%s81 + $0x260] sm:$0xff]
    %v4983 = vld [vmem:[%s81 + $0x270] sm:$0xff]
    %v4984 = vld [vmem:[%s81 + $0x278] sm:$0xff]
    %v4985 = vld [vmem:[%s81 + $0x288] sm:$0xff]
    %v4986 = vld [vmem:[%s81 + $0x290] sm:$0xff]
    %v4987 = vld [vmem:[%s81 + $0x2a0] sm:$0xff]
    %v4988 = vld [vmem:[%s81 + $0x2a8] sm:$0xff]
    %v4989 = vld [vmem:[%s81 + $0x2b8] sm:$0xff]
    %v4990 = vld [vmem:[%s81 + $0x2c0] sm:$0xff]
    %v4991 = vld [vmem:[%s81 + $0x2d0] sm:$0xff]
    %v4992 = vld [vmem:[%s81 + $0x2d8] sm:$0xff]
    %v4993 = vld [vmem:[%s81 + $0x2e8] sm:$0xff]
    %v4994 = vld [vmem:[%s81 + $0x2f0] sm:$0xff]
    %v4995 = vld [vmem:[%s81 + $0x300] sm:$0xff]
    %v4996 = vld [vmem:[%s81 + $0x308] sm:$0xff]
    %v4997 = vld [vmem:[%s81 + $0x318] sm:$0xff]
    %v4998 = vld [vmem:[%s81 + $0x320] sm:$0xff]
    %4999 = vst [vmem:[#allocation3 + $0x18] sm:$0xff] %v4935
    %5000 = vst [vmem:[#allocation3 + $0x60] sm:$0xff] %v4936
    %5001 = vst [vmem:[#allocation3 + $0xa8] sm:$0xff] %v4937
    %5002 = vst [vmem:[#allocation3 + $0xf0] sm:$0xff] %v4938
    %5003 = vst [vmem:[#allocation3 + $0x138] sm:$0xff] %v4939
    %5004 = vst [vmem:[#allocation3 + $0x180] sm:$0xff] %v4940
    %5005 = vst [vmem:[#allocation3 + $0x1c8] sm:$0xff] %v4941
    %5006 = vst [vmem:[#allocation3 + $0x210] sm:$0xff] %v4942
    %5007 = vst [vmem:[#allocation3 + $0x258] sm:$0xff] %v4943
    %5008 = vst [vmem:[#allocation3 + $0x2a0] sm:$0xff] %v4944
    %5009 = vst [vmem:[#allocation3 + $0x2e8] sm:$0xff] %v4945
    %5010 = vst [vmem:[#allocation3 + $0x330] sm:$0xff] %v4946
    %5011 = vst [vmem:[#allocation3 + $0x378] sm:$0xff] %v4947
    %5012 = vst [vmem:[#allocation3 + $0x3c0] sm:$0xff] %v4948
    %5013 = vst [vmem:[#allocation3 + $0x408] sm:$0xff] %v4949
    %5014 = vst [vmem:[#allocation3 + $0x450] sm:$0xff] %v4950
    %5015 = vst [vmem:[#allocation3 + $0x498] sm:$0xff] %v4951
    %5016 = vst [vmem:[#allocation3 + $0x4e0] sm:$0xff] %v4952
    %5017 = vst [vmem:[#allocation3 + $0x528] sm:$0xff] %v4953
    %5018 = vst [vmem:[#allocation3 + $0x570] sm:$0xff] %v4954
    %5019 = vst [vmem:[#allocation3 + $0x5b8] sm:$0xff] %v4955
    %5020 = vst [vmem:[#allocation3 + $0x600] sm:$0xff] %v4956
    %5021 = vst [vmem:[#allocation3 + $0x648] sm:$0xff] %v4957
    %5022 = vst [vmem:[#allocation3 + $0x690] sm:$0xff] %v4958
    %5023 = vst [vmem:[#allocation3 + $0x6d8] sm:$0xff] %v4959
    %5024 = vst [vmem:[#allocation3 + $0x720] sm:$0xff] %v4960
    %5025 = vst [vmem:[#allocation3 + $0x768] sm:$0xff] %v4961
    %5026 = vst [vmem:[#allocation3 + $0x7b0] sm:$0xff] %v4962
    %5027 = vst [vmem:[#allocation3 + $0x7f8] sm:$0xff] %v4963
    %5028 = vst [vmem:[#allocation3 + $0x840] sm:$0xff] %v4964
    %5029 = vst [vmem:[#allocation3 + $0x888] sm:$0xff] %v4965
    %5030 = vst [vmem:[#allocation3 + $0x8d0] sm:$0xff] %v4966
    %5031 = vst [vmem:[#allocation3 + $0x918] sm:$0xff] %v4967
    %5032 = vst [vmem:[#allocation3 + $0x960] sm:$0xff] %v4968
    %5033 = vst [vmem:[#allocation3 + $0x9a8] sm:$0xff] %v4969
    %5034 = vst [vmem:[#allocation3 + $0x9f0] sm:$0xff] %v4970
    %5035 = vst [vmem:[#allocation3 + $0xa38] sm:$0xff] %v4971
    %5036 = vst [vmem:[#allocation3 + $0xa80] sm:$0xff] %v4972
    %5037 = vst [vmem:[#allocation3 + $0xac8] sm:$0xff] %v4973
    %5038 = vst [vmem:[#allocation3 + $0xb10] sm:$0xff] %v4974
    %5039 = vst [vmem:[#allocation3 + $0xb58] sm:$0xff] %v4975
    %5040 = vst [vmem:[#allocation3 + $0xba0] sm:$0xff] %v4976
    %5041 = vst [vmem:[#allocation3 + $0xbe8] sm:$0xff] %v4977
    %5042 = vst [vmem:[#allocation3 + $0xc30] sm:$0xff] %v4978
    %5043 = vst [vmem:[#allocation3 + $0xc78] sm:$0xff] %v4979
    %5044 = vst [vmem:[#allocation3 + $0xcc0] sm:$0xff] %v4980
    %5045 = vst [vmem:[#allocation3 + $0xd08] sm:$0xff] %v4981
    %5046 = vst [vmem:[#allocation3 + $0xd50] sm:$0xff] %v4982
    %5047 = vst [vmem:[#allocation3 + $0xd98] sm:$0xff] %v4983
    %5048 = vst [vmem:[#allocation3 + $0xde0] sm:$0xff] %v4984
    %5049 = vst [vmem:[#allocation3 + $0xe28] sm:$0xff] %v4985
    %5050 = vst [vmem:[#allocation3 + $0xe70] sm:$0xff] %v4986
    %5051 = vst [vmem:[#allocation3 + $0xeb8] sm:$0xff] %v4987
    %5052 = vst [vmem:[#allocation3 + $0xf00] sm:$0xff] %v4988
    %5053 = vst [vmem:[#allocation3 + $0xf48] sm:$0xff] %v4989
    %5054 = vst [vmem:[#allocation3 + $0xf90] sm:$0xff] %v4990
    %5055 = vst [vmem:[#allocation3 + $0xfd8] sm:$0xff] %v4991
    %5056 = vst [vmem:[#allocation3 + $0x1020] sm:$0xff] %v4992
    %5057 = vst [vmem:[#allocation3 + $0x1068] sm:$0xff] %v4993
    %5058 = vst [vmem:[#allocation3 + $0x10b0] sm:$0xff] %v4994
    %5059 = vst [vmem:[#allocation3 + $0x10f8] sm:$0xff] %v4995
    %5060 = vst [vmem:[#allocation3 + $0x1140] sm:$0xff] %v4996
    %5061 = vst [vmem:[#allocation3 + $0x1188] sm:$0xff] %v4997
    %5062 = vst [vmem:[#allocation3 + $0x11d0] sm:$0xff] %v4998
    %v5063 = vld [vmem:[%s81 + $0x1] sm:$0xff]
    %v5064 = vld [vmem:[%s81 + $0x9] sm:$0xff]
    %v5065 = vld [vmem:[%s81 + $0x19] sm:$0xff]
    %v5066 = vld [vmem:[%s81 + $0x21] sm:$0xff]
    %v5067 = vld [vmem:[%s81 + $0x31] sm:$0xff]
    %v5068 = vld [vmem:[%s81 + $0x39] sm:$0xff]
    %v5069 = vld [vmem:[%s81 + $0x49] sm:$0xff]
    %v5070 = vld [vmem:[%s81 + $0x51] sm:$0xff]
    %v5071 = vld [vmem:[%s81 + $0x61] sm:$0xff]
    %v5072 = vld [vmem:[%s81 + $0x69] sm:$0xff]
    %v5073 = vld [vmem:[%s81 + $0x79] sm:$0xff]
    %v5074 = vld [vmem:[%s81 + $0x81] sm:$0xff]
    %v5075 = vld [vmem:[%s81 + $0x91] sm:$0xff]
    %v5076 = vld [vmem:[%s81 + $0x99] sm:$0xff]
    %v5077 = vld [vmem:[%s81 + $0xa9] sm:$0xff]
    %v5078 = vld [vmem:[%s81 + $0xb1] sm:$0xff]
    %v5079 = vld [vmem:[%s81 + $0xc1] sm:$0xff]
    %v5080 = vld [vmem:[%s81 + $0xc9] sm:$0xff]
    %v5081 = vld [vmem:[%s81 + $0xd9] sm:$0xff]
    %v5082 = vld [vmem:[%s81 + $0xe1] sm:$0xff]
    %v5083 = vld [vmem:[%s81 + $0xf1] sm:$0xff]
    %v5084 = vld [vmem:[%s81 + $0xf9] sm:$0xff]
    %v5085 = vld [vmem:[%s81 + $0x109] sm:$0xff]
    %v5086 = vld [vmem:[%s81 + $0x111] sm:$0xff]
    %v5087 = vld [vmem:[%s81 + $0x121] sm:$0xff]
    %v5088 = vld [vmem:[%s81 + $0x129] sm:$0xff]
    %v5089 = vld [vmem:[%s81 + $0x139] sm:$0xff]
    %v5090 = vld [vmem:[%s81 + $0x141] sm:$0xff]
    %v5091 = vld [vmem:[%s81 + $0x151] sm:$0xff]
    %v5092 = vld [vmem:[%s81 + $0x159] sm:$0xff]
    %v5093 = vld [vmem:[%s81 + $0x169] sm:$0xff]
    %v5094 = vld [vmem:[%s81 + $0x171] sm:$0xff]
    %v5095 = vld [vmem:[%s81 + $0x1b1] sm:$0xff]
    %v5096 = vld [vmem:[%s81 + $0x1b9] sm:$0xff]
    %v5097 = vld [vmem:[%s81 + $0x1c9] sm:$0xff]
    %v5098 = vld [vmem:[%s81 + $0x1d1] sm:$0xff]
    %v5099 = vld [vmem:[%s81 + $0x1e1] sm:$0xff]
    %v5100 = vld [vmem:[%s81 + $0x1e9] sm:$0xff]
    %v5101 = vld [vmem:[%s81 + $0x1f9] sm:$0xff]
    %v5102 = vld [vmem:[%s81 + $0x201] sm:$0xff]
    %v5103 = vld [vmem:[%s81 + $0x211] sm:$0xff]
    %v5104 = vld [vmem:[%s81 + $0x219] sm:$0xff]
    %v5105 = vld [vmem:[%s81 + $0x229] sm:$0xff]
    %v5106 = vld [vmem:[%s81 + $0x231] sm:$0xff]
    %v5107 = vld [vmem:[%s81 + $0x241] sm:$0xff]
    %v5108 = vld [vmem:[%s81 + $0x249] sm:$0xff]
    %v5109 = vld [vmem:[%s81 + $0x259] sm:$0xff]
    %v5110 = vld [vmem:[%s81 + $0x261] sm:$0xff]
    %v5111 = vld [vmem:[%s81 + $0x271] sm:$0xff]
    %v5112 = vld [vmem:[%s81 + $0x279] sm:$0xff]
    %v5113 = vld [vmem:[%s81 + $0x289] sm:$0xff]
    %v5114 = vld [vmem:[%s81 + $0x291] sm:$0xff]
    %v5115 = vld [vmem:[%s81 + $0x2a1] sm:$0xff]
    %v5116 = vld [vmem:[%s81 + $0x2a9] sm:$0xff]
    %v5117 = vld [vmem:[%s81 + $0x2b9] sm:$0xff]
    %v5118 = vld [vmem:[%s81 + $0x2c1] sm:$0xff]
    %v5119 = vld [vmem:[%s81 + $0x2d1] sm:$0xff]
    %v5120 = vld [vmem:[%s81 + $0x2d9] sm:$0xff]
    %v5121 = vld [vmem:[%s81 + $0x2e9] sm:$0xff]
    %v5122 = vld [vmem:[%s81 + $0x2f1] sm:$0xff]
    %v5123 = vld [vmem:[%s81 + $0x301] sm:$0xff]
    %v5124 = vld [vmem:[%s81 + $0x309] sm:$0xff]
    %v5125 = vld [vmem:[%s81 + $0x319] sm:$0xff]
    %v5126 = vld [vmem:[%s81 + $0x321] sm:$0xff]
    %5127 = vst [vmem:[#allocation3 + $0x20] sm:$0xff] %v5063
    %5128 = vst [vmem:[#allocation3 + $0x68] sm:$0xff] %v5064
    %5129 = vst [vmem:[#allocation3 + $0xb0] sm:$0xff] %v5065
    %5130 = vst [vmem:[#allocation3 + $0xf8] sm:$0xff] %v5066
    %5131 = vst [vmem:[#allocation3 + $0x140] sm:$0xff] %v5067
    %5132 = vst [vmem:[#allocation3 + $0x188] sm:$0xff] %v5068
    %5133 = vst [vmem:[#allocation3 + $0x1d0] sm:$0xff] %v5069
    %5134 = vst [vmem:[#allocation3 + $0x218] sm:$0xff] %v5070
    %5135 = vst [vmem:[#allocation3 + $0x260] sm:$0xff] %v5071
    %5136 = vst [vmem:[#allocation3 + $0x2a8] sm:$0xff] %v5072
    %5137 = vst [vmem:[#allocation3 + $0x2f0] sm:$0xff] %v5073
    %5138 = vst [vmem:[#allocation3 + $0x338] sm:$0xff] %v5074
    %5139 = vst [vmem:[#allocation3 + $0x380] sm:$0xff] %v5075
    %5140 = vst [vmem:[#allocation3 + $0x3c8] sm:$0xff] %v5076
    %5141 = vst [vmem:[#allocation3 + $0x410] sm:$0xff] %v5077
    %5142 = vst [vmem:[#allocation3 + $0x458] sm:$0xff] %v5078
    %5143 = vst [vmem:[#allocation3 + $0x4a0] sm:$0xff] %v5079
    %5144 = vst [vmem:[#allocation3 + $0x4e8] sm:$0xff] %v5080
    %5145 = vst [vmem:[#allocation3 + $0x530] sm:$0xff] %v5081
    %5146 = vst [vmem:[#allocation3 + $0x578] sm:$0xff] %v5082
    %5147 = vst [vmem:[#allocation3 + $0x5c0] sm:$0xff] %v5083
    %5148 = vst [vmem:[#allocation3 + $0x608] sm:$0xff] %v5084
    %5149 = vst [vmem:[#allocation3 + $0x650] sm:$0xff] %v5085
    %5150 = vst [vmem:[#allocation3 + $0x698] sm:$0xff] %v5086
    %5151 = vst [vmem:[#allocation3 + $0x6e0] sm:$0xff] %v5087
    %5152 = vst [vmem:[#allocation3 + $0x728] sm:$0xff] %v5088
    %5153 = vst [vmem:[#allocation3 + $0x770] sm:$0xff] %v5089
    %5154 = vst [vmem:[#allocation3 + $0x7b8] sm:$0xff] %v5090
    %5155 = vst [vmem:[#allocation3 + $0x800] sm:$0xff] %v5091
    %5156 = vst [vmem:[#allocation3 + $0x848] sm:$0xff] %v5092
    %5157 = vst [vmem:[#allocation3 + $0x890] sm:$0xff] %v5093
    %5158 = vst [vmem:[#allocation3 + $0x8d8] sm:$0xff] %v5094
    %5159 = vst [vmem:[#allocation3 + $0x920] sm:$0xff] %v5095
    %5160 = vst [vmem:[#allocation3 + $0x968] sm:$0xff] %v5096
    %5161 = vst [vmem:[#allocation3 + $0x9b0] sm:$0xff] %v5097
    %5162 = vst [vmem:[#allocation3 + $0x9f8] sm:$0xff] %v5098
    %5163 = vst [vmem:[#allocation3 + $0xa40] sm:$0xff] %v5099
    %5164 = vst [vmem:[#allocation3 + $0xa88] sm:$0xff] %v5100
    %5165 = vst [vmem:[#allocation3 + $0xad0] sm:$0xff] %v5101
    %5166 = vst [vmem:[#allocation3 + $0xb18] sm:$0xff] %v5102
    %5167 = vst [vmem:[#allocation3 + $0xb60] sm:$0xff] %v5103
    %5168 = vst [vmem:[#allocation3 + $0xba8] sm:$0xff] %v5104
    %5169 = vst [vmem:[#allocation3 + $0xbf0] sm:$0xff] %v5105
    %5170 = vst [vmem:[#allocation3 + $0xc38] sm:$0xff] %v5106
    %5171 = vst [vmem:[#allocation3 + $0xc80] sm:$0xff] %v5107
    %5172 = vst [vmem:[#allocation3 + $0xcc8] sm:$0xff] %v5108
    %5173 = vst [vmem:[#allocation3 + $0xd10] sm:$0xff] %v5109
    %5174 = vst [vmem:[#allocation3 + $0xd58] sm:$0xff] %v5110
    %5175 = vst [vmem:[#allocation3 + $0xda0] sm:$0xff] %v5111
    %5176 = vst [vmem:[#allocation3 + $0xde8] sm:$0xff] %v5112
    %5177 = vst [vmem:[#allocation3 + $0xe30] sm:$0xff] %v5113
    %5178 = vst [vmem:[#allocation3 + $0xe78] sm:$0xff] %v5114
    %5179 = vst [vmem:[#allocation3 + $0xec0] sm:$0xff] %v5115
    %5180 = vst [vmem:[#allocation3 + $0xf08] sm:$0xff] %v5116
    %5181 = vst [vmem:[#allocation3 + $0xf50] sm:$0xff] %v5117
    %5182 = vst [vmem:[#allocation3 + $0xf98] sm:$0xff] %v5118
    %5183 = vst [vmem:[#allocation3 + $0xfe0] sm:$0xff] %v5119
    %5184 = vst [vmem:[#allocation3 + $0x1028] sm:$0xff] %v5120
    %5185 = vst [vmem:[#allocation3 + $0x1070] sm:$0xff] %v5121
    %5186 = vst [vmem:[#allocation3 + $0x10b8] sm:$0xff] %v5122
    %5187 = vst [vmem:[#allocation3 + $0x1100] sm:$0xff] %v5123
    %5188 = vst [vmem:[#allocation3 + $0x1148] sm:$0xff] %v5124
    %5189 = vst [vmem:[#allocation3 + $0x1190] sm:$0xff] %v5125
    %5190 = vst [vmem:[#allocation3 + $0x11d8] sm:$0xff] %v5126
    %v5191 = vld [vmem:[%s81 + $0x2] sm:$0xff]
    %v5192 = vld [vmem:[%s81 + $0xa] sm:$0xff]
    %v5193 = vld [vmem:[%s81 + $0x1a] sm:$0xff]
    %v5194 = vld [vmem:[%s81 + $0x22] sm:$0xff]
    %v5195 = vld [vmem:[%s81 + $0x32] sm:$0xff]
    %v5196 = vld [vmem:[%s81 + $0x3a] sm:$0xff]
    %v5197 = vld [vmem:[%s81 + $0x4a] sm:$0xff]
    %v5198 = vld [vmem:[%s81 + $0x52] sm:$0xff]
    %v5199 = vld [vmem:[%s81 + $0x62] sm:$0xff]
    %v5200 = vld [vmem:[%s81 + $0x6a] sm:$0xff]
    %v5201 = vld [vmem:[%s81 + $0x7a] sm:$0xff]
    %v5202 = vld [vmem:[%s81 + $0x82] sm:$0xff]
    %v5203 = vld [vmem:[%s81 + $0x92] sm:$0xff]
    %v5204 = vld [vmem:[%s81 + $0x9a] sm:$0xff]
    %v5205 = vld [vmem:[%s81 + $0xaa] sm:$0xff]
    %v5206 = vld [vmem:[%s81 + $0xb2] sm:$0xff]
    %v5207 = vld [vmem:[%s81 + $0xc2] sm:$0xff]
    %v5208 = vld [vmem:[%s81 + $0xca] sm:$0xff]
    %v5209 = vld [vmem:[%s81 + $0xda] sm:$0xff]
    %v5210 = vld [vmem:[%s81 + $0xe2] sm:$0xff]
    %v5211 = vld [vmem:[%s81 + $0xf2] sm:$0xff]
    %v5212 = vld [vmem:[%s81 + $0xfa] sm:$0xff]
    %v5213 = vld [vmem:[%s81 + $0x10a] sm:$0xff]
    %v5214 = vld [vmem:[%s81 + $0x112] sm:$0xff]
    %v5215 = vld [vmem:[%s81 + $0x122] sm:$0xff]
    %v5216 = vld [vmem:[%s81 + $0x12a] sm:$0xff]
    %v5217 = vld [vmem:[%s81 + $0x13a] sm:$0xff]
    %v5218 = vld [vmem:[%s81 + $0x142] sm:$0xff]
    %v5219 = vld [vmem:[%s81 + $0x152] sm:$0xff]
    %v5220 = vld [vmem:[%s81 + $0x15a] sm:$0xff]
    %v5221 = vld [vmem:[%s81 + $0x16a] sm:$0xff]
    %v5222 = vld [vmem:[%s81 + $0x172] sm:$0xff]
    %v5223 = vld [vmem:[%s81 + $0x1b2] sm:$0xff]
    %v5224 = vld [vmem:[%s81 + $0x1ba] sm:$0xff]
    %v5225 = vld [vmem:[%s81 + $0x1ca] sm:$0xff]
    %v5226 = vld [vmem:[%s81 + $0x1d2] sm:$0xff]
    %v5227 = vld [vmem:[%s81 + $0x1e2] sm:$0xff]
    %v5228 = vld [vmem:[%s81 + $0x1ea] sm:$0xff]
    %v5229 = vld [vmem:[%s81 + $0x1fa] sm:$0xff]
    %v5230 = vld [vmem:[%s81 + $0x202] sm:$0xff]
    %v5231 = vld [vmem:[%s81 + $0x212] sm:$0xff]
    %v5232 = vld [vmem:[%s81 + $0x21a] sm:$0xff]
    %v5233 = vld [vmem:[%s81 + $0x22a] sm:$0xff]
    %v5234 = vld [vmem:[%s81 + $0x232] sm:$0xff]
    %v5235 = vld [vmem:[%s81 + $0x242] sm:$0xff]
    %v5236 = vld [vmem:[%s81 + $0x24a] sm:$0xff]
    %v5237 = vld [vmem:[%s81 + $0x25a] sm:$0xff]
    %v5238 = vld [vmem:[%s81 + $0x262] sm:$0xff]
    %v5239 = vld [vmem:[%s81 + $0x272] sm:$0xff]
    %v5240 = vld [vmem:[%s81 + $0x27a] sm:$0xff]
    %v5241 = vld [vmem:[%s81 + $0x28a] sm:$0xff]
    %v5242 = vld [vmem:[%s81 + $0x292] sm:$0xff]
    %v5243 = vld [vmem:[%s81 + $0x2a2] sm:$0xff]
    %v5244 = vld [vmem:[%s81 + $0x2aa] sm:$0xff]
    %v5245 = vld [vmem:[%s81 + $0x2ba] sm:$0xff]
    %v5246 = vld [vmem:[%s81 + $0x2c2] sm:$0xff]
    %v5247 = vld [vmem:[%s81 + $0x2d2] sm:$0xff]
    %v5248 = vld [vmem:[%s81 + $0x2da] sm:$0xff]
    %v5249 = vld [vmem:[%s81 + $0x2ea] sm:$0xff]
    %v5250 = vld [vmem:[%s81 + $0x2f2] sm:$0xff]
    %v5251 = vld [vmem:[%s81 + $0x302] sm:$0xff]
    %v5252 = vld [vmem:[%s81 + $0x30a] sm:$0xff]
    %v5253 = vld [vmem:[%s81 + $0x31a] sm:$0xff]
    %v5254 = vld [vmem:[%s81 + $0x322] sm:$0xff]
    %5255 = vst [vmem:[#allocation3 + $0x28] sm:$0xff] %v5191
    %5256 = vst [vmem:[#allocation3 + $0x70] sm:$0xff] %v5192
    %5257 = vst [vmem:[#allocation3 + $0xb8] sm:$0xff] %v5193
    %5258 = vst [vmem:[#allocation3 + $0x100] sm:$0xff] %v5194
    %5259 = vst [vmem:[#allocation3 + $0x148] sm:$0xff] %v5195
    %5260 = vst [vmem:[#allocation3 + $0x190] sm:$0xff] %v5196
    %5261 = vst [vmem:[#allocation3 + $0x1d8] sm:$0xff] %v5197
    %5262 = vst [vmem:[#allocation3 + $0x220] sm:$0xff] %v5198
    %5263 = vst [vmem:[#allocation3 + $0x268] sm:$0xff] %v5199
    %5264 = vst [vmem:[#allocation3 + $0x2b0] sm:$0xff] %v5200
    %5265 = vst [vmem:[#allocation3 + $0x2f8] sm:$0xff] %v5201
    %5266 = vst [vmem:[#allocation3 + $0x340] sm:$0xff] %v5202
    %5267 = vst [vmem:[#allocation3 + $0x388] sm:$0xff] %v5203
    %5268 = vst [vmem:[#allocation3 + $0x3d0] sm:$0xff] %v5204
    %5269 = vst [vmem:[#allocation3 + $0x418] sm:$0xff] %v5205
    %5270 = vst [vmem:[#allocation3 + $0x460] sm:$0xff] %v5206
    %5271 = vst [vmem:[#allocation3 + $0x4a8] sm:$0xff] %v5207
    %5272 = vst [vmem:[#allocation3 + $0x4f0] sm:$0xff] %v5208
    %5273 = vst [vmem:[#allocation3 + $0x538] sm:$0xff] %v5209
    %5274 = vst [vmem:[#allocation3 + $0x580] sm:$0xff] %v5210
    %5275 = vst [vmem:[#allocation3 + $0x5c8] sm:$0xff] %v5211
    %5276 = vst [vmem:[#allocation3 + $0x610] sm:$0xff] %v5212
    %5277 = vst [vmem:[#allocation3 + $0x658] sm:$0xff] %v5213
    %5278 = vst [vmem:[#allocation3 + $0x6a0] sm:$0xff] %v5214
    %5279 = vst [vmem:[#allocation3 + $0x6e8] sm:$0xff] %v5215
    %5280 = vst [vmem:[#allocation3 + $0x730] sm:$0xff] %v5216
    %5281 = vst [vmem:[#allocation3 + $0x778] sm:$0xff] %v5217
    %5282 = vst [vmem:[#allocation3 + $0x7c0] sm:$0xff] %v5218
    %5283 = vst [vmem:[#allocation3 + $0x808] sm:$0xff] %v5219
    %5284 = vst [vmem:[#allocation3 + $0x850] sm:$0xff] %v5220
    %5285 = vst [vmem:[#allocation3 + $0x898] sm:$0xff] %v5221
    %5286 = vst [vmem:[#allocation3 + $0x8e0] sm:$0xff] %v5222
    %5287 = vst [vmem:[#allocation3 + $0x928] sm:$0xff] %v5223
    %5288 = vst [vmem:[#allocation3 + $0x970] sm:$0xff] %v5224
    %5289 = vst [vmem:[#allocation3 + $0x9b8] sm:$0xff] %v5225
    %5290 = vst [vmem:[#allocation3 + $0xa00] sm:$0xff] %v5226
    %5291 = vst [vmem:[#allocation3 + $0xa48] sm:$0xff] %v5227
    %5292 = vst [vmem:[#allocation3 + $0xa90] sm:$0xff] %v5228
    %5293 = vst [vmem:[#allocation3 + $0xad8] sm:$0xff] %v5229
    %5294 = vst [vmem:[#allocation3 + $0xb20] sm:$0xff] %v5230
    %5295 = vst [vmem:[#allocation3 + $0xb68] sm:$0xff] %v5231
    %5296 = vst [vmem:[#allocation3 + $0xbb0] sm:$0xff] %v5232
    %5297 = vst [vmem:[#allocation3 + $0xbf8] sm:$0xff] %v5233
    %5298 = vst [vmem:[#allocation3 + $0xc40] sm:$0xff] %v5234
    %5299 = vst [vmem:[#allocation3 + $0xc88] sm:$0xff] %v5235
    %5300 = vst [vmem:[#allocation3 + $0xcd0] sm:$0xff] %v5236
    %5301 = vst [vmem:[#allocation3 + $0xd18] sm:$0xff] %v5237
    %5302 = vst [vmem:[#allocation3 + $0xd60] sm:$0xff] %v5238
    %5303 = vst [vmem:[#allocation3 + $0xda8] sm:$0xff] %v5239
    %5304 = vst [vmem:[#allocation3 + $0xdf0] sm:$0xff] %v5240
    %5305 = vst [vmem:[#allocation3 + $0xe38] sm:$0xff] %v5241
    %5306 = vst [vmem:[#allocation3 + $0xe80] sm:$0xff] %v5242
    %5307 = vst [vmem:[#allocation3 + $0xec8] sm:$0xff] %v5243
    %5308 = vst [vmem:[#allocation3 + $0xf10] sm:$0xff] %v5244
    %5309 = vst [vmem:[#allocation3 + $0xf58] sm:$0xff] %v5245
    %5310 = vst [vmem:[#allocation3 + $0xfa0] sm:$0xff] %v5246
    %5311 = vst [vmem:[#allocation3 + $0xfe8] sm:$0xff] %v5247
    %5312 = vst [vmem:[#allocation3 + $0x1030] sm:$0xff] %v5248
    %5313 = vst [vmem:[#allocation3 + $0x1078] sm:$0xff] %v5249
    %5314 = vst [vmem:[#allocation3 + $0x10c0] sm:$0xff] %v5250
    %5315 = vst [vmem:[#allocation3 + $0x1108] sm:$0xff] %v5251
    %5316 = vst [vmem:[#allocation3 + $0x1150] sm:$0xff] %v5252
    %5317 = vst [vmem:[#allocation3 + $0x1198] sm:$0xff] %v5253
    %5318 = vst [vmem:[#allocation3 + $0x11e0] sm:$0xff] %v5254
    %v5319 = vld [vmem:[%s1042] sm:$0xff]
    %v5320 = vld [vmem:[%s1042 + $0x8] sm:$0xff]
    %v5321 = vld [vmem:[%s1042 + $0x18] sm:$0xff]
    %v5322 = vld [vmem:[%s1042 + $0x20] sm:$0xff]
    %v5323 = vld [vmem:[%s1042 + $0x30] sm:$0xff]
    %v5324 = vld [vmem:[%s1042 + $0x38] sm:$0xff]
    %v5325 = vld [vmem:[%s1042 + $0x48] sm:$0xff]
    %v5326 = vld [vmem:[%s1042 + $0x50] sm:$0xff]
    %v5327 = vld [vmem:[%s1042 + $0x60] sm:$0xff]
    %v5328 = vld [vmem:[%s1042 + $0x68] sm:$0xff]
    %v5329 = vld [vmem:[%s1042 + $0x78] sm:$0xff]
    %v5330 = vld [vmem:[%s1042 + $0x80] sm:$0xff]
    %v5331 = vld [vmem:[%s1042 + $0x90] sm:$0xff]
    %v5332 = vld [vmem:[%s1042 + $0x98] sm:$0xff]
    %v5333 = vld [vmem:[%s1042 + $0xa8] sm:$0xff]
    %v5334 = vld [vmem:[%s1042 + $0xb0] sm:$0xff]
    %v5335 = vld [vmem:[%s1042 + $0xc0] sm:$0xff]
    %v5336 = vld [vmem:[%s1042 + $0xc8] sm:$0xff]
    %v5337 = vld [vmem:[%s1042 + $0xd8] sm:$0xff]
    %v5338 = vld [vmem:[%s1042 + $0xe0] sm:$0xff]
    %v5339 = vld [vmem:[%s1042 + $0xf0] sm:$0xff]
    %v5340 = vld [vmem:[%s1042 + $0xf8] sm:$0xff]
    %v5341 = vld [vmem:[%s1042 + $0x108] sm:$0xff]
    %v5342 = vld [vmem:[%s1042 + $0x110] sm:$0xff]
    %v5343 = vld [vmem:[%s1042 + $0x120] sm:$0xff]
    %v5344 = vld [vmem:[%s1042 + $0x128] sm:$0xff]
    %v5345 = vld [vmem:[%s1042 + $0x138] sm:$0xff]
    %v5346 = vld [vmem:[%s1042 + $0x140] sm:$0xff]
    %v5347 = vld [vmem:[%s1042 + $0x150] sm:$0xff]
    %v5348 = vld [vmem:[%s1042 + $0x158] sm:$0xff]
    %v5349 = vld [vmem:[%s1042 + $0x168] sm:$0xff]
    %v5350 = vld [vmem:[%s1042 + $0x170] sm:$0xff]
    %v5351 = vld [vmem:[%s1042 + $0x1b0] sm:$0xff]
    %v5352 = vld [vmem:[%s1042 + $0x1b8] sm:$0xff]
    %v5353 = vld [vmem:[%s1042 + $0x1c8] sm:$0xff]
    %v5354 = vld [vmem:[%s1042 + $0x1d0] sm:$0xff]
    %v5355 = vld [vmem:[%s1042 + $0x1e0] sm:$0xff]
    %v5356 = vld [vmem:[%s1042 + $0x1e8] sm:$0xff]
    %v5357 = vld [vmem:[%s1042 + $0x1f8] sm:$0xff]
    %v5358 = vld [vmem:[%s1042 + $0x200] sm:$0xff]
    %v5359 = vld [vmem:[%s1042 + $0x210] sm:$0xff]
    %v5360 = vld [vmem:[%s1042 + $0x218] sm:$0xff]
    %v5361 = vld [vmem:[%s1042 + $0x228] sm:$0xff]
    %v5362 = vld [vmem:[%s1042 + $0x230] sm:$0xff]
    %v5363 = vld [vmem:[%s1042 + $0x240] sm:$0xff]
    %v5364 = vld [vmem:[%s1042 + $0x248] sm:$0xff]
    %v5365 = vld [vmem:[%s1042 + $0x258] sm:$0xff]
    %v5366 = vld [vmem:[%s1042 + $0x260] sm:$0xff]
    %v5367 = vld [vmem:[%s1042 + $0x270] sm:$0xff]
    %v5368 = vld [vmem:[%s1042 + $0x278] sm:$0xff]
    %v5369 = vld [vmem:[%s1042 + $0x288] sm:$0xff]
    %v5370 = vld [vmem:[%s1042 + $0x290] sm:$0xff]
    %v5371 = vld [vmem:[%s1042 + $0x2a0] sm:$0xff]
    %v5372 = vld [vmem:[%s1042 + $0x2a8] sm:$0xff]
    %v5373 = vld [vmem:[%s1042 + $0x2b8] sm:$0xff]
    %v5374 = vld [vmem:[%s1042 + $0x2c0] sm:$0xff]
    %v5375 = vld [vmem:[%s1042 + $0x2d0] sm:$0xff]
    %v5376 = vld [vmem:[%s1042 + $0x2d8] sm:$0xff]
    %v5377 = vld [vmem:[%s1042 + $0x2e8] sm:$0xff]
    %v5378 = vld [vmem:[%s1042 + $0x2f0] sm:$0xff]
    %v5379 = vld [vmem:[%s1042 + $0x300] sm:$0xff]
    %v5380 = vld [vmem:[%s1042 + $0x308] sm:$0xff]
    %v5381 = vld [vmem:[%s1042 + $0x318] sm:$0xff]
    %v5382 = vld [vmem:[%s1042 + $0x320] sm:$0xff]
    %5383 = vst [vmem:[#allocation3 + $0x30] sm:$0xff] %v5319
    %5384 = vst [vmem:[#allocation3 + $0x78] sm:$0xff] %v5320
    %5385 = vst [vmem:[#allocation3 + $0xc0] sm:$0xff] %v5321
    %5386 = vst [vmem:[#allocation3 + $0x108] sm:$0xff] %v5322
    %5387 = vst [vmem:[#allocation3 + $0x150] sm:$0xff] %v5323
    %5388 = vst [vmem:[#allocation3 + $0x198] sm:$0xff] %v5324
    %5389 = vst [vmem:[#allocation3 + $0x1e0] sm:$0xff] %v5325
    %5390 = vst [vmem:[#allocation3 + $0x228] sm:$0xff] %v5326
    %5391 = vst [vmem:[#allocation3 + $0x270] sm:$0xff] %v5327
    %5392 = vst [vmem:[#allocation3 + $0x2b8] sm:$0xff] %v5328
    %5393 = vst [vmem:[#allocation3 + $0x300] sm:$0xff] %v5329
    %5394 = vst [vmem:[#allocation3 + $0x348] sm:$0xff] %v5330
    %5395 = vst [vmem:[#allocation3 + $0x390] sm:$0xff] %v5331
    %5396 = vst [vmem:[#allocation3 + $0x3d8] sm:$0xff] %v5332
    %5397 = vst [vmem:[#allocation3 + $0x420] sm:$0xff] %v5333
    %5398 = vst [vmem:[#allocation3 + $0x468] sm:$0xff] %v5334
    %5399 = vst [vmem:[#allocation3 + $0x4b0] sm:$0xff] %v5335
    %5400 = vst [vmem:[#allocation3 + $0x4f8] sm:$0xff] %v5336
    %5401 = vst [vmem:[#allocation3 + $0x540] sm:$0xff] %v5337
    %5402 = vst [vmem:[#allocation3 + $0x588] sm:$0xff] %v5338
    %5403 = vst [vmem:[#allocation3 + $0x5d0] sm:$0xff] %v5339
    %5404 = vst [vmem:[#allocation3 + $0x618] sm:$0xff] %v5340
    %5405 = vst [vmem:[#allocation3 + $0x660] sm:$0xff] %v5341
    %5406 = vst [vmem:[#allocation3 + $0x6a8] sm:$0xff] %v5342
    %5407 = vst [vmem:[#allocation3 + $0x6f0] sm:$0xff] %v5343
    %5408 = vst [vmem:[#allocation3 + $0x738] sm:$0xff] %v5344
    %5409 = vst [vmem:[#allocation3 + $0x780] sm:$0xff] %v5345
    %5410 = vst [vmem:[#allocation3 + $0x7c8] sm:$0xff] %v5346
    %5411 = vst [vmem:[#allocation3 + $0x810] sm:$0xff] %v5347
    %5412 = vst [vmem:[#allocation3 + $0x858] sm:$0xff] %v5348
    %5413 = vst [vmem:[#allocation3 + $0x8a0] sm:$0xff] %v5349
    %5414 = vst [vmem:[#allocation3 + $0x8e8] sm:$0xff] %v5350
    %5415 = vst [vmem:[#allocation3 + $0x930] sm:$0xff] %v5351
    %5416 = vst [vmem:[#allocation3 + $0x978] sm:$0xff] %v5352
    %5417 = vst [vmem:[#allocation3 + $0x9c0] sm:$0xff] %v5353
    %5418 = vst [vmem:[#allocation3 + $0xa08] sm:$0xff] %v5354
    %5419 = vst [vmem:[#allocation3 + $0xa50] sm:$0xff] %v5355
    %5420 = vst [vmem:[#allocation3 + $0xa98] sm:$0xff] %v5356
    %5421 = vst [vmem:[#allocation3 + $0xae0] sm:$0xff] %v5357
    %5422 = vst [vmem:[#allocation3 + $0xb28] sm:$0xff] %v5358
    %5423 = vst [vmem:[#allocation3 + $0xb70] sm:$0xff] %v5359
    %5424 = vst [vmem:[#allocation3 + $0xbb8] sm:$0xff] %v5360
    %5425 = vst [vmem:[#allocation3 + $0xc00] sm:$0xff] %v5361
    %5426 = vst [vmem:[#allocation3 + $0xc48] sm:$0xff] %v5362
    %5427 = vst [vmem:[#allocation3 + $0xc90] sm:$0xff] %v5363
    %5428 = vst [vmem:[#allocation3 + $0xcd8] sm:$0xff] %v5364
    %5429 = vst [vmem:[#allocation3 + $0xd20] sm:$0xff] %v5365
    %5430 = vst [vmem:[#allocation3 + $0xd68] sm:$0xff] %v5366
    %5431 = vst [vmem:[#allocation3 + $0xdb0] sm:$0xff] %v5367
    %5432 = vst [vmem:[#allocation3 + $0xdf8] sm:$0xff] %v5368
    %5433 = vst [vmem:[#allocation3 + $0xe40] sm:$0xff] %v5369
    %5434 = vst [vmem:[#allocation3 + $0xe88] sm:$0xff] %v5370
    %5435 = vst [vmem:[#allocation3 + $0xed0] sm:$0xff] %v5371
    %5436 = vst [vmem:[#allocation3 + $0xf18] sm:$0xff] %v5372
    %5437 = vst [vmem:[#allocation3 + $0xf60] sm:$0xff] %v5373
    %5438 = vst [vmem:[#allocation3 + $0xfa8] sm:$0xff] %v5374
    %5439 = vst [vmem:[#allocation3 + $0xff0] sm:$0xff] %v5375
    %5440 = vst [vmem:[#allocation3 + $0x1038] sm:$0xff] %v5376
    %5441 = vst [vmem:[#allocation3 + $0x1080] sm:$0xff] %v5377
    %5442 = vst [vmem:[#allocation3 + $0x10c8] sm:$0xff] %v5378
    %5443 = vst [vmem:[#allocation3 + $0x1110] sm:$0xff] %v5379
    %5444 = vst [vmem:[#allocation3 + $0x1158] sm:$0xff] %v5380
    %5445 = vst [vmem:[#allocation3 + $0x11a0] sm:$0xff] %v5381
    %5446 = vst [vmem:[#allocation3 + $0x11e8] sm:$0xff] %v5382
    %v5447 = vld [vmem:[%s1042 + $0x1] sm:$0xff]
    %v5448 = vld [vmem:[%s1042 + $0x9] sm:$0xff]
    %v5449 = vld [vmem:[%s1042 + $0x19] sm:$0xff]
    %v5450 = vld [vmem:[%s1042 + $0x21] sm:$0xff]
    %v5451 = vld [vmem:[%s1042 + $0x31] sm:$0xff]
    %v5452 = vld [vmem:[%s1042 + $0x39] sm:$0xff]
    %v5453 = vld [vmem:[%s1042 + $0x49] sm:$0xff]
    %v5454 = vld [vmem:[%s1042 + $0x51] sm:$0xff]
    %v5455 = vld [vmem:[%s1042 + $0x61] sm:$0xff]
    %v5456 = vld [vmem:[%s1042 + $0x69] sm:$0xff]
    %v5457 = vld [vmem:[%s1042 + $0x79] sm:$0xff]
    %v5458 = vld [vmem:[%s1042 + $0x81] sm:$0xff]
    %v5459 = vld [vmem:[%s1042 + $0x91] sm:$0xff]
    %v5460 = vld [vmem:[%s1042 + $0x99] sm:$0xff]
    %v5461 = vld [vmem:[%s1042 + $0xa9] sm:$0xff]
    %v5462 = vld [vmem:[%s1042 + $0xb1] sm:$0xff]
    %v5463 = vld [vmem:[%s1042 + $0xc1] sm:$0xff]
    %v5464 = vld [vmem:[%s1042 + $0xc9] sm:$0xff]
    %v5465 = vld [vmem:[%s1042 + $0xd9] sm:$0xff]
    %v5466 = vld [vmem:[%s1042 + $0xe1] sm:$0xff]
    %v5467 = vld [vmem:[%s1042 + $0xf1] sm:$0xff]
    %v5468 = vld [vmem:[%s1042 + $0xf9] sm:$0xff]
    %v5469 = vld [vmem:[%s1042 + $0x109] sm:$0xff]
    %v5470 = vld [vmem:[%s1042 + $0x111] sm:$0xff]
    %v5471 = vld [vmem:[%s1042 + $0x121] sm:$0xff]
    %v5472 = vld [vmem:[%s1042 + $0x129] sm:$0xff]
    %v5473 = vld [vmem:[%s1042 + $0x139] sm:$0xff]
    %v5474 = vld [vmem:[%s1042 + $0x141] sm:$0xff]
    %v5475 = vld [vmem:[%s1042 + $0x151] sm:$0xff]
    %v5476 = vld [vmem:[%s1042 + $0x159] sm:$0xff]
    %v5477 = vld [vmem:[%s1042 + $0x169] sm:$0xff]
    %v5478 = vld [vmem:[%s1042 + $0x171] sm:$0xff]
    %v5479 = vld [vmem:[%s1042 + $0x1b1] sm:$0xff]
    %v5480 = vld [vmem:[%s1042 + $0x1b9] sm:$0xff]
    %v5481 = vld [vmem:[%s1042 + $0x1c9] sm:$0xff]
    %v5482 = vld [vmem:[%s1042 + $0x1d1] sm:$0xff]
    %v5483 = vld [vmem:[%s1042 + $0x1e1] sm:$0xff]
    %v5484 = vld [vmem:[%s1042 + $0x1e9] sm:$0xff]
    %v5485 = vld [vmem:[%s1042 + $0x1f9] sm:$0xff]
    %v5486 = vld [vmem:[%s1042 + $0x201] sm:$0xff]
    %v5487 = vld [vmem:[%s1042 + $0x211] sm:$0xff]
    %v5488 = vld [vmem:[%s1042 + $0x219] sm:$0xff]
    %v5489 = vld [vmem:[%s1042 + $0x229] sm:$0xff]
    %v5490 = vld [vmem:[%s1042 + $0x231] sm:$0xff]
    %v5491 = vld [vmem:[%s1042 + $0x241] sm:$0xff]
    %v5492 = vld [vmem:[%s1042 + $0x249] sm:$0xff]
    %v5493 = vld [vmem:[%s1042 + $0x259] sm:$0xff]
    %v5494 = vld [vmem:[%s1042 + $0x261] sm:$0xff]
    %v5495 = vld [vmem:[%s1042 + $0x271] sm:$0xff]
    %v5496 = vld [vmem:[%s1042 + $0x279] sm:$0xff]
    %v5497 = vld [vmem:[%s1042 + $0x289] sm:$0xff]
    %v5498 = vld [vmem:[%s1042 + $0x291] sm:$0xff]
    %v5499 = vld [vmem:[%s1042 + $0x2a1] sm:$0xff]
    %v5500 = vld [vmem:[%s1042 + $0x2a9] sm:$0xff]
    %v5501 = vld [vmem:[%s1042 + $0x2b9] sm:$0xff]
    %v5502 = vld [vmem:[%s1042 + $0x2c1] sm:$0xff]
    %v5503 = vld [vmem:[%s1042 + $0x2d1] sm:$0xff]
    %v5504 = vld [vmem:[%s1042 + $0x2d9] sm:$0xff]
    %v5505 = vld [vmem:[%s1042 + $0x2e9] sm:$0xff]
    %v5506 = vld [vmem:[%s1042 + $0x2f1] sm:$0xff]
    %v5507 = vld [vmem:[%s1042 + $0x301] sm:$0xff]
    %v5508 = vld [vmem:[%s1042 + $0x309] sm:$0xff]
    %v5509 = vld [vmem:[%s1042 + $0x319] sm:$0xff]
    %v5510 = vld [vmem:[%s1042 + $0x321] sm:$0xff]
    %5511 = vst [vmem:[#allocation3 + $0x38] sm:$0xff] %v5447
    %5512 = vst [vmem:[#allocation3 + $0x80] sm:$0xff] %v5448
    %5513 = vst [vmem:[#allocation3 + $0xc8] sm:$0xff] %v5449
    %5514 = vst [vmem:[#allocation3 + $0x110] sm:$0xff] %v5450
    %5515 = vst [vmem:[#allocation3 + $0x158] sm:$0xff] %v5451
    %5516 = vst [vmem:[#allocation3 + $0x1a0] sm:$0xff] %v5452
    %5517 = vst [vmem:[#allocation3 + $0x1e8] sm:$0xff] %v5453
    %5518 = vst [vmem:[#allocation3 + $0x230] sm:$0xff] %v5454
    %5519 = vst [vmem:[#allocation3 + $0x278] sm:$0xff] %v5455
    %5520 = vst [vmem:[#allocation3 + $0x2c0] sm:$0xff] %v5456
    %5521 = vst [vmem:[#allocation3 + $0x308] sm:$0xff] %v5457
    %5522 = vst [vmem:[#allocation3 + $0x350] sm:$0xff] %v5458
    %5523 = vst [vmem:[#allocation3 + $0x398] sm:$0xff] %v5459
    %5524 = vst [vmem:[#allocation3 + $0x3e0] sm:$0xff] %v5460
    %5525 = vst [vmem:[#allocation3 + $0x428] sm:$0xff] %v5461
    %5526 = vst [vmem:[#allocation3 + $0x470] sm:$0xff] %v5462
    %5527 = vst [vmem:[#allocation3 + $0x4b8] sm:$0xff] %v5463
    %5528 = vst [vmem:[#allocation3 + $0x500] sm:$0xff] %v5464
    %5529 = vst [vmem:[#allocation3 + $0x548] sm:$0xff] %v5465
    %5530 = vst [vmem:[#allocation3 + $0x590] sm:$0xff] %v5466
    %5531 = vst [vmem:[#allocation3 + $0x5d8] sm:$0xff] %v5467
    %5532 = vst [vmem:[#allocation3 + $0x620] sm:$0xff] %v5468
    %5533 = vst [vmem:[#allocation3 + $0x668] sm:$0xff] %v5469
    %5534 = vst [vmem:[#allocation3 + $0x6b0] sm:$0xff] %v5470
    %5535 = vst [vmem:[#allocation3 + $0x6f8] sm:$0xff] %v5471
    %5536 = vst [vmem:[#allocation3 + $0x740] sm:$0xff] %v5472
    %5537 = vst [vmem:[#allocation3 + $0x788] sm:$0xff] %v5473
    %5538 = vst [vmem:[#allocation3 + $0x7d0] sm:$0xff] %v5474
    %5539 = vst [vmem:[#allocation3 + $0x818] sm:$0xff] %v5475
    %5540 = vst [vmem:[#allocation3 + $0x860] sm:$0xff] %v5476
    %5541 = vst [vmem:[#allocation3 + $0x8a8] sm:$0xff] %v5477
    %5542 = vst [vmem:[#allocation3 + $0x8f0] sm:$0xff] %v5478
    %5543 = vst [vmem:[#allocation3 + $0x938] sm:$0xff] %v5479
    %5544 = vst [vmem:[#allocation3 + $0x980] sm:$0xff] %v5480
    %5545 = vst [vmem:[#allocation3 + $0x9c8] sm:$0xff] %v5481
    %5546 = vst [vmem:[#allocation3 + $0xa10] sm:$0xff] %v5482
    %5547 = vst [vmem:[#allocation3 + $0xa58] sm:$0xff] %v5483
    %5548 = vst [vmem:[#allocation3 + $0xaa0] sm:$0xff] %v5484
    %5549 = vst [vmem:[#allocation3 + $0xae8] sm:$0xff] %v5485
    %5550 = vst [vmem:[#allocation3 + $0xb30] sm:$0xff] %v5486
    %5551 = vst [vmem:[#allocation3 + $0xb78] sm:$0xff] %v5487
    %5552 = vst [vmem:[#allocation3 + $0xbc0] sm:$0xff] %v5488
    %5553 = vst [vmem:[#allocation3 + $0xc08] sm:$0xff] %v5489
    %5554 = vst [vmem:[#allocation3 + $0xc50] sm:$0xff] %v5490
    %5555 = vst [vmem:[#allocation3 + $0xc98] sm:$0xff] %v5491
    %5556 = vst [vmem:[#allocation3 + $0xce0] sm:$0xff] %v5492
    %5557 = vst [vmem:[#allocation3 + $0xd28] sm:$0xff] %v5493
    %5558 = vst [vmem:[#allocation3 + $0xd70] sm:$0xff] %v5494
    %5559 = vst [vmem:[#allocation3 + $0xdb8] sm:$0xff] %v5495
    %5560 = vst [vmem:[#allocation3 + $0xe00] sm:$0xff] %v5496
    %5561 = vst [vmem:[#allocation3 + $0xe48] sm:$0xff] %v5497
    %5562 = vst [vmem:[#allocation3 + $0xe90] sm:$0xff] %v5498
    %5563 = vst [vmem:[#allocation3 + $0xed8] sm:$0xff] %v5499
    %5564 = vst [vmem:[#allocation3 + $0xf20] sm:$0xff] %v5500
    %5565 = vst [vmem:[#allocation3 + $0xf68] sm:$0xff] %v5501
    %5566 = vst [vmem:[#allocation3 + $0xfb0] sm:$0xff] %v5502
    %5567 = vst [vmem:[#allocation3 + $0xff8] sm:$0xff] %v5503
    %5568 = vst [vmem:[#allocation3 + $0x1040] sm:$0xff] %v5504
    %5569 = vst [vmem:[#allocation3 + $0x1088] sm:$0xff] %v5505
    %5570 = vst [vmem:[#allocation3 + $0x10d0] sm:$0xff] %v5506
    %5571 = vst [vmem:[#allocation3 + $0x1118] sm:$0xff] %v5507
    %5572 = vst [vmem:[#allocation3 + $0x1160] sm:$0xff] %v5508
    %5573 = vst [vmem:[#allocation3 + $0x11a8] sm:$0xff] %v5509
    %5574 = vst [vmem:[#allocation3 + $0x11f0] sm:$0xff] %v5510
    %v5575 = vld [vmem:[%s1042 + $0x2] sm:$0xff]
    %v5576 = vld [vmem:[%s1042 + $0xa] sm:$0xff]
    %v5577 = vld [vmem:[%s1042 + $0x1a] sm:$0xff]
    %v5578 = vld [vmem:[%s1042 + $0x22] sm:$0xff]
    %v5579 = vld [vmem:[%s1042 + $0x32] sm:$0xff]
    %v5580 = vld [vmem:[%s1042 + $0x3a] sm:$0xff]
    %v5581 = vld [vmem:[%s1042 + $0x4a] sm:$0xff]
    %v5582 = vld [vmem:[%s1042 + $0x52] sm:$0xff]
    %v5583 = vld [vmem:[%s1042 + $0x62] sm:$0xff]
    %v5584 = vld [vmem:[%s1042 + $0x6a] sm:$0xff]
    %v5585 = vld [vmem:[%s1042 + $0x7a] sm:$0xff]
    %v5586 = vld [vmem:[%s1042 + $0x82] sm:$0xff]
    %v5587 = vld [vmem:[%s1042 + $0x92] sm:$0xff]
    %v5588 = vld [vmem:[%s1042 + $0x9a] sm:$0xff]
    %v5589 = vld [vmem:[%s1042 + $0xaa] sm:$0xff]
    %v5590 = vld [vmem:[%s1042 + $0xb2] sm:$0xff]
    %v5591 = vld [vmem:[%s1042 + $0xc2] sm:$0xff]
    %v5592 = vld [vmem:[%s1042 + $0xca] sm:$0xff]
    %v5593 = vld [vmem:[%s1042 + $0xda] sm:$0xff]
    %v5594 = vld [vmem:[%s1042 + $0xe2] sm:$0xff]
    %v5595 = vld [vmem:[%s1042 + $0xf2] sm:$0xff]
    %v5596 = vld [vmem:[%s1042 + $0xfa] sm:$0xff]
    %v5597 = vld [vmem:[%s1042 + $0x10a] sm:$0xff]
    %v5598 = vld [vmem:[%s1042 + $0x112] sm:$0xff]
    %v5599 = vld [vmem:[%s1042 + $0x122] sm:$0xff]
    %v5600 = vld [vmem:[%s1042 + $0x12a] sm:$0xff]
    %v5601 = vld [vmem:[%s1042 + $0x13a] sm:$0xff]
    %v5602 = vld [vmem:[%s1042 + $0x142] sm:$0xff]
    %v5603 = vld [vmem:[%s1042 + $0x152] sm:$0xff]
    %v5604 = vld [vmem:[%s1042 + $0x15a] sm:$0xff]
    %v5605 = vld [vmem:[%s1042 + $0x16a] sm:$0xff]
    %v5606 = vld [vmem:[%s1042 + $0x172] sm:$0xff]
    %v5607 = vld [vmem:[%s1042 + $0x1b2] sm:$0xff]
    %v5608 = vld [vmem:[%s1042 + $0x1ba] sm:$0xff]
    %v5609 = vld [vmem:[%s1042 + $0x1ca] sm:$0xff]
    %v5610 = vld [vmem:[%s1042 + $0x1d2] sm:$0xff]
    %v5611 = vld [vmem:[%s1042 + $0x1e2] sm:$0xff]
    %v5612 = vld [vmem:[%s1042 + $0x1ea] sm:$0xff]
    %v5613 = vld [vmem:[%s1042 + $0x1fa] sm:$0xff]
    %v5614 = vld [vmem:[%s1042 + $0x202] sm:$0xff]
    %v5615 = vld [vmem:[%s1042 + $0x212] sm:$0xff]
    %v5616 = vld [vmem:[%s1042 + $0x21a] sm:$0xff]
    %v5617 = vld [vmem:[%s1042 + $0x22a] sm:$0xff]
    %v5618 = vld [vmem:[%s1042 + $0x232] sm:$0xff]
    %v5619 = vld [vmem:[%s1042 + $0x242] sm:$0xff]
    %v5620 = vld [vmem:[%s1042 + $0x24a] sm:$0xff]
    %v5621 = vld [vmem:[%s1042 + $0x25a] sm:$0xff]
    %v5622 = vld [vmem:[%s1042 + $0x262] sm:$0xff]
    %v5623 = vld [vmem:[%s1042 + $0x272] sm:$0xff]
    %v5624 = vld [vmem:[%s1042 + $0x27a] sm:$0xff]
    %v5625 = vld [vmem:[%s1042 + $0x28a] sm:$0xff]
    %v5626 = vld [vmem:[%s1042 + $0x292] sm:$0xff]
    %v5627 = vld [vmem:[%s1042 + $0x2a2] sm:$0xff]
    %v5628 = vld [vmem:[%s1042 + $0x2aa] sm:$0xff]
    %v5629 = vld [vmem:[%s1042 + $0x2ba] sm:$0xff]
    %v5630 = vld [vmem:[%s1042 + $0x2c2] sm:$0xff]
    %v5631 = vld [vmem:[%s1042 + $0x2d2] sm:$0xff]
    %v5632 = vld [vmem:[%s1042 + $0x2da] sm:$0xff]
    %v5633 = vld [vmem:[%s1042 + $0x2ea] sm:$0xff]
    %v5634 = vld [vmem:[%s1042 + $0x2f2] sm:$0xff]
    %v5635 = vld [vmem:[%s1042 + $0x302] sm:$0xff]
    %v5636 = vld [vmem:[%s1042 + $0x30a] sm:$0xff]
    %v5637 = vld [vmem:[%s1042 + $0x31a] sm:$0xff]
    %v5638 = vld [vmem:[%s1042 + $0x322] sm:$0xff]
    %5639 = vst [vmem:[#allocation3 + $0x40] sm:$0xff] %v5575
    %5640 = vst [vmem:[#allocation3 + $0x88] sm:$0xff] %v5576
    %5641 = vst [vmem:[#allocation3 + $0xd0] sm:$0xff] %v5577
    %5642 = vst [vmem:[#allocation3 + $0x118] sm:$0xff] %v5578
    %5643 = vst [vmem:[#allocation3 + $0x160] sm:$0xff] %v5579
    %5644 = vst [vmem:[#allocation3 + $0x1a8] sm:$0xff] %v5580
    %5645 = vst [vmem:[#allocation3 + $0x1f0] sm:$0xff] %v5581
    %5646 = vst [vmem:[#allocation3 + $0x238] sm:$0xff] %v5582
    %5647 = vst [vmem:[#allocation3 + $0x280] sm:$0xff] %v5583
    %5648 = vst [vmem:[#allocation3 + $0x2c8] sm:$0xff] %v5584
    %5649 = vst [vmem:[#allocation3 + $0x310] sm:$0xff] %v5585
    %5650 = vst [vmem:[#allocation3 + $0x358] sm:$0xff] %v5586
    %5651 = vst [vmem:[#allocation3 + $0x3a0] sm:$0xff] %v5587
    %5652 = vst [vmem:[#allocation3 + $0x3e8] sm:$0xff] %v5588
    %5653 = vst [vmem:[#allocation3 + $0x430] sm:$0xff] %v5589
    %5654 = vst [vmem:[#allocation3 + $0x478] sm:$0xff] %v5590
    %5655 = vst [vmem:[#allocation3 + $0x4c0] sm:$0xff] %v5591
    %5656 = vst [vmem:[#allocation3 + $0x508] sm:$0xff] %v5592
    %5657 = vst [vmem:[#allocation3 + $0x550] sm:$0xff] %v5593
    %5658 = vst [vmem:[#allocation3 + $0x598] sm:$0xff] %v5594
    %5659 = vst [vmem:[#allocation3 + $0x5e0] sm:$0xff] %v5595
    %5660 = vst [vmem:[#allocation3 + $0x628] sm:$0xff] %v5596
    %5661 = vst [vmem:[#allocation3 + $0x670] sm:$0xff] %v5597
    %5662 = vst [vmem:[#allocation3 + $0x6b8] sm:$0xff] %v5598
    %5663 = vst [vmem:[#allocation3 + $0x700] sm:$0xff] %v5599
    %5664 = vst [vmem:[#allocation3 + $0x748] sm:$0xff] %v5600
    %5665 = vst [vmem:[#allocation3 + $0x790] sm:$0xff] %v5601
    %5666 = vst [vmem:[#allocation3 + $0x7d8] sm:$0xff] %v5602
    %5667 = vst [vmem:[#allocation3 + $0x820] sm:$0xff] %v5603
    %5668 = vst [vmem:[#allocation3 + $0x868] sm:$0xff] %v5604
    %5669 = vst [vmem:[#allocation3 + $0x8b0] sm:$0xff] %v5605
    %5670 = vst [vmem:[#allocation3 + $0x8f8] sm:$0xff] %v5606
    %5671 = vst [vmem:[#allocation3 + $0x940] sm:$0xff] %v5607
    %5672 = vst [vmem:[#allocation3 + $0x988] sm:$0xff] %v5608
    %5673 = vst [vmem:[#allocation3 + $0x9d0] sm:$0xff] %v5609
    %5674 = vst [vmem:[#allocation3 + $0xa18] sm:$0xff] %v5610
    %5675 = vst [vmem:[#allocation3 + $0xa60] sm:$0xff] %v5611
    %5676 = vst [vmem:[#allocation3 + $0xaa8] sm:$0xff] %v5612
    %5677 = vst [vmem:[#allocation3 + $0xaf0] sm:$0xff] %v5613
    %5678 = vst [vmem:[#allocation3 + $0xb38] sm:$0xff] %v5614
    %5679 = vst [vmem:[#allocation3 + $0xb80] sm:$0xff] %v5615
    %5680 = vst [vmem:[#allocation3 + $0xbc8] sm:$0xff] %v5616
    %5681 = vst [vmem:[#allocation3 + $0xc10] sm:$0xff] %v5617
    %5682 = vst [vmem:[#allocation3 + $0xc58] sm:$0xff] %v5618
    %5683 = vst [vmem:[#allocation3 + $0xca0] sm:$0xff] %v5619
    %5684 = vst [vmem:[#allocation3 + $0xce8] sm:$0xff] %v5620
    %5685 = vst [vmem:[#allocation3 + $0xd30] sm:$0xff] %v5621
    %5686 = vst [vmem:[#allocation3 + $0xd78] sm:$0xff] %v5622
    %5687 = vst [vmem:[#allocation3 + $0xdc0] sm:$0xff] %v5623
    %5688 = vst [vmem:[#allocation3 + $0xe08] sm:$0xff] %v5624
    %5689 = vst [vmem:[#allocation3 + $0xe50] sm:$0xff] %v5625
    %5690 = vst [vmem:[#allocation3 + $0xe98] sm:$0xff] %v5626
    %5691 = vst [vmem:[#allocation3 + $0xee0] sm:$0xff] %v5627
    %5692 = vst [vmem:[#allocation3 + $0xf28] sm:$0xff] %v5628
    %5693 = vst [vmem:[#allocation3 + $0xf70] sm:$0xff] %v5629
    %5694 = vst [vmem:[#allocation3 + $0xfb8] sm:$0xff] %v5630
    %5695 = vst [vmem:[#allocation3 + $0x1000] sm:$0xff] %v5631
    %5696 = vst [vmem:[#allocation3 + $0x1048] sm:$0xff] %v5632
    %5697 = vst [vmem:[#allocation3 + $0x1090] sm:$0xff] %v5633
    %5698 = vst [vmem:[#allocation3 + $0x10d8] sm:$0xff] %v5634
    %5699 = vst [vmem:[#allocation3 + $0x1120] sm:$0xff] %v5635
    %5700 = vst [vmem:[#allocation3 + $0x1168] sm:$0xff] %v5636
    %5701 = vst [vmem:[#allocation3 + $0x11b0] sm:$0xff] %v5637
    %5702 = vst [vmem:[#allocation3 + $0x11f8] sm:$0xff] %v5638
    %v5703 = vld [vmem:[#allocation3] sm:$0xff]
    %v5704 = vld [vmem:[#allocation3 + $0x8] sm:$0xff]
    %v5705 = vld [vmem:[#allocation3 + $0x10] sm:$0xff]
    %v5706 = vld [vmem:[#allocation3 + $0x18] sm:$0xff]
    %v5707 = vld [vmem:[#allocation3 + $0x20] sm:$0xff]
    %v5708 = vld [vmem:[#allocation3 + $0x28] sm:$0xff]
    %v5709 = vld [vmem:[#allocation3 + $0x30] sm:$0xff]
    %v5710 = vld [vmem:[#allocation3 + $0x38] sm:$0xff]
    %v5711 = vld [vmem:[#allocation3 + $0x40] sm:$0xff]
    %v5712 = vld [vmem:[#allocation3 + $0x48] sm:$0xff]
    %v5713 = vld [vmem:[#allocation3 + $0x50] sm:$0xff]
    %v5714 = vld [vmem:[#allocation3 + $0x58] sm:$0xff]
    %v5715 = vld [vmem:[#allocation3 + $0x60] sm:$0xff]
    %v5716 = vld [vmem:[#allocation3 + $0x68] sm:$0xff]
    %v5717 = vld [vmem:[#allocation3 + $0x70] sm:$0xff]
    %v5718 = vld [vmem:[#allocation3 + $0x78] sm:$0xff]
    %v5719 = vld [vmem:[#allocation3 + $0x80] sm:$0xff]
    %v5720 = vld [vmem:[#allocation3 + $0x88] sm:$0xff]
    %v5721 = vld [vmem:[#allocation3 + $0x90] sm:$0xff]
    %v5722 = vld [vmem:[#allocation3 + $0x98] sm:$0xff]
    %v5723 = vld [vmem:[#allocation3 + $0xa0] sm:$0xff]
    %v5724 = vld [vmem:[#allocation3 + $0xa8] sm:$0xff]
    %v5725 = vld [vmem:[#allocation3 + $0xb0] sm:$0xff]
    %v5726 = vld [vmem:[#allocation3 + $0xb8] sm:$0xff]
    %v5727 = vld [vmem:[#allocation3 + $0xc0] sm:$0xff]
    %v5728 = vld [vmem:[#allocation3 + $0xc8] sm:$0xff]
    %v5729 = vld [vmem:[#allocation3 + $0xd0] sm:$0xff]
    %v5730 = vld [vmem:[#allocation3 + $0xd8] sm:$0xff]
    %v5731 = vld [vmem:[#allocation3 + $0xe0] sm:$0xff]
    %v5732 = vld [vmem:[#allocation3 + $0xe8] sm:$0xff]
    %v5733 = vld [vmem:[#allocation3 + $0xf0] sm:$0xff]
    %v5734 = vld [vmem:[#allocation3 + $0xf8] sm:$0xff]
    %v5735 = vld [vmem:[#allocation3 + $0x100] sm:$0xff]
    %v5736 = vld [vmem:[#allocation3 + $0x108] sm:$0xff]
    %v5737 = vld [vmem:[#allocation3 + $0x110] sm:$0xff]
    %v5738 = vld [vmem:[#allocation3 + $0x118] sm:$0xff]
    %v5739 = vld [vmem:[#allocation3 + $0x120] sm:$0xff]
    %v5740 = vld [vmem:[#allocation3 + $0x128] sm:$0xff]
    %v5741 = vld [vmem:[#allocation3 + $0x130] sm:$0xff]
    %v5742 = vld [vmem:[#allocation3 + $0x138] sm:$0xff]
    %v5743 = vld [vmem:[#allocation3 + $0x140] sm:$0xff]
    %v5744 = vld [vmem:[#allocation3 + $0x148] sm:$0xff]
    %v5745 = vld [vmem:[#allocation3 + $0x150] sm:$0xff]
    %v5746 = vld [vmem:[#allocation3 + $0x158] sm:$0xff]
    %v5747 = vld [vmem:[#allocation3 + $0x160] sm:$0xff]
    %v5748 = vld [vmem:[#allocation3 + $0x168] sm:$0xff]
    %v5749 = vld [vmem:[#allocation3 + $0x170] sm:$0xff]
    %v5750 = vld [vmem:[#allocation3 + $0x178] sm:$0xff]
    %v5751 = vld [vmem:[#allocation3 + $0x180] sm:$0xff]
    %v5752 = vld [vmem:[#allocation3 + $0x188] sm:$0xff]
    %v5753 = vld [vmem:[#allocation3 + $0x190] sm:$0xff]
    %v5754 = vld [vmem:[#allocation3 + $0x198] sm:$0xff]
    %v5755 = vld [vmem:[#allocation3 + $0x1a0] sm:$0xff]
    %v5756 = vld [vmem:[#allocation3 + $0x1a8] sm:$0xff]
    %v5757 = vld [vmem:[#allocation3 + $0x1b0] sm:$0xff]
    %v5758 = vld [vmem:[#allocation3 + $0x1b8] sm:$0xff]
    %v5759 = vld [vmem:[#allocation3 + $0x1c0] sm:$0xff]
    %v5760 = vld [vmem:[#allocation3 + $0x1c8] sm:$0xff]
    %v5761 = vld [vmem:[#allocation3 + $0x1d0] sm:$0xff]
    %v5762 = vld [vmem:[#allocation3 + $0x1d8] sm:$0xff]
    %v5763 = vld [vmem:[#allocation3 + $0x1e0] sm:$0xff]
    %v5764 = vld [vmem:[#allocation3 + $0x1e8] sm:$0xff]
    %v5765 = vld [vmem:[#allocation3 + $0x1f0] sm:$0xff]
    %v5766 = vld [vmem:[#allocation3 + $0x1f8] sm:$0xff]
    %v5767 = vld [vmem:[#allocation3 + $0x200] sm:$0xff]
    %v5768 = vld [vmem:[#allocation3 + $0x208] sm:$0xff]
    %v5769 = vld [vmem:[#allocation3 + $0x210] sm:$0xff]
    %v5770 = vld [vmem:[#allocation3 + $0x218] sm:$0xff]
    %v5771 = vld [vmem:[#allocation3 + $0x220] sm:$0xff]
    %v5772 = vld [vmem:[#allocation3 + $0x228] sm:$0xff]
    %v5773 = vld [vmem:[#allocation3 + $0x230] sm:$0xff]
    %v5774 = vld [vmem:[#allocation3 + $0x238] sm:$0xff]
    %v5775 = vld [vmem:[#allocation3 + $0x240] sm:$0xff]
    %v5776 = vld [vmem:[#allocation3 + $0x248] sm:$0xff]
    %v5777 = vld [vmem:[#allocation3 + $0x250] sm:$0xff]
    %v5778 = vld [vmem:[#allocation3 + $0x258] sm:$0xff]
    %v5779 = vld [vmem:[#allocation3 + $0x260] sm:$0xff]
    %v5780 = vld [vmem:[#allocation3 + $0x268] sm:$0xff]
    %v5781 = vld [vmem:[#allocation3 + $0x270] sm:$0xff]
    %v5782 = vld [vmem:[#allocation3 + $0x278] sm:$0xff]
    %v5783 = vld [vmem:[#allocation3 + $0x280] sm:$0xff]
    %v5784 = vld [vmem:[#allocation3 + $0x288] sm:$0xff]
    %v5785 = vld [vmem:[#allocation3 + $0x290] sm:$0xff]
    %v5786 = vld [vmem:[#allocation3 + $0x298] sm:$0xff]
    %v5787 = vld [vmem:[#allocation3 + $0x2a0] sm:$0xff]
    %v5788 = vld [vmem:[#allocation3 + $0x2a8] sm:$0xff]
    %v5789 = vld [vmem:[#allocation3 + $0x2b0] sm:$0xff]
    %v5790 = vld [vmem:[#allocation3 + $0x2b8] sm:$0xff]
    %v5791 = vld [vmem:[#allocation3 + $0x2c0] sm:$0xff]
    %v5792 = vld [vmem:[#allocation3 + $0x2c8] sm:$0xff]
    %v5793 = vld [vmem:[#allocation3 + $0x2d0] sm:$0xff]
    %v5794 = vld [vmem:[#allocation3 + $0x2d8] sm:$0xff]
    %v5795 = vld [vmem:[#allocation3 + $0x2e0] sm:$0xff]
    %v5796 = vld [vmem:[#allocation3 + $0x2e8] sm:$0xff]
    %v5797 = vld [vmem:[#allocation3 + $0x2f0] sm:$0xff]
    %v5798 = vld [vmem:[#allocation3 + $0x2f8] sm:$0xff]
    %v5799 = vld [vmem:[#allocation3 + $0x300] sm:$0xff]
    %v5800 = vld [vmem:[#allocation3 + $0x308] sm:$0xff]
    %v5801 = vld [vmem:[#allocation3 + $0x310] sm:$0xff]
    %v5802 = vld [vmem:[#allocation3 + $0x318] sm:$0xff]
    %v5803 = vld [vmem:[#allocation3 + $0x320] sm:$0xff]
    %v5804 = vld [vmem:[#allocation3 + $0x328] sm:$0xff]
    %v5805 = vld [vmem:[#allocation3 + $0x330] sm:$0xff]
    %v5806 = vld [vmem:[#allocation3 + $0x338] sm:$0xff]
    %v5807 = vld [vmem:[#allocation3 + $0x340] sm:$0xff]
    %v5808 = vld [vmem:[#allocation3 + $0x348] sm:$0xff]
    %v5809 = vld [vmem:[#allocation3 + $0x350] sm:$0xff]
    %v5810 = vld [vmem:[#allocation3 + $0x358] sm:$0xff]
    %v5811 = vld [vmem:[#allocation3 + $0x360] sm:$0xff]
    %v5812 = vld [vmem:[#allocation3 + $0x368] sm:$0xff]
    %v5813 = vld [vmem:[#allocation3 + $0x370] sm:$0xff]
    %v5814 = vld [vmem:[#allocation3 + $0x378] sm:$0xff]
    %v5815 = vld [vmem:[#allocation3 + $0x380] sm:$0xff]
    %v5816 = vld [vmem:[#allocation3 + $0x388] sm:$0xff]
    %v5817 = vld [vmem:[#allocation3 + $0x390] sm:$0xff]
    %v5818 = vld [vmem:[#allocation3 + $0x398] sm:$0xff]
    %v5819 = vld [vmem:[#allocation3 + $0x3a0] sm:$0xff]
    %v5820 = vld [vmem:[#allocation3 + $0x3a8] sm:$0xff]
    %v5821 = vld [vmem:[#allocation3 + $0x3b0] sm:$0xff]
    %v5822 = vld [vmem:[#allocation3 + $0x3b8] sm:$0xff]
    %v5823 = vld [vmem:[#allocation3 + $0x3c0] sm:$0xff]
    %v5824 = vld [vmem:[#allocation3 + $0x3c8] sm:$0xff]
    %v5825 = vld [vmem:[#allocation3 + $0x3d0] sm:$0xff]
    %v5826 = vld [vmem:[#allocation3 + $0x3d8] sm:$0xff]
    %v5827 = vld [vmem:[#allocation3 + $0x3e0] sm:$0xff]
    %v5828 = vld [vmem:[#allocation3 + $0x3e8] sm:$0xff]
    %v5829 = vld [vmem:[#allocation3 + $0x3f0] sm:$0xff]
    %v5830 = vld [vmem:[#allocation3 + $0x3f8] sm:$0xff]
    %v5831 = vld [vmem:[#allocation3 + $0x400] sm:$0xff]
    %v5832 = vld [vmem:[#allocation3 + $0x408] sm:$0xff]
    %v5833 = vld [vmem:[#allocation3 + $0x410] sm:$0xff]
    %v5834 = vld [vmem:[#allocation3 + $0x418] sm:$0xff]
    %v5835 = vld [vmem:[#allocation3 + $0x420] sm:$0xff]
    %v5836 = vld [vmem:[#allocation3 + $0x428] sm:$0xff]
    %v5837 = vld [vmem:[#allocation3 + $0x430] sm:$0xff]
    %v5838 = vld [vmem:[#allocation3 + $0x438] sm:$0xff]
    %v5839 = vld [vmem:[#allocation3 + $0x440] sm:$0xff]
    %v5840 = vld [vmem:[#allocation3 + $0x448] sm:$0xff]
    %v5841 = vld [vmem:[#allocation3 + $0x450] sm:$0xff]
    %v5842 = vld [vmem:[#allocation3 + $0x458] sm:$0xff]
    %v5843 = vld [vmem:[#allocation3 + $0x460] sm:$0xff]
    %v5844 = vld [vmem:[#allocation3 + $0x468] sm:$0xff]
    %v5845 = vld [vmem:[#allocation3 + $0x470] sm:$0xff]
    %v5846 = vld [vmem:[#allocation3 + $0x478] sm:$0xff]
    %v5847 = vld [vmem:[#allocation3 + $0x480] sm:$0xff]
    %v5848 = vld [vmem:[#allocation3 + $0x488] sm:$0xff]
    %v5849 = vld [vmem:[#allocation3 + $0x490] sm:$0xff]
    %v5850 = vld [vmem:[#allocation3 + $0x498] sm:$0xff]
    %v5851 = vld [vmem:[#allocation3 + $0x4a0] sm:$0xff]
    %v5852 = vld [vmem:[#allocation3 + $0x4a8] sm:$0xff]
    %v5853 = vld [vmem:[#allocation3 + $0x4b0] sm:$0xff]
    %v5854 = vld [vmem:[#allocation3 + $0x4b8] sm:$0xff]
    %v5855 = vld [vmem:[#allocation3 + $0x4c0] sm:$0xff]
    %v5856 = vld [vmem:[#allocation3 + $0x4c8] sm:$0xff]
    %v5857 = vld [vmem:[#allocation3 + $0x4d0] sm:$0xff]
    %v5858 = vld [vmem:[#allocation3 + $0x4d8] sm:$0xff]
    %v5859 = vld [vmem:[#allocation3 + $0x4e0] sm:$0xff]
    %v5860 = vld [vmem:[#allocation3 + $0x4e8] sm:$0xff]
    %v5861 = vld [vmem:[#allocation3 + $0x4f0] sm:$0xff]
    %v5862 = vld [vmem:[#allocation3 + $0x4f8] sm:$0xff]
    %v5863 = vld [vmem:[#allocation3 + $0x500] sm:$0xff]
    %v5864 = vld [vmem:[#allocation3 + $0x508] sm:$0xff]
    %v5865 = vld [vmem:[#allocation3 + $0x510] sm:$0xff]
    %v5866 = vld [vmem:[#allocation3 + $0x518] sm:$0xff]
    %v5867 = vld [vmem:[#allocation3 + $0x520] sm:$0xff]
    %v5868 = vld [vmem:[#allocation3 + $0x528] sm:$0xff]
    %v5869 = vld [vmem:[#allocation3 + $0x530] sm:$0xff]
    %v5870 = vld [vmem:[#allocation3 + $0x538] sm:$0xff]
    %v5871 = vld [vmem:[#allocation3 + $0x540] sm:$0xff]
    %v5872 = vld [vmem:[#allocation3 + $0x548] sm:$0xff]
    %v5873 = vld [vmem:[#allocation3 + $0x550] sm:$0xff]
    %v5874 = vld [vmem:[#allocation3 + $0x558] sm:$0xff]
    %v5875 = vld [vmem:[#allocation3 + $0x560] sm:$0xff]
    %v5876 = vld [vmem:[#allocation3 + $0x568] sm:$0xff]
    %v5877 = vld [vmem:[#allocation3 + $0x570] sm:$0xff]
    %v5878 = vld [vmem:[#allocation3 + $0x578] sm:$0xff]
    %v5879 = vld [vmem:[#allocation3 + $0x580] sm:$0xff]
    %v5880 = vld [vmem:[#allocation3 + $0x588] sm:$0xff]
    %v5881 = vld [vmem:[#allocation3 + $0x590] sm:$0xff]
    %v5882 = vld [vmem:[#allocation3 + $0x598] sm:$0xff]
    %v5883 = vld [vmem:[#allocation3 + $0x5a0] sm:$0xff]
    %v5884 = vld [vmem:[#allocation3 + $0x5a8] sm:$0xff]
    %v5885 = vld [vmem:[#allocation3 + $0x5b0] sm:$0xff]
    %v5886 = vld [vmem:[#allocation3 + $0x5b8] sm:$0xff]
    %v5887 = vld [vmem:[#allocation3 + $0x5c0] sm:$0xff]
    %v5888 = vld [vmem:[#allocation3 + $0x5c8] sm:$0xff]
    %v5889 = vld [vmem:[#allocation3 + $0x5d0] sm:$0xff]
    %v5890 = vld [vmem:[#allocation3 + $0x5d8] sm:$0xff]
    %v5891 = vld [vmem:[#allocation3 + $0x5e0] sm:$0xff]
    %v5892 = vld [vmem:[#allocation3 + $0x5e8] sm:$0xff]
    %v5893 = vld [vmem:[#allocation3 + $0x5f0] sm:$0xff]
    %v5894 = vld [vmem:[#allocation3 + $0x5f8] sm:$0xff]
    %v5895 = vld [vmem:[#allocation3 + $0x600] sm:$0xff]
    %v5896 = vld [vmem:[#allocation3 + $0x608] sm:$0xff]
    %v5897 = vld [vmem:[#allocation3 + $0x610] sm:$0xff]
    %v5898 = vld [vmem:[#allocation3 + $0x618] sm:$0xff]
    %v5899 = vld [vmem:[#allocation3 + $0x620] sm:$0xff]
    %v5900 = vld [vmem:[#allocation3 + $0x628] sm:$0xff]
    %v5901 = vld [vmem:[#allocation3 + $0x630] sm:$0xff]
    %v5902 = vld [vmem:[#allocation3 + $0x638] sm:$0xff]
    %v5903 = vld [vmem:[#allocation3 + $0x640] sm:$0xff]
    %v5904 = vld [vmem:[#allocation3 + $0x648] sm:$0xff]
    %v5905 = vld [vmem:[#allocation3 + $0x650] sm:$0xff]
    %v5906 = vld [vmem:[#allocation3 + $0x658] sm:$0xff]
    %v5907 = vld [vmem:[#allocation3 + $0x660] sm:$0xff]
    %v5908 = vld [vmem:[#allocation3 + $0x668] sm:$0xff]
    %v5909 = vld [vmem:[#allocation3 + $0x670] sm:$0xff]
    %v5910 = vld [vmem:[#allocation3 + $0x678] sm:$0xff]
    %v5911 = vld [vmem:[#allocation3 + $0x680] sm:$0xff]
    %v5912 = vld [vmem:[#allocation3 + $0x688] sm:$0xff]
    %v5913 = vld [vmem:[#allocation3 + $0x690] sm:$0xff]
    %v5914 = vld [vmem:[#allocation3 + $0x698] sm:$0xff]
    %v5915 = vld [vmem:[#allocation3 + $0x6a0] sm:$0xff]
    %v5916 = vld [vmem:[#allocation3 + $0x6a8] sm:$0xff]
    %v5917 = vld [vmem:[#allocation3 + $0x6b0] sm:$0xff]
    %v5918 = vld [vmem:[#allocation3 + $0x6b8] sm:$0xff]
    %v5919 = vld [vmem:[#allocation3 + $0x6c0] sm:$0xff]
    %v5920 = vld [vmem:[#allocation3 + $0x6c8] sm:$0xff]
    %v5921 = vld [vmem:[#allocation3 + $0x6d0] sm:$0xff]
    %v5922 = vld [vmem:[#allocation3 + $0x6d8] sm:$0xff]
    %v5923 = vld [vmem:[#allocation3 + $0x6e0] sm:$0xff]
    %v5924 = vld [vmem:[#allocation3 + $0x6e8] sm:$0xff]
    %v5925 = vld [vmem:[#allocation3 + $0x6f0] sm:$0xff]
    %v5926 = vld [vmem:[#allocation3 + $0x6f8] sm:$0xff]
    %v5927 = vld [vmem:[#allocation3 + $0x700] sm:$0xff]
    %v5928 = vld [vmem:[#allocation3 + $0x708] sm:$0xff]
    %v5929 = vld [vmem:[#allocation3 + $0x710] sm:$0xff]
    %v5930 = vld [vmem:[#allocation3 + $0x718] sm:$0xff]
    %v5931 = vld [vmem:[#allocation3 + $0x720] sm:$0xff]
    %v5932 = vld [vmem:[#allocation3 + $0x728] sm:$0xff]
    %v5933 = vld [vmem:[#allocation3 + $0x730] sm:$0xff]
    %v5934 = vld [vmem:[#allocation3 + $0x738] sm:$0xff]
    %v5935 = vld [vmem:[#allocation3 + $0x740] sm:$0xff]
    %v5936 = vld [vmem:[#allocation3 + $0x748] sm:$0xff]
    %v5937 = vld [vmem:[#allocation3 + $0x750] sm:$0xff]
    %v5938 = vld [vmem:[#allocation3 + $0x758] sm:$0xff]
    %v5939 = vld [vmem:[#allocation3 + $0x760] sm:$0xff]
    %v5940 = vld [vmem:[#allocation3 + $0x768] sm:$0xff]
    %v5941 = vld [vmem:[#allocation3 + $0x770] sm:$0xff]
    %v5942 = vld [vmem:[#allocation3 + $0x778] sm:$0xff]
    %v5943 = vld [vmem:[#allocation3 + $0x780] sm:$0xff]
    %v5944 = vld [vmem:[#allocation3 + $0x788] sm:$0xff]
    %v5945 = vld [vmem:[#allocation3 + $0x790] sm:$0xff]
    %v5946 = vld [vmem:[#allocation3 + $0x798] sm:$0xff]
    %v5947 = vld [vmem:[#allocation3 + $0x7a0] sm:$0xff]
    %v5948 = vld [vmem:[#allocation3 + $0x7a8] sm:$0xff]
    %v5949 = vld [vmem:[#allocation3 + $0x7b0] sm:$0xff]
    %v5950 = vld [vmem:[#allocation3 + $0x7b8] sm:$0xff]
    %v5951 = vld [vmem:[#allocation3 + $0x7c0] sm:$0xff]
    %v5952 = vld [vmem:[#allocation3 + $0x7c8] sm:$0xff]
    %v5953 = vld [vmem:[#allocation3 + $0x7d0] sm:$0xff]
    %v5954 = vld [vmem:[#allocation3 + $0x7d8] sm:$0xff]
    %v5955 = vld [vmem:[#allocation3 + $0x7e0] sm:$0xff]
    %v5956 = vld [vmem:[#allocation3 + $0x7e8] sm:$0xff]
    %v5957 = vld [vmem:[#allocation3 + $0x7f0] sm:$0xff]
    %v5958 = vld [vmem:[#allocation3 + $0x7f8] sm:$0xff]
    %v5959 = vld [vmem:[#allocation3 + $0x800] sm:$0xff]
    %v5960 = vld [vmem:[#allocation3 + $0x808] sm:$0xff]
    %v5961 = vld [vmem:[#allocation3 + $0x810] sm:$0xff]
    %v5962 = vld [vmem:[#allocation3 + $0x818] sm:$0xff]
    %v5963 = vld [vmem:[#allocation3 + $0x820] sm:$0xff]
    %v5964 = vld [vmem:[#allocation3 + $0x828] sm:$0xff]
    %v5965 = vld [vmem:[#allocation3 + $0x830] sm:$0xff]
    %v5966 = vld [vmem:[#allocation3 + $0x838] sm:$0xff]
    %v5967 = vld [vmem:[#allocation3 + $0x840] sm:$0xff]
    %v5968 = vld [vmem:[#allocation3 + $0x848] sm:$0xff]
    %v5969 = vld [vmem:[#allocation3 + $0x850] sm:$0xff]
    %v5970 = vld [vmem:[#allocation3 + $0x858] sm:$0xff]
    %v5971 = vld [vmem:[#allocation3 + $0x860] sm:$0xff]
    %v5972 = vld [vmem:[#allocation3 + $0x868] sm:$0xff]
    %v5973 = vld [vmem:[#allocation3 + $0x870] sm:$0xff]
    %v5974 = vld [vmem:[#allocation3 + $0x878] sm:$0xff]
    %v5975 = vld [vmem:[#allocation3 + $0x880] sm:$0xff]
    %v5976 = vld [vmem:[#allocation3 + $0x888] sm:$0xff]
    %v5977 = vld [vmem:[#allocation3 + $0x890] sm:$0xff]
    %v5978 = vld [vmem:[#allocation3 + $0x898] sm:$0xff]
    %v5979 = vld [vmem:[#allocation3 + $0x8a0] sm:$0xff]
    %v5980 = vld [vmem:[#allocation3 + $0x8a8] sm:$0xff]
    %v5981 = vld [vmem:[#allocation3 + $0x8b0] sm:$0xff]
    %v5982 = vld [vmem:[#allocation3 + $0x8b8] sm:$0xff]
    %v5983 = vld [vmem:[#allocation3 + $0x8c0] sm:$0xff]
    %v5984 = vld [vmem:[#allocation3 + $0x8c8] sm:$0xff]
    %v5985 = vld [vmem:[#allocation3 + $0x8d0] sm:$0xff]
    %v5986 = vld [vmem:[#allocation3 + $0x8d8] sm:$0xff]
    %v5987 = vld [vmem:[#allocation3 + $0x8e0] sm:$0xff]
    %v5988 = vld [vmem:[#allocation3 + $0x8e8] sm:$0xff]
    %v5989 = vld [vmem:[#allocation3 + $0x8f0] sm:$0xff]
    %v5990 = vld [vmem:[#allocation3 + $0x8f8] sm:$0xff]
    %v5991 = vld [vmem:[#allocation3 + $0x900] sm:$0xff]
    %v5992 = vld [vmem:[#allocation3 + $0x908] sm:$0xff]
    %v5993 = vld [vmem:[#allocation3 + $0x910] sm:$0xff]
    %v5994 = vld [vmem:[#allocation3 + $0x918] sm:$0xff]
    %v5995 = vld [vmem:[#allocation3 + $0x920] sm:$0xff]
    %v5996 = vld [vmem:[#allocation3 + $0x928] sm:$0xff]
    %v5997 = vld [vmem:[#allocation3 + $0x930] sm:$0xff]
    %v5998 = vld [vmem:[#allocation3 + $0x938] sm:$0xff]
    %v5999 = vld [vmem:[#allocation3 + $0x940] sm:$0xff]
    %v6000 = vld [vmem:[#allocation3 + $0x948] sm:$0xff]
    %v6001 = vld [vmem:[#allocation3 + $0x950] sm:$0xff]
    %v6002 = vld [vmem:[#allocation3 + $0x958] sm:$0xff]
    %v6003 = vld [vmem:[#allocation3 + $0x960] sm:$0xff]
    %v6004 = vld [vmem:[#allocation3 + $0x968] sm:$0xff]
    %v6005 = vld [vmem:[#allocation3 + $0x970] sm:$0xff]
    %v6006 = vld [vmem:[#allocation3 + $0x978] sm:$0xff]
    %v6007 = vld [vmem:[#allocation3 + $0x980] sm:$0xff]
    %v6008 = vld [vmem:[#allocation3 + $0x988] sm:$0xff]
    %v6009 = vld [vmem:[#allocation3 + $0x990] sm:$0xff]
    %v6010 = vld [vmem:[#allocation3 + $0x998] sm:$0xff]
    %v6011 = vld [vmem:[#allocation3 + $0x9a0] sm:$0xff]
    %v6012 = vld [vmem:[#allocation3 + $0x9a8] sm:$0xff]
    %v6013 = vld [vmem:[#allocation3 + $0x9b0] sm:$0xff]
    %v6014 = vld [vmem:[#allocation3 + $0x9b8] sm:$0xff]
    %v6015 = vld [vmem:[#allocation3 + $0x9c0] sm:$0xff]
    %v6016 = vld [vmem:[#allocation3 + $0x9c8] sm:$0xff]
    %v6017 = vld [vmem:[#allocation3 + $0x9d0] sm:$0xff]
    %v6018 = vld [vmem:[#allocation3 + $0x9d8] sm:$0xff]
    %v6019 = vld [vmem:[#allocation3 + $0x9e0] sm:$0xff]
    %v6020 = vld [vmem:[#allocation3 + $0x9e8] sm:$0xff]
    %v6021 = vld [vmem:[#allocation3 + $0x9f0] sm:$0xff]
    %v6022 = vld [vmem:[#allocation3 + $0x9f8] sm:$0xff]
    %v6023 = vld [vmem:[#allocation3 + $0xa00] sm:$0xff]
    %v6024 = vld [vmem:[#allocation3 + $0xa08] sm:$0xff]
    %v6025 = vld [vmem:[#allocation3 + $0xa10] sm:$0xff]
    %v6026 = vld [vmem:[#allocation3 + $0xa18] sm:$0xff]
    %v6027 = vld [vmem:[#allocation3 + $0xa20] sm:$0xff]
    %v6028 = vld [vmem:[#allocation3 + $0xa28] sm:$0xff]
    %v6029 = vld [vmem:[#allocation3 + $0xa30] sm:$0xff]
    %v6030 = vld [vmem:[#allocation3 + $0xa38] sm:$0xff]
    %v6031 = vld [vmem:[#allocation3 + $0xa40] sm:$0xff]
    %v6032 = vld [vmem:[#allocation3 + $0xa48] sm:$0xff]
    %v6033 = vld [vmem:[#allocation3 + $0xa50] sm:$0xff]
    %v6034 = vld [vmem:[#allocation3 + $0xa58] sm:$0xff]
    %v6035 = vld [vmem:[#allocation3 + $0xa60] sm:$0xff]
    %v6036 = vld [vmem:[#allocation3 + $0xa68] sm:$0xff]
    %v6037 = vld [vmem:[#allocation3 + $0xa70] sm:$0xff]
    %v6038 = vld [vmem:[#allocation3 + $0xa78] sm:$0xff]
    %v6039 = vld [vmem:[#allocation3 + $0xa80] sm:$0xff]
    %v6040 = vld [vmem:[#allocation3 + $0xa88] sm:$0xff]
    %v6041 = vld [vmem:[#allocation3 + $0xa90] sm:$0xff]
    %v6042 = vld [vmem:[#allocation3 + $0xa98] sm:$0xff]
    %v6043 = vld [vmem:[#allocation3 + $0xaa0] sm:$0xff]
    %v6044 = vld [vmem:[#allocation3 + $0xaa8] sm:$0xff]
    %v6045 = vld [vmem:[#allocation3 + $0xab0] sm:$0xff]
    %v6046 = vld [vmem:[#allocation3 + $0xab8] sm:$0xff]
    %v6047 = vld [vmem:[#allocation3 + $0xac0] sm:$0xff]
    %v6048 = vld [vmem:[#allocation3 + $0xac8] sm:$0xff]
    %v6049 = vld [vmem:[#allocation3 + $0xad0] sm:$0xff]
    %v6050 = vld [vmem:[#allocation3 + $0xad8] sm:$0xff]
    %v6051 = vld [vmem:[#allocation3 + $0xae0] sm:$0xff]
    %v6052 = vld [vmem:[#allocation3 + $0xae8] sm:$0xff]
    %v6053 = vld [vmem:[#allocation3 + $0xaf0] sm:$0xff]
    %v6054 = vld [vmem:[#allocation3 + $0xaf8] sm:$0xff]
    %v6055 = vld [vmem:[#allocation3 + $0xb00] sm:$0xff]
    %v6056 = vld [vmem:[#allocation3 + $0xb08] sm:$0xff]
    %v6057 = vld [vmem:[#allocation3 + $0xb10] sm:$0xff]
    %v6058 = vld [vmem:[#allocation3 + $0xb18] sm:$0xff]
    %v6059 = vld [vmem:[#allocation3 + $0xb20] sm:$0xff]
    %v6060 = vld [vmem:[#allocation3 + $0xb28] sm:$0xff]
    %v6061 = vld [vmem:[#allocation3 + $0xb30] sm:$0xff]
    %v6062 = vld [vmem:[#allocation3 + $0xb38] sm:$0xff]
    %v6063 = vld [vmem:[#allocation3 + $0xb40] sm:$0xff]
    %v6064 = vld [vmem:[#allocation3 + $0xb48] sm:$0xff]
    %v6065 = vld [vmem:[#allocation3 + $0xb50] sm:$0xff]
    %v6066 = vld [vmem:[#allocation3 + $0xb58] sm:$0xff]
    %v6067 = vld [vmem:[#allocation3 + $0xb60] sm:$0xff]
    %v6068 = vld [vmem:[#allocation3 + $0xb68] sm:$0xff]
    %v6069 = vld [vmem:[#allocation3 + $0xb70] sm:$0xff]
    %v6070 = vld [vmem:[#allocation3 + $0xb78] sm:$0xff]
    %v6071 = vld [vmem:[#allocation3 + $0xb80] sm:$0xff]
    %v6072 = vld [vmem:[#allocation3 + $0xb88] sm:$0xff]
    %v6073 = vld [vmem:[#allocation3 + $0xb90] sm:$0xff]
    %v6074 = vld [vmem:[#allocation3 + $0xb98] sm:$0xff]
    %v6075 = vld [vmem:[#allocation3 + $0xba0] sm:$0xff]
    %v6076 = vld [vmem:[#allocation3 + $0xba8] sm:$0xff]
    %v6077 = vld [vmem:[#allocation3 + $0xbb0] sm:$0xff]
    %v6078 = vld [vmem:[#allocation3 + $0xbb8] sm:$0xff]
    %v6079 = vld [vmem:[#allocation3 + $0xbc0] sm:$0xff]
    %v6080 = vld [vmem:[#allocation3 + $0xbc8] sm:$0xff]
    %v6081 = vld [vmem:[#allocation3 + $0xbd0] sm:$0xff]
    %v6082 = vld [vmem:[#allocation3 + $0xbd8] sm:$0xff]
    %v6083 = vld [vmem:[#allocation3 + $0xbe0] sm:$0xff]
    %v6084 = vld [vmem:[#allocation3 + $0xbe8] sm:$0xff]
    %v6085 = vld [vmem:[#allocation3 + $0xbf0] sm:$0xff]
    %v6086 = vld [vmem:[#allocation3 + $0xbf8] sm:$0xff]
    %v6087 = vld [vmem:[#allocation3 + $0xc00] sm:$0xff]
    %v6088 = vld [vmem:[#allocation3 + $0xc08] sm:$0xff]
    %v6089 = vld [vmem:[#allocation3 + $0xc10] sm:$0xff]
    %v6090 = vld [vmem:[#allocation3 + $0xc18] sm:$0xff]
    %v6091 = vld [vmem:[#allocation3 + $0xc20] sm:$0xff]
    %v6092 = vld [vmem:[#allocation3 + $0xc28] sm:$0xff]
    %v6093 = vld [vmem:[#allocation3 + $0xc30] sm:$0xff]
    %v6094 = vld [vmem:[#allocation3 + $0xc38] sm:$0xff]
    %v6095 = vld [vmem:[#allocation3 + $0xc40] sm:$0xff]
    %v6096 = vld [vmem:[#allocation3 + $0xc48] sm:$0xff]
    %v6097 = vld [vmem:[#allocation3 + $0xc50] sm:$0xff]
    %v6098 = vld [vmem:[#allocation3 + $0xc58] sm:$0xff]
    %v6099 = vld [vmem:[#allocation3 + $0xc60] sm:$0xff]
    %v6100 = vld [vmem:[#allocation3 + $0xc68] sm:$0xff]
    %v6101 = vld [vmem:[#allocation3 + $0xc70] sm:$0xff]
    %v6102 = vld [vmem:[#allocation3 + $0xc78] sm:$0xff]
    %v6103 = vld [vmem:[#allocation3 + $0xc80] sm:$0xff]
    %v6104 = vld [vmem:[#allocation3 + $0xc88] sm:$0xff]
    %v6105 = vld [vmem:[#allocation3 + $0xc90] sm:$0xff]
    %v6106 = vld [vmem:[#allocation3 + $0xc98] sm:$0xff]
    %v6107 = vld [vmem:[#allocation3 + $0xca0] sm:$0xff]
    %v6108 = vld [vmem:[#allocation3 + $0xca8] sm:$0xff]
    %v6109 = vld [vmem:[#allocation3 + $0xcb0] sm:$0xff]
    %v6110 = vld [vmem:[#allocation3 + $0xcb8] sm:$0xff]
    %v6111 = vld [vmem:[#allocation3 + $0xcc0] sm:$0xff]
    %v6112 = vld [vmem:[#allocation3 + $0xcc8] sm:$0xff]
    %v6113 = vld [vmem:[#allocation3 + $0xcd0] sm:$0xff]
    %v6114 = vld [vmem:[#allocation3 + $0xcd8] sm:$0xff]
    %v6115 = vld [vmem:[#allocation3 + $0xce0] sm:$0xff]
    %v6116 = vld [vmem:[#allocation3 + $0xce8] sm:$0xff]
    %v6117 = vld [vmem:[#allocation3 + $0xcf0] sm:$0xff]
    %v6118 = vld [vmem:[#allocation3 + $0xcf8] sm:$0xff]
    %v6119 = vld [vmem:[#allocation3 + $0xd00] sm:$0xff]
    %v6120 = vld [vmem:[#allocation3 + $0xd08] sm:$0xff]
    %v6121 = vld [vmem:[#allocation3 + $0xd10] sm:$0xff]
    %v6122 = vld [vmem:[#allocation3 + $0xd18] sm:$0xff]
    %v6123 = vld [vmem:[#allocation3 + $0xd20] sm:$0xff]
    %v6124 = vld [vmem:[#allocation3 + $0xd28] sm:$0xff]
    %v6125 = vld [vmem:[#allocation3 + $0xd30] sm:$0xff]
    %v6126 = vld [vmem:[#allocation3 + $0xd38] sm:$0xff]
    %v6127 = vld [vmem:[#allocation3 + $0xd40] sm:$0xff]
    %v6128 = vld [vmem:[#allocation3 + $0xd48] sm:$0xff]
    %v6129 = vld [vmem:[#allocation3 + $0xd50] sm:$0xff]
    %v6130 = vld [vmem:[#allocation3 + $0xd58] sm:$0xff]
    %v6131 = vld [vmem:[#allocation3 + $0xd60] sm:$0xff]
    %v6132 = vld [vmem:[#allocation3 + $0xd68] sm:$0xff]
    %v6133 = vld [vmem:[#allocation3 + $0xd70] sm:$0xff]
    %v6134 = vld [vmem:[#allocation3 + $0xd78] sm:$0xff]
    %v6135 = vld [vmem:[#allocation3 + $0xd80] sm:$0xff]
    %v6136 = vld [vmem:[#allocation3 + $0xd88] sm:$0xff]
    %v6137 = vld [vmem:[#allocation3 + $0xd90] sm:$0xff]
    %v6138 = vld [vmem:[#allocation3 + $0xd98] sm:$0xff]
    %v6139 = vld [vmem:[#allocation3 + $0xda0] sm:$0xff]
    %v6140 = vld [vmem:[#allocation3 + $0xda8] sm:$0xff]
    %v6141 = vld [vmem:[#allocation3 + $0xdb0] sm:$0xff]
    %v6142 = vld [vmem:[#allocation3 + $0xdb8] sm:$0xff]
    %v6143 = vld [vmem:[#allocation3 + $0xdc0] sm:$0xff]
    %v6144 = vld [vmem:[#allocation3 + $0xdc8] sm:$0xff]
    %v6145 = vld [vmem:[#allocation3 + $0xdd0] sm:$0xff]
    %v6146 = vld [vmem:[#allocation3 + $0xdd8] sm:$0xff]
    %v6147 = vld [vmem:[#allocation3 + $0xde0] sm:$0xff]
    %v6148 = vld [vmem:[#allocation3 + $0xde8] sm:$0xff]
    %v6149 = vld [vmem:[#allocation3 + $0xdf0] sm:$0xff]
    %v6150 = vld [vmem:[#allocation3 + $0xdf8] sm:$0xff]
    %v6151 = vld [vmem:[#allocation3 + $0xe00] sm:$0xff]
    %v6152 = vld [vmem:[#allocation3 + $0xe08] sm:$0xff]
    %v6153 = vld [vmem:[#allocation3 + $0xe10] sm:$0xff]
    %v6154 = vld [vmem:[#allocation3 + $0xe18] sm:$0xff]
    %v6155 = vld [vmem:[#allocation3 + $0xe20] sm:$0xff]
    %v6156 = vld [vmem:[#allocation3 + $0xe28] sm:$0xff]
    %v6157 = vld [vmem:[#allocation3 + $0xe30] sm:$0xff]
    %v6158 = vld [vmem:[#allocation3 + $0xe38] sm:$0xff]
    %v6159 = vld [vmem:[#allocation3 + $0xe40] sm:$0xff]
    %v6160 = vld [vmem:[#allocation3 + $0xe48] sm:$0xff]
    %v6161 = vld [vmem:[#allocation3 + $0xe50] sm:$0xff]
    %v6162 = vld [vmem:[#allocation3 + $0xe58] sm:$0xff]
    %v6163 = vld [vmem:[#allocation3 + $0xe60] sm:$0xff]
    %v6164 = vld [vmem:[#allocation3 + $0xe68] sm:$0xff]
    %v6165 = vld [vmem:[#allocation3 + $0xe70] sm:$0xff]
    %v6166 = vld [vmem:[#allocation3 + $0xe78] sm:$0xff]
    %v6167 = vld [vmem:[#allocation3 + $0xe80] sm:$0xff]
    %v6168 = vld [vmem:[#allocation3 + $0xe88] sm:$0xff]
    %v6169 = vld [vmem:[#allocation3 + $0xe90] sm:$0xff]
    %v6170 = vld [vmem:[#allocation3 + $0xe98] sm:$0xff]
    %v6171 = vld [vmem:[#allocation3 + $0xea0] sm:$0xff]
    %v6172 = vld [vmem:[#allocation3 + $0xea8] sm:$0xff]
    %v6173 = vld [vmem:[#allocation3 + $0xeb0] sm:$0xff]
    %v6174 = vld [vmem:[#allocation3 + $0xeb8] sm:$0xff]
    %v6175 = vld [vmem:[#allocation3 + $0xec0] sm:$0xff]
    %v6176 = vld [vmem:[#allocation3 + $0xec8] sm:$0xff]
    %v6177 = vld [vmem:[#allocation3 + $0xed0] sm:$0xff]
    %v6178 = vld [vmem:[#allocation3 + $0xed8] sm:$0xff]
    %v6179 = vld [vmem:[#allocation3 + $0xee0] sm:$0xff]
    %v6180 = vld [vmem:[#allocation3 + $0xee8] sm:$0xff]
    %v6181 = vld [vmem:[#allocation3 + $0xef0] sm:$0xff]
    %v6182 = vld [vmem:[#allocation3 + $0xef8] sm:$0xff]
    %v6183 = vld [vmem:[#allocation3 + $0xf00] sm:$0xff]
    %v6184 = vld [vmem:[#allocation3 + $0xf08] sm:$0xff]
    %v6185 = vld [vmem:[#allocation3 + $0xf10] sm:$0xff]
    %v6186 = vld [vmem:[#allocation3 + $0xf18] sm:$0xff]
    %v6187 = vld [vmem:[#allocation3 + $0xf20] sm:$0xff]
    %v6188 = vld [vmem:[#allocation3 + $0xf28] sm:$0xff]
    %v6189 = vld [vmem:[#allocation3 + $0xf30] sm:$0xff]
    %v6190 = vld [vmem:[#allocation3 + $0xf38] sm:$0xff]
    %v6191 = vld [vmem:[#allocation3 + $0xf40] sm:$0xff]
    %v6192 = vld [vmem:[#allocation3 + $0xf48] sm:$0xff]
    %v6193 = vld [vmem:[#allocation3 + $0xf50] sm:$0xff]
    %v6194 = vld [vmem:[#allocation3 + $0xf58] sm:$0xff]
    %v6195 = vld [vmem:[#allocation3 + $0xf60] sm:$0xff]
    %v6196 = vld [vmem:[#allocation3 + $0xf68] sm:$0xff]
    %v6197 = vld [vmem:[#allocation3 + $0xf70] sm:$0xff]
    %v6198 = vld [vmem:[#allocation3 + $0xf78] sm:$0xff]
    %v6199 = vld [vmem:[#allocation3 + $0xf80] sm:$0xff]
    %v6200 = vld [vmem:[#allocation3 + $0xf88] sm:$0xff]
    %v6201 = vld [vmem:[#allocation3 + $0xf90] sm:$0xff]
    %v6202 = vld [vmem:[#allocation3 + $0xf98] sm:$0xff]
    %v6203 = vld [vmem:[#allocation3 + $0xfa0] sm:$0xff]
    %v6204 = vld [vmem:[#allocation3 + $0xfa8] sm:$0xff]
    %v6205 = vld [vmem:[#allocation3 + $0xfb0] sm:$0xff]
    %v6206 = vld [vmem:[#allocation3 + $0xfb8] sm:$0xff]
    %v6207 = vld [vmem:[#allocation3 + $0xfc0] sm:$0xff]
    %v6208 = vld [vmem:[#allocation3 + $0xfc8] sm:$0xff]
    %v6209 = vld [vmem:[#allocation3 + $0xfd0] sm:$0xff]
    %v6210 = vld [vmem:[#allocation3 + $0xfd8] sm:$0xff]
    %v6211 = vld [vmem:[#allocation3 + $0xfe0] sm:$0xff]
    %v6212 = vld [vmem:[#allocation3 + $0xfe8] sm:$0xff]
    %v6213 = vld [vmem:[#allocation3 + $0xff0] sm:$0xff]
    %v6214 = vld [vmem:[#allocation3 + $0xff8] sm:$0xff]
    %v6215 = vld [vmem:[#allocation3 + $0x1000] sm:$0xff]
    %v6216 = vld [vmem:[#allocation3 + $0x1008] sm:$0xff]
    %v6217 = vld [vmem:[#allocation3 + $0x1010] sm:$0xff]
    %v6218 = vld [vmem:[#allocation3 + $0x1018] sm:$0xff]
    %v6219 = vld [vmem:[#allocation3 + $0x1020] sm:$0xff]
    %v6220 = vld [vmem:[#allocation3 + $0x1028] sm:$0xff]
    %v6221 = vld [vmem:[#allocation3 + $0x1030] sm:$0xff]
    %v6222 = vld [vmem:[#allocation3 + $0x1038] sm:$0xff]
    %v6223 = vld [vmem:[#allocation3 + $0x1040] sm:$0xff]
    %v6224 = vld [vmem:[#allocation3 + $0x1048] sm:$0xff]
    %v6225 = vld [vmem:[#allocation3 + $0x1050] sm:$0xff]
    %v6226 = vld [vmem:[#allocation3 + $0x1058] sm:$0xff]
    %v6227 = vld [vmem:[#allocation3 + $0x1060] sm:$0xff]
    %v6228 = vld [vmem:[#allocation3 + $0x1068] sm:$0xff]
    %v6229 = vld [vmem:[#allocation3 + $0x1070] sm:$0xff]
    %v6230 = vld [vmem:[#allocation3 + $0x1078] sm:$0xff]
    %v6231 = vld [vmem:[#allocation3 + $0x1080] sm:$0xff]
    %v6232 = vld [vmem:[#allocation3 + $0x1088] sm:$0xff]
    %v6233 = vld [vmem:[#allocation3 + $0x1090] sm:$0xff]
    %v6234 = vld [vmem:[#allocation3 + $0x1098] sm:$0xff]
    %v6235 = vld [vmem:[#allocation3 + $0x10a0] sm:$0xff]
    %v6236 = vld [vmem:[#allocation3 + $0x10a8] sm:$0xff]
    %v6237 = vld [vmem:[#allocation3 + $0x10b0] sm:$0xff]
    %v6238 = vld [vmem:[#allocation3 + $0x10b8] sm:$0xff]
    %v6239 = vld [vmem:[#allocation3 + $0x10c0] sm:$0xff]
    %v6240 = vld [vmem:[#allocation3 + $0x10c8] sm:$0xff]
    %v6241 = vld [vmem:[#allocation3 + $0x10d0] sm:$0xff]
    %v6242 = vld [vmem:[#allocation3 + $0x10d8] sm:$0xff]
    %v6243 = vld [vmem:[#allocation3 + $0x10e0] sm:$0xff]
    %v6244 = vld [vmem:[#allocation3 + $0x10e8] sm:$0xff]
    %v6245 = vld [vmem:[#allocation3 + $0x10f0] sm:$0xff]
    %v6246 = vld [vmem:[#allocation3 + $0x10f8] sm:$0xff]
    %v6247 = vld [vmem:[#allocation3 + $0x1100] sm:$0xff]
    %v6248 = vld [vmem:[#allocation3 + $0x1108] sm:$0xff]
    %v6249 = vld [vmem:[#allocation3 + $0x1110] sm:$0xff]
    %v6250 = vld [vmem:[#allocation3 + $0x1118] sm:$0xff]
    %v6251 = vld [vmem:[#allocation3 + $0x1120] sm:$0xff]
    %v6252 = vld [vmem:[#allocation3 + $0x1128] sm:$0xff]
    %v6253 = vld [vmem:[#allocation3 + $0x1130] sm:$0xff]
    %v6254 = vld [vmem:[#allocation3 + $0x1138] sm:$0xff]
    %v6255 = vld [vmem:[#allocation3 + $0x1140] sm:$0xff]
    %v6256 = vld [vmem:[#allocation3 + $0x1148] sm:$0xff]
    %v6257 = vld [vmem:[#allocation3 + $0x1150] sm:$0xff]
    %v6258 = vld [vmem:[#allocation3 + $0x1158] sm:$0xff]
    %v6259 = vld [vmem:[#allocation3 + $0x1160] sm:$0xff]
    %v6260 = vld [vmem:[#allocation3 + $0x1168] sm:$0xff]
    %v6261 = vld [vmem:[#allocation3 + $0x1170] sm:$0xff]
    %v6262 = vld [vmem:[#allocation3 + $0x1178] sm:$0xff]
    %v6263 = vld [vmem:[#allocation3 + $0x1180] sm:$0xff]
    %v6264 = vld [vmem:[#allocation3 + $0x1188] sm:$0xff]
    %v6265 = vld [vmem:[#allocation3 + $0x1190] sm:$0xff]
    %v6266 = vld [vmem:[#allocation3 + $0x1198] sm:$0xff]
    %v6267 = vld [vmem:[#allocation3 + $0x11a0] sm:$0xff]
    %v6268 = vld [vmem:[#allocation3 + $0x11a8] sm:$0xff]
    %v6269 = vld [vmem:[#allocation3 + $0x11b0] sm:$0xff]
    %v6270 = vld [vmem:[#allocation3 + $0x11b8] sm:$0xff]
    %v6271 = vld [vmem:[#allocation3 + $0x11c0] sm:$0xff]
    %v6272 = vld [vmem:[#allocation3 + $0x11c8] sm:$0xff]
    %v6273 = vld [vmem:[#allocation3 + $0x11d0] sm:$0xff]
    %v6274 = vld [vmem:[#allocation3 + $0x11d8] sm:$0xff]
    %v6275 = vld [vmem:[#allocation3 + $0x11e0] sm:$0xff]
    %v6276 = vld [vmem:[#allocation3 + $0x11e8] sm:$0xff]
    %v6277 = vld [vmem:[#allocation3 + $0x11f0] sm:$0xff]
    %v6278 = vld [vmem:[#allocation3 + $0x11f8] sm:$0xff]
    %v6279 = vld [vmem:[#allocation9] sm:$0xff]
    %v6280 = vld [vmem:[#allocation9 + $0x8] sm:$0xff]
    %v6281 = vld [vmem:[#allocation9 + $0x10] sm:$0xff]
    %v6282 = vld [vmem:[#allocation9 + $0x18] sm:$0xff]
    %v6283 = vld [vmem:[#allocation9 + $0x20] sm:$0xff]
    %v6284 = vld [vmem:[#allocation9 + $0x28] sm:$0xff]
    %v6285 = vld [vmem:[#allocation9 + $0x30] sm:$0xff]
    %v6286 = vld [vmem:[#allocation9 + $0x38] sm:$0xff]
    %v6287 = vld [vmem:[#allocation9 + $0x40] sm:$0xff]
    %v6288 = vld [vmem:[#allocation9 + $0x48] sm:$0xff]
    %v6289 = vld [vmem:[#allocation9 + $0x50] sm:$0xff]
    %v6290 = vld [vmem:[#allocation9 + $0x58] sm:$0xff]
    %v6291 = vld [vmem:[#allocation9 + $0x60] sm:$0xff]
    %v6292 = vld [vmem:[#allocation9 + $0x68] sm:$0xff]
    %v6293 = vld [vmem:[#allocation9 + $0x70] sm:$0xff]
    %v6294 = vld [vmem:[#allocation9 + $0x78] sm:$0xff]
    %v6295 = vld [vmem:[#allocation9 + $0x80] sm:$0xff]
    %v6296 = vld [vmem:[#allocation9 + $0x88] sm:$0xff]
    %v6297 = vld [vmem:[#allocation9 + $0x90] sm:$0xff]
    %v6298 = vld [vmem:[#allocation9 + $0x98] sm:$0xff]
    %v6299 = vld [vmem:[#allocation9 + $0xa0] sm:$0xff]
    %v6300 = vld [vmem:[#allocation9 + $0xa8] sm:$0xff]
    %v6301 = vld [vmem:[#allocation9 + $0xb0] sm:$0xff]
    %v6302 = vld [vmem:[#allocation9 + $0xb8] sm:$0xff]
    %v6303 = vld [vmem:[#allocation9 + $0xc0] sm:$0xff]
    %v6304 = vld [vmem:[#allocation9 + $0xc8] sm:$0xff]
    %v6305 = vld [vmem:[#allocation9 + $0xd0] sm:$0xff]
    %v6306 = vld [vmem:[#allocation9 + $0xd8] sm:$0xff]
    %v6307 = vld [vmem:[#allocation9 + $0xe0] sm:$0xff]
    %v6308 = vld [vmem:[#allocation9 + $0xe8] sm:$0xff]
    %v6309 = vld [vmem:[#allocation9 + $0xf0] sm:$0xff]
    %v6310 = vld [vmem:[#allocation9 + $0xf8] sm:$0xff]
    %v6311 = vld [vmem:[#allocation9 + $0x100] sm:$0xff]
    %v6312 = vld [vmem:[#allocation9 + $0x108] sm:$0xff]
    %v6313 = vld [vmem:[#allocation9 + $0x110] sm:$0xff]
    %v6314 = vld [vmem:[#allocation9 + $0x118] sm:$0xff]
    %v6315 = vld [vmem:[#allocation9 + $0x120] sm:$0xff]
    %v6316 = vld [vmem:[#allocation9 + $0x128] sm:$0xff]
    %v6317 = vld [vmem:[#allocation9 + $0x130] sm:$0xff]
    %v6318 = vld [vmem:[#allocation9 + $0x138] sm:$0xff]
    %v6319 = vld [vmem:[#allocation9 + $0x140] sm:$0xff]
    %v6320 = vld [vmem:[#allocation9 + $0x148] sm:$0xff]
    %v6321 = vld [vmem:[#allocation9 + $0x150] sm:$0xff]
    %v6322 = vld [vmem:[#allocation9 + $0x158] sm:$0xff]
    %v6323 = vld [vmem:[#allocation9 + $0x160] sm:$0xff]
    %v6324 = vld [vmem:[#allocation9 + $0x168] sm:$0xff]
    %v6325 = vld [vmem:[#allocation9 + $0x170] sm:$0xff]
    %v6326 = vld [vmem:[#allocation9 + $0x178] sm:$0xff]
    %v6327 = vld [vmem:[#allocation9 + $0x180] sm:$0xff]
    %v6328 = vld [vmem:[#allocation9 + $0x188] sm:$0xff]
    %v6329 = vld [vmem:[#allocation9 + $0x190] sm:$0xff]
    %v6330 = vld [vmem:[#allocation9 + $0x198] sm:$0xff]
    %v6331 = vld [vmem:[#allocation9 + $0x1a0] sm:$0xff]
    %v6332 = vld [vmem:[#allocation9 + $0x1a8] sm:$0xff]
    %v6333 = vld [vmem:[#allocation9 + $0x1b0] sm:$0xff]
    %v6334 = vld [vmem:[#allocation9 + $0x1b8] sm:$0xff]
    %v6335 = vld [vmem:[#allocation9 + $0x1c0] sm:$0xff]
    %v6336 = vld [vmem:[#allocation9 + $0x1c8] sm:$0xff]
    %v6337 = vld [vmem:[#allocation9 + $0x1d0] sm:$0xff]
    %v6338 = vld [vmem:[#allocation9 + $0x1d8] sm:$0xff]
    %v6339 = vld [vmem:[#allocation9 + $0x1e0] sm:$0xff]
    %v6340 = vld [vmem:[#allocation9 + $0x1e8] sm:$0xff]
    %v6341 = vld [vmem:[#allocation9 + $0x1f0] sm:$0xff]
    %v6342 = vld [vmem:[#allocation9 + $0x1f8] sm:$0xff]
    %v6343 = vld [vmem:[#allocation9 + $0x200] sm:$0xff]
    %v6344 = vld [vmem:[#allocation9 + $0x208] sm:$0xff]
    %v6345 = vld [vmem:[#allocation9 + $0x210] sm:$0xff]
    %v6346 = vld [vmem:[#allocation9 + $0x218] sm:$0xff]
    %v6347 = vld [vmem:[#allocation9 + $0x220] sm:$0xff]
    %v6348 = vld [vmem:[#allocation9 + $0x228] sm:$0xff]
    %v6349 = vld [vmem:[#allocation9 + $0x230] sm:$0xff]
    %v6350 = vld [vmem:[#allocation9 + $0x238] sm:$0xff]
    %v6351 = vld [vmem:[#allocation9 + $0x240] sm:$0xff]
    %v6352 = vld [vmem:[#allocation9 + $0x248] sm:$0xff]
    %v6353 = vld [vmem:[#allocation9 + $0x250] sm:$0xff]
    %v6354 = vld [vmem:[#allocation9 + $0x258] sm:$0xff]
    %v6355 = vld [vmem:[#allocation9 + $0x260] sm:$0xff]
    %v6356 = vld [vmem:[#allocation9 + $0x268] sm:$0xff]
    %v6357 = vld [vmem:[#allocation9 + $0x270] sm:$0xff]
    %v6358 = vld [vmem:[#allocation9 + $0x278] sm:$0xff]
    %v6359 = vld [vmem:[#allocation9 + $0x280] sm:$0xff]
    %v6360 = vld [vmem:[#allocation9 + $0x288] sm:$0xff]
    %v6361 = vld [vmem:[#allocation9 + $0x290] sm:$0xff]
    %v6362 = vld [vmem:[#allocation9 + $0x298] sm:$0xff]
    %v6363 = vld [vmem:[#allocation9 + $0x2a0] sm:$0xff]
    %v6364 = vld [vmem:[#allocation9 + $0x2a8] sm:$0xff]
    %v6365 = vld [vmem:[#allocation9 + $0x2b0] sm:$0xff]
    %v6366 = vld [vmem:[#allocation9 + $0x2b8] sm:$0xff]
    %v6367 = vld [vmem:[#allocation9 + $0x2c0] sm:$0xff]
    %v6368 = vld [vmem:[#allocation9 + $0x2c8] sm:$0xff]
    %v6369 = vld [vmem:[#allocation9 + $0x2d0] sm:$0xff]
    %v6370 = vld [vmem:[#allocation9 + $0x2d8] sm:$0xff]
    %v6371 = vld [vmem:[#allocation9 + $0x2e0] sm:$0xff]
    %v6372 = vld [vmem:[#allocation9 + $0x2e8] sm:$0xff]
    %v6373 = vld [vmem:[#allocation9 + $0x2f0] sm:$0xff]
    %v6374 = vld [vmem:[#allocation9 + $0x2f8] sm:$0xff]
    %v6375 = vld [vmem:[#allocation9 + $0x300] sm:$0xff]
    %v6376 = vld [vmem:[#allocation9 + $0x308] sm:$0xff]
    %v6377 = vld [vmem:[#allocation9 + $0x310] sm:$0xff]
    %v6378 = vld [vmem:[#allocation9 + $0x318] sm:$0xff]
    %v6379 = vld [vmem:[#allocation9 + $0x320] sm:$0xff]
    %v6380 = vld [vmem:[#allocation9 + $0x328] sm:$0xff]
    %v6381 = vld [vmem:[#allocation9 + $0x330] sm:$0xff]
    %v6382 = vld [vmem:[#allocation9 + $0x338] sm:$0xff]
    %v6383 = vld [vmem:[#allocation9 + $0x340] sm:$0xff]
    %v6384 = vld [vmem:[#allocation9 + $0x348] sm:$0xff]
    %v6385 = vld [vmem:[#allocation9 + $0x350] sm:$0xff]
    %v6386 = vld [vmem:[#allocation9 + $0x358] sm:$0xff]
    %v6387 = vld [vmem:[#allocation9 + $0x360] sm:$0xff]
    %v6388 = vld [vmem:[#allocation9 + $0x368] sm:$0xff]
    %v6389 = vld [vmem:[#allocation9 + $0x370] sm:$0xff]
    %v6390 = vld [vmem:[#allocation9 + $0x378] sm:$0xff]
    %v6391 = vld [vmem:[#allocation9 + $0x380] sm:$0xff]
    %v6392 = vld [vmem:[#allocation9 + $0x388] sm:$0xff]
    %v6393 = vld [vmem:[#allocation9 + $0x390] sm:$0xff]
    %v6394 = vld [vmem:[#allocation9 + $0x398] sm:$0xff]
    %v6395 = vld [vmem:[#allocation9 + $0x3a0] sm:$0xff]
    %v6396 = vld [vmem:[#allocation9 + $0x3a8] sm:$0xff]
    %v6397 = vld [vmem:[#allocation9 + $0x3b0] sm:$0xff]
    %v6398 = vld [vmem:[#allocation9 + $0x3b8] sm:$0xff]
    %v6399 = vld [vmem:[#allocation9 + $0x3c0] sm:$0xff]
    %v6400 = vld [vmem:[#allocation9 + $0x3c8] sm:$0xff]
    %v6401 = vld [vmem:[#allocation9 + $0x3d0] sm:$0xff]
    %v6402 = vld [vmem:[#allocation9 + $0x3d8] sm:$0xff]
    %v6403 = vld [vmem:[#allocation9 + $0x3e0] sm:$0xff]
    %v6404 = vld [vmem:[#allocation9 + $0x3e8] sm:$0xff]
    %v6405 = vld [vmem:[#allocation9 + $0x3f0] sm:$0xff]
    %v6406 = vld [vmem:[#allocation9 + $0x3f8] sm:$0xff]
    %v6407 = vld [vmem:[#allocation9 + $0x400] sm:$0xff]
    %v6408 = vld [vmem:[#allocation9 + $0x408] sm:$0xff]
    %v6409 = vld [vmem:[#allocation9 + $0x410] sm:$0xff]
    %v6410 = vld [vmem:[#allocation9 + $0x418] sm:$0xff]
    %v6411 = vld [vmem:[#allocation9 + $0x420] sm:$0xff]
    %v6412 = vld [vmem:[#allocation9 + $0x428] sm:$0xff]
    %v6413 = vld [vmem:[#allocation9 + $0x430] sm:$0xff]
    %v6414 = vld [vmem:[#allocation9 + $0x438] sm:$0xff]
    %v6415 = vld [vmem:[#allocation9 + $0x440] sm:$0xff]
    %v6416 = vld [vmem:[#allocation9 + $0x448] sm:$0xff]
    %v6417 = vld [vmem:[#allocation9 + $0x450] sm:$0xff]
    %v6418 = vld [vmem:[#allocation9 + $0x458] sm:$0xff]
    %v6419 = vld [vmem:[#allocation9 + $0x460] sm:$0xff]
    %v6420 = vld [vmem:[#allocation9 + $0x468] sm:$0xff]
    %v6421 = vld [vmem:[#allocation9 + $0x470] sm:$0xff]
    %v6422 = vld [vmem:[#allocation9 + $0x478] sm:$0xff]
    %6423 = vmatprep.subr.mxu0 0.0
    %6424 = vmatpush1.msra.mxu0 %v6279
    %6425 = vmatprep.subr.mxu0 0.0
    %6426 = vmatpush1.msra.mxu0 %v6280
    %6427 = vmatprep.subr.mxu0 0.0
    %6428 = vmatpush1.msra.mxu0 %v6281
    %6429 = vmatprep.subr.mxu0 0.0
    %6430 = vmatpush1.msra.mxu0 %v6282
    %6431 = vmatprep.subr.mxu0 0.0
    %6432 = vmatpush1.msra.mxu0 %v6283
    %6433 = vmatprep.subr.mxu0 0.0
    %6434 = vmatpush1.msra.mxu0 %v6284
    %6435 = vmatprep.subr.mxu0 0.0
    %6436 = vmatpush1.msra.mxu0 %v6285
    %6437 = vmatprep.subr.mxu0 0.0
    %6438 = vmatpush1.msra.mxu0 %v6286
    %6439 = vmatprep.subr.mxu0 0.0
    %6440 = vmatpush1.msra.mxu0 %v6287
    %6441 = vmatprep.subr.mxu0 0.0
    %6442 = vmatpush1.msra.mxu0 %v6288
    %6443 = vmatprep.subr.mxu0 0.0
    %6444 = vmatpush1.msra.mxu0 %v6289
    %6445 = vmatprep.subr.mxu0 0.0
    %6446 = vmatpush1.msra.mxu0 %v6290
    %6447 = vmatprep.subr.mxu0 0.0
    %6448 = vmatpush1.msra.mxu0 %v6291
    %6449 = vmatprep.subr.mxu0 0.0
    %6450 = vmatpush1.msra.mxu0 %v6292
    %6451 = vmatprep.subr.mxu0 0.0
    %6452 = vmatpush1.msra.mxu0 %v6293
    %6453 = vmatprep.subr.mxu0 0.0
    %6454 = vmatpush1.msra.mxu0 %v6294
    %6455 = vmatprep.subr.mxu0 0.0
    %6456 = vmatpush1.msra.mxu0 %v6295
    %6457 = vmatprep.subr.mxu0 0.0
    %6458 = vmatpush1.msra.mxu0 %v6296
    %6459 = vmatprep.subr.mxu0 0.0
    %6460 = vmatpush1.msra.mxu0 %v6297
    %6461 = vmatprep.subr.mxu0 0.0
    %6462 = vmatpush1.msra.mxu0 %v6298
    %6463 = vmatprep.subr.mxu0 0.0
    %6464 = vmatpush1.msra.mxu0 %v6299
    %6465 = vmatprep.subr.mxu0 0.0
    %6466 = vmatpush1.msra.mxu0 %v6300
    %6467 = vmatprep.subr.mxu0 0.0
    %6468 = vmatpush1.msra.mxu0 %v6301
    %6469 = vmatprep.subr.mxu0 0.0
    %6470 = vmatpush1.msra.mxu0 %v6302
    %6471 = vmatprep.subr.mxu0 0.0
    %6472 = vmatpush1.msra.mxu0 %v6303
    %6473 = vmatprep.subr.mxu0 0.0
    %6474 = vmatpush1.msra.mxu0 %v6304
    %6475 = vmatprep.subr.mxu0 0.0
    %6476 = vmatpush1.msra.mxu0 %v6305
    %6477 = vmatprep.subr.mxu0 0.0
    %6478 = vmatpush1.msra.mxu0 %v6306
    %6479 = vmatprep.subr.mxu0 0.0
    %6480 = vmatpush1.msra.mxu0 %v6307
    %6481 = vmatprep.subr.mxu0 0.0
    %6482 = vmatpush1.msra.mxu0 %v6308
    %6483 = vmatprep.subr.mxu0 0.0
    %6484 = vmatpush1.msra.mxu0 %v6309
    %6485 = vmatprep.subr.mxu0 0.0
    %6486 = vmatpush1.msra.mxu0 %v6310
    %6487 = vmatprep.mubr.f32.mxu0 %v5704
    %6488 = vmatmul.mubr.f32.gmra.mrb[0].mxu0 %v5703
    %v6489 = vpop.f32.mrb[0].mxu0
    %v6490 = vadd.f32 0.0, %v6489
    %v6491 = vpop.f32.mrb[0].mxu0
    %6492 = vmatprep.mubr.f32.mxu0 %v5713
    %6493 = vmatmul.mubr.f32.gmra.mrb[0].mxu0 %v5712
    %v6494 = vpop.f32.mrb[0].mxu0
    %v6495 = vadd.f32 0.0, %v6494
    %v6496 = vpop.f32.mrb[0].mxu0
    %6497 = vmatprep.mubr.f32.mxu0 %v5722
    %6498 = vmatmul.mubr.f32.gmra.mrb[0].mxu0 %v5721
    %v6499 = vpop.f32.mrb[0].mxu0
    %v6500 = vadd.f32 0.0, %v6499
    %v6501 = vpop.f32.mrb[0].mxu0
    %6502 = vmatprep.mubr.f32.mxu0 %v5731
    %6503 = vmatmul.mubr.f32.gmra.mrb[0].mxu0 %v5730
    %v6504 = vpop.f32.mrb[0].mxu0
    %v6505 = vadd.f32 0.0, %v6504
    %v6506 = vpop.f32.mrb[0].mxu0
    %6507 = vmatprep.mubr.f32.mxu0 %v5740
    %6508 = vmatmul.mubr.f32.gmra.mrb[0].mxu0 %v5739
    %v6509 = vpop.f32.mrb[0].mxu0
    %v6510 = vadd.f32 0.0, %v6509
    %v6511 = vpop.f32.mrb[0].mxu0
    %6512 = vmatprep.mubr.f32.mxu0 %v5749
    %6513 = vmatmul.mubr.f32.gmra.mrb[0].mxu0 %v5748
    %v6514 = vpop.f32.mrb[0].mxu0
    %v6515 = vadd.f32 0.0, %v6514
    %v6516 = vpop.f32.mrb[0].mxu0
    %6517 = vmatprep.mubr.f32.mxu0 %v5758
    %6518 = vmatmul.mubr.f32.gmra.mrb[0].mxu0 %v5757
    %v6519 = vpop.f32.mrb[0].mxu0
    %v6520 = vadd.f32 0.0, %v6519
    %v6521 = vpop.f32.mrb[0].mxu0
    %6522 = vmatprep.mubr.f32.mxu0 %v5767
    %6523 = vmatmul.mubr.f32.gmra.mrb[0].mxu0 %v5766
    %v6524 = vpop.f32.mrb[0].mxu0
    %v6525 = vadd.f32 0.0, %v6524
    %v6526 = vpop.f32.mrb[0].mxu0
    %6527 = vmatprep.mubr.f32.mxu0 %v5776
    %6528 = vmatmul.mubr.f32.gmra.mrb[0].mxu0 %v5775
    %v6529 = vpop.f32.mrb[0].mxu0
    %v6530 = vadd.f32 0.0, %v6529
    %v6531 = vpop.f32.mrb[0].mxu0
    %6532 = vmatprep.mubr.f32.mxu0 %v5785
    %6533 = vmatmul.mubr.f32.gmra.mrb[0].mxu0 %v5784
    %v6534 = vpop.f32.mrb[0].mxu0
    %v6535 = vadd.f32 0.0, %v6534
    %v6536 = vpop.f32.mrb[0].mxu0
    %6537 = vmatprep.mubr.f32.mxu0 %v5794
    %6538 = vmatmul.mubr.f32.gmra.mrb[0].mxu0 %v5793
    %v6539 = vpop.f32.mrb[0].mxu0
    %v6540 = vadd.f32 0.0, %v6539
    %v6541 = vpop.f32.mrb[0].mxu0
    %6542 = vmatprep.mubr.f32.mxu0 %v5803
    %6543 = vmatmul.mubr.f32.gmra.mrb[0].mxu0 %v5802
    %v6544 = vpop.f32.mrb[0].mxu0
    %v6545 = vadd.f32 0.0, %v6544
    %v6546 = vpop.f32.mrb[0].mxu0
    %6547 = vmatprep.mubr.f32.mxu0 %v5812
    %6548 = vmatmul.mubr.f32.gmra.mrb[0].mxu0 %v5811
    %v6549 = vpop.f32.mrb[0].mxu0
    %v6550 = vadd.f32 0.0, %v6549
    %v6551 = vpop.f32.mrb[0].mxu0
    %6552 = vmatprep.mubr.f32.mxu0 %v5821
    %6553 = vmatmul.mubr.f32.gmra.mrb[0].mxu0 %v5820
    %v6554 = vpop.f32.mrb[0].mxu0
    %v6555 = vadd.f32 0.0, %v6554
    %v6556 = vpop.f32.mrb[0].mxu0
    %6557 = vmatprep.mubr.f32.mxu0 %v5830
    %6558 = vmatmul.mubr.f32.gmra.mrb[0].mxu0 %v5829
    %v6559 = vpop.f32.mrb[0].mxu0
    %v6560 = vadd.f32 0.0, %v6559
    %v6561 = vpop.f32.mrb[0].mxu0
    %6562 = vmatprep.mubr.f32.mxu0 %v5839
    %6563 = vmatmul.mubr.f32.gmra.mrb[0].mxu0 %v5838
    %v6564 = vpop.f32.mrb[0].mxu0
    %v6565 = vadd.f32 0.0, %v6564
    %v6566 = vpop.f32.mrb[0].mxu0
    %6567 = vmatprep.mubr.f32.mxu0 %v5848
    %6568 = vmatmul.mubr.f32.gmra.mrb[0].mxu0 %v5847
    %v6569 = vpop.f32.mrb[0].mxu0
    %v6570 = vadd.f32 0.0, %v6569
    %v6571 = vpop.f32.mrb[0].mxu0
    %6572 = vmatprep.mubr.f32.mxu0 %v5857
    %6573 = vmatmul.mubr.f32.gmra.mrb[0].mxu0 %v5856
    %v6574 = vpop.f32.mrb[0].mxu0
    %v6575 = vadd.f32 0.0, %v6574
    %v6576 = vpop.f32.mrb[0].mxu0
    %6577 = vmatprep.mubr.f32.mxu0 %v5866
    %6578 = vmatmul.mubr.f32.gmra.mrb[0].mxu0 %v5865
    %v6579 = vpop.f32.mrb[0].mxu0
    %v6580 = vadd.f32 0.0, %v6579
    %v6581 = vpop.f32.mrb[0].mxu0
    %6582 = vmatprep.mubr.f32.mxu0 %v5875
    %6583 = vmatmul.mubr.f32.gmra.mrb[0].mxu0 %v5874
    %v6584 = vpop.f32.mrb[0].mxu0
    %v6585 = vadd.f32 0.0, %v6584
    %v6586 = vpop.f32.mrb[0].mxu0
    %6587 = vmatprep.mubr.f32.mxu0 %v5884
    %6588 = vmatmul.mubr.f32.gmra.mrb[0].mxu0 %v5883
    %v6589 = vpop.f32.mrb[0].mxu0
    %v6590 = vadd.f32 0.0, %v6589
    %v6591 = vpop.f32.mrb[0].mxu0
    %6592 = vmatprep.mubr.f32.mxu0 %v5893
    %6593 = vmatmul.mubr.f32.gmra.mrb[0].mxu0 %v5892
    %v6594 = vpop.f32.mrb[0].mxu0
    %v6595 = vadd.f32 0.0, %v6594
    %v6596 = vpop.f32.mrb[0].mxu0
    %6597 = vmatprep.mubr.f32.mxu0 %v5902
    %6598 = vmatmul.mubr.f32.gmra.mrb[0].mxu0 %v5901
    %v6599 = vpop.f32.mrb[0].mxu0
    %v6600 = vadd.f32 0.0, %v6599
    %v6601 = vpop.f32.mrb[0].mxu0
    %6602 = vmatprep.mubr.f32.mxu0 %v5911
    %6603 = vmatmul.mubr.f32.gmra.mrb[0].mxu0 %v5910
    %v6604 = vpop.f32.mrb[0].mxu0
    %v6605 = vadd.f32 0.0, %v6604
    %v6606 = vpop.f32.mrb[0].mxu0
    %6607 = vmatprep.mubr.f32.mxu0 %v5920
    %6608 = vmatmul.mubr.f32.gmra.mrb[0].mxu0 %v5919
    %v6609 = vpop.f32.mrb[0].mxu0
    %v6610 = vadd.f32 0.0, %v6609
    %v6611 = vpop.f32.mrb[0].mxu0
    %6612 = vmatprep.mubr.f32.mxu0 %v5929
    %6613 = vmatmul.mubr.f32.gmra.mrb[0].mxu0 %v5928
    %v6614 = vpop.f32.mrb[0].mxu0
    %v6615 = vadd.f32 0.0, %v6614
    %v6616 = vpop.f32.mrb[0].mxu0
    %6617 = vmatprep.mubr.f32.mxu0 %v5938
    %6618 = vmatmul.mubr.f32.gmra.mrb[0].mxu0 %v5937
    %v6619 = vpop.f32.mrb[0].mxu0
    %v6620 = vadd.f32 0.0, %v6619
    %v6621 = vpop.f32.mrb[0].mxu0
    %6622 = vmatprep.mubr.f32.mxu0 %v5947
    %6623 = vmatmul.mubr.f32.gmra.mrb[0].mxu0 %v5946
    %v6624 = vpop.f32.mrb[0].mxu0
    %v6625 = vadd.f32 0.0, %v6624
    %v6626 = vpop.f32.mrb[0].mxu0
    %6627 = vmatprep.mubr.f32.mxu0 %v5956
    %6628 = vmatmul.mubr.f32.gmra.mrb[0].mxu0 %v5955
    %v6629 = vpop.f32.mrb[0].mxu0
    %v6630 = vadd.f32 0.0, %v6629
    %v6631 = vpop.f32.mrb[0].mxu0
    %6632 = vmatprep.mubr.f32.mxu0 %v5965
    %6633 = vmatmul.mubr.f32.gmra.mrb[0].mxu0 %v5964
    %v6634 = vpop.f32.mrb[0].mxu0
    %v6635 = vadd.f32 0.0, %v6634
    %v6636 = vpop.f32.mrb[0].mxu0
    %6637 = vmatprep.mubr.f32.mxu0 %v5974
    %6638 = vmatmul.mubr.f32.gmra.mrb[0].mxu0 %v5973
    %v6639 = vpop.f32.mrb[0].mxu0
    %v6640 = vadd.f32 0.0, %v6639
    %v6641 = vpop.f32.mrb[0].mxu0
    %6642 = vmatprep.mubr.f32.mxu0 %v5983
    %6643 = vmatmul.mubr.f32.gmra.mrb[0].mxu0 %v5982
    %v6644 = vpop.f32.mrb[0].mxu0
    %v6645 = vadd.f32 0.0, %v6644
    %v6646 = vpop.f32.mrb[0].mxu0
    %6647 = vmatprep.mubr.f32.mxu0 %v5992
    %6648 = vmatmul.mubr.f32.gmra.mrb[0].mxu0 %v5991
    %v6649 = vpop.f32.mrb[0].mxu0
    %v6650 = vadd.f32 0.0, %v6649
    %v6651 = vpop.f32.mrb[0].mxu0
    %6652 = vmatprep.mubr.f32.mxu0 %v6001
    %6653 = vmatmul.mubr.f32.gmra.mrb[0].mxu0 %v6000
    %v6654 = vpop.f32.mrb[0].mxu0
    %v6655 = vadd.f32 0.0, %v6654
    %v6656 = vpop.f32.mrb[0].mxu0
    %6657 = vmatprep.mubr.f32.mxu0 %v6010
    %6658 = vmatmul.mubr.f32.gmra.mrb[0].mxu0 %v6009
    %v6659 = vpop.f32.mrb[0].mxu0
    %v6660 = vadd.f32 0.0, %v6659
    %v6661 = vpop.f32.mrb[0].mxu0
    %6662 = vmatprep.mubr.f32.mxu0 %v6019
    %6663 = vmatmul.mubr.f32.gmra.mrb[0].mxu0 %v6018
    %v6664 = vpop.f32.mrb[0].mxu0
    %v6665 = vadd.f32 0.0, %v6664
    %v6666 = vpop.f32.mrb[0].mxu0
    %6667 = vmatprep.mubr.f32.mxu0 %v6028
    %6668 = vmatmul.mubr.f32.gmra.mrb[0].mxu0 %v6027
    %v6669 = vpop.f32.mrb[0].mxu0
    %v6670 = vadd.f32 0.0, %v6669
    %v6671 = vpop.f32.mrb[0].mxu0
    %6672 = vmatprep.mubr.f32.mxu0 %v6037
    %6673 = vmatmul.mubr.f32.gmra.mrb[0].mxu0 %v6036
    %v6674 = vpop.f32.mrb[0].mxu0
    %v6675 = vadd.f32 0.0, %v6674
    %v6676 = vpop.f32.mrb[0].mxu0
    %6677 = vmatprep.mubr.f32.mxu0 %v6046
    %6678 = vmatmul.mubr.f32.gmra.mrb[0].mxu0 %v6045
    %v6679 = vpop.f32.mrb[0].mxu0
    %v6680 = vadd.f32 0.0, %v6679
    %v6681 = vpop.f32.mrb[0].mxu0
    %6682 = vmatprep.mubr.f32.mxu0 %v6055
    %6683 = vmatmul.mubr.f32.gmra.mrb[0].mxu0 %v6054
    %v6684 = vpop.f32.mrb[0].mxu0
    %v6685 = vadd.f32 0.0, %v6684
    %v6686 = vpop.f32.mrb[0].mxu0
    %6687 = vmatprep.mubr.f32.mxu0 %v6064
    %6688 = vmatmul.mubr.f32.gmra.mrb[0].mxu0 %v6063
    %v6689 = vpop.f32.mrb[0].mxu0
    %v6690 = vadd.f32 0.0, %v6689
    %v6691 = vpop.f32.mrb[0].mxu0
    %6692 = vmatprep.mubr.f32.mxu0 %v6073
    %6693 = vmatmul.mubr.f32.gmra.mrb[0].mxu0 %v6072
    %v6694 = vpop.f32.mrb[0].mxu0
    %v6695 = vadd.f32 0.0, %v6694
    %v6696 = vpop.f32.mrb[0].mxu0
    %6697 = vmatprep.mubr.f32.mxu0 %v6082
    %6698 = vmatmul.mubr.f32.gmra.mrb[0].mxu0 %v6081
    %v6699 = vpop.f32.mrb[0].mxu0
    %v6700 = vadd.f32 0.0, %v6699
    %v6701 = vpop.f32.mrb[0].mxu0
    %6702 = vmatprep.mubr.f32.mxu0 %v6091
    %6703 = vmatmul.mubr.f32.gmra.mrb[0].mxu0 %v6090
    %v6704 = vpop.f32.mrb[0].mxu0
    %v6705 = vadd.f32 0.0, %v6704
    %v6706 = vpop.f32.mrb[0].mxu0
    %6707 = vmatprep.mubr.f32.mxu0 %v6100
    %6708 = vmatmul.mubr.f32.gmra.mrb[0].mxu0 %v6099
    %v6709 = vpop.f32.mrb[0].mxu0
    %v6710 = vadd.f32 0.0, %v6709
    %v6711 = vpop.f32.mrb[0].mxu0
    %6712 = vmatprep.mubr.f32.mxu0 %v6109
    %6713 = vmatmul.mubr.f32.gmra.mrb[0].mxu0 %v6108
    %v6714 = vpop.f32.mrb[0].mxu0
    %v6715 = vadd.f32 0.0, %v6714
    %v6716 = vpop.f32.mrb[0].mxu0
    %6717 = vmatprep.mubr.f32.mxu0 %v6118
    %6718 = vmatmul.mubr.f32.gmra.mrb[0].mxu0 %v6117
    %v6719 = vpop.f32.mrb[0].mxu0
    %v6720 = vadd.f32 0.0, %v6719
    %v6721 = vpop.f32.mrb[0].mxu0
    %6722 = vmatprep.mubr.f32.mxu0 %v6127
    %6723 = vmatmul.mubr.f32.gmra.mrb[0].mxu0 %v6126
    %v6724 = vpop.f32.mrb[0].mxu0
    %v6725 = vadd.f32 0.0, %v6724
    %v6726 = vpop.f32.mrb[0].mxu0
    %6727 = vmatprep.mubr.f32.mxu0 %v6136
    %6728 = vmatmul.mubr.f32.gmra.mrb[0].mxu0 %v6135
    %v6729 = vpop.f32.mrb[0].mxu0
    %v6730 = vadd.f32 0.0, %v6729
    %v6731 = vpop.f32.mrb[0].mxu0
    %6732 = vmatprep.mubr.f32.mxu0 %v6145
    %6733 = vmatmul.mubr.f32.gmra.mrb[0].mxu0 %v6144
    %v6734 = vpop.f32.mrb[0].mxu0
    %v6735 = vadd.f32 0.0, %v6734
    %v6736 = vpop.f32.mrb[0].mxu0
    %6737 = vmatprep.mubr.f32.mxu0 %v6154
    %6738 = vmatmul.mubr.f32.gmra.mrb[0].mxu0 %v6153
    %v6739 = vpop.f32.mrb[0].mxu0
    %v6740 = vadd.f32 0.0, %v6739
    %v6741 = vpop.f32.mrb[0].mxu0
    %6742 = vmatprep.mubr.f32.mxu0 %v6163
    %6743 = vmatmul.mubr.f32.gmra.mrb[0].mxu0 %v6162
    %v6744 = vpop.f32.mrb[0].mxu0
    %v6745 = vadd.f32 0.0, %v6744
    %v6746 = vpop.f32.mrb[0].mxu0
    %6747 = vmatprep.mubr.f32.mxu0 %v6172
    %6748 = vmatmul.mubr.f32.gmra.mrb[0].mxu0 %v6171
    %v6749 = vpop.f32.mrb[0].mxu0
    %v6750 = vadd.f32 0.0, %v6749
    %v6751 = vpop.f32.mrb[0].mxu0
    %6752 = vmatprep.mubr.f32.mxu0 %v6181
    %6753 = vmatmul.mubr.f32.gmra.mrb[0].mxu0 %v6180
    %v6754 = vpop.f32.mrb[0].mxu0
    %v6755 = vadd.f32 0.0, %v6754
    %v6756 = vpop.f32.mrb[0].mxu0
    %6757 = vmatprep.mubr.f32.mxu0 %v6190
    %6758 = vmatmul.mubr.f32.gmra.mrb[0].mxu0 %v6189
    %v6759 = vpop.f32.mrb[0].mxu0
    %v6760 = vadd.f32 0.0, %v6759
    %v6761 = vpop.f32.mrb[0].mxu0
    %6762 = vmatprep.mubr.f32.mxu0 %v6199
    %6763 = vmatmul.mubr.f32.gmra.mrb[0].mxu0 %v6198
    %v6764 = vpop.f32.mrb[0].mxu0
    %v6765 = vadd.f32 0.0, %v6764
    %v6766 = vpop.f32.mrb[0].mxu0
    %6767 = vmatprep.mubr.f32.mxu0 %v6208
    %6768 = vmatmul.mubr.f32.gmra.mrb[0].mxu0 %v6207
    %v6769 = vpop.f32.mrb[0].mxu0
    %v6770 = vadd.f32 0.0, %v6769
    %v6771 = vpop.f32.mrb[0].mxu0
    %6772 = vmatprep.mubr.f32.mxu0 %v6217
    %6773 = vmatmul.mubr.f32.gmra.mrb[0].mxu0 %v6216
    %v6774 = vpop.f32.mrb[0].mxu0
    %v6775 = vadd.f32 0.0, %v6774
    %v6776 = vpop.f32.mrb[0].mxu0
    %6777 = vmatprep.mubr.f32.mxu0 %v6226
    %6778 = vmatmul.mubr.f32.gmra.mrb[0].mxu0 %v6225
    %v6779 = vpop.f32.mrb[0].mxu0
    %v6780 = vadd.f32 0.0, %v6779
    %v6781 = vpop.f32.mrb[0].mxu0
    %6782 = vmatprep.mubr.f32.mxu0 %v6235
    %6783 = vmatmul.mubr.f32.gmra.mrb[0].mxu0 %v6234
    %v6784 = vpop.f32.mrb[0].mxu0
    %v6785 = vadd.f32 0.0, %v6784
    %v6786 = vpop.f32.mrb[0].mxu0
    %6787 = vmatprep.mubr.f32.mxu0 %v6244
    %6788 = vmatmul.mubr.f32.gmra.mrb[0].mxu0 %v6243
    %v6789 = vpop.f32.mrb[0].mxu0
    %v6790 = vadd.f32 0.0, %v6789
    %v6791 = vpop.f32.mrb[0].mxu0
    %6792 = vmatprep.mubr.f32.mxu0 %v6253
    %6793 = vmatmul.mubr.f32.gmra.mrb[0].mxu0 %v6252
    %v6794 = vpop.f32.mrb[0].mxu0
    %v6795 = vadd.f32 0.0, %v6794
    %v6796 = vpop.f32.mrb[0].mxu0
    %6797 = vmatprep.mubr.f32.mxu0 %v6262
    %6798 = vmatmul.mubr.f32.gmra.mrb[0].mxu0 %v6261
    %v6799 = vpop.f32.mrb[0].mxu0
    %v6800 = vadd.f32 0.0, %v6799
    %v6801 = vpop.f32.mrb[0].mxu0
    %6802 = vmatprep.mubr.f32.mxu0 %v6271
    %6803 = vmatmul.mubr.f32.gmra.mrb[0].mxu0 %v6270
    %v6804 = vpop.f32.mrb[0].mxu0
    %v6805 = vadd.f32 0.0, %v6804
    %v6806 = vpop.f32.mrb[0].mxu0
    %6807 = vdwg.mxu0
    %6808 = vmatprep.subr.mxu0 0.0
    %6809 = vmatpush1.msra.mxu0 %v6311
    %6810 = vmatprep.subr.mxu0 0.0
    %6811 = vmatpush1.msra.mxu0 %v6312
    %6812 = vmatprep.subr.mxu0 0.0
    %6813 = vmatpush1.msra.mxu0 %v6313
    %6814 = vmatprep.subr.mxu0 0.0
    %6815 = vmatpush1.msra.mxu0 %v6314
    %6816 = vmatprep.subr.mxu0 0.0
    %6817 = vmatpush1.msra.mxu0 %v6315
    %6818 = vmatprep.subr.mxu0 0.0
    %6819 = vmatpush1.msra.mxu0 %v6316
    %6820 = vmatprep.subr.mxu0 0.0
    %6821 = vmatpush1.msra.mxu0 %v6317
    %6822 = vmatprep.subr.mxu0 0.0
    %6823 = vmatpush1.msra.mxu0 %v6318
    %6824 = vmatprep.subr.mxu0 0.0
    %6825 = vmatpush1.msra.mxu0 %v6319
    %6826 = vmatprep.subr.mxu0 0.0
    %6827 = vmatpush1.msra.mxu0 %v6320
    %6828 = vmatprep.subr.mxu0 0.0
    %6829 = vmatpush1.msra.mxu0 %v6321
    %6830 = vmatprep.subr.mxu0 0.0
    %6831 = vmatpush1.msra.mxu0 %v6322
    %6832 = vmatprep.subr.mxu0 0.0
    %6833 = vmatpush1.msra.mxu0 %v6323
    %6834 = vmatprep.subr.mxu0 0.0
    %6835 = vmatpush1.msra.mxu0 %v6324
    %6836 = vmatprep.subr.mxu0 0.0
    %6837 = vmatpush1.msra.mxu0 %v6325
    %6838 = vmatprep.subr.mxu0 0.0
    %6839 = vmatpush1.msra.mxu0 %v6326
    %6840 = vmatprep.subr.mxu0 0.0
    %6841 = vmatpush1.msra.mxu0 %v6327
    %6842 = vmatprep.subr.mxu0 0.0
    %6843 = vmatpush1.msra.mxu0 %v6328
    %6844 = vmatprep.subr.mxu0 0.0
    %6845 = vmatpush1.msra.mxu0 %v6329
    %6846 = vmatprep.subr.mxu0 0.0
    %6847 = vmatpush1.msra.mxu0 %v6330
    %6848 = vmatprep.subr.mxu0 0.0
    %6849 = vmatpush1.msra.mxu0 %v6331
    %6850 = vmatprep.subr.mxu0 0.0
    %6851 = vmatpush1.msra.mxu0 %v6332
    %6852 = vmatprep.subr.mxu0 0.0
    %6853 = vmatpush1.msra.mxu0 %v6333
    %6854 = vmatprep.subr.mxu0 0.0
    %6855 = vmatpush1.msra.mxu0 %v6334
    %6856 = vmatprep.subr.mxu0 0.0
    %6857 = vmatpush1.msra.mxu0 %v6335
    %6858 = vmatprep.subr.mxu0 0.0
    %6859 = vmatpush1.msra.mxu0 %v6336
    %6860 = vmatprep.subr.mxu0 0.0
    %6861 = vmatpush1.msra.mxu0 %v6337
    %6862 = vmatprep.subr.mxu0 0.0
    %6863 = vmatpush1.msra.mxu0 %v6338
    %6864 = vmatprep.subr.mxu0 0.0
    %6865 = vmatpush1.msra.mxu0 %v6339
    %6866 = vmatprep.subr.mxu0 0.0
    %6867 = vmatpush1.msra.mxu0 %v6340
    %6868 = vmatprep.subr.mxu0 0.0
    %6869 = vmatpush1.msra.mxu0 %v6341
    %6870 = vmatprep.subr.mxu0 0.0
    %6871 = vmatpush1.msra.mxu0 %v6342
    %6872 = vmatprep.mubr.f32.mxu0 %v5706
    %6873 = vmatmul.mubr.f32.gmra.mrb[0].mxu0 %v5705
    %v6874 = vpop.f32.mrb[0].mxu0
    %v6875 = vadd.f32 %v6490, %v6874
    %v6876 = vpop.f32.mrb[0].mxu0
    %6877 = vmatprep.mubr.f32.mxu0 %v5715
    %6878 = vmatmul.mubr.f32.gmra.mrb[0].mxu0 %v5714
    %v6879 = vpop.f32.mrb[0].mxu0
    %v6880 = vadd.f32 %v6495, %v6879
    %v6881 = vpop.f32.mrb[0].mxu0
    %6882 = vmatprep.mubr.f32.mxu0 %v5724
    %6883 = vmatmul.mubr.f32.gmra.mrb[0].mxu0 %v5723
    %v6884 = vpop.f32.mrb[0].mxu0
    %v6885 = vadd.f32 %v6500, %v6884
    %v6886 = vpop.f32.mrb[0].mxu0
    %6887 = vmatprep.mubr.f32.mxu0 %v5733
    %6888 = vmatmul.mubr.f32.gmra.mrb[0].mxu0 %v5732
    %v6889 = vpop.f32.mrb[0].mxu0
    %v6890 = vadd.f32 %v6505, %v6889
    %v6891 = vpop.f32.mrb[0].mxu0
    %6892 = vmatprep.mubr.f32.mxu0 %v5742
    %6893 = vmatmul.mubr.f32.gmra.mrb[0].mxu0 %v5741
    %v6894 = vpop.f32.mrb[0].mxu0
    %v6895 = vadd.f32 %v6510, %v6894
    %v6896 = vpop.f32.mrb[0].mxu0
    %6897 = vmatprep.mubr.f32.mxu0 %v5751
    %6898 = vmatmul.mubr.f32.gmra.mrb[0].mxu0 %v5750
    %v6899 = vpop.f32.mrb[0].mxu0
    %v6900 = vadd.f32 %v6515, %v6899
    %v6901 = vpop.f32.mrb[0].mxu0
    %6902 = vmatprep.mubr.f32.mxu0 %v5760
    %6903 = vmatmul.mubr.f32.gmra.mrb[0].mxu0 %v5759
    %v6904 = vpop.f32.mrb[0].mxu0
    %v6905 = vadd.f32 %v6520, %v6904
    %v6906 = vpop.f32.mrb[0].mxu0
    %6907 = vmatprep.mubr.f32.mxu0 %v5769
    %6908 = vmatmul.mubr.f32.gmra.mrb[0].mxu0 %v5768
    %v6909 = vpop.f32.mrb[0].mxu0
    %v6910 = vadd.f32 %v6525, %v6909
    %v6911 = vpop.f32.mrb[0].mxu0
    %6912 = vmatprep.mubr.f32.mxu0 %v5778
    %6913 = vmatmul.mubr.f32.gmra.mrb[0].mxu0 %v5777
    %v6914 = vpop.f32.mrb[0].mxu0
    %v6915 = vadd.f32 %v6530, %v6914
    %v6916 = vpop.f32.mrb[0].mxu0
    %6917 = vmatprep.mubr.f32.mxu0 %v5787
    %6918 = vmatmul.mubr.f32.gmra.mrb[0].mxu0 %v5786
    %v6919 = vpop.f32.mrb[0].mxu0
    %v6920 = vadd.f32 %v6535, %v6919
    %v6921 = vpop.f32.mrb[0].mxu0
    %6922 = vmatprep.mubr.f32.mxu0 %v5796
    %6923 = vmatmul.mubr.f32.gmra.mrb[0].mxu0 %v5795
    %v6924 = vpop.f32.mrb[0].mxu0
    %v6925 = vadd.f32 %v6540, %v6924
    %v6926 = vpop.f32.mrb[0].mxu0
    %6927 = vmatprep.mubr.f32.mxu0 %v5805
    %6928 = vmatmul.mubr.f32.gmra.mrb[0].mxu0 %v5804
    %v6929 = vpop.f32.mrb[0].mxu0
    %v6930 = vadd.f32 %v6545, %v6929
    %v6931 = vpop.f32.mrb[0].mxu0
    %6932 = vmatprep.mubr.f32.mxu0 %v5814
    %6933 = vmatmul.mubr.f32.gmra.mrb[0].mxu0 %v5813
    %v6934 = vpop.f32.mrb[0].mxu0
    %v6935 = vadd.f32 %v6550, %v6934
    %v6936 = vpop.f32.mrb[0].mxu0
    %6937 = vmatprep.mubr.f32.mxu0 %v5823
    %6938 = vmatmul.mubr.f32.gmra.mrb[0].mxu0 %v5822
    %v6939 = vpop.f32.mrb[0].mxu0
    %v6940 = vadd.f32 %v6555, %v6939
    %v6941 = vpop.f32.mrb[0].mxu0
    %6942 = vmatprep.mubr.f32.mxu0 %v5832
    %6943 = vmatmul.mubr.f32.gmra.mrb[0].mxu0 %v5831
    %v6944 = vpop.f32.mrb[0].mxu0
    %v6945 = vadd.f32 %v6560, %v6944
    %v6946 = vpop.f32.mrb[0].mxu0
    %6947 = vmatprep.mubr.f32.mxu0 %v5841
    %6948 = vmatmul.mubr.f32.gmra.mrb[0].mxu0 %v5840
    %v6949 = vpop.f32.mrb[0].mxu0
    %v6950 = vadd.f32 %v6565, %v6949
    %v6951 = vpop.f32.mrb[0].mxu0
    %6952 = vmatprep.mubr.f32.mxu0 %v5850
    %6953 = vmatmul.mubr.f32.gmra.mrb[0].mxu0 %v5849
    %v6954 = vpop.f32.mrb[0].mxu0
    %v6955 = vadd.f32 %v6570, %v6954
    %v6956 = vpop.f32.mrb[0].mxu0
    %6957 = vmatprep.mubr.f32.mxu0 %v5859
    %6958 = vmatmul.mubr.f32.gmra.mrb[0].mxu0 %v5858
    %v6959 = vpop.f32.mrb[0].mxu0
    %v6960 = vadd.f32 %v6575, %v6959
    %v6961 = vpop.f32.mrb[0].mxu0
    %6962 = vmatprep.mubr.f32.mxu0 %v5868
    %6963 = vmatmul.mubr.f32.gmra.mrb[0].mxu0 %v5867
    %v6964 = vpop.f32.mrb[0].mxu0
    %v6965 = vadd.f32 %v6580, %v6964
    %v6966 = vpop.f32.mrb[0].mxu0
    %6967 = vmatprep.mubr.f32.mxu0 %v5877
    %6968 = vmatmul.mubr.f32.gmra.mrb[0].mxu0 %v5876
    %v6969 = vpop.f32.mrb[0].mxu0
    %v6970 = vadd.f32 %v6585, %v6969
    %v6971 = vpop.f32.mrb[0].mxu0
    %6972 = vmatprep.mubr.f32.mxu0 %v5886
    %6973 = vmatmul.mubr.f32.gmra.mrb[0].mxu0 %v5885
    %v6974 = vpop.f32.mrb[0].mxu0
    %v6975 = vadd.f32 %v6590, %v6974
    %v6976 = vpop.f32.mrb[0].mxu0
    %6977 = vmatprep.mubr.f32.mxu0 %v5895
    %6978 = vmatmul.mubr.f32.gmra.mrb[0].mxu0 %v5894
    %v6979 = vpop.f32.mrb[0].mxu0
    %v6980 = vadd.f32 %v6595, %v6979
    %v6981 = vpop.f32.mrb[0].mxu0
    %6982 = vmatprep.mubr.f32.mxu0 %v5904
    %6983 = vmatmul.mubr.f32.gmra.mrb[0].mxu0 %v5903
    %v6984 = vpop.f32.mrb[0].mxu0
    %v6985 = vadd.f32 %v6600, %v6984
    %v6986 = vpop.f32.mrb[0].mxu0
    %6987 = vmatprep.mubr.f32.mxu0 %v5913
    %6988 = vmatmul.mubr.f32.gmra.mrb[0].mxu0 %v5912
    %v6989 = vpop.f32.mrb[0].mxu0
    %v6990 = vadd.f32 %v6605, %v6989
    %v6991 = vpop.f32.mrb[0].mxu0
    %6992 = vmatprep.mubr.f32.mxu0 %v5922
    %6993 = vmatmul.mubr.f32.gmra.mrb[0].mxu0 %v5921
    %v6994 = vpop.f32.mrb[0].mxu0
    %v6995 = vadd.f32 %v6610, %v6994
    %v6996 = vpop.f32.mrb[0].mxu0
    %6997 = vmatprep.mubr.f32.mxu0 %v5931
    %6998 = vmatmul.mubr.f32.gmra.mrb[0].mxu0 %v5930
    %v6999 = vpop.f32.mrb[0].mxu0
    %v7000 = vadd.f32 %v6615, %v6999
    %v7001 = vpop.f32.mrb[0].mxu0
    %7002 = vmatprep.mubr.f32.mxu0 %v5940
    %7003 = vmatmul.mubr.f32.gmra.mrb[0].mxu0 %v5939
    %v7004 = vpop.f32.mrb[0].mxu0
    %v7005 = vadd.f32 %v6620, %v7004
    %v7006 = vpop.f32.mrb[0].mxu0
    %7007 = vmatprep.mubr.f32.mxu0 %v5949
    %7008 = vmatmul.mubr.f32.gmra.mrb[0].mxu0 %v5948
    %v7009 = vpop.f32.mrb[0].mxu0
    %v7010 = vadd.f32 %v6625, %v7009
    %v7011 = vpop.f32.mrb[0].mxu0
    %7012 = vmatprep.mubr.f32.mxu0 %v5958
    %7013 = vmatmul.mubr.f32.gmra.mrb[0].mxu0 %v5957
    %v7014 = vpop.f32.mrb[0].mxu0
    %v7015 = vadd.f32 %v6630, %v7014
    %v7016 = vpop.f32.mrb[0].mxu0
    %7017 = vmatprep.mubr.f32.mxu0 %v5967
    %7018 = vmatmul.mubr.f32.gmra.mrb[0].mxu0 %v5966
    %v7019 = vpop.f32.mrb[0].mxu0
    %v7020 = vadd.f32 %v6635, %v7019
    %v7021 = vpop.f32.mrb[0].mxu0
    %7022 = vmatprep.mubr.f32.mxu0 %v5976
    %7023 = vmatmul.mubr.f32.gmra.mrb[0].mxu0 %v5975
    %v7024 = vpop.f32.mrb[0].mxu0
    %v7025 = vadd.f32 %v6640, %v7024
    %v7026 = vpop.f32.mrb[0].mxu0
    %7027 = vmatprep.mubr.f32.mxu0 %v5985
    %7028 = vmatmul.mubr.f32.gmra.mrb[0].mxu0 %v5984
    %v7029 = vpop.f32.mrb[0].mxu0
    %v7030 = vadd.f32 %v6645, %v7029
    %v7031 = vpop.f32.mrb[0].mxu0
    %7032 = vmatprep.mubr.f32.mxu0 %v5994
    %7033 = vmatmul.mubr.f32.gmra.mrb[0].mxu0 %v5993
    %v7034 = vpop.f32.mrb[0].mxu0
    %v7035 = vadd.f32 %v6650, %v7034
    %v7036 = vpop.f32.mrb[0].mxu0
    %7037 = vmatprep.mubr.f32.mxu0 %v6003
    %7038 = vmatmul.mubr.f32.gmra.mrb[0].mxu0 %v6002
    %v7039 = vpop.f32.mrb[0].mxu0
    %v7040 = vadd.f32 %v6655, %v7039
    %v7041 = vpop.f32.mrb[0].mxu0
    %7042 = vmatprep.mubr.f32.mxu0 %v6012
    %7043 = vmatmul.mubr.f32.gmra.mrb[0].mxu0 %v6011
    %v7044 = vpop.f32.mrb[0].mxu0
    %v7045 = vadd.f32 %v6660, %v7044
    %v7046 = vpop.f32.mrb[0].mxu0
    %7047 = vmatprep.mubr.f32.mxu0 %v6021
    %7048 = vmatmul.mubr.f32.gmra.mrb[0].mxu0 %v6020
    %v7049 = vpop.f32.mrb[0].mxu0
    %v7050 = vadd.f32 %v6665, %v7049
    %v7051 = vpop.f32.mrb[0].mxu0
    %7052 = vmatprep.mubr.f32.mxu0 %v6030
    %7053 = vmatmul.mubr.f32.gmra.mrb[0].mxu0 %v6029
    %v7054 = vpop.f32.mrb[0].mxu0
    %v7055 = vadd.f32 %v6670, %v7054
    %v7056 = vpop.f32.mrb[0].mxu0
    %7057 = vmatprep.mubr.f32.mxu0 %v6039
    %7058 = vmatmul.mubr.f32.gmra.mrb[0].mxu0 %v6038
    %v7059 = vpop.f32.mrb[0].mxu0
    %v7060 = vadd.f32 %v6675, %v7059
    %v7061 = vpop.f32.mrb[0].mxu0
    %7062 = vmatprep.mubr.f32.mxu0 %v6048
    %7063 = vmatmul.mubr.f32.gmra.mrb[0].mxu0 %v6047
    %v7064 = vpop.f32.mrb[0].mxu0
    %v7065 = vadd.f32 %v6680, %v7064
    %v7066 = vpop.f32.mrb[0].mxu0
    %7067 = vmatprep.mubr.f32.mxu0 %v6057
    %7068 = vmatmul.mubr.f32.gmra.mrb[0].mxu0 %v6056
    %v7069 = vpop.f32.mrb[0].mxu0
    %v7070 = vadd.f32 %v6685, %v7069
    %v7071 = vpop.f32.mrb[0].mxu0
    %7072 = vmatprep.mubr.f32.mxu0 %v6066
    %7073 = vmatmul.mubr.f32.gmra.mrb[0].mxu0 %v6065
    %v7074 = vpop.f32.mrb[0].mxu0
    %v7075 = vadd.f32 %v6690, %v7074
    %v7076 = vpop.f32.mrb[0].mxu0
    %7077 = vmatprep.mubr.f32.mxu0 %v6075
    %7078 = vmatmul.mubr.f32.gmra.mrb[0].mxu0 %v6074
    %v7079 = vpop.f32.mrb[0].mxu0
    %v7080 = vadd.f32 %v6695, %v7079
    %v7081 = vpop.f32.mrb[0].mxu0
    %7082 = vmatprep.mubr.f32.mxu0 %v6084
    %7083 = vmatmul.mubr.f32.gmra.mrb[0].mxu0 %v6083
    %v7084 = vpop.f32.mrb[0].mxu0
    %v7085 = vadd.f32 %v6700, %v7084
    %v7086 = vpop.f32.mrb[0].mxu0
    %7087 = vmatprep.mubr.f32.mxu0 %v6093
    %7088 = vmatmul.mubr.f32.gmra.mrb[0].mxu0 %v6092
    %v7089 = vpop.f32.mrb[0].mxu0
    %v7090 = vadd.f32 %v6705, %v7089
    %v7091 = vpop.f32.mrb[0].mxu0
    %7092 = vmatprep.mubr.f32.mxu0 %v6102
    %7093 = vmatmul.mubr.f32.gmra.mrb[0].mxu0 %v6101
    %v7094 = vpop.f32.mrb[0].mxu0
    %v7095 = vadd.f32 %v6710, %v7094
    %v7096 = vpop.f32.mrb[0].mxu0
    %7097 = vmatprep.mubr.f32.mxu0 %v6111
    %7098 = vmatmul.mubr.f32.gmra.mrb[0].mxu0 %v6110
    %v7099 = vpop.f32.mrb[0].mxu0
    %v7100 = vadd.f32 %v6715, %v7099
    %v7101 = vpop.f32.mrb[0].mxu0
    %7102 = vmatprep.mubr.f32.mxu0 %v6120
    %7103 = vmatmul.mubr.f32.gmra.mrb[0].mxu0 %v6119
    %v7104 = vpop.f32.mrb[0].mxu0
    %v7105 = vadd.f32 %v6720, %v7104
    %v7106 = vpop.f32.mrb[0].mxu0
    %7107 = vmatprep.mubr.f32.mxu0 %v6129
    %7108 = vmatmul.mubr.f32.gmra.mrb[0].mxu0 %v6128
    %v7109 = vpop.f32.mrb[0].mxu0
    %v7110 = vadd.f32 %v6725, %v7109
    %v7111 = vpop.f32.mrb[0].mxu0
    %7112 = vmatprep.mubr.f32.mxu0 %v6138
    %7113 = vmatmul.mubr.f32.gmra.mrb[0].mxu0 %v6137
    %v7114 = vpop.f32.mrb[0].mxu0
    %v7115 = vadd.f32 %v6730, %v7114
    %v7116 = vpop.f32.mrb[0].mxu0
    %7117 = vmatprep.mubr.f32.mxu0 %v6147
    %7118 = vmatmul.mubr.f32.gmra.mrb[0].mxu0 %v6146
    %v7119 = vpop.f32.mrb[0].mxu0
    %v7120 = vadd.f32 %v6735, %v7119
    %v7121 = vpop.f32.mrb[0].mxu0
    %7122 = vmatprep.mubr.f32.mxu0 %v6156
    %7123 = vmatmul.mubr.f32.gmra.mrb[0].mxu0 %v6155
    %v7124 = vpop.f32.mrb[0].mxu0
    %v7125 = vadd.f32 %v6740, %v7124
    %v7126 = vpop.f32.mrb[0].mxu0
    %7127 = vmatprep.mubr.f32.mxu0 %v6165
    %7128 = vmatmul.mubr.f32.gmra.mrb[0].mxu0 %v6164
    %v7129 = vpop.f32.mrb[0].mxu0
    %v7130 = vadd.f32 %v6745, %v7129
    %v7131 = vpop.f32.mrb[0].mxu0
    %7132 = vmatprep.mubr.f32.mxu0 %v6174
    %7133 = vmatmul.mubr.f32.gmra.mrb[0].mxu0 %v6173
    %v7134 = vpop.f32.mrb[0].mxu0
    %v7135 = vadd.f32 %v6750, %v7134
    %v7136 = vpop.f32.mrb[0].mxu0
    %7137 = vmatprep.mubr.f32.mxu0 %v6183
    %7138 = vmatmul.mubr.f32.gmra.mrb[0].mxu0 %v6182
    %v7139 = vpop.f32.mrb[0].mxu0
    %v7140 = vadd.f32 %v6755, %v7139
    %v7141 = vpop.f32.mrb[0].mxu0
    %7142 = vmatprep.mubr.f32.mxu0 %v6192
    %7143 = vmatmul.mubr.f32.gmra.mrb[0].mxu0 %v6191
    %v7144 = vpop.f32.mrb[0].mxu0
    %v7145 = vadd.f32 %v6760, %v7144
    %v7146 = vpop.f32.mrb[0].mxu0
    %7147 = vmatprep.mubr.f32.mxu0 %v6201
    %7148 = vmatmul.mubr.f32.gmra.mrb[0].mxu0 %v6200
    %v7149 = vpop.f32.mrb[0].mxu0
    %v7150 = vadd.f32 %v6765, %v7149
    %v7151 = vpop.f32.mrb[0].mxu0
    %7152 = vmatprep.mubr.f32.mxu0 %v6210
    %7153 = vmatmul.mubr.f32.gmra.mrb[0].mxu0 %v6209
    %v7154 = vpop.f32.mrb[0].mxu0
    %v7155 = vadd.f32 %v6770, %v7154
    %v7156 = vpop.f32.mrb[0].mxu0
    %7157 = vmatprep.mubr.f32.mxu0 %v6219
    %7158 = vmatmul.mubr.f32.gmra.mrb[0].mxu0 %v6218
    %v7159 = vpop.f32.mrb[0].mxu0
    %v7160 = vadd.f32 %v6775, %v7159
    %v7161 = vpop.f32.mrb[0].mxu0
    %7162 = vmatprep.mubr.f32.mxu0 %v6228
    %7163 = vmatmul.mubr.f32.gmra.mrb[0].mxu0 %v6227
    %v7164 = vpop.f32.mrb[0].mxu0
    %v7165 = vadd.f32 %v6780, %v7164
    %v7166 = vpop.f32.mrb[0].mxu0
    %7167 = vmatprep.mubr.f32.mxu0 %v6237
    %7168 = vmatmul.mubr.f32.gmra.mrb[0].mxu0 %v6236
    %v7169 = vpop.f32.mrb[0].mxu0
    %v7170 = vadd.f32 %v6785, %v7169
    %v7171 = vpop.f32.mrb[0].mxu0
    %7172 = vmatprep.mubr.f32.mxu0 %v6246
    %7173 = vmatmul.mubr.f32.gmra.mrb[0].mxu0 %v6245
    %v7174 = vpop.f32.mrb[0].mxu0
    %v7175 = vadd.f32 %v6790, %v7174
    %v7176 = vpop.f32.mrb[0].mxu0
    %7177 = vmatprep.mubr.f32.mxu0 %v6255
    %7178 = vmatmul.mubr.f32.gmra.mrb[0].mxu0 %v6254
    %v7179 = vpop.f32.mrb[0].mxu0
    %v7180 = vadd.f32 %v6795, %v7179
    %v7181 = vpop.f32.mrb[0].mxu0
    %7182 = vmatprep.mubr.f32.mxu0 %v6264
    %7183 = vmatmul.mubr.f32.gmra.mrb[0].mxu0 %v6263
    %v7184 = vpop.f32.mrb[0].mxu0
    %v7185 = vadd.f32 %v6800, %v7184
    %v7186 = vpop.f32.mrb[0].mxu0
    %7187 = vmatprep.mubr.f32.mxu0 %v6273
    %7188 = vmatmul.mubr.f32.gmra.mrb[0].mxu0 %v6272
    %v7189 = vpop.f32.mrb[0].mxu0
    %v7190 = vadd.f32 %v6805, %v7189
    %v7191 = vpop.f32.mrb[0].mxu0
    %7192 = vdwg.mxu0
    %7193 = vmatprep.subr.mxu0 0.0
    %7194 = vmatpush1.msra.mxu0 %v6343
    %7195 = vmatprep.subr.mxu0 0.0
    %7196 = vmatpush1.msra.mxu0 %v6344
    %7197 = vmatprep.subr.mxu0 0.0
    %7198 = vmatpush1.msra.mxu0 %v6345
    %7199 = vmatprep.subr.mxu0 0.0
    %7200 = vmatpush1.msra.mxu0 %v6346
    %7201 = vmatprep.subr.mxu0 0.0
    %7202 = vmatpush1.msra.mxu0 %v6347
    %7203 = vmatprep.subr.mxu0 0.0
    %7204 = vmatpush1.msra.mxu0 %v6348
    %7205 = vmatprep.subr.mxu0 0.0
    %7206 = vmatpush1.msra.mxu0 %v6349
    %7207 = vmatprep.subr.mxu0 0.0
    %7208 = vmatpush1.msra.mxu0 %v6350
    %7209 = vmatprep.subr.mxu0 0.0
    %7210 = vmatpush1.msra.mxu0 %v6351
    %7211 = vmatprep.subr.mxu0 0.0
    %7212 = vmatpush1.msra.mxu0 %v6352
    %7213 = vmatprep.subr.mxu0 0.0
    %7214 = vmatpush1.msra.mxu0 %v6353
    %7215 = vmatprep.subr.mxu0 0.0
    %7216 = vmatpush1.msra.mxu0 %v6354
    %7217 = vmatprep.subr.mxu0 0.0
    %7218 = vmatpush1.msra.mxu0 %v6355
    %7219 = vmatprep.subr.mxu0 0.0
    %7220 = vmatpush1.msra.mxu0 %v6356
    %7221 = vmatprep.subr.mxu0 0.0
    %7222 = vmatpush1.msra.mxu0 %v6357
    %7223 = vmatprep.subr.mxu0 0.0
    %7224 = vmatpush1.msra.mxu0 %v6358
    %7225 = vmatprep.subr.mxu0 0.0
    %7226 = vmatpush1.msra.mxu0 %v6359
    %7227 = vmatprep.subr.mxu0 0.0
    %7228 = vmatpush1.msra.mxu0 %v6360
    %7229 = vmatprep.subr.mxu0 0.0
    %7230 = vmatpush1.msra.mxu0 %v6361
    %7231 = vmatprep.subr.mxu0 0.0
    %7232 = vmatpush1.msra.mxu0 %v6362
    %7233 = vmatprep.subr.mxu0 0.0
    %7234 = vmatpush1.msra.mxu0 %v6363
    %7235 = vmatprep.subr.mxu0 0.0
    %7236 = vmatpush1.msra.mxu0 %v6364
    %7237 = vmatprep.subr.mxu0 0.0
    %7238 = vmatpush1.msra.mxu0 %v6365
    %7239 = vmatprep.subr.mxu0 0.0
    %7240 = vmatpush1.msra.mxu0 %v6366
    %7241 = vmatprep.subr.mxu0 0.0
    %7242 = vmatpush1.msra.mxu0 %v6367
    %7243 = vmatprep.subr.mxu0 0.0
    %7244 = vmatpush1.msra.mxu0 %v6368
    %7245 = vmatprep.subr.mxu0 0.0
    %7246 = vmatpush1.msra.mxu0 %v6369
    %7247 = vmatprep.subr.mxu0 0.0
    %7248 = vmatpush1.msra.mxu0 %v6370
    %7249 = vmatprep.subr.mxu0 0.0
    %7250 = vmatpush1.msra.mxu0 %v6371
    %7251 = vmatprep.subr.mxu0 0.0
    %7252 = vmatpush1.msra.mxu0 %v6372
    %7253 = vmatprep.subr.mxu0 0.0
    %7254 = vmatpush1.msra.mxu0 %v6373
    %7255 = vmatprep.subr.mxu0 0.0
    %7256 = vmatpush1.msra.mxu0 %v6374
    %7257 = vmatprep.mubr.f32.mxu0 %v5708
    %7258 = vmatmul.mubr.f32.gmra.mrb[0].mxu0 %v5707
    %v7259 = vpop.f32.mrb[0].mxu0
    %v7260 = vadd.f32 %v6875, %v7259
    %v7261 = vpop.f32.mrb[0].mxu0
    %7262 = vmatprep.mubr.f32.mxu0 %v5717
    %7263 = vmatmul.mubr.f32.gmra.mrb[0].mxu0 %v5716
    %v7264 = vpop.f32.mrb[0].mxu0
    %v7265 = vadd.f32 %v6880, %v7264
    %v7266 = vpop.f32.mrb[0].mxu0
    %7267 = vmatprep.mubr.f32.mxu0 %v5726
    %7268 = vmatmul.mubr.f32.gmra.mrb[0].mxu0 %v5725
    %v7269 = vpop.f32.mrb[0].mxu0
    %v7270 = vadd.f32 %v6885, %v7269
    %v7271 = vpop.f32.mrb[0].mxu0
    %7272 = vmatprep.mubr.f32.mxu0 %v5735
    %7273 = vmatmul.mubr.f32.gmra.mrb[0].mxu0 %v5734
    %v7274 = vpop.f32.mrb[0].mxu0
    %v7275 = vadd.f32 %v6890, %v7274
    %v7276 = vpop.f32.mrb[0].mxu0
    %7277 = vmatprep.mubr.f32.mxu0 %v5744
    %7278 = vmatmul.mubr.f32.gmra.mrb[0].mxu0 %v5743
    %v7279 = vpop.f32.mrb[0].mxu0
    %v7280 = vadd.f32 %v6895, %v7279
    %v7281 = vpop.f32.mrb[0].mxu0
    %7282 = vmatprep.mubr.f32.mxu0 %v5753
    %7283 = vmatmul.mubr.f32.gmra.mrb[0].mxu0 %v5752
    %v7284 = vpop.f32.mrb[0].mxu0
    %v7285 = vadd.f32 %v6900, %v7284
    %v7286 = vpop.f32.mrb[0].mxu0
    %7287 = vmatprep.mubr.f32.mxu0 %v5762
    %7288 = vmatmul.mubr.f32.gmra.mrb[0].mxu0 %v5761
    %v7289 = vpop.f32.mrb[0].mxu0
    %v7290 = vadd.f32 %v6905, %v7289
    %v7291 = vpop.f32.mrb[0].mxu0
    %7292 = vmatprep.mubr.f32.mxu0 %v5771
    %7293 = vmatmul.mubr.f32.gmra.mrb[0].mxu0 %v5770
    %v7294 = vpop.f32.mrb[0].mxu0
    %v7295 = vadd.f32 %v6910, %v7294
    %v7296 = vpop.f32.mrb[0].mxu0
    %7297 = vmatprep.mubr.f32.mxu0 %v5780
    %7298 = vmatmul.mubr.f32.gmra.mrb[0].mxu0 %v5779
    %v7299 = vpop.f32.mrb[0].mxu0
    %v7300 = vadd.f32 %v6915, %v7299
    %v7301 = vpop.f32.mrb[0].mxu0
    %7302 = vmatprep.mubr.f32.mxu0 %v5789
    %7303 = vmatmul.mubr.f32.gmra.mrb[0].mxu0 %v5788
    %v7304 = vpop.f32.mrb[0].mxu0
    %v7305 = vadd.f32 %v6920, %v7304
    %v7306 = vpop.f32.mrb[0].mxu0
    %7307 = vmatprep.mubr.f32.mxu0 %v5798
    %7308 = vmatmul.mubr.f32.gmra.mrb[0].mxu0 %v5797
    %v7309 = vpop.f32.mrb[0].mxu0
    %v7310 = vadd.f32 %v6925, %v7309
    %v7311 = vpop.f32.mrb[0].mxu0
    %7312 = vmatprep.mubr.f32.mxu0 %v5807
    %7313 = vmatmul.mubr.f32.gmra.mrb[0].mxu0 %v5806
    %v7314 = vpop.f32.mrb[0].mxu0
    %v7315 = vadd.f32 %v6930, %v7314
    %v7316 = vpop.f32.mrb[0].mxu0
    %7317 = vmatprep.mubr.f32.mxu0 %v5816
    %7318 = vmatmul.mubr.f32.gmra.mrb[0].mxu0 %v5815
    %v7319 = vpop.f32.mrb[0].mxu0
    %v7320 = vadd.f32 %v6935, %v7319
    %v7321 = vpop.f32.mrb[0].mxu0
    %7322 = vmatprep.mubr.f32.mxu0 %v5825
    %7323 = vmatmul.mubr.f32.gmra.mrb[0].mxu0 %v5824
    %v7324 = vpop.f32.mrb[0].mxu0
    %v7325 = vadd.f32 %v6940, %v7324
    %v7326 = vpop.f32.mrb[0].mxu0
    %7327 = vmatprep.mubr.f32.mxu0 %v5834
    %7328 = vmatmul.mubr.f32.gmra.mrb[0].mxu0 %v5833
    %v7329 = vpop.f32.mrb[0].mxu0
    %v7330 = vadd.f32 %v6945, %v7329
    %v7331 = vpop.f32.mrb[0].mxu0
    %7332 = vmatprep.mubr.f32.mxu0 %v5843
    %7333 = vmatmul.mubr.f32.gmra.mrb[0].mxu0 %v5842
    %v7334 = vpop.f32.mrb[0].mxu0
    %v7335 = vadd.f32 %v6950, %v7334
    %v7336 = vpop.f32.mrb[0].mxu0
    %7337 = vmatprep.mubr.f32.mxu0 %v5852
    %7338 = vmatmul.mubr.f32.gmra.mrb[0].mxu0 %v5851
    %v7339 = vpop.f32.mrb[0].mxu0
    %v7340 = vadd.f32 %v6955, %v7339
    %v7341 = vpop.f32.mrb[0].mxu0
    %7342 = vmatprep.mubr.f32.mxu0 %v5861
    %7343 = vmatmul.mubr.f32.gmra.mrb[0].mxu0 %v5860
    %v7344 = vpop.f32.mrb[0].mxu0
    %v7345 = vadd.f32 %v6960, %v7344
    %v7346 = vpop.f32.mrb[0].mxu0
    %7347 = vmatprep.mubr.f32.mxu0 %v5870
    %7348 = vmatmul.mubr.f32.gmra.mrb[0].mxu0 %v5869
    %v7349 = vpop.f32.mrb[0].mxu0
    %v7350 = vadd.f32 %v6965, %v7349
    %v7351 = vpop.f32.mrb[0].mxu0
    %7352 = vmatprep.mubr.f32.mxu0 %v5879
    %7353 = vmatmul.mubr.f32.gmra.mrb[0].mxu0 %v5878
    %v7354 = vpop.f32.mrb[0].mxu0
    %v7355 = vadd.f32 %v6970, %v7354
    %v7356 = vpop.f32.mrb[0].mxu0
    %7357 = vmatprep.mubr.f32.mxu0 %v5888
    %7358 = vmatmul.mubr.f32.gmra.mrb[0].mxu0 %v5887
    %v7359 = vpop.f32.mrb[0].mxu0
    %v7360 = vadd.f32 %v6975, %v7359
    %v7361 = vpop.f32.mrb[0].mxu0
    %7362 = vmatprep.mubr.f32.mxu0 %v5897
    %7363 = vmatmul.mubr.f32.gmra.mrb[0].mxu0 %v5896
    %v7364 = vpop.f32.mrb[0].mxu0
    %v7365 = vadd.f32 %v6980, %v7364
    %v7366 = vpop.f32.mrb[0].mxu0
    %7367 = vmatprep.mubr.f32.mxu0 %v5906
    %7368 = vmatmul.mubr.f32.gmra.mrb[0].mxu0 %v5905
    %v7369 = vpop.f32.mrb[0].mxu0
    %v7370 = vadd.f32 %v6985, %v7369
    %v7371 = vpop.f32.mrb[0].mxu0
    %7372 = vmatprep.mubr.f32.mxu0 %v5915
    %7373 = vmatmul.mubr.f32.gmra.mrb[0].mxu0 %v5914
    %v7374 = vpop.f32.mrb[0].mxu0
    %v7375 = vadd.f32 %v6990, %v7374
    %v7376 = vpop.f32.mrb[0].mxu0
    %7377 = vmatprep.mubr.f32.mxu0 %v5924
    %7378 = vmatmul.mubr.f32.gmra.mrb[0].mxu0 %v5923
    %v7379 = vpop.f32.mrb[0].mxu0
    %v7380 = vadd.f32 %v6995, %v7379
    %v7381 = vpop.f32.mrb[0].mxu0
    %7382 = vmatprep.mubr.f32.mxu0 %v5933
    %7383 = vmatmul.mubr.f32.gmra.mrb[0].mxu0 %v5932
    %v7384 = vpop.f32.mrb[0].mxu0
    %v7385 = vadd.f32 %v7000, %v7384
    %v7386 = vpop.f32.mrb[0].mxu0
    %7387 = vmatprep.mubr.f32.mxu0 %v5942
    %7388 = vmatmul.mubr.f32.gmra.mrb[0].mxu0 %v5941
    %v7389 = vpop.f32.mrb[0].mxu0
    %v7390 = vadd.f32 %v7005, %v7389
    %v7391 = vpop.f32.mrb[0].mxu0
    %7392 = vmatprep.mubr.f32.mxu0 %v5951
    %7393 = vmatmul.mubr.f32.gmra.mrb[0].mxu0 %v5950
    %v7394 = vpop.f32.mrb[0].mxu0
    %v7395 = vadd.f32 %v7010, %v7394
    %v7396 = vpop.f32.mrb[0].mxu0
    %7397 = vmatprep.mubr.f32.mxu0 %v5960
    %7398 = vmatmul.mubr.f32.gmra.mrb[0].mxu0 %v5959
    %v7399 = vpop.f32.mrb[0].mxu0
    %v7400 = vadd.f32 %v7015, %v7399
    %v7401 = vpop.f32.mrb[0].mxu0
    %7402 = vmatprep.mubr.f32.mxu0 %v5969
    %7403 = vmatmul.mubr.f32.gmra.mrb[0].mxu0 %v5968
    %v7404 = vpop.f32.mrb[0].mxu0
    %v7405 = vadd.f32 %v7020, %v7404
    %v7406 = vpop.f32.mrb[0].mxu0
    %7407 = vmatprep.mubr.f32.mxu0 %v5978
    %7408 = vmatmul.mubr.f32.gmra.mrb[0].mxu0 %v5977
    %v7409 = vpop.f32.mrb[0].mxu0
    %v7410 = vadd.f32 %v7025, %v7409
    %v7411 = vpop.f32.mrb[0].mxu0
    %7412 = vmatprep.mubr.f32.mxu0 %v5987
    %7413 = vmatmul.mubr.f32.gmra.mrb[0].mxu0 %v5986
    %v7414 = vpop.f32.mrb[0].mxu0
    %v7415 = vadd.f32 %v7030, %v7414
    %v7416 = vpop.f32.mrb[0].mxu0
    %7417 = vmatprep.mubr.f32.mxu0 %v5996
    %7418 = vmatmul.mubr.f32.gmra.mrb[0].mxu0 %v5995
    %v7419 = vpop.f32.mrb[0].mxu0
    %v7420 = vadd.f32 %v7035, %v7419
    %v7421 = vpop.f32.mrb[0].mxu0
    %7422 = vmatprep.mubr.f32.mxu0 %v6005
    %7423 = vmatmul.mubr.f32.gmra.mrb[0].mxu0 %v6004
    %v7424 = vpop.f32.mrb[0].mxu0
    %v7425 = vadd.f32 %v7040, %v7424
    %v7426 = vpop.f32.mrb[0].mxu0
    %7427 = vmatprep.mubr.f32.mxu0 %v6014
    %7428 = vmatmul.mubr.f32.gmra.mrb[0].mxu0 %v6013
    %v7429 = vpop.f32.mrb[0].mxu0
    %v7430 = vadd.f32 %v7045, %v7429
    %v7431 = vpop.f32.mrb[0].mxu0
    %7432 = vmatprep.mubr.f32.mxu0 %v6023
    %7433 = vmatmul.mubr.f32.gmra.mrb[0].mxu0 %v6022
    %v7434 = vpop.f32.mrb[0].mxu0
    %v7435 = vadd.f32 %v7050, %v7434
    %v7436 = vpop.f32.mrb[0].mxu0
    %7437 = vmatprep.mubr.f32.mxu0 %v6032
    %7438 = vmatmul.mubr.f32.gmra.mrb[0].mxu0 %v6031
    %v7439 = vpop.f32.mrb[0].mxu0
    %v7440 = vadd.f32 %v7055, %v7439
    %v7441 = vpop.f32.mrb[0].mxu0
    %7442 = vmatprep.mubr.f32.mxu0 %v6041
    %7443 = vmatmul.mubr.f32.gmra.mrb[0].mxu0 %v6040
    %v7444 = vpop.f32.mrb[0].mxu0
    %v7445 = vadd.f32 %v7060, %v7444
    %v7446 = vpop.f32.mrb[0].mxu0
    %7447 = vmatprep.mubr.f32.mxu0 %v6050
    %7448 = vmatmul.mubr.f32.gmra.mrb[0].mxu0 %v6049
    %v7449 = vpop.f32.mrb[0].mxu0
    %v7450 = vadd.f32 %v7065, %v7449
    %v7451 = vpop.f32.mrb[0].mxu0
    %7452 = vmatprep.mubr.f32.mxu0 %v6059
    %7453 = vmatmul.mubr.f32.gmra.mrb[0].mxu0 %v6058
    %v7454 = vpop.f32.mrb[0].mxu0
    %v7455 = vadd.f32 %v7070, %v7454
    %v7456 = vpop.f32.mrb[0].mxu0
    %7457 = vmatprep.mubr.f32.mxu0 %v6068
    %7458 = vmatmul.mubr.f32.gmra.mrb[0].mxu0 %v6067
    %v7459 = vpop.f32.mrb[0].mxu0
    %v7460 = vadd.f32 %v7075, %v7459
    %v7461 = vpop.f32.mrb[0].mxu0
    %7462 = vmatprep.mubr.f32.mxu0 %v6077
    %7463 = vmatmul.mubr.f32.gmra.mrb[0].mxu0 %v6076
    %v7464 = vpop.f32.mrb[0].mxu0
    %v7465 = vadd.f32 %v7080, %v7464
    %v7466 = vpop.f32.mrb[0].mxu0
    %7467 = vmatprep.mubr.f32.mxu0 %v6086
    %7468 = vmatmul.mubr.f32.gmra.mrb[0].mxu0 %v6085
    %v7469 = vpop.f32.mrb[0].mxu0
    %v7470 = vadd.f32 %v7085, %v7469
    %v7471 = vpop.f32.mrb[0].mxu0
    %7472 = vmatprep.mubr.f32.mxu0 %v6095
    %7473 = vmatmul.mubr.f32.gmra.mrb[0].mxu0 %v6094
    %v7474 = vpop.f32.mrb[0].mxu0
    %v7475 = vadd.f32 %v7090, %v7474
    %v7476 = vpop.f32.mrb[0].mxu0
    %7477 = vmatprep.mubr.f32.mxu0 %v6104
    %7478 = vmatmul.mubr.f32.gmra.mrb[0].mxu0 %v6103
    %v7479 = vpop.f32.mrb[0].mxu0
    %v7480 = vadd.f32 %v7095, %v7479
    %v7481 = vpop.f32.mrb[0].mxu0
    %7482 = vmatprep.mubr.f32.mxu0 %v6113
    %7483 = vmatmul.mubr.f32.gmra.mrb[0].mxu0 %v6112
    %v7484 = vpop.f32.mrb[0].mxu0
    %v7485 = vadd.f32 %v7100, %v7484
    %v7486 = vpop.f32.mrb[0].mxu0
    %7487 = vmatprep.mubr.f32.mxu0 %v6122
    %7488 = vmatmul.mubr.f32.gmra.mrb[0].mxu0 %v6121
    %v7489 = vpop.f32.mrb[0].mxu0
    %v7490 = vadd.f32 %v7105, %v7489
    %v7491 = vpop.f32.mrb[0].mxu0
    %7492 = vmatprep.mubr.f32.mxu0 %v6131
    %7493 = vmatmul.mubr.f32.gmra.mrb[0].mxu0 %v6130
    %v7494 = vpop.f32.mrb[0].mxu0
    %v7495 = vadd.f32 %v7110, %v7494
    %v7496 = vpop.f32.mrb[0].mxu0
    %7497 = vmatprep.mubr.f32.mxu0 %v6140
    %7498 = vmatmul.mubr.f32.gmra.mrb[0].mxu0 %v6139
    %v7499 = vpop.f32.mrb[0].mxu0
    %v7500 = vadd.f32 %v7115, %v7499
    %v7501 = vpop.f32.mrb[0].mxu0
    %7502 = vmatprep.mubr.f32.mxu0 %v6149
    %7503 = vmatmul.mubr.f32.gmra.mrb[0].mxu0 %v6148
    %v7504 = vpop.f32.mrb[0].mxu0
    %v7505 = vadd.f32 %v7120, %v7504
    %v7506 = vpop.f32.mrb[0].mxu0
    %7507 = vmatprep.mubr.f32.mxu0 %v6158
    %7508 = vmatmul.mubr.f32.gmra.mrb[0].mxu0 %v6157
    %v7509 = vpop.f32.mrb[0].mxu0
    %v7510 = vadd.f32 %v7125, %v7509
    %v7511 = vpop.f32.mrb[0].mxu0
    %7512 = vmatprep.mubr.f32.mxu0 %v6167
    %7513 = vmatmul.mubr.f32.gmra.mrb[0].mxu0 %v6166
    %v7514 = vpop.f32.mrb[0].mxu0
    %v7515 = vadd.f32 %v7130, %v7514
    %v7516 = vpop.f32.mrb[0].mxu0
    %7517 = vmatprep.mubr.f32.mxu0 %v6176
    %7518 = vmatmul.mubr.f32.gmra.mrb[0].mxu0 %v6175
    %v7519 = vpop.f32.mrb[0].mxu0
    %v7520 = vadd.f32 %v7135, %v7519
    %v7521 = vpop.f32.mrb[0].mxu0
    %7522 = vmatprep.mubr.f32.mxu0 %v6185
    %7523 = vmatmul.mubr.f32.gmra.mrb[0].mxu0 %v6184
    %v7524 = vpop.f32.mrb[0].mxu0
    %v7525 = vadd.f32 %v7140, %v7524
    %v7526 = vpop.f32.mrb[0].mxu0
    %7527 = vmatprep.mubr.f32.mxu0 %v6194
    %7528 = vmatmul.mubr.f32.gmra.mrb[0].mxu0 %v6193
    %v7529 = vpop.f32.mrb[0].mxu0
    %v7530 = vadd.f32 %v7145, %v7529
    %v7531 = vpop.f32.mrb[0].mxu0
    %7532 = vmatprep.mubr.f32.mxu0 %v6203
    %7533 = vmatmul.mubr.f32.gmra.mrb[0].mxu0 %v6202
    %v7534 = vpop.f32.mrb[0].mxu0
    %v7535 = vadd.f32 %v7150, %v7534
    %v7536 = vpop.f32.mrb[0].mxu0
    %7537 = vmatprep.mubr.f32.mxu0 %v6212
    %7538 = vmatmul.mubr.f32.gmra.mrb[0].mxu0 %v6211
    %v7539 = vpop.f32.mrb[0].mxu0
    %v7540 = vadd.f32 %v7155, %v7539
    %v7541 = vpop.f32.mrb[0].mxu0
    %7542 = vmatprep.mubr.f32.mxu0 %v6221
    %7543 = vmatmul.mubr.f32.gmra.mrb[0].mxu0 %v6220
    %v7544 = vpop.f32.mrb[0].mxu0
    %v7545 = vadd.f32 %v7160, %v7544
    %v7546 = vpop.f32.mrb[0].mxu0
    %7547 = vmatprep.mubr.f32.mxu0 %v6230
    %7548 = vmatmul.mubr.f32.gmra.mrb[0].mxu0 %v6229
    %v7549 = vpop.f32.mrb[0].mxu0
    %v7550 = vadd.f32 %v7165, %v7549
    %v7551 = vpop.f32.mrb[0].mxu0
    %7552 = vmatprep.mubr.f32.mxu0 %v6239
    %7553 = vmatmul.mubr.f32.gmra.mrb[0].mxu0 %v6238
    %v7554 = vpop.f32.mrb[0].mxu0
    %v7555 = vadd.f32 %v7170, %v7554
    %v7556 = vpop.f32.mrb[0].mxu0
    %7557 = vmatprep.mubr.f32.mxu0 %v6248
    %7558 = vmatmul.mubr.f32.gmra.mrb[0].mxu0 %v6247
    %v7559 = vpop.f32.mrb[0].mxu0
    %v7560 = vadd.f32 %v7175, %v7559
    %v7561 = vpop.f32.mrb[0].mxu0
    %7562 = vmatprep.mubr.f32.mxu0 %v6257
    %7563 = vmatmul.mubr.f32.gmra.mrb[0].mxu0 %v6256
    %v7564 = vpop.f32.mrb[0].mxu0
    %v7565 = vadd.f32 %v7180, %v7564
    %v7566 = vpop.f32.mrb[0].mxu0
    %7567 = vmatprep.mubr.f32.mxu0 %v6266
    %7568 = vmatmul.mubr.f32.gmra.mrb[0].mxu0 %v6265
    %v7569 = vpop.f32.mrb[0].mxu0
    %v7570 = vadd.f32 %v7185, %v7569
    %v7571 = vpop.f32.mrb[0].mxu0
    %7572 = vmatprep.mubr.f32.mxu0 %v6275
    %7573 = vmatmul.mubr.f32.gmra.mrb[0].mxu0 %v6274
    %v7574 = vpop.f32.mrb[0].mxu0
    %v7575 = vadd.f32 %v7190, %v7574
    %v7576 = vpop.f32.mrb[0].mxu0
    %7577 = vdwg.mxu0
    %7578 = vmatprep.subr.mxu0 0.0
    %7579 = vmatpush1.msra.mxu0 %v6375
    %7580 = vmatprep.subr.mxu0 0.0
    %7581 = vmatpush1.msra.mxu0 %v6376
    %7582 = vmatprep.subr.mxu0 0.0
    %7583 = vmatpush1.msra.mxu0 %v6377
    %7584 = vmatprep.subr.mxu0 0.0
    %7585 = vmatpush1.msra.mxu0 %v6378
    %7586 = vmatprep.subr.mxu0 0.0
    %7587 = vmatpush1.msra.mxu0 %v6379
    %7588 = vmatprep.subr.mxu0 0.0
    %7589 = vmatpush1.msra.mxu0 %v6380
    %7590 = vmatprep.subr.mxu0 0.0
    %7591 = vmatpush1.msra.mxu0 %v6381
    %7592 = vmatprep.subr.mxu0 0.0
    %7593 = vmatpush1.msra.mxu0 %v6382
    %7594 = vmatprep.subr.mxu0 0.0
    %7595 = vmatpush1.msra.mxu0 %v6383
    %7596 = vmatprep.subr.mxu0 0.0
    %7597 = vmatpush1.msra.mxu0 %v6384
    %7598 = vmatprep.subr.mxu0 0.0
    %7599 = vmatpush1.msra.mxu0 %v6385
    %7600 = vmatprep.subr.mxu0 0.0
    %7601 = vmatpush1.msra.mxu0 %v6386
    %7602 = vmatprep.subr.mxu0 0.0
    %7603 = vmatpush1.msra.mxu0 %v6387
    %7604 = vmatprep.subr.mxu0 0.0
    %7605 = vmatpush1.msra.mxu0 %v6388
    %7606 = vmatprep.subr.mxu0 0.0
    %7607 = vmatpush1.msra.mxu0 %v6389
    %7608 = vmatprep.subr.mxu0 0.0
    %7609 = vmatpush1.msra.mxu0 %v6390
    %7610 = vmatprep.subr.mxu0 0.0
    %7611 = vmatpush1.msra.mxu0 %v6391
    %7612 = vmatprep.subr.mxu0 0.0
    %7613 = vmatpush1.msra.mxu0 %v6392
    %7614 = vmatprep.subr.mxu0 0.0
    %7615 = vmatpush1.msra.mxu0 %v6393
    %7616 = vmatprep.subr.mxu0 0.0
    %7617 = vmatpush1.msra.mxu0 %v6394
    %7618 = vmatprep.subr.mxu0 0.0
    %7619 = vmatpush1.msra.mxu0 %v6395
    %7620 = vmatprep.subr.mxu0 0.0
    %7621 = vmatpush1.msra.mxu0 %v6396
    %7622 = vmatprep.subr.mxu0 0.0
    %7623 = vmatpush1.msra.mxu0 %v6397
    %7624 = vmatprep.subr.mxu0 0.0
    %7625 = vmatpush1.msra.mxu0 %v6398
    %7626 = vmatprep.subr.mxu0 0.0
    %7627 = vmatpush1.msra.mxu0 %v6399
    %7628 = vmatprep.subr.mxu0 0.0
    %7629 = vmatpush1.msra.mxu0 %v6400
    %7630 = vmatprep.subr.mxu0 0.0
    %7631 = vmatpush1.msra.mxu0 %v6401
    %7632 = vmatprep.subr.mxu0 0.0
    %7633 = vmatpush1.msra.mxu0 %v6402
    %7634 = vmatprep.subr.mxu0 0.0
    %7635 = vmatpush1.msra.mxu0 %v6403
    %7636 = vmatprep.subr.mxu0 0.0
    %7637 = vmatpush1.msra.mxu0 %v6404
    %7638 = vmatprep.subr.mxu0 0.0
    %7639 = vmatpush1.msra.mxu0 %v6405
    %7640 = vmatprep.subr.mxu0 0.0
    %7641 = vmatpush1.msra.mxu0 %v6406
    %7642 = vmatprep.mubr.f32.mxu0 %v5710
    %7643 = vmatmul.mubr.f32.gmra.mrb[0].mxu0 %v5709
    %v7644 = vpop.f32.mrb[0].mxu0
    %v7645 = vadd.f32 %v7260, %v7644
    %v7646 = vpop.f32.mrb[0].mxu0
    %7647 = vmatprep.mubr.f32.mxu0 %v5719
    %7648 = vmatmul.mubr.f32.gmra.mrb[0].mxu0 %v5718
    %v7649 = vpop.f32.mrb[0].mxu0
    %v7650 = vadd.f32 %v7265, %v7649
    %v7651 = vpop.f32.mrb[0].mxu0
    %7652 = vmatprep.mubr.f32.mxu0 %v5728
    %7653 = vmatmul.mubr.f32.gmra.mrb[0].mxu0 %v5727
    %v7654 = vpop.f32.mrb[0].mxu0
    %v7655 = vadd.f32 %v7270, %v7654
    %v7656 = vpop.f32.mrb[0].mxu0
    %7657 = vmatprep.mubr.f32.mxu0 %v5737
    %7658 = vmatmul.mubr.f32.gmra.mrb[0].mxu0 %v5736
    %v7659 = vpop.f32.mrb[0].mxu0
    %v7660 = vadd.f32 %v7275, %v7659
    %v7661 = vpop.f32.mrb[0].mxu0
    %7662 = vmatprep.mubr.f32.mxu0 %v5746
    %7663 = vmatmul.mubr.f32.gmra.mrb[0].mxu0 %v5745
    %v7664 = vpop.f32.mrb[0].mxu0
    %v7665 = vadd.f32 %v7280, %v7664
    %v7666 = vpop.f32.mrb[0].mxu0
    %7667 = vmatprep.mubr.f32.mxu0 %v5755
    %7668 = vmatmul.mubr.f32.gmra.mrb[0].mxu0 %v5754
    %v7669 = vpop.f32.mrb[0].mxu0
    %v7670 = vadd.f32 %v7285, %v7669
    %v7671 = vpop.f32.mrb[0].mxu0
    %7672 = vmatprep.mubr.f32.mxu0 %v5764
    %7673 = vmatmul.mubr.f32.gmra.mrb[0].mxu0 %v5763
    %v7674 = vpop.f32.mrb[0].mxu0
    %v7675 = vadd.f32 %v7290, %v7674
    %v7676 = vpop.f32.mrb[0].mxu0
    %7677 = vmatprep.mubr.f32.mxu0 %v5773
    %7678 = vmatmul.mubr.f32.gmra.mrb[0].mxu0 %v5772
    %v7679 = vpop.f32.mrb[0].mxu0
    %v7680 = vadd.f32 %v7295, %v7679
    %v7681 = vpop.f32.mrb[0].mxu0
    %7682 = vmatprep.mubr.f32.mxu0 %v5782
    %7683 = vmatmul.mubr.f32.gmra.mrb[0].mxu0 %v5781
    %v7684 = vpop.f32.mrb[0].mxu0
    %v7685 = vadd.f32 %v7300, %v7684
    %v7686 = vpop.f32.mrb[0].mxu0
    %7687 = vmatprep.mubr.f32.mxu0 %v5791
    %7688 = vmatmul.mubr.f32.gmra.mrb[0].mxu0 %v5790
    %v7689 = vpop.f32.mrb[0].mxu0
    %v7690 = vadd.f32 %v7305, %v7689
    %v7691 = vpop.f32.mrb[0].mxu0
    %7692 = vmatprep.mubr.f32.mxu0 %v5800
    %7693 = vmatmul.mubr.f32.gmra.mrb[0].mxu0 %v5799
    %v7694 = vpop.f32.mrb[0].mxu0
    %v7695 = vadd.f32 %v7310, %v7694
    %v7696 = vpop.f32.mrb[0].mxu0
    %7697 = vmatprep.mubr.f32.mxu0 %v5809
    %7698 = vmatmul.mubr.f32.gmra.mrb[0].mxu0 %v5808
    %v7699 = vpop.f32.mrb[0].mxu0
    %v7700 = vadd.f32 %v7315, %v7699
    %v7701 = vpop.f32.mrb[0].mxu0
    %7702 = vmatprep.mubr.f32.mxu0 %v5818
    %7703 = vmatmul.mubr.f32.gmra.mrb[0].mxu0 %v5817
    %v7704 = vpop.f32.mrb[0].mxu0
    %v7705 = vadd.f32 %v7320, %v7704
    %v7706 = vpop.f32.mrb[0].mxu0
    %7707 = vmatprep.mubr.f32.mxu0 %v5827
    %7708 = vmatmul.mubr.f32.gmra.mrb[0].mxu0 %v5826
    %v7709 = vpop.f32.mrb[0].mxu0
    %v7710 = vadd.f32 %v7325, %v7709
    %v7711 = vpop.f32.mrb[0].mxu0
    %7712 = vmatprep.mubr.f32.mxu0 %v5836
    %7713 = vmatmul.mubr.f32.gmra.mrb[0].mxu0 %v5835
    %v7714 = vpop.f32.mrb[0].mxu0
    %v7715 = vadd.f32 %v7330, %v7714
    %v7716 = vpop.f32.mrb[0].mxu0
    %7717 = vmatprep.mubr.f32.mxu0 %v5845
    %7718 = vmatmul.mubr.f32.gmra.mrb[0].mxu0 %v5844
    %v7719 = vpop.f32.mrb[0].mxu0
    %v7720 = vadd.f32 %v7335, %v7719
    %v7721 = vpop.f32.mrb[0].mxu0
    %7722 = vmatprep.mubr.f32.mxu0 %v5854
    %7723 = vmatmul.mubr.f32.gmra.mrb[0].mxu0 %v5853
    %v7724 = vpop.f32.mrb[0].mxu0
    %v7725 = vadd.f32 %v7340, %v7724
    %v7726 = vpop.f32.mrb[0].mxu0
    %7727 = vmatprep.mubr.f32.mxu0 %v5863
    %7728 = vmatmul.mubr.f32.gmra.mrb[0].mxu0 %v5862
    %v7729 = vpop.f32.mrb[0].mxu0
    %v7730 = vadd.f32 %v7345, %v7729
    %v7731 = vpop.f32.mrb[0].mxu0
    %7732 = vmatprep.mubr.f32.mxu0 %v5872
    %7733 = vmatmul.mubr.f32.gmra.mrb[0].mxu0 %v5871
    %v7734 = vpop.f32.mrb[0].mxu0
    %v7735 = vadd.f32 %v7350, %v7734
    %v7736 = vpop.f32.mrb[0].mxu0
    %7737 = vmatprep.mubr.f32.mxu0 %v5881
    %7738 = vmatmul.mubr.f32.gmra.mrb[0].mxu0 %v5880
    %v7739 = vpop.f32.mrb[0].mxu0
    %v7740 = vadd.f32 %v7355, %v7739
    %v7741 = vpop.f32.mrb[0].mxu0
    %7742 = vmatprep.mubr.f32.mxu0 %v5890
    %7743 = vmatmul.mubr.f32.gmra.mrb[0].mxu0 %v5889
    %v7744 = vpop.f32.mrb[0].mxu0
    %v7745 = vadd.f32 %v7360, %v7744
    %v7746 = vpop.f32.mrb[0].mxu0
    %7747 = vmatprep.mubr.f32.mxu0 %v5899
    %7748 = vmatmul.mubr.f32.gmra.mrb[0].mxu0 %v5898
    %v7749 = vpop.f32.mrb[0].mxu0
    %v7750 = vadd.f32 %v7365, %v7749
    %v7751 = vpop.f32.mrb[0].mxu0
    %7752 = vmatprep.mubr.f32.mxu0 %v5908
    %7753 = vmatmul.mubr.f32.gmra.mrb[0].mxu0 %v5907
    %v7754 = vpop.f32.mrb[0].mxu0
    %v7755 = vadd.f32 %v7370, %v7754
    %v7756 = vpop.f32.mrb[0].mxu0
    %7757 = vmatprep.mubr.f32.mxu0 %v5917
    %7758 = vmatmul.mubr.f32.gmra.mrb[0].mxu0 %v5916
    %v7759 = vpop.f32.mrb[0].mxu0
    %v7760 = vadd.f32 %v7375, %v7759
    %v7761 = vpop.f32.mrb[0].mxu0
    %7762 = vmatprep.mubr.f32.mxu0 %v5926
    %7763 = vmatmul.mubr.f32.gmra.mrb[0].mxu0 %v5925
    %v7764 = vpop.f32.mrb[0].mxu0
    %v7765 = vadd.f32 %v7380, %v7764
    %v7766 = vpop.f32.mrb[0].mxu0
    %7767 = vmatprep.mubr.f32.mxu0 %v5935
    %7768 = vmatmul.mubr.f32.gmra.mrb[0].mxu0 %v5934
    %v7769 = vpop.f32.mrb[0].mxu0
    %v7770 = vadd.f32 %v7385, %v7769
    %v7771 = vpop.f32.mrb[0].mxu0
    %7772 = vmatprep.mubr.f32.mxu0 %v5944
    %7773 = vmatmul.mubr.f32.gmra.mrb[0].mxu0 %v5943
    %v7774 = vpop.f32.mrb[0].mxu0
    %v7775 = vadd.f32 %v7390, %v7774
    %v7776 = vpop.f32.mrb[0].mxu0
    %7777 = vmatprep.mubr.f32.mxu0 %v5953
    %7778 = vmatmul.mubr.f32.gmra.mrb[0].mxu0 %v5952
    %v7779 = vpop.f32.mrb[0].mxu0
    %v7780 = vadd.f32 %v7395, %v7779
    %v7781 = vpop.f32.mrb[0].mxu0
    %7782 = vmatprep.mubr.f32.mxu0 %v5962
    %7783 = vmatmul.mubr.f32.gmra.mrb[0].mxu0 %v5961
    %v7784 = vpop.f32.mrb[0].mxu0
    %v7785 = vadd.f32 %v7400, %v7784
    %v7786 = vpop.f32.mrb[0].mxu0
    %7787 = vmatprep.mubr.f32.mxu0 %v5971
    %7788 = vmatmul.mubr.f32.gmra.mrb[0].mxu0 %v5970
    %v7789 = vpop.f32.mrb[0].mxu0
    %v7790 = vadd.f32 %v7405, %v7789
    %v7791 = vpop.f32.mrb[0].mxu0
    %7792 = vmatprep.mubr.f32.mxu0 %v5980
    %7793 = vmatmul.mubr.f32.gmra.mrb[0].mxu0 %v5979
    %v7794 = vpop.f32.mrb[0].mxu0
    %v7795 = vadd.f32 %v7410, %v7794
    %v7796 = vpop.f32.mrb[0].mxu0
    %7797 = vmatprep.mubr.f32.mxu0 %v5989
    %7798 = vmatmul.mubr.f32.gmra.mrb[0].mxu0 %v5988
    %v7799 = vpop.f32.mrb[0].mxu0
    %v7800 = vadd.f32 %v7415, %v7799
    %v7801 = vpop.f32.mrb[0].mxu0
    %7802 = vmatprep.mubr.f32.mxu0 %v5998
    %7803 = vmatmul.mubr.f32.gmra.mrb[0].mxu0 %v5997
    %v7804 = vpop.f32.mrb[0].mxu0
    %v7805 = vadd.f32 %v7420, %v7804
    %v7806 = vpop.f32.mrb[0].mxu0
    %7807 = vmatprep.mubr.f32.mxu0 %v6007
    %7808 = vmatmul.mubr.f32.gmra.mrb[0].mxu0 %v6006
    %v7809 = vpop.f32.mrb[0].mxu0
    %v7810 = vadd.f32 %v7425, %v7809
    %v7811 = vpop.f32.mrb[0].mxu0
    %7812 = vmatprep.mubr.f32.mxu0 %v6016
    %7813 = vmatmul.mubr.f32.gmra.mrb[0].mxu0 %v6015
    %v7814 = vpop.f32.mrb[0].mxu0
    %v7815 = vadd.f32 %v7430, %v7814
    %v7816 = vpop.f32.mrb[0].mxu0
    %7817 = vmatprep.mubr.f32.mxu0 %v6025
    %7818 = vmatmul.mubr.f32.gmra.mrb[0].mxu0 %v6024
    %v7819 = vpop.f32.mrb[0].mxu0
    %v7820 = vadd.f32 %v7435, %v7819
    %v7821 = vpop.f32.mrb[0].mxu0
    %7822 = vmatprep.mubr.f32.mxu0 %v6034
    %7823 = vmatmul.mubr.f32.gmra.mrb[0].mxu0 %v6033
    %v7824 = vpop.f32.mrb[0].mxu0
    %v7825 = vadd.f32 %v7440, %v7824
    %v7826 = vpop.f32.mrb[0].mxu0
    %7827 = vmatprep.mubr.f32.mxu0 %v6043
    %7828 = vmatmul.mubr.f32.gmra.mrb[0].mxu0 %v6042
    %v7829 = vpop.f32.mrb[0].mxu0
    %v7830 = vadd.f32 %v7445, %v7829
    %v7831 = vpop.f32.mrb[0].mxu0
    %7832 = vmatprep.mubr.f32.mxu0 %v6052
    %7833 = vmatmul.mubr.f32.gmra.mrb[0].mxu0 %v6051
    %v7834 = vpop.f32.mrb[0].mxu0
    %v7835 = vadd.f32 %v7450, %v7834
    %v7836 = vpop.f32.mrb[0].mxu0
    %7837 = vmatprep.mubr.f32.mxu0 %v6061
    %7838 = vmatmul.mubr.f32.gmra.mrb[0].mxu0 %v6060
    %v7839 = vpop.f32.mrb[0].mxu0
    %v7840 = vadd.f32 %v7455, %v7839
    %v7841 = vpop.f32.mrb[0].mxu0
    %7842 = vmatprep.mubr.f32.mxu0 %v6070
    %7843 = vmatmul.mubr.f32.gmra.mrb[0].mxu0 %v6069
    %v7844 = vpop.f32.mrb[0].mxu0
    %v7845 = vadd.f32 %v7460, %v7844
    %v7846 = vpop.f32.mrb[0].mxu0
    %7847 = vmatprep.mubr.f32.mxu0 %v6079
    %7848 = vmatmul.mubr.f32.gmra.mrb[0].mxu0 %v6078
    %v7849 = vpop.f32.mrb[0].mxu0
    %v7850 = vadd.f32 %v7465, %v7849
    %v7851 = vpop.f32.mrb[0].mxu0
    %7852 = vmatprep.mubr.f32.mxu0 %v6088
    %7853 = vmatmul.mubr.f32.gmra.mrb[0].mxu0 %v6087
    %v7854 = vpop.f32.mrb[0].mxu0
    %v7855 = vadd.f32 %v7470, %v7854
    %v7856 = vpop.f32.mrb[0].mxu0
    %7857 = vmatprep.mubr.f32.mxu0 %v6097
    %7858 = vmatmul.mubr.f32.gmra.mrb[0].mxu0 %v6096
    %v7859 = vpop.f32.mrb[0].mxu0
    %v7860 = vadd.f32 %v7475, %v7859
    %v7861 = vpop.f32.mrb[0].mxu0
    %7862 = vmatprep.mubr.f32.mxu0 %v6106
    %7863 = vmatmul.mubr.f32.gmra.mrb[0].mxu0 %v6105
    %v7864 = vpop.f32.mrb[0].mxu0
    %v7865 = vadd.f32 %v7480, %v7864
    %v7866 = vpop.f32.mrb[0].mxu0
    %7867 = vmatprep.mubr.f32.mxu0 %v6115
    %7868 = vmatmul.mubr.f32.gmra.mrb[0].mxu0 %v6114
    %v7869 = vpop.f32.mrb[0].mxu0
    %v7870 = vadd.f32 %v7485, %v7869
    %v7871 = vpop.f32.mrb[0].mxu0
    %7872 = vmatprep.mubr.f32.mxu0 %v6124
    %7873 = vmatmul.mubr.f32.gmra.mrb[0].mxu0 %v6123
    %v7874 = vpop.f32.mrb[0].mxu0
    %v7875 = vadd.f32 %v7490, %v7874
    %v7876 = vpop.f32.mrb[0].mxu0
    %7877 = vmatprep.mubr.f32.mxu0 %v6133
    %7878 = vmatmul.mubr.f32.gmra.mrb[0].mxu0 %v6132
    %v7879 = vpop.f32.mrb[0].mxu0
    %v7880 = vadd.f32 %v7495, %v7879
    %v7881 = vpop.f32.mrb[0].mxu0
    %7882 = vmatprep.mubr.f32.mxu0 %v6142
    %7883 = vmatmul.mubr.f32.gmra.mrb[0].mxu0 %v6141
    %v7884 = vpop.f32.mrb[0].mxu0
    %v7885 = vadd.f32 %v7500, %v7884
    %v7886 = vpop.f32.mrb[0].mxu0
    %7887 = vmatprep.mubr.f32.mxu0 %v6151
    %7888 = vmatmul.mubr.f32.gmra.mrb[0].mxu0 %v6150
    %v7889 = vpop.f32.mrb[0].mxu0
    %v7890 = vadd.f32 %v7505, %v7889
    %v7891 = vpop.f32.mrb[0].mxu0
    %7892 = vmatprep.mubr.f32.mxu0 %v6160
    %7893 = vmatmul.mubr.f32.gmra.mrb[0].mxu0 %v6159
    %v7894 = vpop.f32.mrb[0].mxu0
    %v7895 = vadd.f32 %v7510, %v7894
    %v7896 = vpop.f32.mrb[0].mxu0
    %7897 = vmatprep.mubr.f32.mxu0 %v6169
    %7898 = vmatmul.mubr.f32.gmra.mrb[0].mxu0 %v6168
    %v7899 = vpop.f32.mrb[0].mxu0
    %v7900 = vadd.f32 %v7515, %v7899
    %v7901 = vpop.f32.mrb[0].mxu0
    %7902 = vmatprep.mubr.f32.mxu0 %v6178
    %7903 = vmatmul.mubr.f32.gmra.mrb[0].mxu0 %v6177
    %v7904 = vpop.f32.mrb[0].mxu0
    %v7905 = vadd.f32 %v7520, %v7904
    %v7906 = vpop.f32.mrb[0].mxu0
    %7907 = vmatprep.mubr.f32.mxu0 %v6187
    %7908 = vmatmul.mubr.f32.gmra.mrb[0].mxu0 %v6186
    %v7909 = vpop.f32.mrb[0].mxu0
    %v7910 = vadd.f32 %v7525, %v7909
    %v7911 = vpop.f32.mrb[0].mxu0
    %7912 = vmatprep.mubr.f32.mxu0 %v6196
    %7913 = vmatmul.mubr.f32.gmra.mrb[0].mxu0 %v6195
    %v7914 = vpop.f32.mrb[0].mxu0
    %v7915 = vadd.f32 %v7530, %v7914
    %v7916 = vpop.f32.mrb[0].mxu0
    %7917 = vmatprep.mubr.f32.mxu0 %v6205
    %7918 = vmatmul.mubr.f32.gmra.mrb[0].mxu0 %v6204
    %v7919 = vpop.f32.mrb[0].mxu0
    %v7920 = vadd.f32 %v7535, %v7919
    %v7921 = vpop.f32.mrb[0].mxu0
    %7922 = vmatprep.mubr.f32.mxu0 %v6214
    %7923 = vmatmul.mubr.f32.gmra.mrb[0].mxu0 %v6213
    %v7924 = vpop.f32.mrb[0].mxu0
    %v7925 = vadd.f32 %v7540, %v7924
    %v7926 = vpop.f32.mrb[0].mxu0
    %7927 = vmatprep.mubr.f32.mxu0 %v6223
    %7928 = vmatmul.mubr.f32.gmra.mrb[0].mxu0 %v6222
    %v7929 = vpop.f32.mrb[0].mxu0
    %v7930 = vadd.f32 %v7545, %v7929
    %v7931 = vpop.f32.mrb[0].mxu0
    %7932 = vmatprep.mubr.f32.mxu0 %v6232
    %7933 = vmatmul.mubr.f32.gmra.mrb[0].mxu0 %v6231
    %v7934 = vpop.f32.mrb[0].mxu0
    %v7935 = vadd.f32 %v7550, %v7934
    %v7936 = vpop.f32.mrb[0].mxu0
    %7937 = vmatprep.mubr.f32.mxu0 %v6241
    %7938 = vmatmul.mubr.f32.gmra.mrb[0].mxu0 %v6240
    %v7939 = vpop.f32.mrb[0].mxu0
    %v7940 = vadd.f32 %v7555, %v7939
    %v7941 = vpop.f32.mrb[0].mxu0
    %7942 = vmatprep.mubr.f32.mxu0 %v6250
    %7943 = vmatmul.mubr.f32.gmra.mrb[0].mxu0 %v6249
    %v7944 = vpop.f32.mrb[0].mxu0
    %v7945 = vadd.f32 %v7560, %v7944
    %v7946 = vpop.f32.mrb[0].mxu0
    %7947 = vmatprep.mubr.f32.mxu0 %v6259
    %7948 = vmatmul.mubr.f32.gmra.mrb[0].mxu0 %v6258
    %v7949 = vpop.f32.mrb[0].mxu0
    %v7950 = vadd.f32 %v7565, %v7949
    %v7951 = vpop.f32.mrb[0].mxu0
    %7952 = vmatprep.mubr.f32.mxu0 %v6268
    %7953 = vmatmul.mubr.f32.gmra.mrb[0].mxu0 %v6267
    %v7954 = vpop.f32.mrb[0].mxu0
    %v7955 = vadd.f32 %v7570, %v7954
    %v7956 = vpop.f32.mrb[0].mxu0
    %7957 = vmatprep.mubr.f32.mxu0 %v6277
    %7958 = vmatmul.mubr.f32.gmra.mrb[0].mxu0 %v6276
    %v7959 = vpop.f32.mrb[0].mxu0
    %v7960 = vadd.f32 %v7575, %v7959
    %v7961 = vpop.f32.mrb[0].mxu0
    %7962 = vdwg.mxu0
    %7963 = vmatprep.subr.mxu0 0.0
    %7964 = vmatpush1.msra.mxu0 %v6407
    %7965 = vmatprep.subr.mxu0 0.0
    %7966 = vmatpush1.msra.mxu0 %v6408
    %7967 = vmatprep.subr.mxu0 0.0
    %7968 = vmatpush1.msra.mxu0 %v6409
    %7969 = vmatprep.subr.mxu0 0.0
    %7970 = vmatpush1.msra.mxu0 %v6410
    %7971 = vmatprep.subr.mxu0 0.0
    %7972 = vmatpush1.msra.mxu0 %v6411
    %7973 = vmatprep.subr.mxu0 0.0
    %7974 = vmatpush1.msra.mxu0 %v6412
    %7975 = vmatprep.subr.mxu0 0.0
    %7976 = vmatpush1.msra.mxu0 %v6413
    %7977 = vmatprep.subr.mxu0 0.0
    %7978 = vmatpush1.msra.mxu0 %v6414
    %7979 = vmatprep.subr.mxu0 0.0
    %7980 = vmatpush1.msra.mxu0 %v6415
    %7981 = vmatprep.subr.mxu0 0.0
    %7982 = vmatpush1.msra.mxu0 %v6416
    %7983 = vmatprep.subr.mxu0 0.0
    %7984 = vmatpush1.msra.mxu0 %v6417
    %7985 = vmatprep.subr.mxu0 0.0
    %7986 = vmatpush1.msra.mxu0 %v6418
    %7987 = vmatprep.subr.mxu0 0.0
    %7988 = vmatpush1.msra.mxu0 %v6419
    %7989 = vmatprep.subr.mxu0 0.0
    %7990 = vmatpush1.msra.mxu0 %v6420
    %7991 = vmatprep.subr.mxu0 0.0
    %7992 = vmatpush1.msra.mxu0 %v6421
    %7993 = vmatprep.subr.mxu0 0.0
    %7994 = vmatpush1.msra.mxu0 %v6422
    %7995 = vmatprep.subr.mxu0 0.0
    %7996 = vmatpush1.msra.mxu0 0.0
    %7997 = vmatprep.subr.mxu0 0.0
    %7998 = vmatpush1.msra.mxu0 0.0
    %7999 = vmatprep.subr.mxu0 0.0
    %8000 = vmatpush1.msra.mxu0 0.0
    %8001 = vmatprep.subr.mxu0 0.0
    %8002 = vmatpush1.msra.mxu0 0.0
    %8003 = vmatprep.subr.mxu0 0.0
    %8004 = vmatpush1.msra.mxu0 0.0
    %8005 = vmatprep.subr.mxu0 0.0
    %8006 = vmatpush1.msra.mxu0 0.0
    %8007 = vmatprep.subr.mxu0 0.0
    %8008 = vmatpush1.msra.mxu0 0.0
    %8009 = vmatprep.subr.mxu0 0.0
    %8010 = vmatpush1.msra.mxu0 0.0
    %8011 = vmatprep.subr.mxu0 0.0
    %8012 = vmatpush1.msra.mxu0 0.0
    %8013 = vmatprep.subr.mxu0 0.0
    %8014 = vmatpush1.msra.mxu0 0.0
    %8015 = vmatprep.subr.mxu0 0.0
    %8016 = vmatpush1.msra.mxu0 0.0
    %8017 = vmatprep.subr.mxu0 0.0
    %8018 = vmatpush1.msra.mxu0 0.0
    %8019 = vmatprep.subr.mxu0 0.0
    %8020 = vmatpush1.msra.mxu0 0.0
    %8021 = vmatprep.subr.mxu0 0.0
    %8022 = vmatpush1.msra.mxu0 0.0
    %8023 = vmatprep.subr.mxu0 0.0
    %8024 = vmatpush1.msra.mxu0 0.0
    %8025 = vmatprep.subr.mxu0 0.0
    %8026 = vmatpush1.msra.mxu0 0.0
    %8027 = vmatprep.mubr.f32.mxu0 0.0
    %8028 = vmatmul.mubr.f32.gmra.mrb[0].mxu0 %v5711
    %v8029 = vpop.f32.mrb[0].mxu0
    %v8030 = vadd.f32 %v7645, %v8029
    %v8031 = vpop.f32.mrb[0].mxu0
    %8032 = vmatprep.mubr.f32.mxu0 0.0
    %8033 = vmatmul.mubr.f32.gmra.mrb[0].mxu0 %v5720
    %v8034 = vpop.f32.mrb[0].mxu0
    %v8035 = vadd.f32 %v7650, %v8034
    %v8036 = vpop.f32.mrb[0].mxu0
    %8037 = vmatprep.mubr.f32.mxu0 0.0
    %8038 = vmatmul.mubr.f32.gmra.mrb[0].mxu0 %v5729
    %v8039 = vpop.f32.mrb[0].mxu0
    %v8040 = vadd.f32 %v7655, %v8039
    %v8041 = vpop.f32.mrb[0].mxu0
    %8042 = vmatprep.mubr.f32.mxu0 0.0
    %8043 = vmatmul.mubr.f32.gmra.mrb[0].mxu0 %v5738
    %v8044 = vpop.f32.mrb[0].mxu0
    %v8045 = vadd.f32 %v7660, %v8044
    %v8046 = vpop.f32.mrb[0].mxu0
    %8047 = vmatprep.mubr.f32.mxu0 0.0
    %8048 = vmatmul.mubr.f32.gmra.mrb[0].mxu0 %v5747
    %v8049 = vpop.f32.mrb[0].mxu0
    %v8050 = vadd.f32 %v7665, %v8049
    %v8051 = vpop.f32.mrb[0].mxu0
    %8052 = vmatprep.mubr.f32.mxu0 0.0
    %8053 = vmatmul.mubr.f32.gmra.mrb[0].mxu0 %v5756
    %v8054 = vpop.f32.mrb[0].mxu0
    %v8055 = vadd.f32 %v7670, %v8054
    %v8056 = vpop.f32.mrb[0].mxu0
    %8057 = vmatprep.mubr.f32.mxu0 0.0
    %8058 = vmatmul.mubr.f32.gmra.mrb[0].mxu0 %v5765
    %v8059 = vpop.f32.mrb[0].mxu0
    %v8060 = vadd.f32 %v7675, %v8059
    %v8061 = vpop.f32.mrb[0].mxu0
    %8062 = vmatprep.mubr.f32.mxu0 0.0
    %8063 = vmatmul.mubr.f32.gmra.mrb[0].mxu0 %v5774
    %v8064 = vpop.f32.mrb[0].mxu0
    %v8065 = vadd.f32 %v7680, %v8064
    %v8066 = vpop.f32.mrb[0].mxu0
    %8067 = vmatprep.mubr.f32.mxu0 0.0
    %8068 = vmatmul.mubr.f32.gmra.mrb[0].mxu0 %v5783
    %v8069 = vpop.f32.mrb[0].mxu0
    %v8070 = vadd.f32 %v7685, %v8069
    %v8071 = vpop.f32.mrb[0].mxu0
    %8072 = vmatprep.mubr.f32.mxu0 0.0
    %8073 = vmatmul.mubr.f32.gmra.mrb[0].mxu0 %v5792
    %v8074 = vpop.f32.mrb[0].mxu0
    %v8075 = vadd.f32 %v7690, %v8074
    %v8076 = vpop.f32.mrb[0].mxu0
    %8077 = vmatprep.mubr.f32.mxu0 0.0
    %8078 = vmatmul.mubr.f32.gmra.mrb[0].mxu0 %v5801
    %v8079 = vpop.f32.mrb[0].mxu0
    %v8080 = vadd.f32 %v7695, %v8079
    %v8081 = vpop.f32.mrb[0].mxu0
    %8082 = vmatprep.mubr.f32.mxu0 0.0
    %8083 = vmatmul.mubr.f32.gmra.mrb[0].mxu0 %v5810
    %v8084 = vpop.f32.mrb[0].mxu0
    %v8085 = vadd.f32 %v7700, %v8084
    %v8086 = vpop.f32.mrb[0].mxu0
    %8087 = vmatprep.mubr.f32.mxu0 0.0
    %8088 = vmatmul.mubr.f32.gmra.mrb[0].mxu0 %v5819
    %v8089 = vpop.f32.mrb[0].mxu0
    %v8090 = vadd.f32 %v7705, %v8089
    %v8091 = vpop.f32.mrb[0].mxu0
    %8092 = vmatprep.mubr.f32.mxu0 0.0
    %8093 = vmatmul.mubr.f32.gmra.mrb[0].mxu0 %v5828
    %v8094 = vpop.f32.mrb[0].mxu0
    %v8095 = vadd.f32 %v7710, %v8094
    %v8096 = vpop.f32.mrb[0].mxu0
    %8097 = vmatprep.mubr.f32.mxu0 0.0
    %8098 = vmatmul.mubr.f32.gmra.mrb[0].mxu0 %v5837
    %v8099 = vpop.f32.mrb[0].mxu0
    %v8100 = vadd.f32 %v7715, %v8099
    %v8101 = vpop.f32.mrb[0].mxu0
    %8102 = vmatprep.mubr.f32.mxu0 0.0
    %8103 = vmatmul.mubr.f32.gmra.mrb[0].mxu0 %v5846
    %v8104 = vpop.f32.mrb[0].mxu0
    %v8105 = vadd.f32 %v7720, %v8104
    %v8106 = vpop.f32.mrb[0].mxu0
    %8107 = vmatprep.mubr.f32.mxu0 0.0
    %8108 = vmatmul.mubr.f32.gmra.mrb[0].mxu0 %v5855
    %v8109 = vpop.f32.mrb[0].mxu0
    %v8110 = vadd.f32 %v7725, %v8109
    %v8111 = vpop.f32.mrb[0].mxu0
    %8112 = vmatprep.mubr.f32.mxu0 0.0
    %8113 = vmatmul.mubr.f32.gmra.mrb[0].mxu0 %v5864
    %v8114 = vpop.f32.mrb[0].mxu0
    %v8115 = vadd.f32 %v7730, %v8114
    %v8116 = vpop.f32.mrb[0].mxu0
    %8117 = vmatprep.mubr.f32.mxu0 0.0
    %8118 = vmatmul.mubr.f32.gmra.mrb[0].mxu0 %v5873
    %v8119 = vpop.f32.mrb[0].mxu0
    %v8120 = vadd.f32 %v7735, %v8119
    %v8121 = vpop.f32.mrb[0].mxu0
    %8122 = vmatprep.mubr.f32.mxu0 0.0
    %8123 = vmatmul.mubr.f32.gmra.mrb[0].mxu0 %v5882
    %v8124 = vpop.f32.mrb[0].mxu0
    %v8125 = vadd.f32 %v7740, %v8124
    %v8126 = vpop.f32.mrb[0].mxu0
    %8127 = vmatprep.mubr.f32.mxu0 0.0
    %8128 = vmatmul.mubr.f32.gmra.mrb[0].mxu0 %v5891
    %v8129 = vpop.f32.mrb[0].mxu0
    %v8130 = vadd.f32 %v7745, %v8129
    %v8131 = vpop.f32.mrb[0].mxu0
    %8132 = vmatprep.mubr.f32.mxu0 0.0
    %8133 = vmatmul.mubr.f32.gmra.mrb[0].mxu0 %v5900
    %v8134 = vpop.f32.mrb[0].mxu0
    %v8135 = vadd.f32 %v7750, %v8134
    %v8136 = vpop.f32.mrb[0].mxu0
    %8137 = vmatprep.mubr.f32.mxu0 0.0
    %8138 = vmatmul.mubr.f32.gmra.mrb[0].mxu0 %v5909
    %v8139 = vpop.f32.mrb[0].mxu0
    %v8140 = vadd.f32 %v7755, %v8139
    %v8141 = vpop.f32.mrb[0].mxu0
    %8142 = vmatprep.mubr.f32.mxu0 0.0
    %8143 = vmatmul.mubr.f32.gmra.mrb[0].mxu0 %v5918
    %v8144 = vpop.f32.mrb[0].mxu0
    %v8145 = vadd.f32 %v7760, %v8144
    %v8146 = vpop.f32.mrb[0].mxu0
    %8147 = vmatprep.mubr.f32.mxu0 0.0
    %8148 = vmatmul.mubr.f32.gmra.mrb[0].mxu0 %v5927
    %v8149 = vpop.f32.mrb[0].mxu0
    %v8150 = vadd.f32 %v7765, %v8149
    %v8151 = vpop.f32.mrb[0].mxu0
    %8152 = vmatprep.mubr.f32.mxu0 0.0
    %8153 = vmatmul.mubr.f32.gmra.mrb[0].mxu0 %v5936
    %v8154 = vpop.f32.mrb[0].mxu0
    %v8155 = vadd.f32 %v7770, %v8154
    %v8156 = vpop.f32.mrb[0].mxu0
    %8157 = vmatprep.mubr.f32.mxu0 0.0
    %8158 = vmatmul.mubr.f32.gmra.mrb[0].mxu0 %v5945
    %v8159 = vpop.f32.mrb[0].mxu0
    %v8160 = vadd.f32 %v7775, %v8159
    %v8161 = vpop.f32.mrb[0].mxu0
    %8162 = vmatprep.mubr.f32.mxu0 0.0
    %8163 = vmatmul.mubr.f32.gmra.mrb[0].mxu0 %v5954
    %v8164 = vpop.f32.mrb[0].mxu0
    %v8165 = vadd.f32 %v7780, %v8164
    %v8166 = vpop.f32.mrb[0].mxu0
    %8167 = vmatprep.mubr.f32.mxu0 0.0
    %8168 = vmatmul.mubr.f32.gmra.mrb[0].mxu0 %v5963
    %v8169 = vpop.f32.mrb[0].mxu0
    %v8170 = vadd.f32 %v7785, %v8169
    %v8171 = vpop.f32.mrb[0].mxu0
    %8172 = vmatprep.mubr.f32.mxu0 0.0
    %8173 = vmatmul.mubr.f32.gmra.mrb[0].mxu0 %v5972
    %v8174 = vpop.f32.mrb[0].mxu0
    %v8175 = vadd.f32 %v7790, %v8174
    %v8176 = vpop.f32.mrb[0].mxu0
    %8177 = vmatprep.mubr.f32.mxu0 0.0
    %8178 = vmatmul.mubr.f32.gmra.mrb[0].mxu0 %v5981
    %v8179 = vpop.f32.mrb[0].mxu0
    %v8180 = vadd.f32 %v7795, %v8179
    %v8181 = vpop.f32.mrb[0].mxu0
    %8182 = vmatprep.mubr.f32.mxu0 0.0
    %8183 = vmatmul.mubr.f32.gmra.mrb[0].mxu0 %v5990
    %v8184 = vpop.f32.mrb[0].mxu0
    %v8185 = vadd.f32 %v7800, %v8184
    %v8186 = vpop.f32.mrb[0].mxu0
    %8187 = vmatprep.mubr.f32.mxu0 0.0
    %8188 = vmatmul.mubr.f32.gmra.mrb[0].mxu0 %v5999
    %v8189 = vpop.f32.mrb[0].mxu0
    %v8190 = vadd.f32 %v7805, %v8189
    %v8191 = vpop.f32.mrb[0].mxu0
    %8192 = vmatprep.mubr.f32.mxu0 0.0
    %8193 = vmatmul.mubr.f32.gmra.mrb[0].mxu0 %v6008
    %v8194 = vpop.f32.mrb[0].mxu0
    %v8195 = vadd.f32 %v7810, %v8194
    %v8196 = vpop.f32.mrb[0].mxu0
    %8197 = vmatprep.mubr.f32.mxu0 0.0
    %8198 = vmatmul.mubr.f32.gmra.mrb[0].mxu0 %v6017
    %v8199 = vpop.f32.mrb[0].mxu0
    %v8200 = vadd.f32 %v7815, %v8199
    %v8201 = vpop.f32.mrb[0].mxu0
    %8202 = vmatprep.mubr.f32.mxu0 0.0
    %8203 = vmatmul.mubr.f32.gmra.mrb[0].mxu0 %v6026
    %v8204 = vpop.f32.mrb[0].mxu0
    %v8205 = vadd.f32 %v7820, %v8204
    %v8206 = vpop.f32.mrb[0].mxu0
    %8207 = vmatprep.mubr.f32.mxu0 0.0
    %8208 = vmatmul.mubr.f32.gmra.mrb[0].mxu0 %v6035
    %v8209 = vpop.f32.mrb[0].mxu0
    %v8210 = vadd.f32 %v7825, %v8209
    %v8211 = vpop.f32.mrb[0].mxu0
    %8212 = vmatprep.mubr.f32.mxu0 0.0
    %8213 = vmatmul.mubr.f32.gmra.mrb[0].mxu0 %v6044
    %v8214 = vpop.f32.mrb[0].mxu0
    %v8215 = vadd.f32 %v7830, %v8214
    %v8216 = vpop.f32.mrb[0].mxu0
    %8217 = vmatprep.mubr.f32.mxu0 0.0
    %8218 = vmatmul.mubr.f32.gmra.mrb[0].mxu0 %v6053
    %v8219 = vpop.f32.mrb[0].mxu0
    %v8220 = vadd.f32 %v7835, %v8219
    %v8221 = vpop.f32.mrb[0].mxu0
    %8222 = vmatprep.mubr.f32.mxu0 0.0
    %8223 = vmatmul.mubr.f32.gmra.mrb[0].mxu0 %v6062
    %v8224 = vpop.f32.mrb[0].mxu0
    %v8225 = vadd.f32 %v7840, %v8224
    %v8226 = vpop.f32.mrb[0].mxu0
    %8227 = vmatprep.mubr.f32.mxu0 0.0
    %8228 = vmatmul.mubr.f32.gmra.mrb[0].mxu0 %v6071
    %v8229 = vpop.f32.mrb[0].mxu0
    %v8230 = vadd.f32 %v7845, %v8229
    %v8231 = vpop.f32.mrb[0].mxu0
    %8232 = vmatprep.mubr.f32.mxu0 0.0
    %8233 = vmatmul.mubr.f32.gmra.mrb[0].mxu0 %v6080
    %v8234 = vpop.f32.mrb[0].mxu0
    %v8235 = vadd.f32 %v7850, %v8234
    %v8236 = vpop.f32.mrb[0].mxu0
    %8237 = vmatprep.mubr.f32.mxu0 0.0
    %8238 = vmatmul.mubr.f32.gmra.mrb[0].mxu0 %v6089
    %v8239 = vpop.f32.mrb[0].mxu0
    %v8240 = vadd.f32 %v7855, %v8239
    %v8241 = vpop.f32.mrb[0].mxu0
    %8242 = vmatprep.mubr.f32.mxu0 0.0
    %8243 = vmatmul.mubr.f32.gmra.mrb[0].mxu0 %v6098
    %v8244 = vpop.f32.mrb[0].mxu0
    %v8245 = vadd.f32 %v7860, %v8244
    %v8246 = vpop.f32.mrb[0].mxu0
    %8247 = vmatprep.mubr.f32.mxu0 0.0
    %8248 = vmatmul.mubr.f32.gmra.mrb[0].mxu0 %v6107
    %v8249 = vpop.f32.mrb[0].mxu0
    %v8250 = vadd.f32 %v7865, %v8249
    %v8251 = vpop.f32.mrb[0].mxu0
    %8252 = vmatprep.mubr.f32.mxu0 0.0
    %8253 = vmatmul.mubr.f32.gmra.mrb[0].mxu0 %v6116
    %v8254 = vpop.f32.mrb[0].mxu0
    %v8255 = vadd.f32 %v7870, %v8254
    %v8256 = vpop.f32.mrb[0].mxu0
    %8257 = vmatprep.mubr.f32.mxu0 0.0
    %8258 = vmatmul.mubr.f32.gmra.mrb[0].mxu0 %v6125
    %v8259 = vpop.f32.mrb[0].mxu0
    %v8260 = vadd.f32 %v7875, %v8259
    %v8261 = vpop.f32.mrb[0].mxu0
    %8262 = vmatprep.mubr.f32.mxu0 0.0
    %8263 = vmatmul.mubr.f32.gmra.mrb[0].mxu0 %v6134
    %v8264 = vpop.f32.mrb[0].mxu0
    %v8265 = vadd.f32 %v7880, %v8264
    %v8266 = vpop.f32.mrb[0].mxu0
    %8267 = vmatprep.mubr.f32.mxu0 0.0
    %8268 = vmatmul.mubr.f32.gmra.mrb[0].mxu0 %v6143
    %v8269 = vpop.f32.mrb[0].mxu0
    %v8270 = vadd.f32 %v7885, %v8269
    %v8271 = vpop.f32.mrb[0].mxu0
    %8272 = vmatprep.mubr.f32.mxu0 0.0
    %8273 = vmatmul.mubr.f32.gmra.mrb[0].mxu0 %v6152
    %v8274 = vpop.f32.mrb[0].mxu0
    %v8275 = vadd.f32 %v7890, %v8274
    %v8276 = vpop.f32.mrb[0].mxu0
    %8277 = vmatprep.mubr.f32.mxu0 0.0
    %8278 = vmatmul.mubr.f32.gmra.mrb[0].mxu0 %v6161
    %v8279 = vpop.f32.mrb[0].mxu0
    %v8280 = vadd.f32 %v7895, %v8279
    %v8281 = vpop.f32.mrb[0].mxu0
    %8282 = vmatprep.mubr.f32.mxu0 0.0
    %8283 = vmatmul.mubr.f32.gmra.mrb[0].mxu0 %v6170
    %v8284 = vpop.f32.mrb[0].mxu0
    %v8285 = vadd.f32 %v7900, %v8284
    %v8286 = vpop.f32.mrb[0].mxu0
    %8287 = vmatprep.mubr.f32.mxu0 0.0
    %8288 = vmatmul.mubr.f32.gmra.mrb[0].mxu0 %v6179
    %v8289 = vpop.f32.mrb[0].mxu0
    %v8290 = vadd.f32 %v7905, %v8289
    %v8291 = vpop.f32.mrb[0].mxu0
    %8292 = vmatprep.mubr.f32.mxu0 0.0
    %8293 = vmatmul.mubr.f32.gmra.mrb[0].mxu0 %v6188
    %v8294 = vpop.f32.mrb[0].mxu0
    %v8295 = vadd.f32 %v7910, %v8294
    %v8296 = vpop.f32.mrb[0].mxu0
    %8297 = vmatprep.mubr.f32.mxu0 0.0
    %8298 = vmatmul.mubr.f32.gmra.mrb[0].mxu0 %v6197
    %v8299 = vpop.f32.mrb[0].mxu0
    %v8300 = vadd.f32 %v7915, %v8299
    %v8301 = vpop.f32.mrb[0].mxu0
    %8302 = vmatprep.mubr.f32.mxu0 0.0
    %8303 = vmatmul.mubr.f32.gmra.mrb[0].mxu0 %v6206
    %v8304 = vpop.f32.mrb[0].mxu0
    %v8305 = vadd.f32 %v7920, %v8304
    %v8306 = vpop.f32.mrb[0].mxu0
    %8307 = vmatprep.mubr.f32.mxu0 0.0
    %8308 = vmatmul.mubr.f32.gmra.mrb[0].mxu0 %v6215
    %v8309 = vpop.f32.mrb[0].mxu0
    %v8310 = vadd.f32 %v7925, %v8309
    %v8311 = vpop.f32.mrb[0].mxu0
    %8312 = vmatprep.mubr.f32.mxu0 0.0
    %8313 = vmatmul.mubr.f32.gmra.mrb[0].mxu0 %v6224
    %v8314 = vpop.f32.mrb[0].mxu0
    %v8315 = vadd.f32 %v7930, %v8314
    %v8316 = vpop.f32.mrb[0].mxu0
    %8317 = vmatprep.mubr.f32.mxu0 0.0
    %8318 = vmatmul.mubr.f32.gmra.mrb[0].mxu0 %v6233
    %v8319 = vpop.f32.mrb[0].mxu0
    %v8320 = vadd.f32 %v7935, %v8319
    %v8321 = vpop.f32.mrb[0].mxu0
    %8322 = vmatprep.mubr.f32.mxu0 0.0
    %8323 = vmatmul.mubr.f32.gmra.mrb[0].mxu0 %v6242
    %v8324 = vpop.f32.mrb[0].mxu0
    %v8325 = vadd.f32 %v7940, %v8324
    %v8326 = vpop.f32.mrb[0].mxu0
    %8327 = vmatprep.mubr.f32.mxu0 0.0
    %8328 = vmatmul.mubr.f32.gmra.mrb[0].mxu0 %v6251
    %v8329 = vpop.f32.mrb[0].mxu0
    %v8330 = vadd.f32 %v7945, %v8329
    %v8331 = vpop.f32.mrb[0].mxu0
    %8332 = vmatprep.mubr.f32.mxu0 0.0
    %8333 = vmatmul.mubr.f32.gmra.mrb[0].mxu0 %v6260
    %v8334 = vpop.f32.mrb[0].mxu0
    %v8335 = vadd.f32 %v7950, %v8334
    %v8336 = vpop.f32.mrb[0].mxu0
    %8337 = vmatprep.mubr.f32.mxu0 0.0
    %8338 = vmatmul.mubr.f32.gmra.mrb[0].mxu0 %v6269
    %v8339 = vpop.f32.mrb[0].mxu0
    %v8340 = vadd.f32 %v7955, %v8339
    %v8341 = vpop.f32.mrb[0].mxu0
    %8342 = vmatprep.mubr.f32.mxu0 0.0
    %8343 = vmatmul.mubr.f32.gmra.mrb[0].mxu0 %v6278
    %v8344 = vpop.f32.mrb[0].mxu0
    %v8345 = vadd.f32 %v7960, %v8344
    %v8346 = vpop.f32.mrb[0].mxu0
    %8347 = vdwg.mxu0
    %v8348 = vld [vmem:[%s5] sm:$0x1]
    %v8349 = vld [vmem:[%s6] sm:$0x1]
    %v8350 = vadd.f32 %v8030, %v8035
    %v8351 = vadd.f32 %v8350, %v8040
    %v8352 = vadd.f32 %v8351, %v8045
    %v8353 = vadd.f32 %v8352, %v8050
    %v8354 = vadd.f32 %v8353, %v8055
    %v8355 = vadd.f32 %v8354, %v8060
    %v8356 = vadd.f32 %v8355, %v8065
    %v8357 = vadd.f32 %v8356, %v8070
    %v8358 = vadd.f32 %v8357, %v8075
    %v8359 = vadd.f32 %v8358, %v8080
    %v8360 = vadd.f32 %v8359, %v8085
    %v8361 = vadd.f32 %v8360, %v8090
    %v8362 = vadd.f32 %v8361, %v8095
    %v8363 = vadd.f32 %v8362, %v8100
    %v8364 = vadd.f32 %v8363, %v8105
    %v8365 = vadd.f32 %v8364, %v8110
    %v8366 = vadd.f32 %v8365, %v8115
    %v8367 = vadd.f32 %v8366, %v8120
    %v8368 = vadd.f32 %v8367, %v8125
    %v8369 = vadd.f32 %v8368, %v8130
    %v8370 = vadd.f32 %v8369, %v8135
    %v8371 = vadd.f32 %v8370, %v8140
    %v8372 = vadd.f32 %v8371, %v8145
    %v8373 = vadd.f32 %v8372, %v8150
    %v8374 = vadd.f32 %v8373, %v8155
    %v8375 = vadd.f32 %v8374, %v8160
    %v8376 = vadd.f32 %v8375, %v8165
    %v8377 = vadd.f32 %v8376, %v8170
    %v8378 = vadd.f32 %v8377, %v8175
    %v8379 = vadd.f32 %v8378, %v8180
    %v8380 = vadd.f32 %v8379, %v8185
    %v8381 = vadd.f32 %v8380, %v8190
    %v8382 = vadd.f32 %v8381, %v8195
    %v8383 = vadd.f32 %v8382, %v8200
    %v8384 = vadd.f32 %v8383, %v8205
    %v8385 = vadd.f32 %v8384, %v8210
    %v8386 = vadd.f32 %v8385, %v8215
    %v8387 = vadd.f32 %v8386, %v8220
    %v8388 = vadd.f32 %v8387, %v8225
    %v8389 = vadd.f32 %v8388, %v8230
    %v8390 = vadd.f32 %v8389, %v8235
    %v8391 = vadd.f32 %v8390, %v8240
    %v8392 = vadd.f32 %v8391, %v8245
    %v8393 = vadd.f32 %v8392, %v8250
    %v8394 = vadd.f32 %v8393, %v8255
    %v8395 = vadd.f32 %v8394, %v8260
    %v8396 = vadd.f32 %v8395, %v8265
    %v8397 = vadd.f32 %v8396, %v8270
    %v8398 = vadd.f32 %v8397, %v8275
    %v8399 = vadd.f32 %v8398, %v8280
    %v8400 = vadd.f32 %v8399, %v8285
    %v8401 = vadd.f32 %v8400, %v8290
    %v8402 = vadd.f32 %v8401, %v8295
    %v8403 = vadd.f32 %v8402, %v8300
    %v8404 = vadd.f32 %v8403, %v8305
    %v8405 = vadd.f32 %v8404, %v8310
    %v8406 = vadd.f32 %v8405, %v8315
    %v8407 = vadd.f32 %v8406, %v8320
    %v8408 = vadd.f32 %v8407, %v8325
    %v8409 = vadd.f32 %v8408, %v8330
    %v8410 = vadd.f32 %v8409, %v8335
    %v8411 = vadd.f32 %v8410, %v8340
    %v8412 = vadd.f32 %v8411, %v8345
    %v8413 = vrot.slane %v8412, 4
    %v8414 = vadd.f32 %v8412, %v8413
    %v8415 = vrot.slane %v8414, 2
    %v8416 = vadd.f32 %v8414, %v8415
    %v8417 = vrot.slane %v8416, 1
    %v8418 = vadd.f32 %v8416, %v8417
    %v8419 = vmul.f32 %v8418, 0.001953125
    %v8420 = vmul.f32 %v8030, %v8030
    %v8421 = vmul.f32 %v8035, %v8035
    %v8422 = vmul.f32 %v8040, %v8040
    %v8423 = vmul.f32 %v8045, %v8045
    %v8424 = vmul.f32 %v8050, %v8050
    %v8425 = vmul.f32 %v8055, %v8055
    %v8426 = vmul.f32 %v8060, %v8060
    %v8427 = vmul.f32 %v8065, %v8065
    %v8428 = vmul.f32 %v8070, %v8070
    %v8429 = vmul.f32 %v8075, %v8075
    %v8430 = vmul.f32 %v8080, %v8080
    %v8431 = vmul.f32 %v8085, %v8085
    %v8432 = vmul.f32 %v8090, %v8090
    %v8433 = vmul.f32 %v8095, %v8095
    %v8434 = vmul.f32 %v8100, %v8100
    %v8435 = vmul.f32 %v8105, %v8105
    %v8436 = vmul.f32 %v8110, %v8110
    %v8437 = vmul.f32 %v8115, %v8115
    %v8438 = vmul.f32 %v8120, %v8120
    %v8439 = vmul.f32 %v8125, %v8125
    %v8440 = vmul.f32 %v8130, %v8130
    %v8441 = vmul.f32 %v8135, %v8135
    %v8442 = vmul.f32 %v8140, %v8140
    %v8443 = vmul.f32 %v8145, %v8145
    %v8444 = vmul.f32 %v8150, %v8150
    %v8445 = vmul.f32 %v8155, %v8155
    %v8446 = vmul.f32 %v8160, %v8160
    %v8447 = vmul.f32 %v8165, %v8165
    %v8448 = vmul.f32 %v8170, %v8170
    %v8449 = vmul.f32 %v8175, %v8175
    %v8450 = vmul.f32 %v8180, %v8180
    %v8451 = vmul.f32 %v8185, %v8185
    %v8452 = vmul.f32 %v8190, %v8190
    %v8453 = vmul.f32 %v8195, %v8195
    %v8454 = vmul.f32 %v8200, %v8200
    %v8455 = vmul.f32 %v8205, %v8205
    %v8456 = vmul.f32 %v8210, %v8210
    %v8457 = vmul.f32 %v8215, %v8215
    %v8458 = vmul.f32 %v8220, %v8220
    %v8459 = vmul.f32 %v8225, %v8225
    %v8460 = vmul.f32 %v8230, %v8230
    %v8461 = vmul.f32 %v8235, %v8235
    %v8462 = vmul.f32 %v8240, %v8240
    %v8463 = vmul.f32 %v8245, %v8245
    %v8464 = vmul.f32 %v8250, %v8250
    %v8465 = vmul.f32 %v8255, %v8255
    %v8466 = vmul.f32 %v8260, %v8260
    %v8467 = vmul.f32 %v8265, %v8265
    %v8468 = vmul.f32 %v8270, %v8270
    %v8469 = vmul.f32 %v8275, %v8275
    %v8470 = vmul.f32 %v8280, %v8280
    %v8471 = vmul.f32 %v8285, %v8285
    %v8472 = vmul.f32 %v8290, %v8290
    %v8473 = vmul.f32 %v8295, %v8295
    %v8474 = vmul.f32 %v8300, %v8300
    %v8475 = vmul.f32 %v8305, %v8305
    %v8476 = vmul.f32 %v8310, %v8310
    %v8477 = vmul.f32 %v8315, %v8315
    %v8478 = vmul.f32 %v8320, %v8320
    %v8479 = vmul.f32 %v8325, %v8325
    %v8480 = vmul.f32 %v8330, %v8330
    %v8481 = vmul.f32 %v8335, %v8335
    %v8482 = vmul.f32 %v8340, %v8340
    %v8483 = vmul.f32 %v8345, %v8345
    %v8484 = vadd.f32 %v8420, %v8421
    %v8485 = vadd.f32 %v8484, %v8422
    %v8486 = vadd.f32 %v8485, %v8423
    %v8487 = vadd.f32 %v8486, %v8424
    %v8488 = vadd.f32 %v8487, %v8425
    %v8489 = vadd.f32 %v8488, %v8426
    %v8490 = vadd.f32 %v8489, %v8427
    %v8491 = vadd.f32 %v8490, %v8428
    %v8492 = vadd.f32 %v8491, %v8429
    %v8493 = vadd.f32 %v8492, %v8430
    %v8494 = vadd.f32 %v8493, %v8431
    %v8495 = vadd.f32 %v8494, %v8432
    %v8496 = vadd.f32 %v8495, %v8433
    %v8497 = vadd.f32 %v8496, %v8434
    %v8498 = vadd.f32 %v8497, %v8435
    %v8499 = vadd.f32 %v8498, %v8436
    %v8500 = vadd.f32 %v8499, %v8437
    %v8501 = vadd.f32 %v8500, %v8438
    %v8502 = vadd.f32 %v8501, %v8439
    %v8503 = vadd.f32 %v8502, %v8440
    %v8504 = vadd.f32 %v8503, %v8441
    %v8505 = vadd.f32 %v8504, %v8442
    %v8506 = vadd.f32 %v8505, %v8443
    %v8507 = vadd.f32 %v8506, %v8444
    %v8508 = vadd.f32 %v8507, %v8445
    %v8509 = vadd.f32 %v8508, %v8446
    %v8510 = vadd.f32 %v8509, %v8447
    %v8511 = vadd.f32 %v8510, %v8448
    %v8512 = vadd.f32 %v8511, %v8449
    %v8513 = vadd.f32 %v8512, %v8450
    %v8514 = vadd.f32 %v8513, %v8451
    %v8515 = vadd.f32 %v8514, %v8452
    %v8516 = vadd.f32 %v8515, %v8453
    %v8517 = vadd.f32 %v8516, %v8454
    %v8518 = vadd.f32 %v8517, %v8455
    %v8519 = vadd.f32 %v8518, %v8456
    %v8520 = vadd.f32 %v8519, %v8457
    %v8521 = vadd.f32 %v8520, %v8458
    %v8522 = vadd.f32 %v8521, %v8459
    %v8523 = vadd.f32 %v8522, %v8460
    %v8524 = vadd.f32 %v8523, %v8461
    %v8525 = vadd.f32 %v8524, %v8462
    %v8526 = vadd.f32 %v8525, %v8463
    %v8527 = vadd.f32 %v8526, %v8464
    %v8528 = vadd.f32 %v8527, %v8465
    %v8529 = vadd.f32 %v8528, %v8466
    %v8530 = vadd.f32 %v8529, %v8467
    %v8531 = vadd.f32 %v8530, %v8468
    %v8532 = vadd.f32 %v8531, %v8469
    %v8533 = vadd.f32 %v8532, %v8470
    %v8534 = vadd.f32 %v8533, %v8471
    %v8535 = vadd.f32 %v8534, %v8472
    %v8536 = vadd.f32 %v8535, %v8473
    %v8537 = vadd.f32 %v8536, %v8474
    %v8538 = vadd.f32 %v8537, %v8475
    %v8539 = vadd.f32 %v8538, %v8476
    %v8540 = vadd.f32 %v8539, %v8477
    %v8541 = vadd.f32 %v8540, %v8478
    %v8542 = vadd.f32 %v8541, %v8479
    %v8543 = vadd.f32 %v8542, %v8480
    %v8544 = vadd.f32 %v8543, %v8481
    %v8545 = vadd.f32 %v8544, %v8482
    %v8546 = vadd.f32 %v8545, %v8483
    %v8547 = vrot.slane %v8546, 4
    %v8548 = vadd.f32 %v8546, %v8547
    %v8549 = vrot.slane %v8548, 2
    %v8550 = vadd.f32 %v8548, %v8549
    %v8551 = vrot.slane %v8550, 1
    %v8552 = vadd.f32 %v8550, %v8551
    %v8553 = vmul.f32 %v8552, 0.001953125
    %v8554 = vmul.f32 %v8419, %v8419
    %v8555 = vsub.f32 %v8553, %v8554
    %v8556 = vadd.f32 %v8555, 1e-05
    %v8557 = vrsqrt.pop %v8556
    %v8558 = vmul.f32 %v8557, %v8348
    %v8559 = vmul.f32 %v8419, %v8558
    %v8560 = vsub.f32 %v8349, %v8559
    %v8561 = vlaneseq
    %v8562 = vshrl.u32 %v8561, 7
    %v8563 = vsub.s32 0, %v8562
    %v8564 = vrot.slane %v8558, %v8563
    %v8565 = vmul.f32 %v8030, %v8564
    %v8566 = vmul.f32 %v8035, %v8564
    %v8567 = vmul.f32 %v8040, %v8564
    %v8568 = vmul.f32 %v8045, %v8564
    %v8569 = vmul.f32 %v8050, %v8564
    %v8570 = vmul.f32 %v8055, %v8564
    %v8571 = vmul.f32 %v8060, %v8564
    %v8572 = vmul.f32 %v8065, %v8564
    %v8573 = vmul.f32 %v8070, %v8564
    %v8574 = vmul.f32 %v8075, %v8564
    %v8575 = vmul.f32 %v8080, %v8564
    %v8576 = vmul.f32 %v8085, %v8564
    %v8577 = vmul.f32 %v8090, %v8564
    %v8578 = vmul.f32 %v8095, %v8564
    %v8579 = vmul.f32 %v8100, %v8564
    %v8580 = vmul.f32 %v8105, %v8564
    %v8581 = vmul.f32 %v8110, %v8564
    %v8582 = vmul.f32 %v8115, %v8564
    %v8583 = vmul.f32 %v8120, %v8564
    %v8584 = vmul.f32 %v8125, %v8564
    %v8585 = vmul.f32 %v8130, %v8564
    %v8586 = vmul.f32 %v8135, %v8564
    %v8587 = vmul.f32 %v8140, %v8564
    %v8588 = vmul.f32 %v8145, %v8564
    %v8589 = vmul.f32 %v8150, %v8564
    %v8590 = vmul.f32 %v8155, %v8564
    %v8591 = vmul.f32 %v8160, %v8564
    %v8592 = vmul.f32 %v8165, %v8564
    %v8593 = vmul.f32 %v8170, %v8564
    %v8594 = vmul.f32 %v8175, %v8564
    %v8595 = vmul.f32 %v8180, %v8564
    %v8596 = vmul.f32 %v8185, %v8564
    %v8597 = vmul.f32 %v8190, %v8564
    %v8598 = vmul.f32 %v8195, %v8564
    %v8599 = vmul.f32 %v8200, %v8564
    %v8600 = vmul.f32 %v8205, %v8564
    %v8601 = vmul.f32 %v8210, %v8564
    %v8602 = vmul.f32 %v8215, %v8564
    %v8603 = vmul.f32 %v8220, %v8564
    %v8604 = vmul.f32 %v8225, %v8564
    %v8605 = vmul.f32 %v8230, %v8564
    %v8606 = vmul.f32 %v8235, %v8564
    %v8607 = vmul.f32 %v8240, %v8564
    %v8608 = vmul.f32 %v8245, %v8564
    %v8609 = vmul.f32 %v8250, %v8564
    %v8610 = vmul.f32 %v8255, %v8564
    %v8611 = vmul.f32 %v8260, %v8564
    %v8612 = vmul.f32 %v8265, %v8564
    %v8613 = vmul.f32 %v8270, %v8564
    %v8614 = vmul.f32 %v8275, %v8564
    %v8615 = vmul.f32 %v8280, %v8564
    %v8616 = vmul.f32 %v8285, %v8564
    %v8617 = vmul.f32 %v8290, %v8564
    %v8618 = vmul.f32 %v8295, %v8564
    %v8619 = vmul.f32 %v8300, %v8564
    %v8620 = vmul.f32 %v8305, %v8564
    %v8621 = vmul.f32 %v8310, %v8564
    %v8622 = vmul.f32 %v8315, %v8564
    %v8623 = vmul.f32 %v8320, %v8564
    %v8624 = vmul.f32 %v8325, %v8564
    %v8625 = vmul.f32 %v8330, %v8564
    %v8626 = vmul.f32 %v8335, %v8564
    %v8627 = vmul.f32 %v8340, %v8564
    %v8628 = vmul.f32 %v8345, %v8564
    %v8630 = vlaneseq
    %v8631 = vshrl.u32 %v8630, 7
    %v8632 = vsub.s32 0, %v8631
    %v8633 = vrot.slane %v8560, %v8632
    %v8635 = vadd.f32 %v8565, %v8633
    %v8636 = vadd.f32 %v8566, %v8633
    %v8637 = vadd.f32 %v8567, %v8633
    %v8638 = vadd.f32 %v8568, %v8633
    %v8639 = vadd.f32 %v8569, %v8633
    %v8640 = vadd.f32 %v8570, %v8633
    %v8641 = vadd.f32 %v8571, %v8633
    %v8642 = vadd.f32 %v8572, %v8633
    %v8643 = vadd.f32 %v8573, %v8633
    %v8644 = vadd.f32 %v8574, %v8633
    %v8645 = vadd.f32 %v8575, %v8633
    %v8646 = vadd.f32 %v8576, %v8633
    %v8647 = vadd.f32 %v8577, %v8633
    %v8648 = vadd.f32 %v8578, %v8633
    %v8649 = vadd.f32 %v8579, %v8633
    %v8650 = vadd.f32 %v8580, %v8633
    %v8651 = vadd.f32 %v8581, %v8633
    %v8652 = vadd.f32 %v8582, %v8633
    %v8653 = vadd.f32 %v8583, %v8633
    %v8654 = vadd.f32 %v8584, %v8633
    %v8655 = vadd.f32 %v8585, %v8633
    %v8656 = vadd.f32 %v8586, %v8633
    %v8657 = vadd.f32 %v8587, %v8633
    %v8658 = vadd.f32 %v8588, %v8633
    %v8659 = vadd.f32 %v8589, %v8633
    %v8660 = vadd.f32 %v8590, %v8633
    %v8661 = vadd.f32 %v8591, %v8633
    %v8662 = vadd.f32 %v8592, %v8633
    %v8663 = vadd.f32 %v8593, %v8633
    %v8664 = vadd.f32 %v8594, %v8633
    %v8665 = vadd.f32 %v8595, %v8633
    %v8666 = vadd.f32 %v8596, %v8633
    %v8667 = vadd.f32 %v8597, %v8633
    %v8668 = vadd.f32 %v8598, %v8633
    %v8669 = vadd.f32 %v8599, %v8633
    %v8670 = vadd.f32 %v8600, %v8633
    %v8671 = vadd.f32 %v8601, %v8633
    %v8672 = vadd.f32 %v8602, %v8633
    %v8673 = vadd.f32 %v8603, %v8633
    %v8674 = vadd.f32 %v8604, %v8633
    %v8675 = vadd.f32 %v8605, %v8633
    %v8676 = vadd.f32 %v8606, %v8633
    %v8677 = vadd.f32 %v8607, %v8633
    %v8678 = vadd.f32 %v8608, %v8633
    %v8679 = vadd.f32 %v8609, %v8633
    %v8680 = vadd.f32 %v8610, %v8633
    %v8681 = vadd.f32 %v8611, %v8633
    %v8682 = vadd.f32 %v8612, %v8633
    %v8683 = vadd.f32 %v8613, %v8633
    %v8684 = vadd.f32 %v8614, %v8633
    %v8685 = vadd.f32 %v8615, %v8633
    %v8686 = vadd.f32 %v8616, %v8633
    %v8687 = vadd.f32 %v8617, %v8633
    %v8688 = vadd.f32 %v8618, %v8633
    %v8689 = vadd.f32 %v8619, %v8633
    %v8690 = vadd.f32 %v8620, %v8633
    %v8691 = vadd.f32 %v8621, %v8633
    %v8692 = vadd.f32 %v8622, %v8633
    %v8693 = vadd.f32 %v8623, %v8633
    %v8694 = vadd.f32 %v8624, %v8633
    %v8695 = vadd.f32 %v8625, %v8633
    %v8696 = vadd.f32 %v8626, %v8633
    %v8697 = vadd.f32 %v8627, %v8633
    %v8698 = vadd.f32 %v8628, %v8633
    %v8699 = vld [vmem:[#allocation4] sm:$0xff]
    %v8700 = vld [vmem:[#allocation4 + $0x8] sm:$0xff]
    %v8701 = vld [vmem:[#allocation4 + $0x10] sm:$0xff]
    %v8702 = vld [vmem:[#allocation4 + $0x18] sm:$0xff]
    %v8703 = vld [vmem:[#allocation4 + $0x20] sm:$0xff]
    %v8704 = vld [vmem:[#allocation4 + $0x28] sm:$0xff]
    %v8705 = vld [vmem:[#allocation4 + $0x30] sm:$0xff]
    %v8706 = vld [vmem:[#allocation4 + $0x38] sm:$0xff]
    %v8707 = vld [vmem:[#allocation4 + $0x40] sm:$0xff]
    %v8708 = vld [vmem:[#allocation4 + $0x48] sm:$0xff]
    %v8709 = vld [vmem:[#allocation4 + $0x50] sm:$0xff]
    %v8710 = vld [vmem:[#allocation4 + $0x58] sm:$0xff]
    %v8711 = vld [vmem:[#allocation4 + $0x60] sm:$0xff]
    %v8712 = vld [vmem:[#allocation4 + $0x68] sm:$0xff]
    %v8713 = vld [vmem:[#allocation4 + $0x70] sm:$0xff]
    %v8714 = vld [vmem:[#allocation4 + $0x78] sm:$0xff]
    %v8715 = vld [vmem:[#allocation4 + $0x80] sm:$0xff]
    %v8716 = vld [vmem:[#allocation4 + $0x88] sm:$0xff]
    %v8717 = vld [vmem:[#allocation4 + $0x90] sm:$0xff]
    %v8718 = vld [vmem:[#allocation4 + $0x98] sm:$0xff]
    %v8719 = vld [vmem:[#allocation4 + $0xa0] sm:$0xff]
    %v8720 = vld [vmem:[#allocation4 + $0xa8] sm:$0xff]
    %v8721 = vld [vmem:[#allocation4 + $0xb0] sm:$0xff]
    %v8722 = vld [vmem:[#allocation4 + $0xb8] sm:$0xff]
    %v8723 = vld [vmem:[#allocation4 + $0xc0] sm:$0xff]
    %v8724 = vld [vmem:[#allocation4 + $0xc8] sm:$0xff]
    %v8725 = vld [vmem:[#allocation4 + $0xd0] sm:$0xff]
    %v8726 = vld [vmem:[#allocation4 + $0xd8] sm:$0xff]
    %v8727 = vld [vmem:[#allocation4 + $0xe0] sm:$0xff]
    %v8728 = vld [vmem:[#allocation4 + $0xe8] sm:$0xff]
    %v8729 = vld [vmem:[#allocation4 + $0xf0] sm:$0xff]
    %v8730 = vld [vmem:[#allocation4 + $0xf8] sm:$0xff]
    %v8731 = vld [vmem:[#allocation4 + $0x100] sm:$0xff]
    %v8732 = vld [vmem:[#allocation4 + $0x108] sm:$0xff]
    %v8733 = vld [vmem:[#allocation4 + $0x110] sm:$0xff]
    %v8734 = vld [vmem:[#allocation4 + $0x118] sm:$0xff]
    %v8735 = vld [vmem:[#allocation4 + $0x120] sm:$0xff]
    %v8736 = vld [vmem:[#allocation4 + $0x128] sm:$0xff]
    %v8737 = vld [vmem:[#allocation4 + $0x130] sm:$0xff]
    %v8738 = vld [vmem:[#allocation4 + $0x138] sm:$0xff]
    %v8739 = vld [vmem:[#allocation4 + $0x140] sm:$0xff]
    %v8740 = vld [vmem:[#allocation4 + $0x148] sm:$0xff]
    %v8741 = vld [vmem:[#allocation4 + $0x150] sm:$0xff]
    %v8742 = vld [vmem:[#allocation4 + $0x158] sm:$0xff]
    %v8743 = vld [vmem:[#allocation4 + $0x160] sm:$0xff]
    %v8744 = vld [vmem:[#allocation4 + $0x168] sm:$0xff]
    %v8745 = vld [vmem:[#allocation4 + $0x170] sm:$0xff]
    %v8746 = vld [vmem:[#allocation4 + $0x178] sm:$0xff]
    %v8747 = vld [vmem:[#allocation4 + $0x180] sm:$0xff]
    %v8748 = vld [vmem:[#allocation4 + $0x188] sm:$0xff]
    %v8749 = vld [vmem:[#allocation4 + $0x190] sm:$0xff]
    %v8750 = vld [vmem:[#allocation4 + $0x198] sm:$0xff]
    %v8751 = vld [vmem:[#allocation4 + $0x1a0] sm:$0xff]
    %v8752 = vld [vmem:[#allocation4 + $0x1a8] sm:$0xff]
    %v8753 = vld [vmem:[#allocation4 + $0x1b0] sm:$0xff]
    %v8754 = vld [vmem:[#allocation4 + $0x1b8] sm:$0xff]
    %v8755 = vld [vmem:[#allocation4 + $0x1c0] sm:$0xff]
    %v8756 = vld [vmem:[#allocation4 + $0x1c8] sm:$0xff]
    %v8757 = vld [vmem:[#allocation4 + $0x1d0] sm:$0xff]
    %v8758 = vld [vmem:[#allocation4 + $0x1d8] sm:$0xff]
    %v8759 = vld [vmem:[#allocation4 + $0x1e0] sm:$0xff]
    %v8760 = vld [vmem:[#allocation4 + $0x1e8] sm:$0xff]
    %v8761 = vld [vmem:[#allocation4 + $0x1f0] sm:$0xff]
    %v8762 = vld [vmem:[#allocation4 + $0x1f8] sm:$0xff]
    %v8763 = vadd.f32 %v8635, %v8699
    %v8764 = vadd.f32 %v8636, %v8700
    %v8765 = vadd.f32 %v8637, %v8701
    %v8766 = vadd.f32 %v8638, %v8702
    %v8767 = vadd.f32 %v8639, %v8703
    %v8768 = vadd.f32 %v8640, %v8704
    %v8769 = vadd.f32 %v8641, %v8705
    %v8770 = vadd.f32 %v8642, %v8706
    %v8771 = vadd.f32 %v8643, %v8707
    %v8772 = vadd.f32 %v8644, %v8708
    %v8773 = vadd.f32 %v8645, %v8709
    %v8774 = vadd.f32 %v8646, %v8710
    %v8775 = vadd.f32 %v8647, %v8711
    %v8776 = vadd.f32 %v8648, %v8712
    %v8777 = vadd.f32 %v8649, %v8713
    %v8778 = vadd.f32 %v8650, %v8714
    %v8779 = vadd.f32 %v8651, %v8715
    %v8780 = vadd.f32 %v8652, %v8716
    %v8781 = vadd.f32 %v8653, %v8717
    %v8782 = vadd.f32 %v8654, %v8718
    %v8783 = vadd.f32 %v8655, %v8719
    %v8784 = vadd.f32 %v8656, %v8720
    %v8785 = vadd.f32 %v8657, %v8721
    %v8786 = vadd.f32 %v8658, %v8722
    %v8787 = vadd.f32 %v8659, %v8723
    %v8788 = vadd.f32 %v8660, %v8724
    %v8789 = vadd.f32 %v8661, %v8725
    %v8790 = vadd.f32 %v8662, %v8726
    %v8791 = vadd.f32 %v8663, %v8727
    %v8792 = vadd.f32 %v8664, %v8728
    %v8793 = vadd.f32 %v8665, %v8729
    %v8794 = vadd.f32 %v8666, %v8730
    %v8795 = vadd.f32 %v8667, %v8731
    %v8796 = vadd.f32 %v8668, %v8732
    %v8797 = vadd.f32 %v8669, %v8733
    %v8798 = vadd.f32 %v8670, %v8734
    %v8799 = vadd.f32 %v8671, %v8735
    %v8800 = vadd.f32 %v8672, %v8736
    %v8801 = vadd.f32 %v8673, %v8737
    %v8802 = vadd.f32 %v8674, %v8738
    %v8803 = vadd.f32 %v8675, %v8739
    %v8804 = vadd.f32 %v8676, %v8740
    %v8805 = vadd.f32 %v8677, %v8741
    %v8806 = vadd.f32 %v8678, %v8742
    %v8807 = vadd.f32 %v8679, %v8743
    %v8808 = vadd.f32 %v8680, %v8744
    %v8809 = vadd.f32 %v8681, %v8745
    %v8810 = vadd.f32 %v8682, %v8746
    %v8811 = vadd.f32 %v8683, %v8747
    %v8812 = vadd.f32 %v8684, %v8748
    %v8813 = vadd.f32 %v8685, %v8749
    %v8814 = vadd.f32 %v8686, %v8750
    %v8815 = vadd.f32 %v8687, %v8751
    %v8816 = vadd.f32 %v8688, %v8752
    %v8817 = vadd.f32 %v8689, %v8753
    %v8818 = vadd.f32 %v8690, %v8754
    %v8819 = vadd.f32 %v8691, %v8755
    %v8820 = vadd.f32 %v8692, %v8756
    %v8821 = vadd.f32 %v8693, %v8757
    %v8822 = vadd.f32 %v8694, %v8758
    %v8823 = vadd.f32 %v8695, %v8759
    %v8824 = vadd.f32 %v8696, %v8760
    %v8825 = vadd.f32 %v8697, %v8761
    %v8826 = vadd.f32 %v8698, %v8762
    %v8827 = vmax.f32 %v8763, 0.0
    %v8828 = vmax.f32 %v8764, 0.0
    %v8829 = vmax.f32 %v8765, 0.0
    %v8830 = vmax.f32 %v8766, 0.0
    %v8831 = vmax.f32 %v8767, 0.0
    %v8832 = vmax.f32 %v8768, 0.0
    %v8833 = vmax.f32 %v8769, 0.0
    %v8834 = vmax.f32 %v8770, 0.0
    %v8835 = vmax.f32 %v8771, 0.0
    %v8836 = vmax.f32 %v8772, 0.0
    %v8837 = vmax.f32 %v8773, 0.0
    %v8838 = vmax.f32 %v8774, 0.0
    %v8839 = vmax.f32 %v8775, 0.0
    %v8840 = vmax.f32 %v8776, 0.0
    %v8841 = vmax.f32 %v8777, 0.0
    %v8842 = vmax.f32 %v8778, 0.0
    %v8843 = vmax.f32 %v8779, 0.0
    %v8844 = vmax.f32 %v8780, 0.0
    %v8845 = vmax.f32 %v8781, 0.0
    %v8846 = vmax.f32 %v8782, 0.0
    %v8847 = vmax.f32 %v8783, 0.0
    %v8848 = vmax.f32 %v8784, 0.0
    %v8849 = vmax.f32 %v8785, 0.0
    %v8850 = vmax.f32 %v8786, 0.0
    %v8851 = vmax.f32 %v8787, 0.0
    %v8852 = vmax.f32 %v8788, 0.0
    %v8853 = vmax.f32 %v8789, 0.0
    %v8854 = vmax.f32 %v8790, 0.0
    %v8855 = vmax.f32 %v8791, 0.0
    %v8856 = vmax.f32 %v8792, 0.0
    %v8857 = vmax.f32 %v8793, 0.0
    %v8858 = vmax.f32 %v8794, 0.0
    %v8859 = vmax.f32 %v8795, 0.0
    %v8860 = vmax.f32 %v8796, 0.0
    %v8861 = vmax.f32 %v8797, 0.0
    %v8862 = vmax.f32 %v8798, 0.0
    %v8863 = vmax.f32 %v8799, 0.0
    %v8864 = vmax.f32 %v8800, 0.0
    %v8865 = vmax.f32 %v8801, 0.0
    %v8866 = vmax.f32 %v8802, 0.0
    %v8867 = vmax.f32 %v8803, 0.0
    %v8868 = vmax.f32 %v8804, 0.0
    %v8869 = vmax.f32 %v8805, 0.0
    %v8870 = vmax.f32 %v8806, 0.0
    %v8871 = vmax.f32 %v8807, 0.0
    %v8872 = vmax.f32 %v8808, 0.0
    %v8873 = vmax.f32 %v8809, 0.0
    %v8874 = vmax.f32 %v8810, 0.0
    %v8875 = vmax.f32 %v8811, 0.0
    %v8876 = vmax.f32 %v8812, 0.0
    %v8877 = vmax.f32 %v8813, 0.0
    %v8878 = vmax.f32 %v8814, 0.0
    %v8879 = vmax.f32 %v8815, 0.0
    %v8880 = vmax.f32 %v8816, 0.0
    %v8881 = vmax.f32 %v8817, 0.0
    %v8882 = vmax.f32 %v8818, 0.0
    %v8883 = vmax.f32 %v8819, 0.0
    %v8884 = vmax.f32 %v8820, 0.0
    %v8885 = vmax.f32 %v8821, 0.0
    %v8886 = vmax.f32 %v8822, 0.0
    %v8887 = vmax.f32 %v8823, 0.0
    %v8888 = vmax.f32 %v8824, 0.0
    %v8889 = vmax.f32 %v8825, 0.0
    %v8890 = vmax.f32 %v8826, 0.0
    %8891 = vst [vmem:[#allocation10] sm:$0xff] %v8827
    %8892 = vst [vmem:[#allocation10 + $0x8] sm:$0xff] %v8828
    %8893 = vst [vmem:[#allocation10 + $0x10] sm:$0xff] %v8829
    %8894 = vst [vmem:[#allocation10 + $0x18] sm:$0xff] %v8830
    %8895 = vst [vmem:[#allocation10 + $0x20] sm:$0xff] %v8831
    %8896 = vst [vmem:[#allocation10 + $0x28] sm:$0xff] %v8832
    %8897 = vst [vmem:[#allocation10 + $0x30] sm:$0xff] %v8833
    %8898 = vst [vmem:[#allocation10 + $0x38] sm:$0xff] %v8834
    %8899 = vst [vmem:[#allocation10 + $0x40] sm:$0xff] %v8835
    %8900 = vst [vmem:[#allocation10 + $0x48] sm:$0xff] %v8836
    %8901 = vst [vmem:[#allocation10 + $0x50] sm:$0xff] %v8837
    %8902 = vst [vmem:[#allocation10 + $0x58] sm:$0xff] %v8838
    %8903 = vst [vmem:[#allocation10 + $0x60] sm:$0xff] %v8839
    %8904 = vst [vmem:[#allocation10 + $0x68] sm:$0xff] %v8840
    %8905 = vst [vmem:[#allocation10 + $0x70] sm:$0xff] %v8841
    %8906 = vst [vmem:[#allocation10 + $0x78] sm:$0xff] %v8842
    %8907 = vst [vmem:[#allocation10 + $0x80] sm:$0xff] %v8843
    %8908 = vst [vmem:[#allocation10 + $0x88] sm:$0xff] %v8844
    %8909 = vst [vmem:[#allocation10 + $0x90] sm:$0xff] %v8845
    %8910 = vst [vmem:[#allocation10 + $0x98] sm:$0xff] %v8846
    %8911 = vst [vmem:[#allocation10 + $0xa0] sm:$0xff] %v8847
    %8912 = vst [vmem:[#allocation10 + $0xa8] sm:$0xff] %v8848
    %8913 = vst [vmem:[#allocation10 + $0xb0] sm:$0xff] %v8849
    %8914 = vst [vmem:[#allocation10 + $0xb8] sm:$0xff] %v8850
    %8915 = vst [vmem:[#allocation10 + $0xc0] sm:$0xff] %v8851
    %8916 = vst [vmem:[#allocation10 + $0xc8] sm:$0xff] %v8852
    %8917 = vst [vmem:[#allocation10 + $0xd0] sm:$0xff] %v8853
    %8918 = vst [vmem:[#allocation10 + $0xd8] sm:$0xff] %v8854
    %8919 = vst [vmem:[#allocation10 + $0xe0] sm:$0xff] %v8855
    %8920 = vst [vmem:[#allocation10 + $0xe8] sm:$0xff] %v8856
    %8921 = vst [vmem:[#allocation10 + $0xf0] sm:$0xff] %v8857
    %8922 = vst [vmem:[#allocation10 + $0xf8] sm:$0xff] %v8858
    %8923 = vst [vmem:[#allocation10 + $0x100] sm:$0xff] %v8859
    %8924 = vst [vmem:[#allocation10 + $0x108] sm:$0xff] %v8860
    %8925 = vst [vmem:[#allocation10 + $0x110] sm:$0xff] %v8861
    %8926 = vst [vmem:[#allocation10 + $0x118] sm:$0xff] %v8862
    %8927 = vst [vmem:[#allocation10 + $0x120] sm:$0xff] %v8863
    %8928 = vst [vmem:[#allocation10 + $0x128] sm:$0xff] %v8864
    %8929 = vst [vmem:[#allocation10 + $0x130] sm:$0xff] %v8865
    %8930 = vst [vmem:[#allocation10 + $0x138] sm:$0xff] %v8866
    %8931 = vst [vmem:[#allocation10 + $0x140] sm:$0xff] %v8867
    %8932 = vst [vmem:[#allocation10 + $0x148] sm:$0xff] %v8868
    %8933 = vst [vmem:[#allocation10 + $0x150] sm:$0xff] %v8869
    %8934 = vst [vmem:[#allocation10 + $0x158] sm:$0xff] %v8870
    %8935 = vst [vmem:[#allocation10 + $0x160] sm:$0xff] %v8871
    %8936 = vst [vmem:[#allocation10 + $0x168] sm:$0xff] %v8872
    %8937 = vst [vmem:[#allocation10 + $0x170] sm:$0xff] %v8873
    %8938 = vst [vmem:[#allocation10 + $0x178] sm:$0xff] %v8874
    %8939 = vst [vmem:[#allocation10 + $0x180] sm:$0xff] %v8875
    %8940 = vst [vmem:[#allocation10 + $0x188] sm:$0xff] %v8876
    %8941 = vst [vmem:[#allocation10 + $0x190] sm:$0xff] %v8877
    %8942 = vst [vmem:[#allocation10 + $0x198] sm:$0xff] %v8878
    %8943 = vst [vmem:[#allocation10 + $0x1a0] sm:$0xff] %v8879
    %8944 = vst [vmem:[#allocation10 + $0x1a8] sm:$0xff] %v8880
    %8945 = vst [vmem:[#allocation10 + $0x1b0] sm:$0xff] %v8881
    %8946 = vst [vmem:[#allocation10 + $0x1b8] sm:$0xff] %v8882
    %8947 = vst [vmem:[#allocation10 + $0x1c0] sm:$0xff] %v8883
    %8948 = vst [vmem:[#allocation10 + $0x1c8] sm:$0xff] %v8884
    %8949 = vst [vmem:[#allocation10 + $0x1d0] sm:$0xff] %v8885
    %8950 = vst [vmem:[#allocation10 + $0x1d8] sm:$0xff] %v8886
    %8951 = vst [vmem:[#allocation10 + $0x1e0] sm:$0xff] %v8887
    %8952 = vst [vmem:[#allocation10 + $0x1e8] sm:$0xff] %v8888
    %8953 = vst [vmem:[#allocation10 + $0x1f0] sm:$0xff] %v8889
    %8954 = vst [vmem:[#allocation10 + $0x1f8] sm:$0xff] %v8890
    // Predicated region
    $region42: #{tpu_custom_call.1} parent=1 // pred_check
      _
    $region43: #{tpu_custom_call.1} parent=1 // pred_check_branch
      %8956 = sbr.rel (0) target = $region45
    $region44: #{tpu_custom_call.1} parent=1 // pred_region
      %s8958 = ssub.s32 8192, 8192
      %8959 = vsyncadd [#allocation6], %s8958
      %s8960 = sshll.u32 [#allocation10], 4
      %s8961 = int_to_ptr.vmem [resolvable:$true] %s8960
      %8966 = dma.vmem_to_hbm [thread:$0]  %s8961, 8192, %s7, [#allocation6], 128, 128, 8
    $region45: #{tpu_custom_call.1} parent=1 // pred_fallthru
      _
    // Predicated region
    $region46: #{tpu_custom_call.1} parent=1 // pred_check
      _
    $region47: #{tpu_custom_call.1} parent=1 // pred_check_branch
      %8968 = sbr.rel (0) target = $region49
    $region48: #{tpu_custom_call.1} parent=1 // pred_region
      %8969 = dma.done [#allocation6], 8192
    $region49: #{tpu_custom_call.1} parent=1 // pred_fallthru
      _
    %8970 = vsyncpa [#allocation5], 1
    %8971 = vsyncpa [#allocation8], 1
    %8972 = vsyncpa [#allocation6], 1

</llo_original>
